<compile_context>
chip_gen: v5e
topology: v5e:2x2
jax: 0.10.0
libtpu: 0.0.40
codegen_flags: <defaults>
</compile_context>

<pallas_src>
import functools

import jax
import jax.numpy as jnp
from jax.experimental import pallas as pl
from jax.experimental.pallas import tpu as pltpu

NGF = 16            # Unet(ngf=16): small but consistent with the module
TM_MAX = 256        # row tile (keeps grid >= 2 on the big layers for v7x)
TN_VEC = 512        # lane tile for the single-output-channel conv
JNP_MIN_ROWS = 16   # below this, a pallas launch is pure overhead


# ----------------------------------------------------------------------------
# Pallas kernels
# ----------------------------------------------------------------------------
def _matmul_kernel(a_ref, b_ref, s_ref, o_ref, *, act):
    # Fused epilogue: (a @ b) + bias, optional activation, f32 accumulation.
    y = jnp.dot(a_ref[...], b_ref[...], preferred_element_type=jnp.float32)
    y = y + s_ref[...]
    if act == "relu":
        y = jnp.maximum(y, 0.0)
    elif act == "leaky":
        y = jnp.where(y >= 0.0, y, 0.2 * y)
    o_ref[...] = y


def _cout1_kernel(w_ref, a_ref, b_ref, o_ref):
    # (8, K) @ (K, tn) -> (8, tn).  All 8 lhs rows hold the same weight vector
    # (wrapper keeps row 0); this keeps the store lane-dense (tn-wide) instead
    # of one masked width-1 store per output row.
    o_ref[...] = (jnp.dot(w_ref[...], a_ref[...],
                          preferred_element_type=jnp.float32) + b_ref[...])


def _apply_act(y, act):
    if act == "relu":
        return jnp.maximum(y, 0.0)
    if act == "leaky":
        return jnp.where(y >= 0.0, y, 0.2 * y)
    return y


def matmul_bias_act(a, b, bias=None, act="none"):
    """act((a @ b) + bias).  bf16 operands, f32 accumulation, fused epilogue.

    Tiny / oddly shaped problems fall back to plain jnp (launch overhead would
    dominate — see perf review)."""
    M, K = a.shape
    N = b.shape[1]
    if bias is None:
        bias = jnp.zeros((N,), jnp.float32)
    bias2 = bias.astype(jnp.float32).reshape(1, N)

    if M < JNP_MIN_ROWS or (M % 8 != 0):
        y = jnp.dot(a.astype(jnp.bfloat16), b.astype(jnp.bfloat16),
                    preferred_element_type=jnp.float32) + bias2
        return _apply_act(y, act)

    tm = min(TM_MAX, M)
    return pl.pallas_call(
        functools.partial(_matmul_kernel, act=act),
        out_shape=jax.ShapeDtypeStruct((M, N), jnp.float32),
        grid=(pl.cdiv(M, tm),),
        in_specs=[pl.BlockSpec((tm, K), lambda i: (i, 0)),
                  pl.BlockSpec((K, N), lambda i: (0, 0)),
                  pl.BlockSpec((1, N), lambda i: (0, 0))],
        out_specs=pl.BlockSpec((tm, N), lambda i: (i, 0)),
        compiler_params=pltpu.CompilerParams(
            dimension_semantics=("parallel",)),
    )(a.astype(jnp.bfloat16), b.astype(jnp.bfloat16), bias2)


# ----------------------------------------------------------------------------
# JAX glue: im2col, conv wrappers, BN stats, activations, bilinear upsample
# ----------------------------------------------------------------------------
# TODO(synk): for large H/W, replace im2col+matmul with a halo-tile Pallas conv
#             to avoid the 9x/16x im2col HBM amplification.
def _im2col(x, kh, kw, stride, pad):
    N, H, W, C = x.shape
    xp = jnp.pad(x, ((0, 0), (pad, pad), (pad, pad), (0, 0)))
    Ho = (H + 2 * pad - kh) // stride + 1
    Wo = (W + 2 * pad - kw) // stride + 1
    cols = []
    for di in range(kh):
        for dj in range(kw):
            cols.append(xp[:, di:di + stride * (Ho - 1) + 1:stride,
                           dj:dj + stride * (Wo - 1) + 1:stride, :])
    cols = jnp.stack(cols, axis=3)                       # (N, Ho, Wo, kh*kw, C)
    return cols.reshape(N * Ho * Wo, kh * kw * C), (N, Ho, Wo)


def _im2col_T(x, kh, kw, stride, pad):
    # Transposed im2col: (kh*kw*C, N*Ho*Wo) — spatial dim last (lane axis).
    N, H, W, C = x.shape
    xp = jnp.pad(x, ((0, 0), (pad, pad), (pad, pad), (0, 0)))
    Ho = (H + 2 * pad - kh) // stride + 1
    Wo = (W + 2 * pad - kw) // stride + 1
    cols = []
    for di in range(kh):
        for dj in range(kw):
            cols.append(xp[:, di:di + stride * (Ho - 1) + 1:stride,
                           dj:dj + stride * (Wo - 1) + 1:stride, :])
    cols = jnp.stack(cols, axis=0)                       # (kh*kw, N, Ho, Wo, C)
    cols = jnp.transpose(cols, (0, 4, 1, 2, 3))          # (kh*kw, C, N, Ho, Wo)
    return cols.reshape(kh * kw * C, N * Ho * Wo), (N, Ho, Wo)


def conv2d(x, w, stride, pad, bias=None, act="none"):
    """x NHWC, w (kh, kw, Cin, Cout); the matmul (+epilogue) runs in Pallas."""
    kh, kw, cin, cout = w.shape
    cols, (N, Ho, Wo) = _im2col(x, kh, kw, stride, pad)
    y = matmul_bias_act(cols, w.reshape(kh * kw * cin, cout), bias, act)
    return y.reshape(N, Ho, Wo, cout)


def conv2d_cout1(x, w, bias):
    """3x3 / s1 / p1 conv with a single output channel (final Unet layer).

    Computed as w(1,K) @ colsT(K,M) so the spatial dim sits in the lane axis:
    lane-dense output stores instead of width-1 masked stores."""
    kh, kw, cin, cout = w.shape
    assert cout == 1
    colsT, (N, Ho, Wo) = _im2col_T(x, kh, kw, 1, 1)
    K, M = colsT.shape
    if M % 128 != 0 or M < 128:
        y = matmul_bias_act(colsT.T, w.reshape(K, 1), bias)
        return y.reshape(N, Ho, Wo, 1)
    tn = min(TN_VEC, M)
    wrow = jnp.broadcast_to(w.reshape(1, K), (8, K)).astype(jnp.bfloat16)
    brow = bias.astype(jnp.float32).reshape(1, 1)
    out = pl.pallas_call(
        _cout1_kernel,
        out_shape=jax.ShapeDtypeStruct((8, M), jnp.float32),
        grid=(M // tn,),
        in_specs=[pl.BlockSpec((8, K), lambda i: (0, 0)),
                  pl.BlockSpec((K, tn), lambda i: (0, i)),
                  pl.BlockSpec((1, 1), lambda i: (0, 0))],
        out_specs=pl.BlockSpec((8, tn), lambda i: (0, i)),
        compiler_params=pltpu.CompilerParams(
            dimension_semantics=("parallel",)),
    )(wrow, colsT.astype(jnp.bfloat16), brow)
    return out[0].reshape(N, Ho, Wo, 1)


def bn_apply(x, gamma, beta, eps=1e-5):
    # Training-mode BatchNorm2d (fresh module default): batch stats over
    # (N, H, W), biased variance.  Elementwise apply is left to XLA so it fuses
    # into the next layer's im2col / upsample producer (no extra HBM pass).
    C = x.shape[-1]
    x2 = x.reshape(-1, C)
    mean = jnp.mean(x2, axis=0)
    var = jnp.var(x2, axis=0)
    scale = gamma * jax.lax.rsqrt(var + eps)
    shift = beta - mean * scale
    return x * scale + shift


def leaky_relu(x):
    return jnp.where(x >= 0.0, x, 0.2 * x)


def relu(x):
    return jnp.maximum(x, 0.0)


def upsample2x(x):
    # nn.Upsample(scale_factor=2, mode='bilinear', align_corners=True), NHWC.
    B, H, W, C = x.shape
    Ho, Wo = 2 * H, 2 * W

    def idx(n_in, n_out):
        if n_in == 1:
            src = jnp.zeros((n_out,), jnp.float32)
        else:
            src = jnp.arange(n_out, dtype=jnp.float32) * (n_in - 1) / (n_out - 1)
        lo = jnp.clip(jnp.floor(src).astype(jnp.int32), 0, n_in - 1)
        hi = jnp.clip(lo + 1, 0, n_in - 1)
        return lo, hi, src - lo.astype(jnp.float32)

    h0, h1, fh = idx(H, Ho)
    w0, w1, fw = idx(W, Wo)
    top = (x[:, h0, :, :] * (1.0 - fh)[None, :, None, None]
           + x[:, h1, :, :] * fh[None, :, None, None])
    out = (top[:, :, w0, :] * (1.0 - fw)[None, None, :, None]
           + top[:, :, w1, :] * fw[None, None, :, None])
    return out


# ----------------------------------------------------------------------------
# Parameters (deterministic init)
# ----------------------------------------------------------------------------
def init_params(key):
    ngf = NGF
    cm = ngf * 8
    p = {}
    keys = iter(jax.random.split(key, 64))

    def nrm(shape, scale=0.05):
        return jax.random.normal(next(keys), shape, dtype=jnp.float32) * scale

    # Down convs (k4 s2 p1), outermost (block1) -> innermost (block5)
    down_dims = [(1, ngf), (ngf, 2 * ngf), (2 * ngf, 4 * ngf),
                 (4 * ngf, 8 * ngf), (8 * ngf, 8 * ngf)]
    for i, (ci, co) in enumerate(down_dims, start=1):
        p[f"d{i}_w"] = nrm((4, 4, ci, co))
        if i > 1:  # outermost down has no BatchNorm
            p[f"d{i}_bn_g"] = jnp.ones((co,), jnp.float32)
            p[f"d{i}_bn_b"] = jnp.zeros((co,), jnp.float32)

    # Up convs (k3 s1 p1)
    up_dims = {5: (16 * ngf, 8 * ngf), 4: (16 * ngf, 4 * ngf),
               3: (8 * ngf, 2 * ngf), 2: (4 * ngf, ngf), 1: (2 * ngf, 1)}
    for i, (ci, co) in up_dims.items():
        p[f"u{i}_w"] = nrm((3, 3, ci, co))
        if i == 1:  # outermost upconv has bias, no BatchNorm
            p["u1_b"] = jnp.zeros((co,), jnp.float32)
        else:
            p[f"u{i}_bn_g"] = jnp.ones((co,), jnp.float32)
            p[f"u{i}_bn_b"] = jnp.zeros((co,), jnp.float32)

    # bn0
    p["bn0_g"] = jnp.ones((1,), jnp.float32)
    p["bn0_b"] = jnp.zeros((1,), jnp.float32)

    # TwoStreamBlock
    p["fc_m_w"] = nrm((2048, cm))
    p["fc_m_b"] = nrm((cm,))
    p["fc_a_w"] = nrm((512, cm))
    p["fc_a_b"] = nrm((cm,))
    p["sig_w"] = nrm((1,), 0.5)
    p["sig_b"] = nrm((1,), 0.5)
    p["ts_dm_w"] = nrm((4, 4, cm, cm))
    p["ts_da_w"] = nrm((4, 4, cm, cm))
    p["ts_um_w"] = nrm((3, 3, cm, cm))
    p["ts_ua_w"] = nrm((3, 3, cm, cm))
    for n in ("ts_um", "ts_ua"):
        p[f"{n}_bn_g"] = jnp.ones((cm,), jnp.float32)
        p[f"{n}_bn_b"] = jnp.zeros((cm,), jnp.float32)
    return p


# ----------------------------------------------------------------------------
# Forward pass (TwoStreamBlock + nested UnetBlocks, unrolled)
# ----------------------------------------------------------------------------
def two_stream(p, x, feat_motion, feat_appear):
    B = x.shape[0]
    cm = NGF * 8

    # fc_motion: (B, 2048) -> (B, cm)   (M=B: degenerate -> jnp path, fused bias)
    fm = matmul_bias_act(feat_motion, p["fc_m_w"], p["fc_m_b"])

    # fc_appear: (B, 512, T, Ha, Wa) -> permute(0,2,3,4,1) -> Linear -> mean(T)
    fa5 = jnp.transpose(feat_appear, (0, 2, 3, 4, 1))
    _, T, Ha, Wa, cfa = fa5.shape
    fa = matmul_bias_act(fa5.reshape(-1, cfa), p["fc_a_w"], p["fc_a_b"])
    fa = fa.reshape(B, T, Ha, Wa, cm).mean(axis=1)            # (B, Ha, Wa, cm)

    # map = sum_c(fm * fa) -> sig_conv(1x1) -> sigmoid : tiny, inline jnp
    mp = jnp.sum(fm[:, None, None, :] * fa, axis=-1, keepdims=True)
    mp = jax.nn.sigmoid(mp * p["sig_w"][0] + p["sig_b"][0])
    # AdaptiveMaxPool2d((1,1)) + squeeze
    fa_pooled = jnp.max(mp * fa, axis=(1, 2))                  # (B, cm)

    # Merged two-stream down conv: shared leaky(x), shared im2col, Cout=2*cm.
    x_act = leaky_relu(x)
    w_down = jnp.concatenate([p["ts_dm_w"], p["ts_da_w"]], axis=-1)
    xd = conv2d(x_act, w_down, 2, 1)                           # (B, 1, 1, 2*cm)
    xm = xd[..., :cm] + fm[:, None, None, :]
    xa = xd[..., cm:] + fa_pooled[:, None, None, :]

    xm = bn_apply(conv2d(upsample2x(relu(xm)), p["ts_um_w"], 1, 1),
                  p["ts_um_bn_g"], p["ts_um_bn_b"])
    xa = bn_apply(conv2d(upsample2x(relu(xa)), p["ts_ua_w"], 1, 1),
                  p["ts_ua_bn_g"], p["ts_ua_bn_b"])

    return jnp.concatenate([xa, xm], axis=-1), fm, fa_pooled


def unet_forward(p, x, feat_motion, feat_appear):
    # x: (B, H, W)  (the PyTorch forward unsqueezes the channel dim itself)
    # bn0: scalar-channel affine — inline jnp so XLA fuses it into the d1
    # im2col producer (avoids a lane-width-1 Pallas store).
    a1 = bn_apply(x[..., None].astype(jnp.float32), p["bn0_g"], p["bn0_b"])

    # ---- down path ----
    a2 = conv2d(a1, p["d1_w"], 2, 1)                           # outermost: conv only
    a3 = bn_apply(conv2d(leaky_relu(a2), p["d2_w"], 2, 1), p["d2_bn_g"], p["d2_bn_b"])
    a4 = bn_apply(conv2d(leaky_relu(a3), p["d3_w"], 2, 1), p["d3_bn_g"], p["d3_bn_b"])
    a5 = bn_apply(conv2d(leaky_relu(a4), p["d4_w"], 2, 1), p["d4_bn_g"], p["d4_bn_b"])
    d5 = bn_apply(conv2d(leaky_relu(a5), p["d5_w"], 2, 1), p["d5_bn_g"], p["d5_bn_b"])

    # ---- two-stream bottleneck ----
    ts_out, fm, fa = two_stream(p, d5, feat_motion, feat_appear)

    # ---- up path (relu -> upsample x2 -> conv k3 -> bn, skip concat [skip, up]) ----
    u5 = bn_apply(conv2d(upsample2x(relu(ts_out)), p["u5_w"], 1, 1), p["u5_bn_g"], p["u5_bn_b"])
    c5 = jnp.concatenate([a5, u5], axis=-1)
    u4 = bn_apply(conv2d(upsample2x(relu(c5)), p["u4_w"], 1, 1), p["u4_bn_g"], p["u4_bn_b"])
    c4 = jnp.concatenate([a4, u4], axis=-1)
    u3 = bn_apply(conv2d(upsample2x(relu(c4)), p["u3_w"], 1, 1), p["u3_bn_g"], p["u3_bn_b"])
    c3 = jnp.concatenate([a3, u3], axis=-1)
    u2 = bn_apply(conv2d(upsample2x(relu(c3)), p["u2_w"], 1, 1), p["u2_bn_g"], p["u2_bn_b"])
    c2 = jnp.concatenate([a2, u2], axis=-1)
    # outermost upconv: bias, no BN, single output channel -> lane-dense kernel
    u1 = conv2d_cout1(upsample2x(relu(c2)), p["u1_w"], p["u1_b"])

    out = jnp.squeeze(u1, axis=-1)            # (B, H, W)  == x.squeeze()
    fm_out = fm[:, :, None, None]             # (B, 8*ngf, 1, 1) as in torch
    return out, fm_out, fa                    # fa: (B, 8*ngf)


# ----------------------------------------------------------------------------
if __name__ == "__main__":
    key = jax.random.PRNGKey(0)
    kx, km, ka, kp = jax.random.split(key, 4)

    B, H, W = 2, 64, 64                      # H, W must be divisible by 64
    x = jax.random.normal(kx, (B, H, W), dtype=jnp.float32)
    feat_motion = jax.random.normal(km, (B, 2048), dtype=jnp.float32)
    feat_appear = jax.random.normal(ka, (B, 512, 2, 4, 4), dtype=jnp.float32)

    params = init_params(kp)
    fwd = jax.jit(unet_forward)
    out, fm, fa = fwd(params, x, feat_motion, feat_appear)
    (out, fm, fa) = jax.block_until_ready((out, fm, fa))

    assert out.shape == (B, H, W)
    assert fm.shape == (B, NGF * 8, 1, 1)
    assert fa.shape == (B, NGF * 8)
    assert jnp.all(jnp.isfinite(out))
    assert jnp.all(jnp.isfinite(fm))
    assert jnp.all(jnp.isfinite(fa))
    print("KERNEL_OK")
</pallas_src>

<mosaic_0001>
module attributes {stable_mosaic.version = 11 : i64} {
  func.func @_matmul_kernel(%arg0: i32, %arg1: memref<256x16xbf16, #tpu.memory_space<vmem>>, %arg2: memref<16x16xbf16, #tpu.memory_space<vmem>>, %arg3: memref<1x16xf32, #tpu.memory_space<vmem>>, %arg4: memref<256x16xf32, #tpu.memory_space<vmem>>) attributes {dimension_semantics = [#tpu.dimension_semantics<parallel>], iteration_bounds = array<i64: 8>, scalar_prefetch = 0 : i64, scratch_operands = 0 : i64, tpu.core_type = #tpu.core_type<tc>, window_params = [{transform_indices = @transform_0, window_bounds = array<i64: 256, 16>}, {pipeline_mode = #tpu.pipeline_mode<synchronous>, transform_indices = @transform_1, window_bounds = array<i64: 16, 16>}, {pipeline_mode = #tpu.pipeline_mode<synchronous>, transform_indices = @transform_2, window_bounds = array<i64: 1, 16>}, {transform_indices = @transform_3, window_bounds = array<i64: 256, 16>}]} {
    %c0 = arith.constant 0 : index
    %c0_0 = arith.constant 0 : index
    %0 = vector.load %arg1[%c0, %c0_0] : memref<256x16xbf16, #tpu.memory_space<vmem>>, vector<256x16xbf16>
    %c0_1 = arith.constant 0 : index
    %c0_2 = arith.constant 0 : index
    %1 = vector.load %arg2[%c0_1, %c0_2] : memref<16x16xbf16, #tpu.memory_space<vmem>>, vector<16x16xbf16>
    %cst = arith.constant dense<0.000000e+00> : vector<256x16xf32>
    %2 = tpu.matmul %0, %1, %cst {dimension_numbers = #tpu.dot_dimension_numbers<[1], [0], [0], [1], [0, 0, 1, 1], [], []>} : vector<256x16xbf16>, vector<16x16xbf16>, vector<256x16xf32> -> vector<256x16xf32>
    %c0_3 = arith.constant 0 : index
    %c0_4 = arith.constant 0 : index
    %3 = vector.load %arg3[%c0_3, %c0_4] : memref<1x16xf32, #tpu.memory_space<vmem>>, vector<1x16xf32>
    %4 = vector.broadcast %3 : vector<1x16xf32> to vector<256x16xf32>
    %5 = arith.addf %2, %4 : vector<256x16xf32>
    %c0_5 = arith.constant 0 : index
    %c0_6 = arith.constant 0 : index
    %6 = vector.load %arg4[%c0_5, %c0_6] : memref<256x16xf32, #tpu.memory_space<vmem>>, vector<256x16xf32>
    tpu.vector_store %arg4[%c0_5, %c0_6], %5 {strides = array<i32>} : memref<256x16xf32, #tpu.memory_space<vmem>>, vector<256x16xf32>,
    return
  }
  func.func @transform_0(%arg0: i32) -> (i32, i32) {
    %c0_i32 = arith.constant 0 : i32
    %c0_i32_0 = arith.constant 0 : i32
    return %arg0, %c0_i32 : i32, i32
  }
  func.func @transform_1(%arg0: i32) -> (i32, i32) {
    %c0_i32 = arith.constant 0 : i32
    %c0_i32_0 = arith.constant 0 : i32
    %c0_i32_1 = arith.constant 0 : i32
    return %c0_i32, %c0_i32_0 : i32, i32
  }
  func.func @transform_2(%arg0: i32) -> (i32, i32) {
    %c0_i32 = arith.constant 0 : i32
    %c0_i32_0 = arith.constant 0 : i32
    %c0_i32_1 = arith.constant 0 : i32
    return %c0_i32, %c0_i32_0 : i32, i32
  }
  func.func @transform_3(%arg0: i32) -> (i32, i32) {
    %c0_i32 = arith.constant 0 : i32
    %c0_i32_0 = arith.constant 0 : i32
    return %arg0, %c0_i32 : i32, i32
  }
}

module attributes {stable_mosaic.version = 11 : i64} {
  func.func @_matmul_kernel(%arg0: i32, %arg1: memref<256x256xbf16, #tpu.memory_space<vmem>>, %arg2: memref<256x32xbf16, #tpu.memory_space<vmem>>, %arg3: memref<1x32xf32, #tpu.memory_space<vmem>>, %arg4: memref<256x32xf32, #tpu.memory_space<vmem>>) attributes {dimension_semantics = [#tpu.dimension_semantics<parallel>], iteration_bounds = array<i64: 2>, scalar_prefetch = 0 : i64, scratch_operands = 0 : i64, tpu.core_type = #tpu.core_type<tc>, window_params = [{transform_indices = @transform_0, window_bounds = array<i64: 256, 256>}, {pipeline_mode = #tpu.pipeline_mode<synchronous>, transform_indices = @transform_1, window_bounds = array<i64: 256, 32>}, {pipeline_mode = #tpu.pipeline_mode<synchronous>, transform_indices = @transform_2, window_bounds = array<i64: 1, 32>}, {transform_indices = @transform_3, window_bounds = array<i64: 256, 32>}]} {
    %c0 = arith.constant 0 : index
    %c0_0 = arith.constant 0 : index
    %0 = vector.load %arg1[%c0, %c0_0] : memref<256x256xbf16, #tpu.memory_space<vmem>>, vector<256x256xbf16>
    %c0_1 = arith.constant 0 : index
    %c0_2 = arith.constant 0 : index
    %1 = vector.load %arg2[%c0_1, %c0_2] : memref<256x32xbf16, #tpu.memory_space<vmem>>, vector<256x32xbf16>
    %cst = arith.constant dense<0.000000e+00> : vector<256x32xf32>
    %2 = tpu.matmul %0, %1, %cst {dimension_numbers = #tpu.dot_dimension_numbers<[1], [0], [0], [1], [0, 0, 1, 1], [], []>} : vector<256x256xbf16>, vector<256x32xbf16>, vector<256x32xf32> -> vector<256x32xf32>
    %c0_3 = arith.constant 0 : index
    %c0_4 = arith.constant 0 : index
    %3 = vector.load %arg3[%c0_3, %c0_4] : memref<1x32xf32, #tpu.memory_space<vmem>>, vector<1x32xf32>
    %4 = vector.broadcast %3 : vector<1x32xf32> to vector<256x32xf32>
    %5 = arith.addf %2, %4 : vector<256x32xf32>
    %c0_5 = arith.constant 0 : index
    %c0_6 = arith.constant 0 : index
    %6 = vector.load %arg4[%c0_5, %c0_6] : memref<256x32xf32, #tpu.memory_space<vmem>>, vector<256x32xf32>
    tpu.vector_store %arg4[%c0_5, %c0_6], %5 {strides = array<i32>} : memref<256x32xf32, #tpu.memory_space<vmem>>, vector<256x32xf32>,
    return
  }
  func.func @transform_0(%arg0: i32) -> (i32, i32) {
    %c0_i32 = arith.constant 0 : i32
    %c0_i32_0 = arith.constant 0 : i32
    return %arg0, %c0_i32 : i32, i32
  }
  func.func @transform_1(%arg0: i32) -> (i32, i32) {
    %c0_i32 = arith.constant 0 : i32
    %c0_i32_0 = arith.constant 0 : i32
    %c0_i32_1 = arith.constant 0 : i32
    return %c0_i32, %c0_i32_0 : i32, i32
  }
  func.func @transform_2(%arg0: i32) -> (i32, i32) {
    %c0_i32 = arith.constant 0 : i32
    %c0_i32_0 = arith.constant 0 : i32
    %c0_i32_1 = arith.constant 0 : i32
    return %c0_i32, %c0_i32_0 : i32, i32
  }
  func.func @transform_3(%arg0: i32) -> (i32, i32) {
    %c0_i32 = arith.constant 0 : i32
    %c0_i32_0 = arith.constant 0 : i32
    return %arg0, %c0_i32 : i32, i32
  }
}

module attributes {stable_mosaic.version = 11 : i64} {
  func.func @_matmul_kernel(%arg0: i32, %arg1: memref<128x512xbf16, #tpu.memory_space<vmem>>, %arg2: memref<512x64xbf16, #tpu.memory_space<vmem>>, %arg3: memref<1x64xf32, #tpu.memory_space<vmem>>, %arg4: memref<128x64xf32, #tpu.memory_space<vmem>>) attributes {dimension_semantics = [#tpu.dimension_semantics<parallel>], iteration_bounds = array<i64: 1>, scalar_prefetch = 0 : i64, scratch_operands = 0 : i64, tpu.core_type = #tpu.core_type<tc>, window_params = [{transform_indices = @transform_0, window_bounds = array<i64: 128, 512>}, {pipeline_mode = #tpu.pipeline_mode<synchronous>, transform_indices = @transform_1, window_bounds = array<i64: 512, 64>}, {pipeline_mode = #tpu.pipeline_mode<synchronous>, transform_indices = @transform_2, window_bounds = array<i64: 1, 64>}, {transform_indices = @transform_3, window_bounds = array<i64: 128, 64>}]} {
    %c0 = arith.constant 0 : index
    %c0_0 = arith.constant 0 : index
    %0 = vector.load %arg1[%c0, %c0_0] : memref<128x512xbf16, #tpu.memory_space<vmem>>, vector<128x512xbf16>
    %c0_1 = arith.constant 0 : index
    %c0_2 = arith.constant 0 : index
    %1 = vector.load %arg2[%c0_1, %c0_2] : memref<512x64xbf16, #tpu.memory_space<vmem>>, vector<512x64xbf16>
    %cst = arith.constant dense<0.000000e+00> : vector<128x64xf32>
    %2 = tpu.matmul %0, %1, %cst {dimension_numbers = #tpu.dot_dimension_numbers<[1], [0], [0], [1], [0, 0, 1, 1], [], []>} : vector<128x512xbf16>, vector<512x64xbf16>, vector<128x64xf32> -> vector<128x64xf32>
    %c0_3 = arith.constant 0 : index
    %c0_4 = arith.constant 0 : index
    %3 = vector.load %arg3[%c0_3, %c0_4] : memref<1x64xf32, #tpu.memory_space<vmem>>, vector<1x64xf32>
    %4 = vector.broadcast %3 : vector<1x64xf32> to vector<128x64xf32>
    %5 = arith.addf %2, %4 : vector<128x64xf32>
    %c0_5 = arith.constant 0 : index
    %c0_6 = arith.constant 0 : index
    %6 = vector.load %arg4[%c0_5, %c0_6] : memref<128x64xf32, #tpu.memory_space<vmem>>, vector<128x64xf32>
    tpu.vector_store %arg4[%c0_5, %c0_6], %5 {strides = array<i32>} : memref<128x64xf32, #tpu.memory_space<vmem>>, vector<128x64xf32>,
    return
  }
  func.func @transform_0(%arg0: i32) -> (i32, i32) {
    %c0_i32 = arith.constant 0 : i32
    %c0_i32_0 = arith.constant 0 : i32
    return %arg0, %c0_i32 : i32, i32
  }
  func.func @transform_1(%arg0: i32) -> (i32, i32) {
    %c0_i32 = arith.constant 0 : i32
    %c0_i32_0 = arith.constant 0 : i32
    %c0_i32_1 = arith.constant 0 : i32
    return %c0_i32, %c0_i32_0 : i32, i32
  }
  func.func @transform_2(%arg0: i32) -> (i32, i32) {
    %c0_i32 = arith.constant 0 : i32
    %c0_i32_0 = arith.constant 0 : i32
    %c0_i32_1 = arith.constant 0 : i32
    return %c0_i32, %c0_i32_0 : i32, i32
  }
  func.func @transform_3(%arg0: i32) -> (i32, i32) {
    %c0_i32 = arith.constant 0 : i32
    %c0_i32_0 = arith.constant 0 : i32
    return %arg0, %c0_i32 : i32, i32
  }
}

module attributes {stable_mosaic.version = 11 : i64} {
  func.func @_matmul_kernel(%arg0: i32, %arg1: memref<32x1024xbf16, #tpu.memory_space<vmem>>, %arg2: memref<1024x128xbf16, #tpu.memory_space<vmem>>, %arg3: memref<1x128xf32, #tpu.memory_space<vmem>>, %arg4: memref<32x128xf32, #tpu.memory_space<vmem>>) attributes {dimension_semantics = [#tpu.dimension_semantics<parallel>], iteration_bounds = array<i64: 1>, scalar_prefetch = 0 : i64, scratch_operands = 0 : i64, tpu.core_type = #tpu.core_type<tc>, window_params = [{transform_indices = @transform_0, window_bounds = array<i64: 32, 1024>}, {pipeline_mode = #tpu.pipeline_mode<synchronous>, transform_indices = @transform_1, window_bounds = array<i64: 1024, 128>}, {pipeline_mode = #tpu.pipeline_mode<synchronous>, transform_indices = @transform_2, window_bounds = array<i64: 1, 128>}, {transform_indices = @transform_3, window_bounds = array<i64: 32, 128>}]} {
    %c0 = arith.constant 0 : index
    %c0_0 = arith.constant 0 : index
    %0 = vector.load %arg1[%c0, %c0_0] : memref<32x1024xbf16, #tpu.memory_space<vmem>>, vector<32x1024xbf16>
    %c0_1 = arith.constant 0 : index
    %c0_2 = arith.constant 0 : index
    %1 = vector.load %arg2[%c0_1, %c0_2] : memref<1024x128xbf16, #tpu.memory_space<vmem>>, vector<1024x128xbf16>
    %cst = arith.constant dense<0.000000e+00> : vector<32x128xf32>
    %2 = tpu.matmul %0, %1, %cst {dimension_numbers = #tpu.dot_dimension_numbers<[1], [0], [0], [1], [0, 0, 1, 1], [], []>} : vector<32x1024xbf16>, vector<1024x128xbf16>, vector<32x128xf32> -> vector<32x128xf32>
    %c0_3 = arith.constant 0 : index
    %c0_4 = arith.constant 0 : index
    %3 = vector.load %arg3[%c0_3, %c0_4] : memref<1x128xf32, #tpu.memory_space<vmem>>, vector<1x128xf32>
    %4 = vector.broadcast %3 : vector<1x128xf32> to vector<32x128xf32>
    %5 = arith.addf %2, %4 : vector<32x128xf32>
    %c0_5 = arith.constant 0 : index
    %c0_6 = arith.constant 0 : index
    %6 = vector.load %arg4[%c0_5, %c0_6] : memref<32x128xf32, #tpu.memory_space<vmem>>, vector<32x128xf32>
    tpu.vector_store %arg4[%c0_5, %c0_6], %5 {strides = array<i32>} : memref<32x128xf32, #tpu.memory_space<vmem>>, vector<32x128xf32>,
    return
  }
  func.func @transform_0(%arg0: i32) -> (i32, i32) {
    %c0_i32 = arith.constant 0 : i32
    %c0_i32_0 = arith.constant 0 : i32
    return %arg0, %c0_i32 : i32, i32
  }
  func.func @transform_1(%arg0: i32) -> (i32, i32) {
    %c0_i32 = arith.constant 0 : i32
    %c0_i32_0 = arith.constant 0 : i32
    %c0_i32_1 = arith.constant 0 : i32
    return %c0_i32, %c0_i32_0 : i32, i32
  }
  func.func @transform_2(%arg0: i32) -> (i32, i32) {
    %c0_i32 = arith.constant 0 : i32
    %c0_i32_0 = arith.constant 0 : i32
    %c0_i32_1 = arith.constant 0 : i32
    return %c0_i32, %c0_i32_0 : i32, i32
  }
  func.func @transform_3(%arg0: i32) -> (i32, i32) {
    %c0_i32 = arith.constant 0 : i32
    %c0_i32_0 = arith.constant 0 : i32
    return %arg0, %c0_i32 : i32, i32
  }
}

module attributes {stable_mosaic.version = 11 : i64} {
  func.func @_matmul_kernel(%arg0: i32, %arg1: memref<64x512xbf16, #tpu.memory_space<vmem>>, %arg2: memref<512x128xbf16, #tpu.memory_space<vmem>>, %arg3: memref<1x128xf32, #tpu.memory_space<vmem>>, %arg4: memref<64x128xf32, #tpu.memory_space<vmem>>) attributes {dimension_semantics = [#tpu.dimension_semantics<parallel>], iteration_bounds = array<i64: 1>, scalar_prefetch = 0 : i64, scratch_operands = 0 : i64, tpu.core_type = #tpu.core_type<tc>, window_params = [{transform_indices = @transform_0, window_bounds = array<i64: 64, 512>}, {pipeline_mode = #tpu.pipeline_mode<synchronous>, transform_indices = @transform_1, window_bounds = array<i64: 512, 128>}, {pipeline_mode = #tpu.pipeline_mode<synchronous>, transform_indices = @transform_2, window_bounds = array<i64: 1, 128>}, {transform_indices = @transform_3, window_bounds = array<i64: 64, 128>}]} {
    %c0 = arith.constant 0 : index
    %c0_0 = arith.constant 0 : index
    %0 = vector.load %arg1[%c0, %c0_0] : memref<64x512xbf16, #tpu.memory_space<vmem>>, vector<64x512xbf16>
    %c0_1 = arith.constant 0 : index
    %c0_2 = arith.constant 0 : index
    %1 = vector.load %arg2[%c0_1, %c0_2] : memref<512x128xbf16, #tpu.memory_space<vmem>>, vector<512x128xbf16>
    %cst = arith.constant dense<0.000000e+00> : vector<64x128xf32>
    %2 = tpu.matmul %0, %1, %cst {dimension_numbers = #tpu.dot_dimension_numbers<[1], [0], [0], [1], [0, 0, 1, 1], [], []>} : vector<64x512xbf16>, vector<512x128xbf16>, vector<64x128xf32> -> vector<64x128xf32>
    %c0_3 = arith.constant 0 : index
    %c0_4 = arith.constant 0 : index
    %3 = vector.load %arg3[%c0_3, %c0_4] : memref<1x128xf32, #tpu.memory_space<vmem>>, vector<1x128xf32>
    %4 = vector.broadcast %3 : vector<1x128xf32> to vector<64x128xf32>
    %5 = arith.addf %2, %4 : vector<64x128xf32>
    %c0_5 = arith.constant 0 : index
    %c0_6 = arith.constant 0 : index
    %6 = vector.load %arg4[%c0_5, %c0_6] : memref<64x128xf32, #tpu.memory_space<vmem>>, vector<64x128xf32>
    tpu.vector_store %arg4[%c0_5, %c0_6], %5 {strides = array<i32>} : memref<64x128xf32, #tpu.memory_space<vmem>>, vector<64x128xf32>,
    return
  }
  func.func @transform_0(%arg0: i32) -> (i32, i32) {
    %c0_i32 = arith.constant 0 : i32
    %c0_i32_0 = arith.constant 0 : i32
    return %arg0, %c0_i32 : i32, i32
  }
  func.func @transform_1(%arg0: i32) -> (i32, i32) {
    %c0_i32 = arith.constant 0 : i32
    %c0_i32_0 = arith.constant 0 : i32
    %c0_i32_1 = arith.constant 0 : i32
    return %c0_i32, %c0_i32_0 : i32, i32
  }
  func.func @transform_2(%arg0: i32) -> (i32, i32) {
    %c0_i32 = arith.constant 0 : i32
    %c0_i32_0 = arith.constant 0 : i32
    %c0_i32_1 = arith.constant 0 : i32
    return %c0_i32, %c0_i32_0 : i32, i32
  }
  func.func @transform_3(%arg0: i32) -> (i32, i32) {
    %c0_i32 = arith.constant 0 : i32
    %c0_i32_0 = arith.constant 0 : i32
    return %arg0, %c0_i32 : i32, i32
  }
}

module attributes {stable_mosaic.version = 11 : i64} {
  func.func @_matmul_kernel(%arg0: i32, %arg1: memref<32x2304xbf16, #tpu.memory_space<vmem>>, %arg2: memref<2304x128xbf16, #tpu.memory_space<vmem>>, %arg3: memref<1x128xf32, #tpu.memory_space<vmem>>, %arg4: memref<32x128xf32, #tpu.memory_space<vmem>>) attributes {dimension_semantics = [#tpu.dimension_semantics<parallel>], iteration_bounds = array<i64: 1>, scalar_prefetch = 0 : i64, scratch_operands = 0 : i64, tpu.core_type = #tpu.core_type<tc>, window_params = [{transform_indices = @transform_0, window_bounds = array<i64: 32, 2304>}, {pipeline_mode = #tpu.pipeline_mode<synchronous>, transform_indices = @transform_1, window_bounds = array<i64: 2304, 128>}, {pipeline_mode = #tpu.pipeline_mode<synchronous>, transform_indices = @transform_2, window_bounds = array<i64: 1, 128>}, {transform_indices = @transform_3, window_bounds = array<i64: 32, 128>}]} {
    %c0 = arith.constant 0 : index
    %c0_0 = arith.constant 0 : index
    %0 = vector.load %arg1[%c0, %c0_0] : memref<32x2304xbf16, #tpu.memory_space<vmem>>, vector<32x2304xbf16>
    %c0_1 = arith.constant 0 : index
    %c0_2 = arith.constant 0 : index
    %1 = vector.load %arg2[%c0_1, %c0_2] : memref<2304x128xbf16, #tpu.memory_space<vmem>>, vector<2304x128xbf16>
    %cst = arith.constant dense<0.000000e+00> : vector<32x128xf32>
    %2 = tpu.matmul %0, %1, %cst {dimension_numbers = #tpu.dot_dimension_numbers<[1], [0], [0], [1], [0, 0, 1, 1], [], []>} : vector<32x2304xbf16>, vector<2304x128xbf16>, vector<32x128xf32> -> vector<32x128xf32>
    %c0_3 = arith.constant 0 : index
    %c0_4 = arith.constant 0 : index
    %3 = vector.load %arg3[%c0_3, %c0_4] : memref<1x128xf32, #tpu.memory_space<vmem>>, vector<1x128xf32>
    %4 = vector.broadcast %3 : vector<1x128xf32> to vector<32x128xf32>
    %5 = arith.addf %2, %4 : vector<32x128xf32>
    %c0_5 = arith.constant 0 : index
    %c0_6 = arith.constant 0 : index
    %6 = vector.load %arg4[%c0_5, %c0_6] : memref<32x128xf32, #tpu.memory_space<vmem>>, vector<32x128xf32>
    tpu.vector_store %arg4[%c0_5, %c0_6], %5 {strides = array<i32>} : memref<32x128xf32, #tpu.memory_space<vmem>>, vector<32x128xf32>,
    return
  }
  func.func @transform_0(%arg0: i32) -> (i32, i32) {
    %c0_i32 = arith.constant 0 : i32
    %c0_i32_0 = arith.constant 0 : i32
    return %arg0, %c0_i32 : i32, i32
  }
  func.func @transform_1(%arg0: i32) -> (i32, i32) {
    %c0_i32 = arith.constant 0 : i32
    %c0_i32_0 = arith.constant 0 : i32
    %c0_i32_1 = arith.constant 0 : i32
    return %c0_i32, %c0_i32_0 : i32, i32
  }
  func.func @transform_2(%arg0: i32) -> (i32, i32) {
    %c0_i32 = arith.constant 0 : i32
    %c0_i32_0 = arith.constant 0 : i32
    %c0_i32_1 = arith.constant 0 : i32
    return %c0_i32, %c0_i32_0 : i32, i32
  }
  func.func @transform_3(%arg0: i32) -> (i32, i32) {
    %c0_i32 = arith.constant 0 : i32
    %c0_i32_0 = arith.constant 0 : i32
    return %arg0, %c0_i32 : i32, i32
  }
}

module attributes {stable_mosaic.version = 11 : i64} {
  func.func @_matmul_kernel(%arg0: i32, %arg1: memref<128x2304xbf16, #tpu.memory_space<vmem>>, %arg2: memref<2304x64xbf16, #tpu.memory_space<vmem>>, %arg3: memref<1x64xf32, #tpu.memory_space<vmem>>, %arg4: memref<128x64xf32, #tpu.memory_space<vmem>>) attributes {dimension_semantics = [#tpu.dimension_semantics<parallel>], iteration_bounds = array<i64: 1>, scalar_prefetch = 0 : i64, scratch_operands = 0 : i64, tpu.core_type = #tpu.core_type<tc>, window_params = [{transform_indices = @transform_0, window_bounds = array<i64: 128, 2304>}, {pipeline_mode = #tpu.pipeline_mode<synchronous>, transform_indices = @transform_1, window_bounds = array<i64: 2304, 64>}, {pipeline_mode = #tpu.pipeline_mode<synchronous>, transform_indices = @transform_2, window_bounds = array<i64: 1, 64>}, {transform_indices = @transform_3, window_bounds = array<i64: 128, 64>}]} {
    %c0 = arith.constant 0 : index
    %c0_0 = arith.constant 0 : index
    %0 = vector.load %arg1[%c0, %c0_0] : memref<128x2304xbf16, #tpu.memory_space<vmem>>, vector<128x2304xbf16>
    %c0_1 = arith.constant 0 : index
    %c0_2 = arith.constant 0 : index
    %1 = vector.load %arg2[%c0_1, %c0_2] : memref<2304x64xbf16, #tpu.memory_space<vmem>>, vector<2304x64xbf16>
    %cst = arith.constant dense<0.000000e+00> : vector<128x64xf32>
    %2 = tpu.matmul %0, %1, %cst {dimension_numbers = #tpu.dot_dimension_numbers<[1], [0], [0], [1], [0, 0, 1, 1], [], []>} : vector<128x2304xbf16>, vector<2304x64xbf16>, vector<128x64xf32> -> vector<128x64xf32>
    %c0_3 = arith.constant 0 : index
    %c0_4 = arith.constant 0 : index
    %3 = vector.load %arg3[%c0_3, %c0_4] : memref<1x64xf32, #tpu.memory_space<vmem>>, vector<1x64xf32>
    %4 = vector.broadcast %3 : vector<1x64xf32> to vector<128x64xf32>
    %5 = arith.addf %2, %4 : vector<128x64xf32>
    %c0_5 = arith.constant 0 : index
    %c0_6 = arith.constant 0 : index
    %6 = vector.load %arg4[%c0_5, %c0_6] : memref<128x64xf32, #tpu.memory_space<vmem>>, vector<128x64xf32>
    tpu.vector_store %arg4[%c0_5, %c0_6], %5 {strides = array<i32>} : memref<128x64xf32, #tpu.memory_space<vmem>>, vector<128x64xf32>,
    return
  }
  func.func @transform_0(%arg0: i32) -> (i32, i32) {
    %c0_i32 = arith.constant 0 : i32
    %c0_i32_0 = arith.constant 0 : i32
    return %arg0, %c0_i32 : i32, i32
  }
  func.func @transform_1(%arg0: i32) -> (i32, i32) {
    %c0_i32 = arith.constant 0 : i32
    %c0_i32_0 = arith.constant 0 : i32
    %c0_i32_1 = arith.constant 0 : i32
    return %c0_i32, %c0_i32_0 : i32, i32
  }
  func.func @transform_2(%arg0: i32) -> (i32, i32) {
    %c0_i32 = arith.constant 0 : i32
    %c0_i32_0 = arith.constant 0 : i32
    %c0_i32_1 = arith.constant 0 : i32
    return %c0_i32, %c0_i32_0 : i32, i32
  }
  func.func @transform_3(%arg0: i32) -> (i32, i32) {
    %c0_i32 = arith.constant 0 : i32
    %c0_i32_0 = arith.constant 0 : i32
    return %arg0, %c0_i32 : i32, i32
  }
}

module attributes {stable_mosaic.version = 11 : i64} {
  func.func @_matmul_kernel(%arg0: i32, %arg1: memref<256x1152xbf16, #tpu.memory_space<vmem>>, %arg2: memref<1152x32xbf16, #tpu.memory_space<vmem>>, %arg3: memref<1x32xf32, #tpu.memory_space<vmem>>, %arg4: memref<256x32xf32, #tpu.memory_space<vmem>>) attributes {dimension_semantics = [#tpu.dimension_semantics<parallel>], iteration_bounds = array<i64: 2>, scalar_prefetch = 0 : i64, scratch_operands = 0 : i64, tpu.core_type = #tpu.core_type<tc>, window_params = [{transform_indices = @transform_0, window_bounds = array<i64: 256, 1152>}, {pipeline_mode = #tpu.pipeline_mode<synchronous>, transform_indices = @transform_1, window_bounds = array<i64: 1152, 32>}, {pipeline_mode = #tpu.pipeline_mode<synchronous>, transform_indices = @transform_2, window_bounds = array<i64: 1, 32>}, {transform_indices = @transform_3, window_bounds = array<i64: 256, 32>}]} {
    %c0 = arith.constant 0 : index
    %c0_0 = arith.constant 0 : index
    %0 = vector.load %arg1[%c0, %c0_0] : memref<256x1152xbf16, #tpu.memory_space<vmem>>, vector<256x1152xbf16>
    %c0_1 = arith.constant 0 : index
    %c0_2 = arith.constant 0 : index
    %1 = vector.load %arg2[%c0_1, %c0_2] : memref<1152x32xbf16, #tpu.memory_space<vmem>>, vector<1152x32xbf16>
    %cst = arith.constant dense<0.000000e+00> : vector<256x32xf32>
    %2 = tpu.matmul %0, %1, %cst {dimension_numbers = #tpu.dot_dimension_numbers<[1], [0], [0], [1], [0, 0, 1, 1], [], []>} : vector<256x1152xbf16>, vector<1152x32xbf16>, vector<256x32xf32> -> vector<256x32xf32>
    %c0_3 = arith.constant 0 : index
    %c0_4 = arith.constant 0 : index
    %3 = vector.load %arg3[%c0_3, %c0_4] : memref<1x32xf32, #tpu.memory_space<vmem>>, vector<1x32xf32>
    %4 = vector.broadcast %3 : vector<1x32xf32> to vector<256x32xf32>
    %5 = arith.addf %2, %4 : vector<256x32xf32>
    %c0_5 = arith.constant 0 : index
    %c0_6 = arith.constant 0 : index
    %6 = vector.load %arg4[%c0_5, %c0_6] : memref<256x32xf32, #tpu.memory_space<vmem>>, vector<256x32xf32>
    tpu.vector_store %arg4[%c0_5, %c0_6], %5 {strides = array<i32>} : memref<256x32xf32, #tpu.memory_space<vmem>>, vector<256x32xf32>,
    return
  }
  func.func @transform_0(%arg0: i32) -> (i32, i32) {
    %c0_i32 = arith.constant 0 : i32
    %c0_i32_0 = arith.constant 0 : i32
    return %arg0, %c0_i32 : i32, i32
  }
  func.func @transform_1(%arg0: i32) -> (i32, i32) {
    %c0_i32 = arith.constant 0 : i32
    %c0_i32_0 = arith.constant 0 : i32
    %c0_i32_1 = arith.constant 0 : i32
    return %c0_i32, %c0_i32_0 : i32, i32
  }
  func.func @transform_2(%arg0: i32) -> (i32, i32) {
    %c0_i32 = arith.constant 0 : i32
    %c0_i32_0 = arith.constant 0 : i32
    %c0_i32_1 = arith.constant 0 : i32
    return %c0_i32, %c0_i32_0 : i32, i32
  }
  func.func @transform_3(%arg0: i32) -> (i32, i32) {
    %c0_i32 = arith.constant 0 : i32
    %c0_i32_0 = arith.constant 0 : i32
    return %arg0, %c0_i32 : i32, i32
  }
}

module attributes {stable_mosaic.version = 11 : i64} {
  func.func @_matmul_kernel(%arg0: i32, %arg1: memref<256x576xbf16, #tpu.memory_space<vmem>>, %arg2: memref<576x16xbf16, #tpu.memory_space<vmem>>, %arg3: memref<1x16xf32, #tpu.memory_space<vmem>>, %arg4: memref<256x16xf32, #tpu.memory_space<vmem>>) attributes {dimension_semantics = [#tpu.dimension_semantics<parallel>], iteration_bounds = array<i64: 8>, scalar_prefetch = 0 : i64, scratch_operands = 0 : i64, tpu.core_type = #tpu.core_type<tc>, window_params = [{transform_indices = @transform_0, window_bounds = array<i64: 256, 576>}, {pipeline_mode = #tpu.pipeline_mode<synchronous>, transform_indices = @transform_1, window_bounds = array<i64: 576, 16>}, {pipeline_mode = #tpu.pipeline_mode<synchronous>, transform_indices = @transform_2, window_bounds = array<i64: 1, 16>}, {transform_indices = @transform_3, window_bounds = array<i64: 256, 16>}]} {
    %c0 = arith.constant 0 : index
    %c0_0 = arith.constant 0 : index
    %0 = vector.load %arg1[%c0, %c0_0] : memref<256x576xbf16, #tpu.memory_space<vmem>>, vector<256x576xbf16>
    %c0_1 = arith.constant 0 : index
    %c0_2 = arith.constant 0 : index
    %1 = vector.load %arg2[%c0_1, %c0_2] : memref<576x16xbf16, #tpu.memory_space<vmem>>, vector<576x16xbf16>
    %cst = arith.constant dense<0.000000e+00> : vector<256x16xf32>
    %2 = tpu.matmul %0, %1, %cst {dimension_numbers = #tpu.dot_dimension_numbers<[1], [0], [0], [1], [0, 0, 1, 1], [], []>} : vector<256x576xbf16>, vector<576x16xbf16>, vector<256x16xf32> -> vector<256x16xf32>
    %c0_3 = arith.constant 0 : index
    %c0_4 = arith.constant 0 : index
    %3 = vector.load %arg3[%c0_3, %c0_4] : memref<1x16xf32, #tpu.memory_space<vmem>>, vector<1x16xf32>
    %4 = vector.broadcast %3 : vector<1x16xf32> to vector<256x16xf32>
    %5 = arith.addf %2, %4 : vector<256x16xf32>
    %c0_5 = arith.constant 0 : index
    %c0_6 = arith.constant 0 : index
    %6 = vector.load %arg4[%c0_5, %c0_6] : memref<256x16xf32, #tpu.memory_space<vmem>>, vector<256x16xf32>
    tpu.vector_store %arg4[%c0_5, %c0_6], %5 {strides = array<i32>} : memref<256x16xf32, #tpu.memory_space<vmem>>, vector<256x16xf32>,
    return
  }
  func.func @transform_0(%arg0: i32) -> (i32, i32) {
    %c0_i32 = arith.constant 0 : i32
    %c0_i32_0 = arith.constant 0 : i32
    return %arg0, %c0_i32 : i32, i32
  }
  func.func @transform_1(%arg0: i32) -> (i32, i32) {
    %c0_i32 = arith.constant 0 : i32
    %c0_i32_0 = arith.constant 0 : i32
    %c0_i32_1 = arith.constant 0 : i32
    return %c0_i32, %c0_i32_0 : i32, i32
  }
  func.func @transform_2(%arg0: i32) -> (i32, i32) {
    %c0_i32 = arith.constant 0 : i32
    %c0_i32_0 = arith.constant 0 : i32
    %c0_i32_1 = arith.constant 0 : i32
    return %c0_i32, %c0_i32_0 : i32, i32
  }
  func.func @transform_3(%arg0: i32) -> (i32, i32) {
    %c0_i32 = arith.constant 0 : i32
    %c0_i32_0 = arith.constant 0 : i32
    return %arg0, %c0_i32 : i32, i32
  }
}

module attributes {stable_mosaic.version = 11 : i64} {
  func.func @_cout1_kernel(%arg0: i32, %arg1: memref<8x288xbf16, #tpu.memory_space<vmem>>, %arg2: memref<288x512xbf16, #tpu.memory_space<vmem>>, %arg3: memref<1x1xf32, #tpu.memory_space<vmem>>, %arg4: memref<8x512xf32, #tpu.memory_space<vmem>>) attributes {dimension_semantics = [#tpu.dimension_semantics<parallel>], iteration_bounds = array<i64: 16>, scalar_prefetch = 0 : i64, scratch_operands = 0 : i64, tpu.core_type = #tpu.core_type<tc>, window_params = [{pipeline_mode = #tpu.pipeline_mode<synchronous>, transform_indices = @transform_0, window_bounds = array<i64: 8, 288>}, {transform_indices = @transform_1, window_bounds = array<i64: 288, 512>}, {pipeline_mode = #tpu.pipeline_mode<synchronous>, transform_indices = @transform_2, window_bounds = array<i64: 1, 1>}, {transform_indices = @transform_3, window_bounds = array<i64: 8, 512>}]} {
    %c0 = arith.constant 0 : index
    %c0_0 = arith.constant 0 : index
    %0 = vector.load %arg1[%c0, %c0_0] : memref<8x288xbf16, #tpu.memory_space<vmem>>, vector<8x288xbf16>
    %c0_1 = arith.constant 0 : index
    %c0_2 = arith.constant 0 : index
    %1 = vector.load %arg2[%c0_1, %c0_2] : memref<288x512xbf16, #tpu.memory_space<vmem>>, vector<288x512xbf16>
    %cst = arith.constant dense<0.000000e+00> : vector<8x512xf32>
    %2 = tpu.matmul %0, %1, %cst {dimension_numbers = #tpu.dot_dimension_numbers<[1], [0], [0], [1], [0, 0, 1, 1], [], []>} : vector<8x288xbf16>, vector<288x512xbf16>, vector<8x512xf32> -> vector<8x512xf32>
    %c0_3 = arith.constant 0 : index
    %c0_4 = arith.constant 0 : index
    %3 = vector.load %arg3[%c0_3, %c0_4] : memref<1x1xf32, #tpu.memory_space<vmem>>, vector<1x1xf32>
    %4 = vector.broadcast %3 : vector<1x1xf32> to vector<8x512xf32>
    %5 = arith.addf %2, %4 : vector<8x512xf32>
    %c0_5 = arith.constant 0 : index
    %c0_6 = arith.constant 0 : index
    %6 = vector.load %arg4[%c0_5, %c0_6] : memref<8x512xf32, #tpu.memory_space<vmem>>, vector<8x512xf32>
    tpu.vector_store %arg4[%c0_5, %c0_6], %5 {strides = array<i32>} : memref<8x512xf32, #tpu.memory_space<vmem>>, vector<8x512xf32>,
    return
  }
  func.func @transform_0(%arg0: i32) -> (i32, i32) {
    %c0_i32 = arith.constant 0 : i32
    %c0_i32_0 = arith.constant 0 : i32
    %c0_i32_1 = arith.constant 0 : i32
    return %c0_i32, %c0_i32_0 : i32, i32
  }
  func.func @transform_1(%arg0: i32) -> (i32, i32) {
    %c0_i32 = arith.constant 0 : i32
    %c0_i32_0 = arith.constant 0 : i32
    return %c0_i32, %arg0 : i32, i32
  }
  func.func @transform_2(%arg0: i32) -> (i32, i32) {
    %c0_i32 = arith.constant 0 : i32
    %c0_i32_0 = arith.constant 0 : i32
    %c0_i32_1 = arith.constant 0 : i32
    return %c0_i32, %c0_i32_0 : i32, i32
  }
  func.func @transform_3(%arg0: i32) -> (i32, i32) {
    %c0_i32 = arith.constant 0 : i32
    %c0_i32_0 = arith.constant 0 : i32
    return %c0_i32, %arg0 : i32, i32
  }
}

</mosaic_0001>

<llo_original>
// kernel: unet_forward.10
$region0: #{unet_forward.10}
  #allocation0 [shape = 'u32[]', space=smem, size = 0x4, offset = 0x4, fixed_abs, tag = 'smem constant byte address 0x4 - core index']
  #allocation1 [shape = 'u32[72,128]{1,0:T(1,128)}', space=vmem, size = 0x9000, scoped, tag = 'internal scratch']
  %s0 = inlined_call_operand.vmem [shape: bf16[2048,16], index: 0, kind: input, shape index: {}]
  %s1 = inlined_call_operand.vmem [shape: bf16[16,16], index: 1, kind: input, shape index: {}]
  %s2 = inlined_call_operand.vmem [shape: f32[1,16], index: 2, kind: input, shape index: {}]
  %s3 = inlined_call_operand.vmem [shape: f32[2048,16], index: 3, kind: output, shape index: {}]
  %s4 = sld [smem:[#allocation0]]
  $region45: #{unet_forward.10} parent=0
    _
  %s6 = ssub.s32 1, %s4
  %s7 = scalar_select 0, %s6, %s4
  loop: start=0, step=1, limit=10
  $region2: #{unet_forward.10} parent=0 // loop_pre_header
    _
  $region3: #{unet_forward.10} parent=0 // loop_header
    %s9 = sphi 0, %s13
    %p10 = scmp.ge.s32.totalorder %s9, 10
    %s19 = sphi 0, %s21
    %s22 = sphi 0, %s19
    %s23 = sphi 0, %s22
    %s39 = sphi 0, %s23
    %s43 = sphi 0, %s43
    %s45 = sphi 0, %s43
    %s46 = sphi 0, %s45
    %s60 = sphi 0, %s46
    %s64 = sphi 0, %s64
    %s66 = sphi 0, %s64
    %s67 = sphi 0, %s66
    %s81 = sphi 0, %s67
    %s87 = sphi 0, %s89
    %s90 = sphi 0, %s87
    %s91 = sphi 0, %s90
    %s107 = sphi 0, %s91
  $region4: #{unet_forward.10} parent=0 // loop_header_branch
    %12 = sbr.rel (%p10) target = $region8
  $region5: #{unet_forward.10} parent=0 // loop_body
    %s14 = ssub.s32 %s9, 1
    %s15 = ssub.s32 %s9, 2
    %s16 = sadd.s32 %s9, 1
    %s17 = ssub.s32 %s9, %s16
    %p18 = scmp.eq.s32.totalorder %s17, 0
    %s20 = sadd.s32 %s19, 1
    %s21 = scalar_select %p18, %s19, %s20
    %p24 = pneg %p18
    %p25 = scmp.eq.s32.totalorder %s9, 7
    %p26 = por %p24, %p25
    %p27 = scmp.ne.s32.totalorder %s19, %s22
    %p28 = scmp.eq.s32.totalorder %s9, 0
    %p29 = por %p27, %p28
    %p30 = scmp.ne.s32.totalorder %s19, %s22
    %p31 = scmp.eq.s32.totalorder %s14, 7
    %p32 = por %p30, %p31
    %p33 = scmp.ne.s32.totalorder %s22, %s23
    %p34 = scmp.eq.s32.totalorder %s14, 0
    %p35 = por %p33, %p34
    %p36 = scmp.ne.s32.totalorder %s22, %s23
    %p37 = scmp.eq.s32.totalorder %s15, 7
    %p38 = por %p36, %p37
    %p40 = scmp.ne.s32.totalorder %s23, %s39
    %p41 = scmp.eq.s32.totalorder %s15, 0
    %p42 = por %p40, %p41
    %s44 = sadd.s32 %s43, 1
    %p47 = scmp.eq.s32.totalorder %s9, 7
    %p48 = scmp.ne.s32.totalorder %s43, %s45
    %p49 = scmp.eq.s32.totalorder %s9, 0
    %p50 = por %p48, %p49
    %p51 = scmp.ne.s32.totalorder %s43, %s45
    %p52 = scmp.eq.s32.totalorder %s14, 7
    %p53 = por %p51, %p52
    %p54 = scmp.ne.s32.totalorder %s45, %s46
    %p55 = scmp.eq.s32.totalorder %s14, 0
    %p56 = por %p54, %p55
    %p57 = scmp.ne.s32.totalorder %s45, %s46
    %p58 = scmp.eq.s32.totalorder %s15, 7
    %p59 = por %p57, %p58
    %p61 = scmp.ne.s32.totalorder %s46, %s60
    %p62 = scmp.eq.s32.totalorder %s15, 0
    %p63 = por %p61, %p62
    %s65 = sadd.s32 %s64, 1
    %p68 = scmp.eq.s32.totalorder %s9, 7
    %p69 = scmp.ne.s32.totalorder %s64, %s66
    %p70 = scmp.eq.s32.totalorder %s9, 0
    %p71 = por %p69, %p70
    %p72 = scmp.ne.s32.totalorder %s64, %s66
    %p73 = scmp.eq.s32.totalorder %s14, 7
    %p74 = por %p72, %p73
    %p75 = scmp.ne.s32.totalorder %s66, %s67
    %p76 = scmp.eq.s32.totalorder %s14, 0
    %p77 = por %p75, %p76
    %p78 = scmp.ne.s32.totalorder %s66, %s67
    %p79 = scmp.eq.s32.totalorder %s15, 7
    %p80 = por %p78, %p79
    %p82 = scmp.ne.s32.totalorder %s67, %s81
    %p83 = scmp.eq.s32.totalorder %s15, 0
    %p84 = por %p82, %p83
    %s85 = ssub.s32 %s9, %s16
    %p86 = scmp.eq.s32.totalorder %s85, 0
    %s88 = sadd.s32 %s87, 1
    %s89 = scalar_select %p86, %s87, %s88
    %p92 = pneg %p86
    %p93 = scmp.eq.s32.totalorder %s9, 7
    %p94 = por %p92, %p93
    %p95 = scmp.ne.s32.totalorder %s87, %s90
    %p96 = scmp.eq.s32.totalorder %s9, 0
    %p97 = por %p95, %p96
    %p98 = scmp.ne.s32.totalorder %s87, %s90
    %p99 = scmp.eq.s32.totalorder %s14, 7
    %p100 = por %p98, %p99
    %p101 = scmp.ne.s32.totalorder %s90, %s91
    %p102 = scmp.eq.s32.totalorder %s14, 0
    %p103 = por %p101, %p102
    %p104 = scmp.ne.s32.totalorder %s90, %s91
    %p105 = scmp.eq.s32.totalorder %s15, 7
    %p106 = por %p104, %p105
    %p108 = scmp.ne.s32.totalorder %s91, %s107
    %p109 = scmp.eq.s32.totalorder %s15, 0
    %p110 = por %p108, %p109
    %p111 = scmp.le.s32.totalorder 1, %s9
    %p112 = scmp.lt.s32.totalorder %s9, 9
    %p113 = pnand %p111, %p112
    %p114 = pneg %p113
    // Predicated region
    $region9: #{unet_forward.10} parent=5 // pred_check
      _
    $region10: #{unet_forward.10} parent=5 // pred_check_branch
      %116 = sbr.rel (%p113) target = $region12
    $region11: #{unet_forward.10} parent=5 // pred_region
      %s117 = ssub.s32 %s9, 1
      // Predicated region
      $region13: #{unet_forward.10} parent=11 // pred_check
        %p118 = pneg %p56
      $region14: #{unet_forward.10} parent=11 // pred_check_branch
        %120 = sbr.rel (%p118) target = $region16
      $region15: #{unet_forward.10} parent=11 // pred_region
        _
      $region16: #{unet_forward.10} parent=11 // pred_fallthru
        _
      // Predicated region
      $region17: #{unet_forward.10} parent=11 // pred_check
        %p121 = pneg %p77
      $region18: #{unet_forward.10} parent=11 // pred_check_branch
        %123 = sbr.rel (%p121) target = $region20
      $region19: #{unet_forward.10} parent=11 // pred_region
        _
      $region20: #{unet_forward.10} parent=11 // pred_fallthru
        _
    $region12: #{unet_forward.10} parent=5 // pred_fallthru
      _
    %p124 = scmp.lt.s32.totalorder %s9, 8
    // Predicated region
    $region21: #{unet_forward.10} parent=5 // pred_check
      %p125 = pneg %p124
    $region22: #{unet_forward.10} parent=5 // pred_check_branch
      %127 = sbr.rel (%p125) target = $region24
    $region23: #{unet_forward.10} parent=5 // pred_region
      // Predicated region
      $region25: #{unet_forward.10} parent=23 // pred_check
        %p128 = pneg %p29
      $region26: #{unet_forward.10} parent=23 // pred_check_branch
        %130 = sbr.rel (%p128) target = $region28
      $region27: #{unet_forward.10} parent=23 // pred_region
        %s131 = smul.u32 32, %s9
        %p132 = scmp.lt.s32.totalorder %s131, 255
        %s133 = scalar_select %p132, %s131, 255
        %s134 = smul.addr %s133, 4
        %s135 = scalar_lea.vmem %s0, %s134
        %s136 = smul.u32 32, %s9
      $region28: #{unet_forward.10} parent=23 // pred_fallthru
        _
    $region24: #{unet_forward.10} parent=5 // pred_fallthru
      _
    %p137 = scmp.le.s32.totalorder 1, %s9
    %p138 = scmp.lt.s32.totalorder %s9, 9
    %p139 = pnand %p137, %p138
    %p140 = pneg %p139
    // Predicated region
    $region29: #{unet_forward.10} parent=5 // pred_check
      _
    $region30: #{unet_forward.10} parent=5 // pred_check_branch
      %142 = sbr.rel (%p139) target = $region32
    $region31: #{unet_forward.10} parent=5 // pred_region
      %s143 = ssub.s32 %s9, 1
      %s144 = smul.u32 32, %s14
      %p145 = scmp.lt.s32.totalorder %s144, 255
      %s146 = scalar_select %p145, %s144, 255
      %s147 = smul.addr %s146, 4
      %s148 = scalar_lea.vmem %s0, %s147
      %p149 = pneg %p35
      %p150 = pneg %p32
      %p151 = pneg %p56
      %p152 = pneg %p53
      %p153 = pneg %p77
      %p154 = pneg %p74
      %p155 = pneg %p103
      %p156 = pneg %p100
      %s157 = smul.u32 32, %s14
      %p158 = scmp.lt.s32.totalorder %s157, 255
      %s159 = scalar_select %p158, %s157, 255
      %s160 = smul.addr %s159, 8
      %s161 = scalar_lea.vmem %s3, %s160
      %s162 = smul.u32 32, %s14
      %p163 = scmp.lt.s32.totalorder %s162, 255
      %s164 = scalar_select %p163, %s162, 255
      %s165 = smul.addr %s164, 4
      %s166 = scalar_lea.vmem %s0, %s165
      %s167 = smul.u32 32, %s14
      %s168 = smul.u32 32, %s14
      %p169 = scmp.lt.s32.totalorder %s168, 255
      %s170 = scalar_select %p169, %s168, 255
      %s171 = smul.addr %s170, 8
      %s172 = scalar_lea.vmem %s3, %s171
      %s173 = smul.u32 32, %s14
      %v175 = vld [vmem:[%s166] sm:$0xf]
      %v176 = vld [vmem:[%s166 + $0x4] sm:$0xf]
      %v177 = vld [vmem:[%s166 + $0x8] sm:$0xf]
      %v178 = vld [vmem:[%s166 + $0xc] sm:$0xf]
      %v179 = vld [vmem:[%s166 + $0x10] sm:$0xf]
      %v180 = vld [vmem:[%s166 + $0x14] sm:$0xf]
      %v181 = vld [vmem:[%s166 + $0x18] sm:$0xf]
      %v182 = vld [vmem:[%s166 + $0x1c] sm:$0xf]
      %v183 = vld [vmem:[%s166 + $0x20] sm:$0xf]
      %v184 = vld [vmem:[%s166 + $0x24] sm:$0xf]
      %v185 = vld [vmem:[%s166 + $0x28] sm:$0xf]
      %v186 = vld [vmem:[%s166 + $0x2c] sm:$0xf]
      %v187 = vld [vmem:[%s166 + $0x30] sm:$0xf]
      %v188 = vld [vmem:[%s166 + $0x34] sm:$0xf]
      %v189 = vld [vmem:[%s166 + $0x38] sm:$0xf]
      %v190 = vld [vmem:[%s166 + $0x3c] sm:$0xf]
      %v191 = vld [vmem:[%s166 + $0x40] sm:$0xf]
      %v192 = vld [vmem:[%s166 + $0x44] sm:$0xf]
      %v193 = vld [vmem:[%s166 + $0x48] sm:$0xf]
      %v194 = vld [vmem:[%s166 + $0x4c] sm:$0xf]
      %v195 = vld [vmem:[%s166 + $0x50] sm:$0xf]
      %v196 = vld [vmem:[%s166 + $0x54] sm:$0xf]
      %v197 = vld [vmem:[%s166 + $0x58] sm:$0xf]
      %v198 = vld [vmem:[%s166 + $0x5c] sm:$0xf]
      %v199 = vld [vmem:[%s166 + $0x60] sm:$0xf]
      %v200 = vld [vmem:[%s166 + $0x64] sm:$0xf]
      %v201 = vld [vmem:[%s166 + $0x68] sm:$0xf]
      %v202 = vld [vmem:[%s166 + $0x6c] sm:$0xf]
      %v203 = vld [vmem:[%s166 + $0x70] sm:$0xf]
      %v204 = vld [vmem:[%s166 + $0x74] sm:$0xf]
      %v205 = vld [vmem:[%s166 + $0x78] sm:$0xf]
      %v206 = vld [vmem:[%s166 + $0x7c] sm:$0xf]
      %v207 = vld [vmem:[%s1] sm:$0xf]
      %v208 = vld [vmem:[%s1 + $0x4] sm:$0xf]
      %v209 = vld [vmem:[%s2] sm:$0x1]
      %v211 = vperm.slane %v209, 0
      %v245 = vunpack.c.l.b16 %v175
      %v246 = vunpack.c.l.b16 %v176
      %v247 = vunpack.c.l.b16 %v177
      %v248 = vunpack.c.l.b16 %v178
      %v249 = vunpack.c.l.b16 %v179
      %v250 = vunpack.c.l.b16 %v180
      %v251 = vunpack.c.l.b16 %v181
      %v252 = vunpack.c.l.b16 %v182
      %v253 = vunpack.c.l.b16 %v183
      %v254 = vunpack.c.l.b16 %v184
      %v255 = vunpack.c.l.b16 %v185
      %v256 = vunpack.c.l.b16 %v186
      %v257 = vunpack.c.l.b16 %v187
      %v258 = vunpack.c.l.b16 %v188
      %v259 = vunpack.c.l.b16 %v189
      %v260 = vunpack.c.l.b16 %v190
      %v261 = vunpack.c.l.b16 %v191
      %v262 = vunpack.c.l.b16 %v192
      %v263 = vunpack.c.l.b16 %v193
      %v264 = vunpack.c.l.b16 %v194
      %v265 = vunpack.c.l.b16 %v195
      %v266 = vunpack.c.l.b16 %v196
      %v267 = vunpack.c.l.b16 %v197
      %v268 = vunpack.c.l.b16 %v198
      %v269 = vunpack.c.l.b16 %v199
      %v270 = vunpack.c.l.b16 %v200
      %v271 = vunpack.c.l.b16 %v201
      %v272 = vunpack.c.l.b16 %v202
      %v273 = vunpack.c.l.b16 %v203
      %v274 = vunpack.c.l.b16 %v204
      %v275 = vunpack.c.l.b16 %v205
      %v276 = vunpack.c.l.b16 %v206
      %v277 = vpack.c.b16 %v246, %v245
      %v278 = vpack.c.b16 %v248, %v247
      %v279 = vpack.c.b16 %v250, %v249
      %v280 = vpack.c.b16 %v252, %v251
      %v281 = vpack.c.b16 %v254, %v253
      %v282 = vpack.c.b16 %v256, %v255
      %v283 = vpack.c.b16 %v258, %v257
      %v284 = vpack.c.b16 %v260, %v259
      %v285 = vpack.c.b16 %v262, %v261
      %v286 = vpack.c.b16 %v264, %v263
      %v287 = vpack.c.b16 %v266, %v265
      %v288 = vpack.c.b16 %v268, %v267
      %v289 = vpack.c.b16 %v270, %v269
      %v290 = vpack.c.b16 %v272, %v271
      %v291 = vpack.c.b16 %v274, %v273
      %v292 = vpack.c.b16 %v276, %v275
      %v295 = vunpack.c.l.b16 %v207
      %v296 = vunpack.c.l.b16 %v208
      %v297 = vpack.c.b16 %v296, %v295
      %vm299 = vcmask 130048
      %v301 = vsel %vm299, %v277, 0
      %v304 = vsel %vm299, %v278, 0
      %v307 = vsel %vm299, %v279, 0
      %v310 = vsel %vm299, %v280, 0
      %v313 = vsel %vm299, %v281, 0
      %v316 = vsel %vm299, %v282, 0
      %v319 = vsel %vm299, %v283, 0
      %v322 = vsel %vm299, %v284, 0
      %v325 = vsel %vm299, %v285, 0
      %v328 = vsel %vm299, %v286, 0
      %v331 = vsel %vm299, %v287, 0
      %v334 = vsel %vm299, %v288, 0
      %v337 = vsel %vm299, %v289, 0
      %v340 = vsel %vm299, %v290, 0
      %v343 = vsel %vm299, %v291, 0
      %v346 = vsel %vm299, %v292, 0
      %348 = vmatpush.bf16.msra.mxu0 0
      %349 = vmatpush.bf16.msra.mxu0 0
      %350 = vmatpush.bf16.msra.mxu0 0
      %351 = vmatpush.bf16.msra.mxu0 0
      %352 = vmatpush.bf16.msra.mxu0 0
      %353 = vmatpush.bf16.msra.mxu0 0
      %354 = vmatpush.bf16.msra.mxu0 0
      %355 = vmatpush.bf16.msra.mxu0 %v297
      %356 = vmatmul.bf16.gmra.mxu0 %v301
      %v357 = vpop.f32.mrf.mxu0
      %v358 = vadd.f32 %v211, %v357
      %v359 = vpop.f32.mrf.mxu0
      %v360 = vadd.f32 %v211, %v359
      %361 = vmatmul.bf16.gmra.mxu0 %v304
      %v362 = vpop.f32.mrf.mxu0
      %v363 = vadd.f32 %v211, %v362
      %v364 = vpop.f32.mrf.mxu0
      %v365 = vadd.f32 %v211, %v364
      %366 = vmatmul.bf16.gmra.mxu0 %v307
      %v367 = vpop.f32.mrf.mxu0
      %v368 = vadd.f32 %v211, %v367
      %v369 = vpop.f32.mrf.mxu0
      %v370 = vadd.f32 %v211, %v369
      %371 = vmatmul.bf16.gmra.mxu0 %v310
      %v372 = vpop.f32.mrf.mxu0
      %v373 = vadd.f32 %v211, %v372
      %v374 = vpop.f32.mrf.mxu0
      %v375 = vadd.f32 %v211, %v374
      %376 = vmatmul.bf16.gmra.mxu0 %v313
      %v377 = vpop.f32.mrf.mxu0
      %v378 = vadd.f32 %v211, %v377
      %v379 = vpop.f32.mrf.mxu0
      %v380 = vadd.f32 %v211, %v379
      %381 = vmatmul.bf16.gmra.mxu0 %v316
      %v382 = vpop.f32.mrf.mxu0
      %v383 = vadd.f32 %v211, %v382
      %v384 = vpop.f32.mrf.mxu0
      %v385 = vadd.f32 %v211, %v384
      %386 = vmatmul.bf16.gmra.mxu0 %v319
      %v387 = vpop.f32.mrf.mxu0
      %v388 = vadd.f32 %v211, %v387
      %v389 = vpop.f32.mrf.mxu0
      %v390 = vadd.f32 %v211, %v389
      %391 = vmatmul.bf16.gmra.mxu0 %v322
      %v392 = vpop.f32.mrf.mxu0
      %v393 = vadd.f32 %v211, %v392
      %v394 = vpop.f32.mrf.mxu0
      %v395 = vadd.f32 %v211, %v394
      %396 = vmatmul.bf16.gmra.mxu0 %v325
      %v397 = vpop.f32.mrf.mxu0
      %v398 = vadd.f32 %v211, %v397
      %v399 = vpop.f32.mrf.mxu0
      %v400 = vadd.f32 %v211, %v399
      %401 = vmatmul.bf16.gmra.mxu0 %v328
      %v402 = vpop.f32.mrf.mxu0
      %v403 = vadd.f32 %v211, %v402
      %v404 = vpop.f32.mrf.mxu0
      %v405 = vadd.f32 %v211, %v404
      %406 = vmatmul.bf16.gmra.mxu0 %v331
      %v407 = vpop.f32.mrf.mxu0
      %v408 = vadd.f32 %v211, %v407
      %v409 = vpop.f32.mrf.mxu0
      %v410 = vadd.f32 %v211, %v409
      %411 = vmatmul.bf16.gmra.mxu0 %v334
      %v412 = vpop.f32.mrf.mxu0
      %v413 = vadd.f32 %v211, %v412
      %v414 = vpop.f32.mrf.mxu0
      %v415 = vadd.f32 %v211, %v414
      %416 = vmatmul.bf16.gmra.mxu0 %v337
      %v417 = vpop.f32.mrf.mxu0
      %v418 = vadd.f32 %v211, %v417
      %v419 = vpop.f32.mrf.mxu0
      %v420 = vadd.f32 %v211, %v419
      %421 = vmatmul.bf16.gmra.mxu0 %v340
      %v422 = vpop.f32.mrf.mxu0
      %v423 = vadd.f32 %v211, %v422
      %v424 = vpop.f32.mrf.mxu0
      %v425 = vadd.f32 %v211, %v424
      %426 = vmatmul.bf16.gmra.mxu0 %v343
      %v427 = vpop.f32.mrf.mxu0
      %v428 = vadd.f32 %v211, %v427
      %v429 = vpop.f32.mrf.mxu0
      %v430 = vadd.f32 %v211, %v429
      %431 = vmatmul.bf16.gmra.mxu0 %v346
      %v432 = vpop.f32.mrf.mxu0
      %v433 = vadd.f32 %v211, %v432
      %v434 = vpop.f32.mrf.mxu0
      %v435 = vadd.f32 %v211, %v434
      %436 = vdwg.mxu0
      %437 = vst.msk [vmem:[%s172] sm:$0xff] %vm299, %v358
      %438 = vst.msk [vmem:[%s172 + $0x8] sm:$0xff] %vm299, %v360
      %439 = vst.msk [vmem:[%s172 + $0x10] sm:$0xff] %vm299, %v363
      %440 = vst.msk [vmem:[%s172 + $0x18] sm:$0xff] %vm299, %v365
      %441 = vst.msk [vmem:[%s172 + $0x20] sm:$0xff] %vm299, %v368
      %442 = vst.msk [vmem:[%s172 + $0x28] sm:$0xff] %vm299, %v370
      %443 = vst.msk [vmem:[%s172 + $0x30] sm:$0xff] %vm299, %v373
      %444 = vst.msk [vmem:[%s172 + $0x38] sm:$0xff] %vm299, %v375
      %445 = vst.msk [vmem:[%s172 + $0x40] sm:$0xff] %vm299, %v378
      %446 = vst.msk [vmem:[%s172 + $0x48] sm:$0xff] %vm299, %v380
      %447 = vst.msk [vmem:[%s172 + $0x50] sm:$0xff] %vm299, %v383
      %448 = vst.msk [vmem:[%s172 + $0x58] sm:$0xff] %vm299, %v385
      %449 = vst.msk [vmem:[%s172 + $0x60] sm:$0xff] %vm299, %v388
      %450 = vst.msk [vmem:[%s172 + $0x68] sm:$0xff] %vm299, %v390
      %451 = vst.msk [vmem:[%s172 + $0x70] sm:$0xff] %vm299, %v393
      %452 = vst.msk [vmem:[%s172 + $0x78] sm:$0xff] %vm299, %v395
      %453 = vst.msk [vmem:[%s172 + $0x80] sm:$0xff] %vm299, %v398
      %454 = vst.msk [vmem:[%s172 + $0x88] sm:$0xff] %vm299, %v400
      %455 = vst.msk [vmem:[%s172 + $0x90] sm:$0xff] %vm299, %v403
      %456 = vst.msk [vmem:[%s172 + $0x98] sm:$0xff] %vm299, %v405
      %457 = vst.msk [vmem:[%s172 + $0xa0] sm:$0xff] %vm299, %v408
      %458 = vst.msk [vmem:[%s172 + $0xa8] sm:$0xff] %vm299, %v410
      %459 = vst.msk [vmem:[%s172 + $0xb0] sm:$0xff] %vm299, %v413
      %460 = vst.msk [vmem:[%s172 + $0xb8] sm:$0xff] %vm299, %v415
      %461 = vst.msk [vmem:[%s172 + $0xc0] sm:$0xff] %vm299, %v418
      %462 = vst.msk [vmem:[%s172 + $0xc8] sm:$0xff] %vm299, %v420
      %463 = vst.msk [vmem:[%s172 + $0xd0] sm:$0xff] %vm299, %v423
      %464 = vst.msk [vmem:[%s172 + $0xd8] sm:$0xff] %vm299, %v425
      %465 = vst.msk [vmem:[%s172 + $0xe0] sm:$0xff] %vm299, %v428
      %466 = vst.msk [vmem:[%s172 + $0xe8] sm:$0xff] %vm299, %v430
      %467 = vst.msk [vmem:[%s172 + $0xf0] sm:$0xff] %vm299, %v433
      %468 = vst.msk [vmem:[%s172 + $0xf8] sm:$0xff] %vm299, %v435
      %s469 = smul.u32 32, %s14
      %p470 = scmp.lt.s32.totalorder %s469, 255
      %s471 = scalar_select %p470, %s469, 255
      %s472 = smul.addr %s471, 8
      %s473 = scalar_lea.vmem %s3, %s472
      // Predicated region
      $region33: #{unet_forward.10} parent=31 // pred_check
        %p474 = pneg %p100
      $region34: #{unet_forward.10} parent=31 // pred_check_branch
        %476 = sbr.rel (%p474) target = $region36
      $region35: #{unet_forward.10} parent=31 // pred_region
        %s477 = smul.u32 32, %s14
      $region36: #{unet_forward.10} parent=31 // pred_fallthru
        _
    $region32: #{unet_forward.10} parent=5 // pred_fallthru
      _
    %p478 = scmp.le.s32.totalorder 2, %s9
    // Predicated region
    $region37: #{unet_forward.10} parent=5 // pred_check
      %p479 = pneg %p478
    $region38: #{unet_forward.10} parent=5 // pred_check_branch
      %481 = sbr.rel (%p479) target = $region40
    $region39: #{unet_forward.10} parent=5 // pred_region
      %s482 = ssub.s32 %s9, 2
      // Predicated region
      $region41: #{unet_forward.10} parent=39 // pred_check
        %p483 = pneg %p106
      $region42: #{unet_forward.10} parent=39 // pred_check_branch
        %485 = sbr.rel (%p483) target = $region44
      $region43: #{unet_forward.10} parent=39 // pred_region
        %s486 = smul.u32 32, %s15
        %p487 = scmp.lt.s32.totalorder %s486, 255
        %s488 = scalar_select %p487, %s486, 255
        %s489 = smul.addr %s488, 8
        %s490 = scalar_lea.vmem %s3, %s489
      $region44: #{unet_forward.10} parent=39 // pred_fallthru
        _
    $region40: #{unet_forward.10} parent=5 // pred_fallthru
      _
  $region6: #{unet_forward.10} parent=0 // loop_footer
    %s13 = sadd.s32 1, %s9
  $region7: #{unet_forward.10} parent=0 // loop_footer_branch
    %8 = sbr.rel target = $region3
  $region8: #{unet_forward.10} parent=0 // loop_exit
    _

// kernel: unet_forward.11
$region0: #{unet_forward.11}
  #allocation0 [shape = 'u32[]', space=smem, size = 0x4, offset = 0x4, fixed_abs, tag = 'smem constant byte address 0x4 - core index']
  #allocation1 [shape = 'u32[72,128]{1,0:T(1,128)}', space=vmem, size = 0x9000, scoped, tag = 'internal scratch']
  %s0 = inlined_call_operand.vmem [shape: bf16[512,256], index: 0, kind: input, shape index: {}]
  %s1 = inlined_call_operand.vmem [shape: bf16[256,32], index: 1, kind: input, shape index: {}]
  %s2 = inlined_call_operand.vmem [shape: f32[1,32], index: 2, kind: input, shape index: {}]
  %s3 = inlined_call_operand.vmem [shape: f32[512,32], index: 3, kind: output, shape index: {}]
  %s4 = sld [smem:[#allocation0]]
  $region45: #{unet_forward.11} parent=0
    _
  %s6 = ssub.s32 1, %s4
  %s7 = scalar_select 0, %s6, %s4
  loop: start=0, step=1, limit=4
  $region2: #{unet_forward.11} parent=0 // loop_pre_header
    _
  $region3: #{unet_forward.11} parent=0 // loop_header
    %s9 = sphi 0, %s13
    %p10 = scmp.ge.s32.totalorder %s9, 4
    %s19 = sphi 0, %s21
    %s22 = sphi 0, %s19
    %s23 = sphi 0, %s22
    %s39 = sphi 0, %s23
    %s43 = sphi 0, %s43
    %s45 = sphi 0, %s43
    %s46 = sphi 0, %s45
    %s60 = sphi 0, %s46
    %s64 = sphi 0, %s64
    %s66 = sphi 0, %s64
    %s67 = sphi 0, %s66
    %s81 = sphi 0, %s67
    %s87 = sphi 0, %s89
    %s90 = sphi 0, %s87
    %s91 = sphi 0, %s90
    %s107 = sphi 0, %s91
  $region4: #{unet_forward.11} parent=0 // loop_header_branch
    %12 = sbr.rel (%p10) target = $region8
  $region5: #{unet_forward.11} parent=0 // loop_body
    %s14 = ssub.s32 %s9, 1
    %s15 = ssub.s32 %s9, 2
    %s16 = sadd.s32 %s9, 1
    %s17 = ssub.s32 %s9, %s16
    %p18 = scmp.eq.s32.totalorder %s17, 0
    %s20 = sadd.s32 %s19, 1
    %s21 = scalar_select %p18, %s19, %s20
    %p24 = pneg %p18
    %p25 = scmp.eq.s32.totalorder %s9, 1
    %p26 = por %p24, %p25
    %p27 = scmp.ne.s32.totalorder %s19, %s22
    %p28 = scmp.eq.s32.totalorder %s9, 0
    %p29 = por %p27, %p28
    %p30 = scmp.ne.s32.totalorder %s19, %s22
    %p31 = scmp.eq.s32.totalorder %s14, 1
    %p32 = por %p30, %p31
    %p33 = scmp.ne.s32.totalorder %s22, %s23
    %p34 = scmp.eq.s32.totalorder %s14, 0
    %p35 = por %p33, %p34
    %p36 = scmp.ne.s32.totalorder %s22, %s23
    %p37 = scmp.eq.s32.totalorder %s15, 1
    %p38 = por %p36, %p37
    %p40 = scmp.ne.s32.totalorder %s23, %s39
    %p41 = scmp.eq.s32.totalorder %s15, 0
    %p42 = por %p40, %p41
    %s44 = sadd.s32 %s43, 1
    %p47 = scmp.eq.s32.totalorder %s9, 1
    %p48 = scmp.ne.s32.totalorder %s43, %s45
    %p49 = scmp.eq.s32.totalorder %s9, 0
    %p50 = por %p48, %p49
    %p51 = scmp.ne.s32.totalorder %s43, %s45
    %p52 = scmp.eq.s32.totalorder %s14, 1
    %p53 = por %p51, %p52
    %p54 = scmp.ne.s32.totalorder %s45, %s46
    %p55 = scmp.eq.s32.totalorder %s14, 0
    %p56 = por %p54, %p55
    %p57 = scmp.ne.s32.totalorder %s45, %s46
    %p58 = scmp.eq.s32.totalorder %s15, 1
    %p59 = por %p57, %p58
    %p61 = scmp.ne.s32.totalorder %s46, %s60
    %p62 = scmp.eq.s32.totalorder %s15, 0
    %p63 = por %p61, %p62
    %s65 = sadd.s32 %s64, 1
    %p68 = scmp.eq.s32.totalorder %s9, 1
    %p69 = scmp.ne.s32.totalorder %s64, %s66
    %p70 = scmp.eq.s32.totalorder %s9, 0
    %p71 = por %p69, %p70
    %p72 = scmp.ne.s32.totalorder %s64, %s66
    %p73 = scmp.eq.s32.totalorder %s14, 1
    %p74 = por %p72, %p73
    %p75 = scmp.ne.s32.totalorder %s66, %s67
    %p76 = scmp.eq.s32.totalorder %s14, 0
    %p77 = por %p75, %p76
    %p78 = scmp.ne.s32.totalorder %s66, %s67
    %p79 = scmp.eq.s32.totalorder %s15, 1
    %p80 = por %p78, %p79
    %p82 = scmp.ne.s32.totalorder %s67, %s81
    %p83 = scmp.eq.s32.totalorder %s15, 0
    %p84 = por %p82, %p83
    %s85 = ssub.s32 %s9, %s16
    %p86 = scmp.eq.s32.totalorder %s85, 0
    %s88 = sadd.s32 %s87, 1
    %s89 = scalar_select %p86, %s87, %s88
    %p92 = pneg %p86
    %p93 = scmp.eq.s32.totalorder %s9, 1
    %p94 = por %p92, %p93
    %p95 = scmp.ne.s32.totalorder %s87, %s90
    %p96 = scmp.eq.s32.totalorder %s9, 0
    %p97 = por %p95, %p96
    %p98 = scmp.ne.s32.totalorder %s87, %s90
    %p99 = scmp.eq.s32.totalorder %s14, 1
    %p100 = por %p98, %p99
    %p101 = scmp.ne.s32.totalorder %s90, %s91
    %p102 = scmp.eq.s32.totalorder %s14, 0
    %p103 = por %p101, %p102
    %p104 = scmp.ne.s32.totalorder %s90, %s91
    %p105 = scmp.eq.s32.totalorder %s15, 1
    %p106 = por %p104, %p105
    %p108 = scmp.ne.s32.totalorder %s91, %s107
    %p109 = scmp.eq.s32.totalorder %s15, 0
    %p110 = por %p108, %p109
    %p111 = scmp.le.s32.totalorder 1, %s9
    %p112 = scmp.lt.s32.totalorder %s9, 3
    %p113 = pnand %p111, %p112
    %p114 = pneg %p113
    // Predicated region
    $region9: #{unet_forward.11} parent=5 // pred_check
      _
    $region10: #{unet_forward.11} parent=5 // pred_check_branch
      %116 = sbr.rel (%p113) target = $region12
    $region11: #{unet_forward.11} parent=5 // pred_region
      %s117 = ssub.s32 %s9, 1
      // Predicated region
      $region13: #{unet_forward.11} parent=11 // pred_check
        %p118 = pneg %p56
      $region14: #{unet_forward.11} parent=11 // pred_check_branch
        %120 = sbr.rel (%p118) target = $region16
      $region15: #{unet_forward.11} parent=11 // pred_region
        _
      $region16: #{unet_forward.11} parent=11 // pred_fallthru
        _
      // Predicated region
      $region17: #{unet_forward.11} parent=11 // pred_check
        %p121 = pneg %p77
      $region18: #{unet_forward.11} parent=11 // pred_check_branch
        %123 = sbr.rel (%p121) target = $region20
      $region19: #{unet_forward.11} parent=11 // pred_region
        _
      $region20: #{unet_forward.11} parent=11 // pred_fallthru
        _
    $region12: #{unet_forward.11} parent=5 // pred_fallthru
      _
    %p124 = scmp.lt.s32.totalorder %s9, 2
    // Predicated region
    $region21: #{unet_forward.11} parent=5 // pred_check
      %p125 = pneg %p124
    $region22: #{unet_forward.11} parent=5 // pred_check_branch
      %127 = sbr.rel (%p125) target = $region24
    $region23: #{unet_forward.11} parent=5 // pred_region
      // Predicated region
      $region25: #{unet_forward.11} parent=23 // pred_check
        %p128 = pneg %p29
      $region26: #{unet_forward.11} parent=23 // pred_check_branch
        %130 = sbr.rel (%p128) target = $region28
      $region27: #{unet_forward.11} parent=23 // pred_region
        %s131 = smul.u32 32, %s9
        %p132 = scmp.lt.s32.totalorder %s131, 63
        %s133 = scalar_select %p132, %s131, 63
        %s134 = smul.addr %s133, 2
        %s135 = smul.addr %s134, 4
        %s136 = scalar_lea.vmem %s0, %s135
        %s137 = smul.u32 32, %s9
      $region28: #{unet_forward.11} parent=23 // pred_fallthru
        _
    $region24: #{unet_forward.11} parent=5 // pred_fallthru
      _
    %p138 = scmp.le.s32.totalorder 1, %s9
    %p139 = scmp.lt.s32.totalorder %s9, 3
    %p140 = pnand %p138, %p139
    %p141 = pneg %p140
    // Predicated region
    $region29: #{unet_forward.11} parent=5 // pred_check
      _
    $region30: #{unet_forward.11} parent=5 // pred_check_branch
      %143 = sbr.rel (%p140) target = $region32
    $region31: #{unet_forward.11} parent=5 // pred_region
      %s144 = ssub.s32 %s9, 1
      %s145 = smul.u32 32, %s14
      %p146 = scmp.lt.s32.totalorder %s145, 63
      %s147 = scalar_select %p146, %s145, 63
      %s148 = smul.addr %s147, 2
      %s149 = smul.addr %s148, 4
      %s150 = scalar_lea.vmem %s0, %s149
      %p151 = pneg %p35
      %p152 = pneg %p32
      %p153 = pneg %p56
      %p154 = pneg %p53
      %p155 = pneg %p77
      %p156 = pneg %p74
      %p157 = pneg %p103
      %p158 = pneg %p100
      %s159 = smul.u32 32, %s14
      %p160 = scmp.lt.s32.totalorder %s159, 63
      %s161 = scalar_select %p160, %s159, 63
      %s162 = smul.addr %s161, 8
      %s163 = scalar_lea.vmem %s3, %s162
      %s164 = smul.u32 32, %s14
      %p165 = scmp.lt.s32.totalorder %s164, 63
      %s166 = scalar_select %p165, %s164, 63
      %s167 = smul.addr %s166, 2
      %s168 = smul.addr %s167, 4
      %s169 = scalar_lea.vmem %s0, %s168
      %s170 = smul.u32 32, %s14
      %s171 = smul.u32 32, %s14
      %p172 = scmp.lt.s32.totalorder %s171, 63
      %s173 = scalar_select %p172, %s171, 63
      %s174 = smul.addr %s173, 8
      %s175 = scalar_lea.vmem %s3, %s174
      %s176 = smul.u32 32, %s14
      %v177 = vld [vmem:[%s169] sm:$0xff]
      %v178 = vld [vmem:[%s169 + $0x8] sm:$0xff]
      %v179 = vld [vmem:[%s169 + $0x10] sm:$0xff]
      %v180 = vld [vmem:[%s169 + $0x18] sm:$0xff]
      %v181 = vld [vmem:[%s169 + $0x20] sm:$0xff]
      %v182 = vld [vmem:[%s169 + $0x28] sm:$0xff]
      %v183 = vld [vmem:[%s169 + $0x30] sm:$0xff]
      %v184 = vld [vmem:[%s169 + $0x38] sm:$0xff]
      %v185 = vld [vmem:[%s169 + $0x40] sm:$0xff]
      %v186 = vld [vmem:[%s169 + $0x48] sm:$0xff]
      %v187 = vld [vmem:[%s169 + $0x50] sm:$0xff]
      %v188 = vld [vmem:[%s169 + $0x58] sm:$0xff]
      %v189 = vld [vmem:[%s169 + $0x60] sm:$0xff]
      %v190 = vld [vmem:[%s169 + $0x68] sm:$0xff]
      %v191 = vld [vmem:[%s169 + $0x70] sm:$0xff]
      %v192 = vld [vmem:[%s169 + $0x78] sm:$0xff]
      %v193 = vld [vmem:[%s169 + $0x80] sm:$0xff]
      %v194 = vld [vmem:[%s169 + $0x88] sm:$0xff]
      %v195 = vld [vmem:[%s169 + $0x90] sm:$0xff]
      %v196 = vld [vmem:[%s169 + $0x98] sm:$0xff]
      %v197 = vld [vmem:[%s169 + $0xa0] sm:$0xff]
      %v198 = vld [vmem:[%s169 + $0xa8] sm:$0xff]
      %v199 = vld [vmem:[%s169 + $0xb0] sm:$0xff]
      %v200 = vld [vmem:[%s169 + $0xb8] sm:$0xff]
      %v201 = vld [vmem:[%s169 + $0xc0] sm:$0xff]
      %v202 = vld [vmem:[%s169 + $0xc8] sm:$0xff]
      %v203 = vld [vmem:[%s169 + $0xd0] sm:$0xff]
      %v204 = vld [vmem:[%s169 + $0xd8] sm:$0xff]
      %v205 = vld [vmem:[%s169 + $0xe0] sm:$0xff]
      %v206 = vld [vmem:[%s169 + $0xe8] sm:$0xff]
      %v207 = vld [vmem:[%s169 + $0xf0] sm:$0xff]
      %v208 = vld [vmem:[%s169 + $0xf8] sm:$0xff]
      %v209 = vld [vmem:[%s1] sm:$0xf]
      %v210 = vld [vmem:[%s1 + $0x4] sm:$0xf]
      %v211 = vld [vmem:[%s1 + $0x8] sm:$0xf]
      %v212 = vld [vmem:[%s1 + $0xc] sm:$0xf]
      %v213 = vld [vmem:[%s1 + $0x10] sm:$0xf]
      %v214 = vld [vmem:[%s1 + $0x14] sm:$0xf]
      %v215 = vld [vmem:[%s1 + $0x18] sm:$0xf]
      %v216 = vld [vmem:[%s1 + $0x1c] sm:$0xf]
      %v217 = vld [vmem:[%s1 + $0x20] sm:$0xf]
      %v218 = vld [vmem:[%s1 + $0x24] sm:$0xf]
      %v219 = vld [vmem:[%s1 + $0x28] sm:$0xf]
      %v220 = vld [vmem:[%s1 + $0x2c] sm:$0xf]
      %v221 = vld [vmem:[%s1 + $0x30] sm:$0xf]
      %v222 = vld [vmem:[%s1 + $0x34] sm:$0xf]
      %v223 = vld [vmem:[%s1 + $0x38] sm:$0xf]
      %v224 = vld [vmem:[%s1 + $0x3c] sm:$0xf]
      %v225 = vld [vmem:[%s1 + $0x40] sm:$0xf]
      %v226 = vld [vmem:[%s1 + $0x44] sm:$0xf]
      %v227 = vld [vmem:[%s1 + $0x48] sm:$0xf]
      %v228 = vld [vmem:[%s1 + $0x4c] sm:$0xf]
      %v229 = vld [vmem:[%s1 + $0x50] sm:$0xf]
      %v230 = vld [vmem:[%s1 + $0x54] sm:$0xf]
      %v231 = vld [vmem:[%s1 + $0x58] sm:$0xf]
      %v232 = vld [vmem:[%s1 + $0x5c] sm:$0xf]
      %v233 = vld [vmem:[%s1 + $0x60] sm:$0xf]
      %v234 = vld [vmem:[%s1 + $0x64] sm:$0xf]
      %v235 = vld [vmem:[%s1 + $0x68] sm:$0xf]
      %v236 = vld [vmem:[%s1 + $0x6c] sm:$0xf]
      %v237 = vld [vmem:[%s1 + $0x70] sm:$0xf]
      %v238 = vld [vmem:[%s1 + $0x74] sm:$0xf]
      %v239 = vld [vmem:[%s1 + $0x78] sm:$0xf]
      %v240 = vld [vmem:[%s1 + $0x7c] sm:$0xf]
      %v241 = vld [vmem:[%s2] sm:$0x1]
      %v243 = vperm.slane %v241, 0
      %v277 = vunpack.c.l.b16 %v177
      %v278 = vunpack.c.h.b16 %v177
      %v279 = vunpack.c.l.b16 %v178
      %v280 = vunpack.c.h.b16 %v178
      %v281 = vunpack.c.l.b16 %v179
      %v282 = vunpack.c.h.b16 %v179
      %v283 = vunpack.c.l.b16 %v180
      %v284 = vunpack.c.h.b16 %v180
      %v285 = vunpack.c.l.b16 %v181
      %v286 = vunpack.c.h.b16 %v181
      %v287 = vunpack.c.l.b16 %v182
      %v288 = vunpack.c.h.b16 %v182
      %v289 = vunpack.c.l.b16 %v183
      %v290 = vunpack.c.h.b16 %v183
      %v291 = vunpack.c.l.b16 %v184
      %v292 = vunpack.c.h.b16 %v184
      %v293 = vunpack.c.l.b16 %v185
      %v294 = vunpack.c.h.b16 %v185
      %v295 = vunpack.c.l.b16 %v186
      %v296 = vunpack.c.h.b16 %v186
      %v297 = vunpack.c.l.b16 %v187
      %v298 = vunpack.c.h.b16 %v187
      %v299 = vunpack.c.l.b16 %v188
      %v300 = vunpack.c.h.b16 %v188
      %v301 = vunpack.c.l.b16 %v189
      %v302 = vunpack.c.h.b16 %v189
      %v303 = vunpack.c.l.b16 %v190
      %v304 = vunpack.c.h.b16 %v190
      %v305 = vunpack.c.l.b16 %v191
      %v306 = vunpack.c.h.b16 %v191
      %v307 = vunpack.c.l.b16 %v192
      %v308 = vunpack.c.h.b16 %v192
      %v309 = vunpack.c.l.b16 %v193
      %v310 = vunpack.c.h.b16 %v193
      %v311 = vunpack.c.l.b16 %v194
      %v312 = vunpack.c.h.b16 %v194
      %v313 = vunpack.c.l.b16 %v195
      %v314 = vunpack.c.h.b16 %v195
      %v315 = vunpack.c.l.b16 %v196
      %v316 = vunpack.c.h.b16 %v196
      %v317 = vunpack.c.l.b16 %v197
      %v318 = vunpack.c.h.b16 %v197
      %v319 = vunpack.c.l.b16 %v198
      %v320 = vunpack.c.h.b16 %v198
      %v321 = vunpack.c.l.b16 %v199
      %v322 = vunpack.c.h.b16 %v199
      %v323 = vunpack.c.l.b16 %v200
      %v324 = vunpack.c.h.b16 %v200
      %v325 = vunpack.c.l.b16 %v201
      %v326 = vunpack.c.h.b16 %v201
      %v327 = vunpack.c.l.b16 %v202
      %v328 = vunpack.c.h.b16 %v202
      %v329 = vunpack.c.l.b16 %v203
      %v330 = vunpack.c.h.b16 %v203
      %v331 = vunpack.c.l.b16 %v204
      %v332 = vunpack.c.h.b16 %v204
      %v333 = vunpack.c.l.b16 %v205
      %v334 = vunpack.c.h.b16 %v205
      %v335 = vunpack.c.l.b16 %v206
      %v336 = vunpack.c.h.b16 %v206
      %v337 = vunpack.c.l.b16 %v207
      %v338 = vunpack.c.h.b16 %v207
      %v339 = vunpack.c.l.b16 %v208
      %v340 = vunpack.c.h.b16 %v208
      %v341 = vpack.c.b16 %v279, %v277
      %v342 = vpack.c.b16 %v280, %v278
      %v343 = vpack.c.b16 %v283, %v281
      %v344 = vpack.c.b16 %v284, %v282
      %v345 = vpack.c.b16 %v287, %v285
      %v346 = vpack.c.b16 %v288, %v286
      %v347 = vpack.c.b16 %v291, %v289
      %v348 = vpack.c.b16 %v292, %v290
      %v349 = vpack.c.b16 %v295, %v293
      %v350 = vpack.c.b16 %v296, %v294
      %v351 = vpack.c.b16 %v299, %v297
      %v352 = vpack.c.b16 %v300, %v298
      %v353 = vpack.c.b16 %v303, %v301
      %v354 = vpack.c.b16 %v304, %v302
      %v355 = vpack.c.b16 %v307, %v305
      %v356 = vpack.c.b16 %v308, %v306
      %v357 = vpack.c.b16 %v311, %v309
      %v358 = vpack.c.b16 %v312, %v310
      %v359 = vpack.c.b16 %v315, %v313
      %v360 = vpack.c.b16 %v316, %v314
      %v361 = vpack.c.b16 %v319, %v317
      %v362 = vpack.c.b16 %v320, %v318
      %v363 = vpack.c.b16 %v323, %v321
      %v364 = vpack.c.b16 %v324, %v322
      %v365 = vpack.c.b16 %v327, %v325
      %v366 = vpack.c.b16 %v328, %v326
      %v367 = vpack.c.b16 %v331, %v329
      %v368 = vpack.c.b16 %v332, %v330
      %v369 = vpack.c.b16 %v335, %v333
      %v370 = vpack.c.b16 %v336, %v334
      %v371 = vpack.c.b16 %v339, %v337
      %v372 = vpack.c.b16 %v340, %v338
      %v437 = vunpack.c.l.b16 %v209
      %v438 = vunpack.c.l.b16 %v210
      %v439 = vunpack.c.l.b16 %v211
      %v440 = vunpack.c.l.b16 %v212
      %v441 = vunpack.c.l.b16 %v213
      %v442 = vunpack.c.l.b16 %v214
      %v443 = vunpack.c.l.b16 %v215
      %v444 = vunpack.c.l.b16 %v216
      %v445 = vunpack.c.l.b16 %v217
      %v446 = vunpack.c.l.b16 %v218
      %v447 = vunpack.c.l.b16 %v219
      %v448 = vunpack.c.l.b16 %v220
      %v449 = vunpack.c.l.b16 %v221
      %v450 = vunpack.c.l.b16 %v222
      %v451 = vunpack.c.l.b16 %v223
      %v452 = vunpack.c.l.b16 %v224
      %v453 = vunpack.c.l.b16 %v225
      %v454 = vunpack.c.l.b16 %v226
      %v455 = vunpack.c.l.b16 %v227
      %v456 = vunpack.c.l.b16 %v228
      %v457 = vunpack.c.l.b16 %v229
      %v458 = vunpack.c.l.b16 %v230
      %v459 = vunpack.c.l.b16 %v231
      %v460 = vunpack.c.l.b16 %v232
      %v461 = vunpack.c.l.b16 %v233
      %v462 = vunpack.c.l.b16 %v234
      %v463 = vunpack.c.l.b16 %v235
      %v464 = vunpack.c.l.b16 %v236
      %v465 = vunpack.c.l.b16 %v237
      %v466 = vunpack.c.l.b16 %v238
      %v467 = vunpack.c.l.b16 %v239
      %v468 = vunpack.c.l.b16 %v240
      %v469 = vpack.c.b16 %v438, %v437
      %v470 = vpack.c.b16 %v440, %v439
      %v471 = vpack.c.b16 %v442, %v441
      %v472 = vpack.c.b16 %v444, %v443
      %v473 = vpack.c.b16 %v446, %v445
      %v474 = vpack.c.b16 %v448, %v447
      %v475 = vpack.c.b16 %v450, %v449
      %v476 = vpack.c.b16 %v452, %v451
      %v477 = vpack.c.b16 %v454, %v453
      %v478 = vpack.c.b16 %v456, %v455
      %v479 = vpack.c.b16 %v458, %v457
      %v480 = vpack.c.b16 %v460, %v459
      %v481 = vpack.c.b16 %v462, %v461
      %v482 = vpack.c.b16 %v464, %v463
      %v483 = vpack.c.b16 %v466, %v465
      %v484 = vpack.c.b16 %v468, %v467
      %501 = vmatpush.bf16.msra.mxu0 %v476
      %502 = vmatpush.bf16.msra.mxu0 %v475
      %503 = vmatpush.bf16.msra.mxu0 %v474
      %504 = vmatpush.bf16.msra.mxu0 %v473
      %505 = vmatpush.bf16.msra.mxu0 %v472
      %506 = vmatpush.bf16.msra.mxu0 %v471
      %507 = vmatpush.bf16.msra.mxu0 %v470
      %508 = vmatpush.bf16.msra.mxu0 %v469
      %509 = vmatmul.bf16.gmra.mxu0 %v341
      %v510 = vpop.f32.mrf.mxu0
      %v511 = vadd.f32 %v243, %v510
      %v512 = vpop.f32.mrf.mxu0
      %v513 = vadd.f32 %v243, %v512
      %514 = vmatmul.bf16.gmra.mxu0 %v343
      %v515 = vpop.f32.mrf.mxu0
      %v516 = vadd.f32 %v243, %v515
      %v517 = vpop.f32.mrf.mxu0
      %v518 = vadd.f32 %v243, %v517
      %519 = vmatmul.bf16.gmra.mxu0 %v345
      %v520 = vpop.f32.mrf.mxu0
      %v521 = vadd.f32 %v243, %v520
      %v522 = vpop.f32.mrf.mxu0
      %v523 = vadd.f32 %v243, %v522
      %524 = vmatmul.bf16.gmra.mxu0 %v347
      %v525 = vpop.f32.mrf.mxu0
      %v526 = vadd.f32 %v243, %v525
      %v527 = vpop.f32.mrf.mxu0
      %v528 = vadd.f32 %v243, %v527
      %529 = vmatmul.bf16.gmra.mxu0 %v349
      %v530 = vpop.f32.mrf.mxu0
      %v531 = vadd.f32 %v243, %v530
      %v532 = vpop.f32.mrf.mxu0
      %v533 = vadd.f32 %v243, %v532
      %534 = vmatmul.bf16.gmra.mxu0 %v351
      %v535 = vpop.f32.mrf.mxu0
      %v536 = vadd.f32 %v243, %v535
      %v537 = vpop.f32.mrf.mxu0
      %v538 = vadd.f32 %v243, %v537
      %539 = vmatmul.bf16.gmra.mxu0 %v353
      %v540 = vpop.f32.mrf.mxu0
      %v541 = vadd.f32 %v243, %v540
      %v542 = vpop.f32.mrf.mxu0
      %v543 = vadd.f32 %v243, %v542
      %544 = vmatmul.bf16.gmra.mxu0 %v355
      %v545 = vpop.f32.mrf.mxu0
      %v546 = vadd.f32 %v243, %v545
      %v547 = vpop.f32.mrf.mxu0
      %v548 = vadd.f32 %v243, %v547
      %549 = vmatmul.bf16.gmra.mxu0 %v357
      %v550 = vpop.f32.mrf.mxu0
      %v551 = vadd.f32 %v243, %v550
      %v552 = vpop.f32.mrf.mxu0
      %v553 = vadd.f32 %v243, %v552
      %554 = vmatmul.bf16.gmra.mxu0 %v359
      %v555 = vpop.f32.mrf.mxu0
      %v556 = vadd.f32 %v243, %v555
      %v557 = vpop.f32.mrf.mxu0
      %v558 = vadd.f32 %v243, %v557
      %559 = vmatmul.bf16.gmra.mxu0 %v361
      %v560 = vpop.f32.mrf.mxu0
      %v561 = vadd.f32 %v243, %v560
      %v562 = vpop.f32.mrf.mxu0
      %v563 = vadd.f32 %v243, %v562
      %564 = vmatmul.bf16.gmra.mxu0 %v363
      %v565 = vpop.f32.mrf.mxu0
      %v566 = vadd.f32 %v243, %v565
      %v567 = vpop.f32.mrf.mxu0
      %v568 = vadd.f32 %v243, %v567
      %569 = vmatmul.bf16.gmra.mxu0 %v365
      %v570 = vpop.f32.mrf.mxu0
      %v571 = vadd.f32 %v243, %v570
      %v572 = vpop.f32.mrf.mxu0
      %v573 = vadd.f32 %v243, %v572
      %574 = vmatmul.bf16.gmra.mxu0 %v367
      %v575 = vpop.f32.mrf.mxu0
      %v576 = vadd.f32 %v243, %v575
      %v577 = vpop.f32.mrf.mxu0
      %v578 = vadd.f32 %v243, %v577
      %579 = vmatmul.bf16.gmra.mxu0 %v369
      %v580 = vpop.f32.mrf.mxu0
      %v581 = vadd.f32 %v243, %v580
      %v582 = vpop.f32.mrf.mxu0
      %v583 = vadd.f32 %v243, %v582
      %584 = vmatmul.bf16.gmra.mxu0 %v371
      %v585 = vpop.f32.mrf.mxu0
      %v586 = vadd.f32 %v243, %v585
      %v587 = vpop.f32.mrf.mxu0
      %v588 = vadd.f32 %v243, %v587
      %589 = vdwg.mxu0
      %590 = vmatpush.bf16.msra.mxu0 %v484
      %591 = vmatpush.bf16.msra.mxu0 %v483
      %592 = vmatpush.bf16.msra.mxu0 %v482
      %593 = vmatpush.bf16.msra.mxu0 %v481
      %594 = vmatpush.bf16.msra.mxu0 %v480
      %595 = vmatpush.bf16.msra.mxu0 %v479
      %596 = vmatpush.bf16.msra.mxu0 %v478
      %597 = vmatpush.bf16.msra.mxu0 %v477
      %598 = vmatmul.bf16.gmra.mxu0 %v342
      %v599 = vpop.f32.mrf.mxu0
      %v600 = vadd.f32 %v511, %v599
      %v601 = vpop.f32.mrf.mxu0
      %v602 = vadd.f32 %v513, %v601
      %603 = vmatmul.bf16.gmra.mxu0 %v344
      %v604 = vpop.f32.mrf.mxu0
      %v605 = vadd.f32 %v516, %v604
      %v606 = vpop.f32.mrf.mxu0
      %v607 = vadd.f32 %v518, %v606
      %608 = vmatmul.bf16.gmra.mxu0 %v346
      %v609 = vpop.f32.mrf.mxu0
      %v610 = vadd.f32 %v521, %v609
      %v611 = vpop.f32.mrf.mxu0
      %v612 = vadd.f32 %v523, %v611
      %613 = vmatmul.bf16.gmra.mxu0 %v348
      %v614 = vpop.f32.mrf.mxu0
      %v615 = vadd.f32 %v526, %v614
      %v616 = vpop.f32.mrf.mxu0
      %v617 = vadd.f32 %v528, %v616
      %618 = vmatmul.bf16.gmra.mxu0 %v350
      %v619 = vpop.f32.mrf.mxu0
      %v620 = vadd.f32 %v531, %v619
      %v621 = vpop.f32.mrf.mxu0
      %v622 = vadd.f32 %v533, %v621
      %623 = vmatmul.bf16.gmra.mxu0 %v352
      %v624 = vpop.f32.mrf.mxu0
      %v625 = vadd.f32 %v536, %v624
      %v626 = vpop.f32.mrf.mxu0
      %v627 = vadd.f32 %v538, %v626
      %628 = vmatmul.bf16.gmra.mxu0 %v354
      %v629 = vpop.f32.mrf.mxu0
      %v630 = vadd.f32 %v541, %v629
      %v631 = vpop.f32.mrf.mxu0
      %v632 = vadd.f32 %v543, %v631
      %633 = vmatmul.bf16.gmra.mxu0 %v356
      %v634 = vpop.f32.mrf.mxu0
      %v635 = vadd.f32 %v546, %v634
      %v636 = vpop.f32.mrf.mxu0
      %v637 = vadd.f32 %v548, %v636
      %638 = vmatmul.bf16.gmra.mxu0 %v358
      %v639 = vpop.f32.mrf.mxu0
      %v640 = vadd.f32 %v551, %v639
      %v641 = vpop.f32.mrf.mxu0
      %v642 = vadd.f32 %v553, %v641
      %643 = vmatmul.bf16.gmra.mxu0 %v360
      %v644 = vpop.f32.mrf.mxu0
      %v645 = vadd.f32 %v556, %v644
      %v646 = vpop.f32.mrf.mxu0
      %v647 = vadd.f32 %v558, %v646
      %648 = vmatmul.bf16.gmra.mxu0 %v362
      %v649 = vpop.f32.mrf.mxu0
      %v650 = vadd.f32 %v561, %v649
      %v651 = vpop.f32.mrf.mxu0
      %v652 = vadd.f32 %v563, %v651
      %653 = vmatmul.bf16.gmra.mxu0 %v364
      %v654 = vpop.f32.mrf.mxu0
      %v655 = vadd.f32 %v566, %v654
      %v656 = vpop.f32.mrf.mxu0
      %v657 = vadd.f32 %v568, %v656
      %658 = vmatmul.bf16.gmra.mxu0 %v366
      %v659 = vpop.f32.mrf.mxu0
      %v660 = vadd.f32 %v571, %v659
      %v661 = vpop.f32.mrf.mxu0
      %v662 = vadd.f32 %v573, %v661
      %663 = vmatmul.bf16.gmra.mxu0 %v368
      %v664 = vpop.f32.mrf.mxu0
      %v665 = vadd.f32 %v576, %v664
      %v666 = vpop.f32.mrf.mxu0
      %v667 = vadd.f32 %v578, %v666
      %668 = vmatmul.bf16.gmra.mxu0 %v370
      %v669 = vpop.f32.mrf.mxu0
      %v670 = vadd.f32 %v581, %v669
      %v671 = vpop.f32.mrf.mxu0
      %v672 = vadd.f32 %v583, %v671
      %673 = vmatmul.bf16.gmra.mxu0 %v372
      %v674 = vpop.f32.mrf.mxu0
      %v675 = vadd.f32 %v586, %v674
      %v676 = vpop.f32.mrf.mxu0
      %v677 = vadd.f32 %v588, %v676
      %678 = vdwg.mxu0
      %vm679 = vcmask 261120
      %680 = vst.msk [vmem:[%s175] sm:$0xff] %vm679, %v600
      %681 = vst.msk [vmem:[%s175 + $0x8] sm:$0xff] %vm679, %v602
      %682 = vst.msk [vmem:[%s175 + $0x10] sm:$0xff] %vm679, %v605
      %683 = vst.msk [vmem:[%s175 + $0x18] sm:$0xff] %vm679, %v607
      %684 = vst.msk [vmem:[%s175 + $0x20] sm:$0xff] %vm679, %v610
      %685 = vst.msk [vmem:[%s175 + $0x28] sm:$0xff] %vm679, %v612
      %686 = vst.msk [vmem:[%s175 + $0x30] sm:$0xff] %vm679, %v615
      %687 = vst.msk [vmem:[%s175 + $0x38] sm:$0xff] %vm679, %v617
      %688 = vst.msk [vmem:[%s175 + $0x40] sm:$0xff] %vm679, %v620
      %689 = vst.msk [vmem:[%s175 + $0x48] sm:$0xff] %vm679, %v622
      %690 = vst.msk [vmem:[%s175 + $0x50] sm:$0xff] %vm679, %v625
      %691 = vst.msk [vmem:[%s175 + $0x58] sm:$0xff] %vm679, %v627
      %692 = vst.msk [vmem:[%s175 + $0x60] sm:$0xff] %vm679, %v630
      %693 = vst.msk [vmem:[%s175 + $0x68] sm:$0xff] %vm679, %v632
      %694 = vst.msk [vmem:[%s175 + $0x70] sm:$0xff] %vm679, %v635
      %695 = vst.msk [vmem:[%s175 + $0x78] sm:$0xff] %vm679, %v637
      %696 = vst.msk [vmem:[%s175 + $0x80] sm:$0xff] %vm679, %v640
      %697 = vst.msk [vmem:[%s175 + $0x88] sm:$0xff] %vm679, %v642
      %698 = vst.msk [vmem:[%s175 + $0x90] sm:$0xff] %vm679, %v645
      %699 = vst.msk [vmem:[%s175 + $0x98] sm:$0xff] %vm679, %v647
      %700 = vst.msk [vmem:[%s175 + $0xa0] sm:$0xff] %vm679, %v650
      %701 = vst.msk [vmem:[%s175 + $0xa8] sm:$0xff] %vm679, %v652
      %702 = vst.msk [vmem:[%s175 + $0xb0] sm:$0xff] %vm679, %v655
      %703 = vst.msk [vmem:[%s175 + $0xb8] sm:$0xff] %vm679, %v657
      %704 = vst.msk [vmem:[%s175 + $0xc0] sm:$0xff] %vm679, %v660
      %705 = vst.msk [vmem:[%s175 + $0xc8] sm:$0xff] %vm679, %v662
      %706 = vst.msk [vmem:[%s175 + $0xd0] sm:$0xff] %vm679, %v665
      %707 = vst.msk [vmem:[%s175 + $0xd8] sm:$0xff] %vm679, %v667
      %708 = vst.msk [vmem:[%s175 + $0xe0] sm:$0xff] %vm679, %v670
      %709 = vst.msk [vmem:[%s175 + $0xe8] sm:$0xff] %vm679, %v672
      %710 = vst.msk [vmem:[%s175 + $0xf0] sm:$0xff] %vm679, %v675
      %711 = vst.msk [vmem:[%s175 + $0xf8] sm:$0xff] %vm679, %v677
      %s712 = smul.u32 32, %s14
      %p713 = scmp.lt.s32.totalorder %s712, 63
      %s714 = scalar_select %p713, %s712, 63
      %s715 = smul.addr %s714, 8
      %s716 = scalar_lea.vmem %s3, %s715
      // Predicated region
      $region33: #{unet_forward.11} parent=31 // pred_check
        %p717 = pneg %p100
      $region34: #{unet_forward.11} parent=31 // pred_check_branch
        %719 = sbr.rel (%p717) target = $region36
      $region35: #{unet_forward.11} parent=31 // pred_region
        %s720 = smul.u32 32, %s14
      $region36: #{unet_forward.11} parent=31 // pred_fallthru
        _
    $region32: #{unet_forward.11} parent=5 // pred_fallthru
      _
    %p721 = scmp.le.s32.totalorder 2, %s9
    // Predicated region
    $region37: #{unet_forward.11} parent=5 // pred_check
      %p722 = pneg %p721
    $region38: #{unet_forward.11} parent=5 // pred_check_branch
      %724 = sbr.rel (%p722) target = $region40
    $region39: #{unet_forward.11} parent=5 // pred_region
      %s725 = ssub.s32 %s9, 2
      // Predicated region
      $region41: #{unet_forward.11} parent=39 // pred_check
        %p726 = pneg %p106
      $region42: #{unet_forward.11} parent=39 // pred_check_branch
        %728 = sbr.rel (%p726) target = $region44
      $region43: #{unet_forward.11} parent=39 // pred_region
        %s729 = smul.u32 32, %s15
        %p730 = scmp.lt.s32.totalorder %s729, 63
        %s731 = scalar_select %p730, %s729, 63
        %s732 = smul.addr %s731, 8
        %s733 = scalar_lea.vmem %s3, %s732
      $region44: #{unet_forward.11} parent=39 // pred_fallthru
        _
    $region40: #{unet_forward.11} parent=5 // pred_fallthru
      _
  $region6: #{unet_forward.11} parent=0 // loop_footer
    %s13 = sadd.s32 1, %s9
  $region7: #{unet_forward.11} parent=0 // loop_footer_branch
    %8 = sbr.rel target = $region3
  $region8: #{unet_forward.11} parent=0 // loop_exit
    _

// kernel: unet_forward.12
$region0: #{unet_forward.12}
  #allocation0 [shape = 'u32[]', space=smem, size = 0x4, offset = 0x4, fixed_abs, tag = 'smem constant byte address 0x4 - core index']
  #allocation1 [shape = 'u32[72,128]{1,0:T(1,128)}', space=vmem, size = 0x9000, scoped, tag = 'internal scratch']
  %s0 = inlined_call_operand.vmem [shape: bf16[128,512], index: 0, kind: input, shape index: {}]
  %s1 = inlined_call_operand.vmem [shape: bf16[512,64], index: 1, kind: input, shape index: {}]
  %s2 = inlined_call_operand.vmem [shape: f32[1,64], index: 2, kind: input, shape index: {}]
  %s3 = inlined_call_operand.vmem [shape: f32[128,64], index: 3, kind: output, shape index: {}]
  %s4 = sld [smem:[#allocation0]]
  $region22: #{unet_forward.12} parent=0
    _
  %s6 = ssub.s32 1, %s4
  %s7 = scalar_select 0, %s6, %s4
  // Predicated region
  $region2: #{unet_forward.12} parent=0 // pred_check
    _
  $region3: #{unet_forward.12} parent=0 // pred_check_branch
    %9 = sbr.rel (0) target = $region5
  $region4: #{unet_forward.12} parent=0 // pred_region
    _
  $region5: #{unet_forward.12} parent=0 // pred_fallthru
    _
  // Predicated region
  $region6: #{unet_forward.12} parent=0 // pred_check
    _
  $region7: #{unet_forward.12} parent=0 // pred_check_branch
    %11 = sbr.rel (0) target = $region9
  $region8: #{unet_forward.12} parent=0 // pred_region
    _
  $region9: #{unet_forward.12} parent=0 // pred_fallthru
    _
  // Predicated region
  $region10: #{unet_forward.12} parent=0 // pred_check
    _
  $region11: #{unet_forward.12} parent=0 // pred_check_branch
    %13 = sbr.rel (0) target = $region13
  $region12: #{unet_forward.12} parent=0 // pred_region
    _
  $region13: #{unet_forward.12} parent=0 // pred_fallthru
    _
  %v14 = vld [vmem:[%s0] sm:$0xff]
  %v15 = vld [vmem:[%s0 + $0x8] sm:$0xff]
  %v16 = vld [vmem:[%s0 + $0x10] sm:$0xff]
  %v17 = vld [vmem:[%s0 + $0x18] sm:$0xff]
  %v18 = vld [vmem:[%s0 + $0x20] sm:$0xff]
  %v19 = vld [vmem:[%s0 + $0x28] sm:$0xff]
  %v20 = vld [vmem:[%s0 + $0x30] sm:$0xff]
  %v21 = vld [vmem:[%s0 + $0x38] sm:$0xff]
  %v22 = vld [vmem:[%s0 + $0x40] sm:$0xff]
  %v23 = vld [vmem:[%s0 + $0x48] sm:$0xff]
  %v24 = vld [vmem:[%s0 + $0x50] sm:$0xff]
  %v25 = vld [vmem:[%s0 + $0x58] sm:$0xff]
  %v26 = vld [vmem:[%s0 + $0x60] sm:$0xff]
  %v27 = vld [vmem:[%s0 + $0x68] sm:$0xff]
  %v28 = vld [vmem:[%s0 + $0x70] sm:$0xff]
  %v29 = vld [vmem:[%s0 + $0x78] sm:$0xff]
  %v30 = vld [vmem:[%s0 + $0x80] sm:$0xff]
  %v31 = vld [vmem:[%s0 + $0x88] sm:$0xff]
  %v32 = vld [vmem:[%s0 + $0x90] sm:$0xff]
  %v33 = vld [vmem:[%s0 + $0x98] sm:$0xff]
  %v34 = vld [vmem:[%s0 + $0xa0] sm:$0xff]
  %v35 = vld [vmem:[%s0 + $0xa8] sm:$0xff]
  %v36 = vld [vmem:[%s0 + $0xb0] sm:$0xff]
  %v37 = vld [vmem:[%s0 + $0xb8] sm:$0xff]
  %v38 = vld [vmem:[%s0 + $0xc0] sm:$0xff]
  %v39 = vld [vmem:[%s0 + $0xc8] sm:$0xff]
  %v40 = vld [vmem:[%s0 + $0xd0] sm:$0xff]
  %v41 = vld [vmem:[%s0 + $0xd8] sm:$0xff]
  %v42 = vld [vmem:[%s0 + $0xe0] sm:$0xff]
  %v43 = vld [vmem:[%s0 + $0xe8] sm:$0xff]
  %v44 = vld [vmem:[%s0 + $0xf0] sm:$0xff]
  %v45 = vld [vmem:[%s0 + $0xf8] sm:$0xff]
  %v46 = vld [vmem:[%s1] sm:$0xf]
  %v47 = vld [vmem:[%s1 + $0x4] sm:$0xf]
  %v48 = vld [vmem:[%s1 + $0x8] sm:$0xf]
  %v49 = vld [vmem:[%s1 + $0xc] sm:$0xf]
  %v50 = vld [vmem:[%s1 + $0x10] sm:$0xf]
  %v51 = vld [vmem:[%s1 + $0x14] sm:$0xf]
  %v52 = vld [vmem:[%s1 + $0x18] sm:$0xf]
  %v53 = vld [vmem:[%s1 + $0x1c] sm:$0xf]
  %v54 = vld [vmem:[%s1 + $0x20] sm:$0xf]
  %v55 = vld [vmem:[%s1 + $0x24] sm:$0xf]
  %v56 = vld [vmem:[%s1 + $0x28] sm:$0xf]
  %v57 = vld [vmem:[%s1 + $0x2c] sm:$0xf]
  %v58 = vld [vmem:[%s1 + $0x30] sm:$0xf]
  %v59 = vld [vmem:[%s1 + $0x34] sm:$0xf]
  %v60 = vld [vmem:[%s1 + $0x38] sm:$0xf]
  %v61 = vld [vmem:[%s1 + $0x3c] sm:$0xf]
  %v62 = vld [vmem:[%s1 + $0x40] sm:$0xf]
  %v63 = vld [vmem:[%s1 + $0x44] sm:$0xf]
  %v64 = vld [vmem:[%s1 + $0x48] sm:$0xf]
  %v65 = vld [vmem:[%s1 + $0x4c] sm:$0xf]
  %v66 = vld [vmem:[%s1 + $0x50] sm:$0xf]
  %v67 = vld [vmem:[%s1 + $0x54] sm:$0xf]
  %v68 = vld [vmem:[%s1 + $0x58] sm:$0xf]
  %v69 = vld [vmem:[%s1 + $0x5c] sm:$0xf]
  %v70 = vld [vmem:[%s1 + $0x60] sm:$0xf]
  %v71 = vld [vmem:[%s1 + $0x64] sm:$0xf]
  %v72 = vld [vmem:[%s1 + $0x68] sm:$0xf]
  %v73 = vld [vmem:[%s1 + $0x6c] sm:$0xf]
  %v74 = vld [vmem:[%s1 + $0x70] sm:$0xf]
  %v75 = vld [vmem:[%s1 + $0x74] sm:$0xf]
  %v76 = vld [vmem:[%s1 + $0x78] sm:$0xf]
  %v77 = vld [vmem:[%s1 + $0x7c] sm:$0xf]
  %v78 = vld [vmem:[%s1 + $0x80] sm:$0xf]
  %v79 = vld [vmem:[%s1 + $0x84] sm:$0xf]
  %v80 = vld [vmem:[%s1 + $0x88] sm:$0xf]
  %v81 = vld [vmem:[%s1 + $0x8c] sm:$0xf]
  %v82 = vld [vmem:[%s1 + $0x90] sm:$0xf]
  %v83 = vld [vmem:[%s1 + $0x94] sm:$0xf]
  %v84 = vld [vmem:[%s1 + $0x98] sm:$0xf]
  %v85 = vld [vmem:[%s1 + $0x9c] sm:$0xf]
  %v86 = vld [vmem:[%s1 + $0xa0] sm:$0xf]
  %v87 = vld [vmem:[%s1 + $0xa4] sm:$0xf]
  %v88 = vld [vmem:[%s1 + $0xa8] sm:$0xf]
  %v89 = vld [vmem:[%s1 + $0xac] sm:$0xf]
  %v90 = vld [vmem:[%s1 + $0xb0] sm:$0xf]
  %v91 = vld [vmem:[%s1 + $0xb4] sm:$0xf]
  %v92 = vld [vmem:[%s1 + $0xb8] sm:$0xf]
  %v93 = vld [vmem:[%s1 + $0xbc] sm:$0xf]
  %v94 = vld [vmem:[%s1 + $0xc0] sm:$0xf]
  %v95 = vld [vmem:[%s1 + $0xc4] sm:$0xf]
  %v96 = vld [vmem:[%s1 + $0xc8] sm:$0xf]
  %v97 = vld [vmem:[%s1 + $0xcc] sm:$0xf]
  %v98 = vld [vmem:[%s1 + $0xd0] sm:$0xf]
  %v99 = vld [vmem:[%s1 + $0xd4] sm:$0xf]
  %v100 = vld [vmem:[%s1 + $0xd8] sm:$0xf]
  %v101 = vld [vmem:[%s1 + $0xdc] sm:$0xf]
  %v102 = vld [vmem:[%s1 + $0xe0] sm:$0xf]
  %v103 = vld [vmem:[%s1 + $0xe4] sm:$0xf]
  %v104 = vld [vmem:[%s1 + $0xe8] sm:$0xf]
  %v105 = vld [vmem:[%s1 + $0xec] sm:$0xf]
  %v106 = vld [vmem:[%s1 + $0xf0] sm:$0xf]
  %v107 = vld [vmem:[%s1 + $0xf4] sm:$0xf]
  %v108 = vld [vmem:[%s1 + $0xf8] sm:$0xf]
  %v109 = vld [vmem:[%s1 + $0xfc] sm:$0xf]
  %v110 = vld [vmem:[%s2] sm:$0x1]
  %v112 = vperm.slane %v110, 0
  %v146 = vunpack.c.l.b16 %v14
  %v147 = vunpack.c.h.b16 %v14
  %v148 = vunpack.c.l.b16 %v15
  %v149 = vunpack.c.h.b16 %v15
  %v150 = vunpack.c.l.b16 %v16
  %v151 = vunpack.c.h.b16 %v16
  %v152 = vunpack.c.l.b16 %v17
  %v153 = vunpack.c.h.b16 %v17
  %v154 = vunpack.c.l.b16 %v18
  %v155 = vunpack.c.h.b16 %v18
  %v156 = vunpack.c.l.b16 %v19
  %v157 = vunpack.c.h.b16 %v19
  %v158 = vunpack.c.l.b16 %v20
  %v159 = vunpack.c.h.b16 %v20
  %v160 = vunpack.c.l.b16 %v21
  %v161 = vunpack.c.h.b16 %v21
  %v162 = vunpack.c.l.b16 %v22
  %v163 = vunpack.c.h.b16 %v22
  %v164 = vunpack.c.l.b16 %v23
  %v165 = vunpack.c.h.b16 %v23
  %v166 = vunpack.c.l.b16 %v24
  %v167 = vunpack.c.h.b16 %v24
  %v168 = vunpack.c.l.b16 %v25
  %v169 = vunpack.c.h.b16 %v25
  %v170 = vunpack.c.l.b16 %v26
  %v171 = vunpack.c.h.b16 %v26
  %v172 = vunpack.c.l.b16 %v27
  %v173 = vunpack.c.h.b16 %v27
  %v174 = vunpack.c.l.b16 %v28
  %v175 = vunpack.c.h.b16 %v28
  %v176 = vunpack.c.l.b16 %v29
  %v177 = vunpack.c.h.b16 %v29
  %v178 = vunpack.c.l.b16 %v30
  %v179 = vunpack.c.h.b16 %v30
  %v180 = vunpack.c.l.b16 %v31
  %v181 = vunpack.c.h.b16 %v31
  %v182 = vunpack.c.l.b16 %v32
  %v183 = vunpack.c.h.b16 %v32
  %v184 = vunpack.c.l.b16 %v33
  %v185 = vunpack.c.h.b16 %v33
  %v186 = vunpack.c.l.b16 %v34
  %v187 = vunpack.c.h.b16 %v34
  %v188 = vunpack.c.l.b16 %v35
  %v189 = vunpack.c.h.b16 %v35
  %v190 = vunpack.c.l.b16 %v36
  %v191 = vunpack.c.h.b16 %v36
  %v192 = vunpack.c.l.b16 %v37
  %v193 = vunpack.c.h.b16 %v37
  %v194 = vunpack.c.l.b16 %v38
  %v195 = vunpack.c.h.b16 %v38
  %v196 = vunpack.c.l.b16 %v39
  %v197 = vunpack.c.h.b16 %v39
  %v198 = vunpack.c.l.b16 %v40
  %v199 = vunpack.c.h.b16 %v40
  %v200 = vunpack.c.l.b16 %v41
  %v201 = vunpack.c.h.b16 %v41
  %v202 = vunpack.c.l.b16 %v42
  %v203 = vunpack.c.h.b16 %v42
  %v204 = vunpack.c.l.b16 %v43
  %v205 = vunpack.c.h.b16 %v43
  %v206 = vunpack.c.l.b16 %v44
  %v207 = vunpack.c.h.b16 %v44
  %v208 = vunpack.c.l.b16 %v45
  %v209 = vunpack.c.h.b16 %v45
  %v210 = vpack.c.b16 %v150, %v146
  %v211 = vpack.c.b16 %v151, %v147
  %v212 = vpack.c.b16 %v152, %v148
  %v213 = vpack.c.b16 %v153, %v149
  %v214 = vpack.c.b16 %v158, %v154
  %v215 = vpack.c.b16 %v159, %v155
  %v216 = vpack.c.b16 %v160, %v156
  %v217 = vpack.c.b16 %v161, %v157
  %v218 = vpack.c.b16 %v166, %v162
  %v219 = vpack.c.b16 %v167, %v163
  %v220 = vpack.c.b16 %v168, %v164
  %v221 = vpack.c.b16 %v169, %v165
  %v222 = vpack.c.b16 %v174, %v170
  %v223 = vpack.c.b16 %v175, %v171
  %v224 = vpack.c.b16 %v176, %v172
  %v225 = vpack.c.b16 %v177, %v173
  %v226 = vpack.c.b16 %v182, %v178
  %v227 = vpack.c.b16 %v183, %v179
  %v228 = vpack.c.b16 %v184, %v180
  %v229 = vpack.c.b16 %v185, %v181
  %v230 = vpack.c.b16 %v190, %v186
  %v231 = vpack.c.b16 %v191, %v187
  %v232 = vpack.c.b16 %v192, %v188
  %v233 = vpack.c.b16 %v193, %v189
  %v234 = vpack.c.b16 %v198, %v194
  %v235 = vpack.c.b16 %v199, %v195
  %v236 = vpack.c.b16 %v200, %v196
  %v237 = vpack.c.b16 %v201, %v197
  %v238 = vpack.c.b16 %v206, %v202
  %v239 = vpack.c.b16 %v207, %v203
  %v240 = vpack.c.b16 %v208, %v204
  %v241 = vpack.c.b16 %v209, %v205
  %v338 = vunpack.c.l.b16 %v46
  %v339 = vunpack.c.l.b16 %v47
  %v340 = vunpack.c.l.b16 %v48
  %v341 = vunpack.c.l.b16 %v49
  %v342 = vunpack.c.l.b16 %v50
  %v343 = vunpack.c.l.b16 %v51
  %v344 = vunpack.c.l.b16 %v52
  %v345 = vunpack.c.l.b16 %v53
  %v346 = vunpack.c.l.b16 %v54
  %v347 = vunpack.c.l.b16 %v55
  %v348 = vunpack.c.l.b16 %v56
  %v349 = vunpack.c.l.b16 %v57
  %v350 = vunpack.c.l.b16 %v58
  %v351 = vunpack.c.l.b16 %v59
  %v352 = vunpack.c.l.b16 %v60
  %v353 = vunpack.c.l.b16 %v61
  %v354 = vunpack.c.l.b16 %v62
  %v355 = vunpack.c.l.b16 %v63
  %v356 = vunpack.c.l.b16 %v64
  %v357 = vunpack.c.l.b16 %v65
  %v358 = vunpack.c.l.b16 %v66
  %v359 = vunpack.c.l.b16 %v67
  %v360 = vunpack.c.l.b16 %v68
  %v361 = vunpack.c.l.b16 %v69
  %v362 = vunpack.c.l.b16 %v70
  %v363 = vunpack.c.l.b16 %v71
  %v364 = vunpack.c.l.b16 %v72
  %v365 = vunpack.c.l.b16 %v73
  %v366 = vunpack.c.l.b16 %v74
  %v367 = vunpack.c.l.b16 %v75
  %v368 = vunpack.c.l.b16 %v76
  %v369 = vunpack.c.l.b16 %v77
  %v370 = vunpack.c.l.b16 %v78
  %v371 = vunpack.c.l.b16 %v79
  %v372 = vunpack.c.l.b16 %v80
  %v373 = vunpack.c.l.b16 %v81
  %v374 = vunpack.c.l.b16 %v82
  %v375 = vunpack.c.l.b16 %v83
  %v376 = vunpack.c.l.b16 %v84
  %v377 = vunpack.c.l.b16 %v85
  %v378 = vunpack.c.l.b16 %v86
  %v379 = vunpack.c.l.b16 %v87
  %v380 = vunpack.c.l.b16 %v88
  %v381 = vunpack.c.l.b16 %v89
  %v382 = vunpack.c.l.b16 %v90
  %v383 = vunpack.c.l.b16 %v91
  %v384 = vunpack.c.l.b16 %v92
  %v385 = vunpack.c.l.b16 %v93
  %v386 = vunpack.c.l.b16 %v94
  %v387 = vunpack.c.l.b16 %v95
  %v388 = vunpack.c.l.b16 %v96
  %v389 = vunpack.c.l.b16 %v97
  %v390 = vunpack.c.l.b16 %v98
  %v391 = vunpack.c.l.b16 %v99
  %v392 = vunpack.c.l.b16 %v100
  %v393 = vunpack.c.l.b16 %v101
  %v394 = vunpack.c.l.b16 %v102
  %v395 = vunpack.c.l.b16 %v103
  %v396 = vunpack.c.l.b16 %v104
  %v397 = vunpack.c.l.b16 %v105
  %v398 = vunpack.c.l.b16 %v106
  %v399 = vunpack.c.l.b16 %v107
  %v400 = vunpack.c.l.b16 %v108
  %v401 = vunpack.c.l.b16 %v109
  %v402 = vpack.c.b16 %v339, %v338
  %v403 = vpack.c.b16 %v341, %v340
  %v404 = vpack.c.b16 %v343, %v342
  %v405 = vpack.c.b16 %v345, %v344
  %v406 = vpack.c.b16 %v347, %v346
  %v407 = vpack.c.b16 %v349, %v348
  %v408 = vpack.c.b16 %v351, %v350
  %v409 = vpack.c.b16 %v353, %v352
  %v410 = vpack.c.b16 %v355, %v354
  %v411 = vpack.c.b16 %v357, %v356
  %v412 = vpack.c.b16 %v359, %v358
  %v413 = vpack.c.b16 %v361, %v360
  %v414 = vpack.c.b16 %v363, %v362
  %v415 = vpack.c.b16 %v365, %v364
  %v416 = vpack.c.b16 %v367, %v366
  %v417 = vpack.c.b16 %v369, %v368
  %v418 = vpack.c.b16 %v371, %v370
  %v419 = vpack.c.b16 %v373, %v372
  %v420 = vpack.c.b16 %v375, %v374
  %v421 = vpack.c.b16 %v377, %v376
  %v422 = vpack.c.b16 %v379, %v378
  %v423 = vpack.c.b16 %v381, %v380
  %v424 = vpack.c.b16 %v383, %v382
  %v425 = vpack.c.b16 %v385, %v384
  %v426 = vpack.c.b16 %v387, %v386
  %v427 = vpack.c.b16 %v389, %v388
  %v428 = vpack.c.b16 %v391, %v390
  %v429 = vpack.c.b16 %v393, %v392
  %v430 = vpack.c.b16 %v395, %v394
  %v431 = vpack.c.b16 %v397, %v396
  %v432 = vpack.c.b16 %v399, %v398
  %v433 = vpack.c.b16 %v401, %v400
  %466 = vmatpush.bf16.msra.mxu0 %v409
  %467 = vmatpush.bf16.msra.mxu0 %v408
  %468 = vmatpush.bf16.msra.mxu0 %v407
  %469 = vmatpush.bf16.msra.mxu0 %v406
  %470 = vmatpush.bf16.msra.mxu0 %v405
  %471 = vmatpush.bf16.msra.mxu0 %v404
  %472 = vmatpush.bf16.msra.mxu0 %v403
  %473 = vmatpush.bf16.msra.mxu0 %v402
  %474 = vmatmul.bf16.gmra.mxu0 %v210
  %v475 = vpop.f32.mrf.mxu0
  %v476 = vadd.f32 %v112, %v475
  %v477 = vpop.f32.mrf.mxu0
  %v478 = vadd.f32 %v112, %v477
  %479 = vmatmul.bf16.gmra.mxu0 %v214
  %v480 = vpop.f32.mrf.mxu0
  %v481 = vadd.f32 %v112, %v480
  %v482 = vpop.f32.mrf.mxu0
  %v483 = vadd.f32 %v112, %v482
  %484 = vmatmul.bf16.gmra.mxu0 %v218
  %v485 = vpop.f32.mrf.mxu0
  %v486 = vadd.f32 %v112, %v485
  %v487 = vpop.f32.mrf.mxu0
  %v488 = vadd.f32 %v112, %v487
  %489 = vmatmul.bf16.gmra.mxu0 %v222
  %v490 = vpop.f32.mrf.mxu0
  %v491 = vadd.f32 %v112, %v490
  %v492 = vpop.f32.mrf.mxu0
  %v493 = vadd.f32 %v112, %v492
  %494 = vmatmul.bf16.gmra.mxu0 %v226
  %v495 = vpop.f32.mrf.mxu0
  %v496 = vadd.f32 %v112, %v495
  %v497 = vpop.f32.mrf.mxu0
  %v498 = vadd.f32 %v112, %v497
  %499 = vmatmul.bf16.gmra.mxu0 %v230
  %v500 = vpop.f32.mrf.mxu0
  %v501 = vadd.f32 %v112, %v500
  %v502 = vpop.f32.mrf.mxu0
  %v503 = vadd.f32 %v112, %v502
  %504 = vmatmul.bf16.gmra.mxu0 %v234
  %v505 = vpop.f32.mrf.mxu0
  %v506 = vadd.f32 %v112, %v505
  %v507 = vpop.f32.mrf.mxu0
  %v508 = vadd.f32 %v112, %v507
  %509 = vmatmul.bf16.gmra.mxu0 %v238
  %v510 = vpop.f32.mrf.mxu0
  %v511 = vadd.f32 %v112, %v510
  %v512 = vpop.f32.mrf.mxu0
  %v513 = vadd.f32 %v112, %v512
  %514 = vdwg.mxu0
  %515 = vmatpush.bf16.msra.mxu0 %v417
  %516 = vmatpush.bf16.msra.mxu0 %v416
  %517 = vmatpush.bf16.msra.mxu0 %v415
  %518 = vmatpush.bf16.msra.mxu0 %v414
  %519 = vmatpush.bf16.msra.mxu0 %v413
  %520 = vmatpush.bf16.msra.mxu0 %v412
  %521 = vmatpush.bf16.msra.mxu0 %v411
  %522 = vmatpush.bf16.msra.mxu0 %v410
  %523 = vmatmul.bf16.gmra.mxu0 %v211
  %v524 = vpop.f32.mrf.mxu0
  %v525 = vadd.f32 %v476, %v524
  %v526 = vpop.f32.mrf.mxu0
  %v527 = vadd.f32 %v478, %v526
  %528 = vmatmul.bf16.gmra.mxu0 %v215
  %v529 = vpop.f32.mrf.mxu0
  %v530 = vadd.f32 %v481, %v529
  %v531 = vpop.f32.mrf.mxu0
  %v532 = vadd.f32 %v483, %v531
  %533 = vmatmul.bf16.gmra.mxu0 %v219
  %v534 = vpop.f32.mrf.mxu0
  %v535 = vadd.f32 %v486, %v534
  %v536 = vpop.f32.mrf.mxu0
  %v537 = vadd.f32 %v488, %v536
  %538 = vmatmul.bf16.gmra.mxu0 %v223
  %v539 = vpop.f32.mrf.mxu0
  %v540 = vadd.f32 %v491, %v539
  %v541 = vpop.f32.mrf.mxu0
  %v542 = vadd.f32 %v493, %v541
  %543 = vmatmul.bf16.gmra.mxu0 %v227
  %v544 = vpop.f32.mrf.mxu0
  %v545 = vadd.f32 %v496, %v544
  %v546 = vpop.f32.mrf.mxu0
  %v547 = vadd.f32 %v498, %v546
  %548 = vmatmul.bf16.gmra.mxu0 %v231
  %v549 = vpop.f32.mrf.mxu0
  %v550 = vadd.f32 %v501, %v549
  %v551 = vpop.f32.mrf.mxu0
  %v552 = vadd.f32 %v503, %v551
  %553 = vmatmul.bf16.gmra.mxu0 %v235
  %v554 = vpop.f32.mrf.mxu0
  %v555 = vadd.f32 %v506, %v554
  %v556 = vpop.f32.mrf.mxu0
  %v557 = vadd.f32 %v508, %v556
  %558 = vmatmul.bf16.gmra.mxu0 %v239
  %v559 = vpop.f32.mrf.mxu0
  %v560 = vadd.f32 %v511, %v559
  %v561 = vpop.f32.mrf.mxu0
  %v562 = vadd.f32 %v513, %v561
  %563 = vdwg.mxu0
  %564 = vmatpush.bf16.msra.mxu0 %v425
  %565 = vmatpush.bf16.msra.mxu0 %v424
  %566 = vmatpush.bf16.msra.mxu0 %v423
  %567 = vmatpush.bf16.msra.mxu0 %v422
  %568 = vmatpush.bf16.msra.mxu0 %v421
  %569 = vmatpush.bf16.msra.mxu0 %v420
  %570 = vmatpush.bf16.msra.mxu0 %v419
  %571 = vmatpush.bf16.msra.mxu0 %v418
  %572 = vmatmul.bf16.gmra.mxu0 %v212
  %v573 = vpop.f32.mrf.mxu0
  %v574 = vadd.f32 %v525, %v573
  %v575 = vpop.f32.mrf.mxu0
  %v576 = vadd.f32 %v527, %v575
  %577 = vmatmul.bf16.gmra.mxu0 %v216
  %v578 = vpop.f32.mrf.mxu0
  %v579 = vadd.f32 %v530, %v578
  %v580 = vpop.f32.mrf.mxu0
  %v581 = vadd.f32 %v532, %v580
  %582 = vmatmul.bf16.gmra.mxu0 %v220
  %v583 = vpop.f32.mrf.mxu0
  %v584 = vadd.f32 %v535, %v583
  %v585 = vpop.f32.mrf.mxu0
  %v586 = vadd.f32 %v537, %v585
  %587 = vmatmul.bf16.gmra.mxu0 %v224
  %v588 = vpop.f32.mrf.mxu0
  %v589 = vadd.f32 %v540, %v588
  %v590 = vpop.f32.mrf.mxu0
  %v591 = vadd.f32 %v542, %v590
  %592 = vmatmul.bf16.gmra.mxu0 %v228
  %v593 = vpop.f32.mrf.mxu0
  %v594 = vadd.f32 %v545, %v593
  %v595 = vpop.f32.mrf.mxu0
  %v596 = vadd.f32 %v547, %v595
  %597 = vmatmul.bf16.gmra.mxu0 %v232
  %v598 = vpop.f32.mrf.mxu0
  %v599 = vadd.f32 %v550, %v598
  %v600 = vpop.f32.mrf.mxu0
  %v601 = vadd.f32 %v552, %v600
  %602 = vmatmul.bf16.gmra.mxu0 %v236
  %v603 = vpop.f32.mrf.mxu0
  %v604 = vadd.f32 %v555, %v603
  %v605 = vpop.f32.mrf.mxu0
  %v606 = vadd.f32 %v557, %v605
  %607 = vmatmul.bf16.gmra.mxu0 %v240
  %v608 = vpop.f32.mrf.mxu0
  %v609 = vadd.f32 %v560, %v608
  %v610 = vpop.f32.mrf.mxu0
  %v611 = vadd.f32 %v562, %v610
  %612 = vdwg.mxu0
  %613 = vmatpush.bf16.msra.mxu0 %v433
  %614 = vmatpush.bf16.msra.mxu0 %v432
  %615 = vmatpush.bf16.msra.mxu0 %v431
  %616 = vmatpush.bf16.msra.mxu0 %v430
  %617 = vmatpush.bf16.msra.mxu0 %v429
  %618 = vmatpush.bf16.msra.mxu0 %v428
  %619 = vmatpush.bf16.msra.mxu0 %v427
  %620 = vmatpush.bf16.msra.mxu0 %v426
  %621 = vmatmul.bf16.gmra.mxu0 %v213
  %v622 = vpop.f32.mrf.mxu0
  %v623 = vadd.f32 %v574, %v622
  %v624 = vpop.f32.mrf.mxu0
  %v625 = vadd.f32 %v576, %v624
  %626 = vmatmul.bf16.gmra.mxu0 %v217
  %v627 = vpop.f32.mrf.mxu0
  %v628 = vadd.f32 %v579, %v627
  %v629 = vpop.f32.mrf.mxu0
  %v630 = vadd.f32 %v581, %v629
  %631 = vmatmul.bf16.gmra.mxu0 %v221
  %v632 = vpop.f32.mrf.mxu0
  %v633 = vadd.f32 %v584, %v632
  %v634 = vpop.f32.mrf.mxu0
  %v635 = vadd.f32 %v586, %v634
  %636 = vmatmul.bf16.gmra.mxu0 %v225
  %v637 = vpop.f32.mrf.mxu0
  %v638 = vadd.f32 %v589, %v637
  %v639 = vpop.f32.mrf.mxu0
  %v640 = vadd.f32 %v591, %v639
  %641 = vmatmul.bf16.gmra.mxu0 %v229
  %v642 = vpop.f32.mrf.mxu0
  %v643 = vadd.f32 %v594, %v642
  %v644 = vpop.f32.mrf.mxu0
  %v645 = vadd.f32 %v596, %v644
  %646 = vmatmul.bf16.gmra.mxu0 %v233
  %v647 = vpop.f32.mrf.mxu0
  %v648 = vadd.f32 %v599, %v647
  %v649 = vpop.f32.mrf.mxu0
  %v650 = vadd.f32 %v601, %v649
  %651 = vmatmul.bf16.gmra.mxu0 %v237
  %v652 = vpop.f32.mrf.mxu0
  %v653 = vadd.f32 %v604, %v652
  %v654 = vpop.f32.mrf.mxu0
  %v655 = vadd.f32 %v606, %v654
  %656 = vmatmul.bf16.gmra.mxu0 %v241
  %v657 = vpop.f32.mrf.mxu0
  %v658 = vadd.f32 %v609, %v657
  %v659 = vpop.f32.mrf.mxu0
  %v660 = vadd.f32 %v611, %v659
  %661 = vdwg.mxu0
  %vm662 = vcmask 523264
  %663 = vst.msk [vmem:[%s3] sm:$0xff] %vm662, %v623
  %664 = vst.msk [vmem:[%s3 + $0x8] sm:$0xff] %vm662, %v625
  %665 = vst.msk [vmem:[%s3 + $0x10] sm:$0xff] %vm662, %v628
  %666 = vst.msk [vmem:[%s3 + $0x18] sm:$0xff] %vm662, %v630
  %667 = vst.msk [vmem:[%s3 + $0x20] sm:$0xff] %vm662, %v633
  %668 = vst.msk [vmem:[%s3 + $0x28] sm:$0xff] %vm662, %v635
  %669 = vst.msk [vmem:[%s3 + $0x30] sm:$0xff] %vm662, %v638
  %670 = vst.msk [vmem:[%s3 + $0x38] sm:$0xff] %vm662, %v640
  %671 = vst.msk [vmem:[%s3 + $0x40] sm:$0xff] %vm662, %v643
  %672 = vst.msk [vmem:[%s3 + $0x48] sm:$0xff] %vm662, %v645
  %673 = vst.msk [vmem:[%s3 + $0x50] sm:$0xff] %vm662, %v648
  %674 = vst.msk [vmem:[%s3 + $0x58] sm:$0xff] %vm662, %v650
  %675 = vst.msk [vmem:[%s3 + $0x60] sm:$0xff] %vm662, %v653
  %676 = vst.msk [vmem:[%s3 + $0x68] sm:$0xff] %vm662, %v655
  %677 = vst.msk [vmem:[%s3 + $0x70] sm:$0xff] %vm662, %v658
  %678 = vst.msk [vmem:[%s3 + $0x78] sm:$0xff] %vm662, %v660
  // Predicated region
  $region14: #{unet_forward.12} parent=0 // pred_check
    _
  $region15: #{unet_forward.12} parent=0 // pred_check_branch
    %680 = sbr.rel (0) target = $region17
  $region16: #{unet_forward.12} parent=0 // pred_region
    _
  $region17: #{unet_forward.12} parent=0 // pred_fallthru
    _
  // Predicated region
  $region18: #{unet_forward.12} parent=0 // pred_check
    _
  $region19: #{unet_forward.12} parent=0 // pred_check_branch
    %682 = sbr.rel (0) target = $region21
  $region20: #{unet_forward.12} parent=0 // pred_region
    _
  $region21: #{unet_forward.12} parent=0 // pred_fallthru
    _

// kernel: unet_forward.13
$region0: #{unet_forward.13}
  #allocation0 [shape = 'u32[]', space=smem, size = 0x4, offset = 0x4, fixed_abs, tag = 'smem constant byte address 0x4 - core index']
  #allocation1 [shape = 'u32[72,128]{1,0:T(1,128)}', space=vmem, size = 0x9000, scoped, tag = 'internal scratch']
  %s0 = inlined_call_operand.vmem [shape: bf16[32,1024], index: 0, kind: input, shape index: {}]
  %s1 = inlined_call_operand.vmem [shape: bf16[1024,128], index: 1, kind: input, shape index: {}]
  %s2 = inlined_call_operand.vmem [shape: f32[1,128], index: 2, kind: input, shape index: {}]
  %s3 = inlined_call_operand.vmem [shape: f32[32,128], index: 3, kind: output, shape index: {}]
  %s4 = sld [smem:[#allocation0]]
  $region22: #{unet_forward.13} parent=0
    _
  %s6 = ssub.s32 1, %s4
  %s7 = scalar_select 0, %s6, %s4
  // Predicated region
  $region2: #{unet_forward.13} parent=0 // pred_check
    _
  $region3: #{unet_forward.13} parent=0 // pred_check_branch
    %9 = sbr.rel (0) target = $region5
  $region4: #{unet_forward.13} parent=0 // pred_region
    _
  $region5: #{unet_forward.13} parent=0 // pred_fallthru
    _
  // Predicated region
  $region6: #{unet_forward.13} parent=0 // pred_check
    _
  $region7: #{unet_forward.13} parent=0 // pred_check_branch
    %11 = sbr.rel (0) target = $region9
  $region8: #{unet_forward.13} parent=0 // pred_region
    _
  $region9: #{unet_forward.13} parent=0 // pred_fallthru
    _
  // Predicated region
  $region10: #{unet_forward.13} parent=0 // pred_check
    _
  $region11: #{unet_forward.13} parent=0 // pred_check_branch
    %13 = sbr.rel (0) target = $region13
  $region12: #{unet_forward.13} parent=0 // pred_region
    _
  $region13: #{unet_forward.13} parent=0 // pred_fallthru
    _
  %v14 = vld [vmem:[%s0] sm:$0xff]
  %v15 = vld [vmem:[%s0 + $0x8] sm:$0xff]
  %v16 = vld [vmem:[%s0 + $0x10] sm:$0xff]
  %v17 = vld [vmem:[%s0 + $0x18] sm:$0xff]
  %v18 = vld [vmem:[%s0 + $0x20] sm:$0xff]
  %v19 = vld [vmem:[%s0 + $0x28] sm:$0xff]
  %v20 = vld [vmem:[%s0 + $0x30] sm:$0xff]
  %v21 = vld [vmem:[%s0 + $0x38] sm:$0xff]
  %v22 = vld [vmem:[%s0 + $0x40] sm:$0xff]
  %v23 = vld [vmem:[%s0 + $0x48] sm:$0xff]
  %v24 = vld [vmem:[%s0 + $0x50] sm:$0xff]
  %v25 = vld [vmem:[%s0 + $0x58] sm:$0xff]
  %v26 = vld [vmem:[%s0 + $0x60] sm:$0xff]
  %v27 = vld [vmem:[%s0 + $0x68] sm:$0xff]
  %v28 = vld [vmem:[%s0 + $0x70] sm:$0xff]
  %v29 = vld [vmem:[%s0 + $0x78] sm:$0xff]
  %v30 = vld [vmem:[%s1] sm:$0xf]
  %v31 = vld [vmem:[%s1 + $0x4] sm:$0xf]
  %v32 = vld [vmem:[%s1 + $0x8] sm:$0xf]
  %v33 = vld [vmem:[%s1 + $0xc] sm:$0xf]
  %v34 = vld [vmem:[%s1 + $0x10] sm:$0xf]
  %v35 = vld [vmem:[%s1 + $0x14] sm:$0xf]
  %v36 = vld [vmem:[%s1 + $0x18] sm:$0xf]
  %v37 = vld [vmem:[%s1 + $0x1c] sm:$0xf]
  %v38 = vld [vmem:[%s1 + $0x20] sm:$0xf]
  %v39 = vld [vmem:[%s1 + $0x24] sm:$0xf]
  %v40 = vld [vmem:[%s1 + $0x28] sm:$0xf]
  %v41 = vld [vmem:[%s1 + $0x2c] sm:$0xf]
  %v42 = vld [vmem:[%s1 + $0x30] sm:$0xf]
  %v43 = vld [vmem:[%s1 + $0x34] sm:$0xf]
  %v44 = vld [vmem:[%s1 + $0x38] sm:$0xf]
  %v45 = vld [vmem:[%s1 + $0x3c] sm:$0xf]
  %v46 = vld [vmem:[%s1 + $0x40] sm:$0xf]
  %v47 = vld [vmem:[%s1 + $0x44] sm:$0xf]
  %v48 = vld [vmem:[%s1 + $0x48] sm:$0xf]
  %v49 = vld [vmem:[%s1 + $0x4c] sm:$0xf]
  %v50 = vld [vmem:[%s1 + $0x50] sm:$0xf]
  %v51 = vld [vmem:[%s1 + $0x54] sm:$0xf]
  %v52 = vld [vmem:[%s1 + $0x58] sm:$0xf]
  %v53 = vld [vmem:[%s1 + $0x5c] sm:$0xf]
  %v54 = vld [vmem:[%s1 + $0x60] sm:$0xf]
  %v55 = vld [vmem:[%s1 + $0x64] sm:$0xf]
  %v56 = vld [vmem:[%s1 + $0x68] sm:$0xf]
  %v57 = vld [vmem:[%s1 + $0x6c] sm:$0xf]
  %v58 = vld [vmem:[%s1 + $0x70] sm:$0xf]
  %v59 = vld [vmem:[%s1 + $0x74] sm:$0xf]
  %v60 = vld [vmem:[%s1 + $0x78] sm:$0xf]
  %v61 = vld [vmem:[%s1 + $0x7c] sm:$0xf]
  %v62 = vld [vmem:[%s1 + $0x80] sm:$0xf]
  %v63 = vld [vmem:[%s1 + $0x84] sm:$0xf]
  %v64 = vld [vmem:[%s1 + $0x88] sm:$0xf]
  %v65 = vld [vmem:[%s1 + $0x8c] sm:$0xf]
  %v66 = vld [vmem:[%s1 + $0x90] sm:$0xf]
  %v67 = vld [vmem:[%s1 + $0x94] sm:$0xf]
  %v68 = vld [vmem:[%s1 + $0x98] sm:$0xf]
  %v69 = vld [vmem:[%s1 + $0x9c] sm:$0xf]
  %v70 = vld [vmem:[%s1 + $0xa0] sm:$0xf]
  %v71 = vld [vmem:[%s1 + $0xa4] sm:$0xf]
  %v72 = vld [vmem:[%s1 + $0xa8] sm:$0xf]
  %v73 = vld [vmem:[%s1 + $0xac] sm:$0xf]
  %v74 = vld [vmem:[%s1 + $0xb0] sm:$0xf]
  %v75 = vld [vmem:[%s1 + $0xb4] sm:$0xf]
  %v76 = vld [vmem:[%s1 + $0xb8] sm:$0xf]
  %v77 = vld [vmem:[%s1 + $0xbc] sm:$0xf]
  %v78 = vld [vmem:[%s1 + $0xc0] sm:$0xf]
  %v79 = vld [vmem:[%s1 + $0xc4] sm:$0xf]
  %v80 = vld [vmem:[%s1 + $0xc8] sm:$0xf]
  %v81 = vld [vmem:[%s1 + $0xcc] sm:$0xf]
  %v82 = vld [vmem:[%s1 + $0xd0] sm:$0xf]
  %v83 = vld [vmem:[%s1 + $0xd4] sm:$0xf]
  %v84 = vld [vmem:[%s1 + $0xd8] sm:$0xf]
  %v85 = vld [vmem:[%s1 + $0xdc] sm:$0xf]
  %v86 = vld [vmem:[%s1 + $0xe0] sm:$0xf]
  %v87 = vld [vmem:[%s1 + $0xe4] sm:$0xf]
  %v88 = vld [vmem:[%s1 + $0xe8] sm:$0xf]
  %v89 = vld [vmem:[%s1 + $0xec] sm:$0xf]
  %v90 = vld [vmem:[%s1 + $0xf0] sm:$0xf]
  %v91 = vld [vmem:[%s1 + $0xf4] sm:$0xf]
  %v92 = vld [vmem:[%s1 + $0xf8] sm:$0xf]
  %v93 = vld [vmem:[%s1 + $0xfc] sm:$0xf]
  %v94 = vld [vmem:[%s1 + $0x100] sm:$0xf]
  %v95 = vld [vmem:[%s1 + $0x104] sm:$0xf]
  %v96 = vld [vmem:[%s1 + $0x108] sm:$0xf]
  %v97 = vld [vmem:[%s1 + $0x10c] sm:$0xf]
  %v98 = vld [vmem:[%s1 + $0x110] sm:$0xf]
  %v99 = vld [vmem:[%s1 + $0x114] sm:$0xf]
  %v100 = vld [vmem:[%s1 + $0x118] sm:$0xf]
  %v101 = vld [vmem:[%s1 + $0x11c] sm:$0xf]
  %v102 = vld [vmem:[%s1 + $0x120] sm:$0xf]
  %v103 = vld [vmem:[%s1 + $0x124] sm:$0xf]
  %v104 = vld [vmem:[%s1 + $0x128] sm:$0xf]
  %v105 = vld [vmem:[%s1 + $0x12c] sm:$0xf]
  %v106 = vld [vmem:[%s1 + $0x130] sm:$0xf]
  %v107 = vld [vmem:[%s1 + $0x134] sm:$0xf]
  %v108 = vld [vmem:[%s1 + $0x138] sm:$0xf]
  %v109 = vld [vmem:[%s1 + $0x13c] sm:$0xf]
  %v110 = vld [vmem:[%s1 + $0x140] sm:$0xf]
  %v111 = vld [vmem:[%s1 + $0x144] sm:$0xf]
  %v112 = vld [vmem:[%s1 + $0x148] sm:$0xf]
  %v113 = vld [vmem:[%s1 + $0x14c] sm:$0xf]
  %v114 = vld [vmem:[%s1 + $0x150] sm:$0xf]
  %v115 = vld [vmem:[%s1 + $0x154] sm:$0xf]
  %v116 = vld [vmem:[%s1 + $0x158] sm:$0xf]
  %v117 = vld [vmem:[%s1 + $0x15c] sm:$0xf]
  %v118 = vld [vmem:[%s1 + $0x160] sm:$0xf]
  %v119 = vld [vmem:[%s1 + $0x164] sm:$0xf]
  %v120 = vld [vmem:[%s1 + $0x168] sm:$0xf]
  %v121 = vld [vmem:[%s1 + $0x16c] sm:$0xf]
  %v122 = vld [vmem:[%s1 + $0x170] sm:$0xf]
  %v123 = vld [vmem:[%s1 + $0x174] sm:$0xf]
  %v124 = vld [vmem:[%s1 + $0x178] sm:$0xf]
  %v125 = vld [vmem:[%s1 + $0x17c] sm:$0xf]
  %v126 = vld [vmem:[%s1 + $0x180] sm:$0xf]
  %v127 = vld [vmem:[%s1 + $0x184] sm:$0xf]
  %v128 = vld [vmem:[%s1 + $0x188] sm:$0xf]
  %v129 = vld [vmem:[%s1 + $0x18c] sm:$0xf]
  %v130 = vld [vmem:[%s1 + $0x190] sm:$0xf]
  %v131 = vld [vmem:[%s1 + $0x194] sm:$0xf]
  %v132 = vld [vmem:[%s1 + $0x198] sm:$0xf]
  %v133 = vld [vmem:[%s1 + $0x19c] sm:$0xf]
  %v134 = vld [vmem:[%s1 + $0x1a0] sm:$0xf]
  %v135 = vld [vmem:[%s1 + $0x1a4] sm:$0xf]
  %v136 = vld [vmem:[%s1 + $0x1a8] sm:$0xf]
  %v137 = vld [vmem:[%s1 + $0x1ac] sm:$0xf]
  %v138 = vld [vmem:[%s1 + $0x1b0] sm:$0xf]
  %v139 = vld [vmem:[%s1 + $0x1b4] sm:$0xf]
  %v140 = vld [vmem:[%s1 + $0x1b8] sm:$0xf]
  %v141 = vld [vmem:[%s1 + $0x1bc] sm:$0xf]
  %v142 = vld [vmem:[%s1 + $0x1c0] sm:$0xf]
  %v143 = vld [vmem:[%s1 + $0x1c4] sm:$0xf]
  %v144 = vld [vmem:[%s1 + $0x1c8] sm:$0xf]
  %v145 = vld [vmem:[%s1 + $0x1cc] sm:$0xf]
  %v146 = vld [vmem:[%s1 + $0x1d0] sm:$0xf]
  %v147 = vld [vmem:[%s1 + $0x1d4] sm:$0xf]
  %v148 = vld [vmem:[%s1 + $0x1d8] sm:$0xf]
  %v149 = vld [vmem:[%s1 + $0x1dc] sm:$0xf]
  %v150 = vld [vmem:[%s1 + $0x1e0] sm:$0xf]
  %v151 = vld [vmem:[%s1 + $0x1e4] sm:$0xf]
  %v152 = vld [vmem:[%s1 + $0x1e8] sm:$0xf]
  %v153 = vld [vmem:[%s1 + $0x1ec] sm:$0xf]
  %v154 = vld [vmem:[%s1 + $0x1f0] sm:$0xf]
  %v155 = vld [vmem:[%s1 + $0x1f4] sm:$0xf]
  %v156 = vld [vmem:[%s1 + $0x1f8] sm:$0xf]
  %v157 = vld [vmem:[%s1 + $0x1fc] sm:$0xf]
  %v158 = vld [vmem:[%s2] sm:$0x1]
  %v160 = vperm.slane %v158, 0
  %v178 = vunpack.c.l.b16 %v14
  %v179 = vunpack.c.h.b16 %v14
  %v180 = vunpack.c.l.b16 %v15
  %v181 = vunpack.c.h.b16 %v15
  %v182 = vunpack.c.l.b16 %v16
  %v183 = vunpack.c.h.b16 %v16
  %v184 = vunpack.c.l.b16 %v17
  %v185 = vunpack.c.h.b16 %v17
  %v186 = vunpack.c.l.b16 %v18
  %v187 = vunpack.c.h.b16 %v18
  %v188 = vunpack.c.l.b16 %v19
  %v189 = vunpack.c.h.b16 %v19
  %v190 = vunpack.c.l.b16 %v20
  %v191 = vunpack.c.h.b16 %v20
  %v192 = vunpack.c.l.b16 %v21
  %v193 = vunpack.c.h.b16 %v21
  %v194 = vunpack.c.l.b16 %v22
  %v195 = vunpack.c.h.b16 %v22
  %v196 = vunpack.c.l.b16 %v23
  %v197 = vunpack.c.h.b16 %v23
  %v198 = vunpack.c.l.b16 %v24
  %v199 = vunpack.c.h.b16 %v24
  %v200 = vunpack.c.l.b16 %v25
  %v201 = vunpack.c.h.b16 %v25
  %v202 = vunpack.c.l.b16 %v26
  %v203 = vunpack.c.h.b16 %v26
  %v204 = vunpack.c.l.b16 %v27
  %v205 = vunpack.c.h.b16 %v27
  %v206 = vunpack.c.l.b16 %v28
  %v207 = vunpack.c.h.b16 %v28
  %v208 = vunpack.c.l.b16 %v29
  %v209 = vunpack.c.h.b16 %v29
  %v210 = vpack.c.b16 %v186, %v178
  %v211 = vpack.c.b16 %v187, %v179
  %v212 = vpack.c.b16 %v188, %v180
  %v213 = vpack.c.b16 %v189, %v181
  %v214 = vpack.c.b16 %v190, %v182
  %v215 = vpack.c.b16 %v191, %v183
  %v216 = vpack.c.b16 %v192, %v184
  %v217 = vpack.c.b16 %v193, %v185
  %v218 = vpack.c.b16 %v202, %v194
  %v219 = vpack.c.b16 %v203, %v195
  %v220 = vpack.c.b16 %v204, %v196
  %v221 = vpack.c.b16 %v205, %v197
  %v222 = vpack.c.b16 %v206, %v198
  %v223 = vpack.c.b16 %v207, %v199
  %v224 = vpack.c.b16 %v208, %v200
  %v225 = vpack.c.b16 %v209, %v201
  %v370 = vunpack.c.l.b16 %v30
  %v371 = vunpack.c.l.b16 %v31
  %v372 = vunpack.c.l.b16 %v32
  %v373 = vunpack.c.l.b16 %v33
  %v374 = vunpack.c.l.b16 %v34
  %v375 = vunpack.c.l.b16 %v35
  %v376 = vunpack.c.l.b16 %v36
  %v377 = vunpack.c.l.b16 %v37
  %v378 = vunpack.c.l.b16 %v38
  %v379 = vunpack.c.l.b16 %v39
  %v380 = vunpack.c.l.b16 %v40
  %v381 = vunpack.c.l.b16 %v41
  %v382 = vunpack.c.l.b16 %v42
  %v383 = vunpack.c.l.b16 %v43
  %v384 = vunpack.c.l.b16 %v44
  %v385 = vunpack.c.l.b16 %v45
  %v386 = vunpack.c.l.b16 %v46
  %v387 = vunpack.c.l.b16 %v47
  %v388 = vunpack.c.l.b16 %v48
  %v389 = vunpack.c.l.b16 %v49
  %v390 = vunpack.c.l.b16 %v50
  %v391 = vunpack.c.l.b16 %v51
  %v392 = vunpack.c.l.b16 %v52
  %v393 = vunpack.c.l.b16 %v53
  %v394 = vunpack.c.l.b16 %v54
  %v395 = vunpack.c.l.b16 %v55
  %v396 = vunpack.c.l.b16 %v56
  %v397 = vunpack.c.l.b16 %v57
  %v398 = vunpack.c.l.b16 %v58
  %v399 = vunpack.c.l.b16 %v59
  %v400 = vunpack.c.l.b16 %v60
  %v401 = vunpack.c.l.b16 %v61
  %v402 = vunpack.c.l.b16 %v62
  %v403 = vunpack.c.l.b16 %v63
  %v404 = vunpack.c.l.b16 %v64
  %v405 = vunpack.c.l.b16 %v65
  %v406 = vunpack.c.l.b16 %v66
  %v407 = vunpack.c.l.b16 %v67
  %v408 = vunpack.c.l.b16 %v68
  %v409 = vunpack.c.l.b16 %v69
  %v410 = vunpack.c.l.b16 %v70
  %v411 = vunpack.c.l.b16 %v71
  %v412 = vunpack.c.l.b16 %v72
  %v413 = vunpack.c.l.b16 %v73
  %v414 = vunpack.c.l.b16 %v74
  %v415 = vunpack.c.l.b16 %v75
  %v416 = vunpack.c.l.b16 %v76
  %v417 = vunpack.c.l.b16 %v77
  %v418 = vunpack.c.l.b16 %v78
  %v419 = vunpack.c.l.b16 %v79
  %v420 = vunpack.c.l.b16 %v80
  %v421 = vunpack.c.l.b16 %v81
  %v422 = vunpack.c.l.b16 %v82
  %v423 = vunpack.c.l.b16 %v83
  %v424 = vunpack.c.l.b16 %v84
  %v425 = vunpack.c.l.b16 %v85
  %v426 = vunpack.c.l.b16 %v86
  %v427 = vunpack.c.l.b16 %v87
  %v428 = vunpack.c.l.b16 %v88
  %v429 = vunpack.c.l.b16 %v89
  %v430 = vunpack.c.l.b16 %v90
  %v431 = vunpack.c.l.b16 %v91
  %v432 = vunpack.c.l.b16 %v92
  %v433 = vunpack.c.l.b16 %v93
  %v434 = vunpack.c.l.b16 %v94
  %v435 = vunpack.c.l.b16 %v95
  %v436 = vunpack.c.l.b16 %v96
  %v437 = vunpack.c.l.b16 %v97
  %v438 = vunpack.c.l.b16 %v98
  %v439 = vunpack.c.l.b16 %v99
  %v440 = vunpack.c.l.b16 %v100
  %v441 = vunpack.c.l.b16 %v101
  %v442 = vunpack.c.l.b16 %v102
  %v443 = vunpack.c.l.b16 %v103
  %v444 = vunpack.c.l.b16 %v104
  %v445 = vunpack.c.l.b16 %v105
  %v446 = vunpack.c.l.b16 %v106
  %v447 = vunpack.c.l.b16 %v107
  %v448 = vunpack.c.l.b16 %v108
  %v449 = vunpack.c.l.b16 %v109
  %v450 = vunpack.c.l.b16 %v110
  %v451 = vunpack.c.l.b16 %v111
  %v452 = vunpack.c.l.b16 %v112
  %v453 = vunpack.c.l.b16 %v113
  %v454 = vunpack.c.l.b16 %v114
  %v455 = vunpack.c.l.b16 %v115
  %v456 = vunpack.c.l.b16 %v116
  %v457 = vunpack.c.l.b16 %v117
  %v458 = vunpack.c.l.b16 %v118
  %v459 = vunpack.c.l.b16 %v119
  %v460 = vunpack.c.l.b16 %v120
  %v461 = vunpack.c.l.b16 %v121
  %v462 = vunpack.c.l.b16 %v122
  %v463 = vunpack.c.l.b16 %v123
  %v464 = vunpack.c.l.b16 %v124
  %v465 = vunpack.c.l.b16 %v125
  %v466 = vunpack.c.l.b16 %v126
  %v467 = vunpack.c.l.b16 %v127
  %v468 = vunpack.c.l.b16 %v128
  %v469 = vunpack.c.l.b16 %v129
  %v470 = vunpack.c.l.b16 %v130
  %v471 = vunpack.c.l.b16 %v131
  %v472 = vunpack.c.l.b16 %v132
  %v473 = vunpack.c.l.b16 %v133
  %v474 = vunpack.c.l.b16 %v134
  %v475 = vunpack.c.l.b16 %v135
  %v476 = vunpack.c.l.b16 %v136
  %v477 = vunpack.c.l.b16 %v137
  %v478 = vunpack.c.l.b16 %v138
  %v479 = vunpack.c.l.b16 %v139
  %v480 = vunpack.c.l.b16 %v140
  %v481 = vunpack.c.l.b16 %v141
  %v482 = vunpack.c.l.b16 %v142
  %v483 = vunpack.c.l.b16 %v143
  %v484 = vunpack.c.l.b16 %v144
  %v485 = vunpack.c.l.b16 %v145
  %v486 = vunpack.c.l.b16 %v146
  %v487 = vunpack.c.l.b16 %v147
  %v488 = vunpack.c.l.b16 %v148
  %v489 = vunpack.c.l.b16 %v149
  %v490 = vunpack.c.l.b16 %v150
  %v491 = vunpack.c.l.b16 %v151
  %v492 = vunpack.c.l.b16 %v152
  %v493 = vunpack.c.l.b16 %v153
  %v494 = vunpack.c.l.b16 %v154
  %v495 = vunpack.c.l.b16 %v155
  %v496 = vunpack.c.l.b16 %v156
  %v497 = vunpack.c.l.b16 %v157
  %v498 = vpack.c.b16 %v371, %v370
  %v499 = vpack.c.b16 %v373, %v372
  %v500 = vpack.c.b16 %v375, %v374
  %v501 = vpack.c.b16 %v377, %v376
  %v502 = vpack.c.b16 %v379, %v378
  %v503 = vpack.c.b16 %v381, %v380
  %v504 = vpack.c.b16 %v383, %v382
  %v505 = vpack.c.b16 %v385, %v384
  %v506 = vpack.c.b16 %v387, %v386
  %v507 = vpack.c.b16 %v389, %v388
  %v508 = vpack.c.b16 %v391, %v390
  %v509 = vpack.c.b16 %v393, %v392
  %v510 = vpack.c.b16 %v395, %v394
  %v511 = vpack.c.b16 %v397, %v396
  %v512 = vpack.c.b16 %v399, %v398
  %v513 = vpack.c.b16 %v401, %v400
  %v514 = vpack.c.b16 %v403, %v402
  %v515 = vpack.c.b16 %v405, %v404
  %v516 = vpack.c.b16 %v407, %v406
  %v517 = vpack.c.b16 %v409, %v408
  %v518 = vpack.c.b16 %v411, %v410
  %v519 = vpack.c.b16 %v413, %v412
  %v520 = vpack.c.b16 %v415, %v414
  %v521 = vpack.c.b16 %v417, %v416
  %v522 = vpack.c.b16 %v419, %v418
  %v523 = vpack.c.b16 %v421, %v420
  %v524 = vpack.c.b16 %v423, %v422
  %v525 = vpack.c.b16 %v425, %v424
  %v526 = vpack.c.b16 %v427, %v426
  %v527 = vpack.c.b16 %v429, %v428
  %v528 = vpack.c.b16 %v431, %v430
  %v529 = vpack.c.b16 %v433, %v432
  %v530 = vpack.c.b16 %v435, %v434
  %v531 = vpack.c.b16 %v437, %v436
  %v532 = vpack.c.b16 %v439, %v438
  %v533 = vpack.c.b16 %v441, %v440
  %v534 = vpack.c.b16 %v443, %v442
  %v535 = vpack.c.b16 %v445, %v444
  %v536 = vpack.c.b16 %v447, %v446
  %v537 = vpack.c.b16 %v449, %v448
  %v538 = vpack.c.b16 %v451, %v450
  %v539 = vpack.c.b16 %v453, %v452
  %v540 = vpack.c.b16 %v455, %v454
  %v541 = vpack.c.b16 %v457, %v456
  %v542 = vpack.c.b16 %v459, %v458
  %v543 = vpack.c.b16 %v461, %v460
  %v544 = vpack.c.b16 %v463, %v462
  %v545 = vpack.c.b16 %v465, %v464
  %v546 = vpack.c.b16 %v467, %v466
  %v547 = vpack.c.b16 %v469, %v468
  %v548 = vpack.c.b16 %v471, %v470
  %v549 = vpack.c.b16 %v473, %v472
  %v550 = vpack.c.b16 %v475, %v474
  %v551 = vpack.c.b16 %v477, %v476
  %v552 = vpack.c.b16 %v479, %v478
  %v553 = vpack.c.b16 %v481, %v480
  %v554 = vpack.c.b16 %v483, %v482
  %v555 = vpack.c.b16 %v485, %v484
  %v556 = vpack.c.b16 %v487, %v486
  %v557 = vpack.c.b16 %v489, %v488
  %v558 = vpack.c.b16 %v491, %v490
  %v559 = vpack.c.b16 %v493, %v492
  %v560 = vpack.c.b16 %v495, %v494
  %v561 = vpack.c.b16 %v497, %v496
  %626 = vmatpush.bf16.msra.mxu0 %v505
  %627 = vmatpush.bf16.msra.mxu0 %v504
  %628 = vmatpush.bf16.msra.mxu0 %v503
  %629 = vmatpush.bf16.msra.mxu0 %v502
  %630 = vmatpush.bf16.msra.mxu0 %v501
  %631 = vmatpush.bf16.msra.mxu0 %v500
  %632 = vmatpush.bf16.msra.mxu0 %v499
  %633 = vmatpush.bf16.msra.mxu0 %v498
  %634 = vmatmul.bf16.gmra.mxu0 %v210
  %v635 = vpop.f32.mrf.mxu0
  %v636 = vadd.f32 %v160, %v635
  %v637 = vpop.f32.mrf.mxu0
  %v638 = vadd.f32 %v160, %v637
  %639 = vmatmul.bf16.gmra.mxu0 %v218
  %v640 = vpop.f32.mrf.mxu0
  %v641 = vadd.f32 %v160, %v640
  %v642 = vpop.f32.mrf.mxu0
  %v643 = vadd.f32 %v160, %v642
  %644 = vdwg.mxu0
  %645 = vmatpush.bf16.msra.mxu0 %v513
  %646 = vmatpush.bf16.msra.mxu0 %v512
  %647 = vmatpush.bf16.msra.mxu0 %v511
  %648 = vmatpush.bf16.msra.mxu0 %v510
  %649 = vmatpush.bf16.msra.mxu0 %v509
  %650 = vmatpush.bf16.msra.mxu0 %v508
  %651 = vmatpush.bf16.msra.mxu0 %v507
  %652 = vmatpush.bf16.msra.mxu0 %v506
  %653 = vmatmul.bf16.gmra.mxu0 %v211
  %v654 = vpop.f32.mrf.mxu0
  %v655 = vadd.f32 %v636, %v654
  %v656 = vpop.f32.mrf.mxu0
  %v657 = vadd.f32 %v638, %v656
  %658 = vmatmul.bf16.gmra.mxu0 %v219
  %v659 = vpop.f32.mrf.mxu0
  %v660 = vadd.f32 %v641, %v659
  %v661 = vpop.f32.mrf.mxu0
  %v662 = vadd.f32 %v643, %v661
  %663 = vdwg.mxu0
  %664 = vmatpush.bf16.msra.mxu0 %v521
  %665 = vmatpush.bf16.msra.mxu0 %v520
  %666 = vmatpush.bf16.msra.mxu0 %v519
  %667 = vmatpush.bf16.msra.mxu0 %v518
  %668 = vmatpush.bf16.msra.mxu0 %v517
  %669 = vmatpush.bf16.msra.mxu0 %v516
  %670 = vmatpush.bf16.msra.mxu0 %v515
  %671 = vmatpush.bf16.msra.mxu0 %v514
  %672 = vmatmul.bf16.gmra.mxu0 %v212
  %v673 = vpop.f32.mrf.mxu0
  %v674 = vadd.f32 %v655, %v673
  %v675 = vpop.f32.mrf.mxu0
  %v676 = vadd.f32 %v657, %v675
  %677 = vmatmul.bf16.gmra.mxu0 %v220
  %v678 = vpop.f32.mrf.mxu0
  %v679 = vadd.f32 %v660, %v678
  %v680 = vpop.f32.mrf.mxu0
  %v681 = vadd.f32 %v662, %v680
  %682 = vdwg.mxu0
  %683 = vmatpush.bf16.msra.mxu0 %v529
  %684 = vmatpush.bf16.msra.mxu0 %v528
  %685 = vmatpush.bf16.msra.mxu0 %v527
  %686 = vmatpush.bf16.msra.mxu0 %v526
  %687 = vmatpush.bf16.msra.mxu0 %v525
  %688 = vmatpush.bf16.msra.mxu0 %v524
  %689 = vmatpush.bf16.msra.mxu0 %v523
  %690 = vmatpush.bf16.msra.mxu0 %v522
  %691 = vmatmul.bf16.gmra.mxu0 %v213
  %v692 = vpop.f32.mrf.mxu0
  %v693 = vadd.f32 %v674, %v692
  %v694 = vpop.f32.mrf.mxu0
  %v695 = vadd.f32 %v676, %v694
  %696 = vmatmul.bf16.gmra.mxu0 %v221
  %v697 = vpop.f32.mrf.mxu0
  %v698 = vadd.f32 %v679, %v697
  %v699 = vpop.f32.mrf.mxu0
  %v700 = vadd.f32 %v681, %v699
  %701 = vdwg.mxu0
  %702 = vmatpush.bf16.msra.mxu0 %v537
  %703 = vmatpush.bf16.msra.mxu0 %v536
  %704 = vmatpush.bf16.msra.mxu0 %v535
  %705 = vmatpush.bf16.msra.mxu0 %v534
  %706 = vmatpush.bf16.msra.mxu0 %v533
  %707 = vmatpush.bf16.msra.mxu0 %v532
  %708 = vmatpush.bf16.msra.mxu0 %v531
  %709 = vmatpush.bf16.msra.mxu0 %v530
  %710 = vmatmul.bf16.gmra.mxu0 %v214
  %v711 = vpop.f32.mrf.mxu0
  %v712 = vadd.f32 %v693, %v711
  %v713 = vpop.f32.mrf.mxu0
  %v714 = vadd.f32 %v695, %v713
  %715 = vmatmul.bf16.gmra.mxu0 %v222
  %v716 = vpop.f32.mrf.mxu0
  %v717 = vadd.f32 %v698, %v716
  %v718 = vpop.f32.mrf.mxu0
  %v719 = vadd.f32 %v700, %v718
  %720 = vdwg.mxu0
  %721 = vmatpush.bf16.msra.mxu0 %v545
  %722 = vmatpush.bf16.msra.mxu0 %v544
  %723 = vmatpush.bf16.msra.mxu0 %v543
  %724 = vmatpush.bf16.msra.mxu0 %v542
  %725 = vmatpush.bf16.msra.mxu0 %v541
  %726 = vmatpush.bf16.msra.mxu0 %v540
  %727 = vmatpush.bf16.msra.mxu0 %v539
  %728 = vmatpush.bf16.msra.mxu0 %v538
  %729 = vmatmul.bf16.gmra.mxu0 %v215
  %v730 = vpop.f32.mrf.mxu0
  %v731 = vadd.f32 %v712, %v730
  %v732 = vpop.f32.mrf.mxu0
  %v733 = vadd.f32 %v714, %v732
  %734 = vmatmul.bf16.gmra.mxu0 %v223
  %v735 = vpop.f32.mrf.mxu0
  %v736 = vadd.f32 %v717, %v735
  %v737 = vpop.f32.mrf.mxu0
  %v738 = vadd.f32 %v719, %v737
  %739 = vdwg.mxu0
  %740 = vmatpush.bf16.msra.mxu0 %v553
  %741 = vmatpush.bf16.msra.mxu0 %v552
  %742 = vmatpush.bf16.msra.mxu0 %v551
  %743 = vmatpush.bf16.msra.mxu0 %v550
  %744 = vmatpush.bf16.msra.mxu0 %v549
  %745 = vmatpush.bf16.msra.mxu0 %v548
  %746 = vmatpush.bf16.msra.mxu0 %v547
  %747 = vmatpush.bf16.msra.mxu0 %v546
  %748 = vmatmul.bf16.gmra.mxu0 %v216
  %v749 = vpop.f32.mrf.mxu0
  %v750 = vadd.f32 %v731, %v749
  %v751 = vpop.f32.mrf.mxu0
  %v752 = vadd.f32 %v733, %v751
  %753 = vmatmul.bf16.gmra.mxu0 %v224
  %v754 = vpop.f32.mrf.mxu0
  %v755 = vadd.f32 %v736, %v754
  %v756 = vpop.f32.mrf.mxu0
  %v757 = vadd.f32 %v738, %v756
  %758 = vdwg.mxu0
  %759 = vmatpush.bf16.msra.mxu0 %v561
  %760 = vmatpush.bf16.msra.mxu0 %v560
  %761 = vmatpush.bf16.msra.mxu0 %v559
  %762 = vmatpush.bf16.msra.mxu0 %v558
  %763 = vmatpush.bf16.msra.mxu0 %v557
  %764 = vmatpush.bf16.msra.mxu0 %v556
  %765 = vmatpush.bf16.msra.mxu0 %v555
  %766 = vmatpush.bf16.msra.mxu0 %v554
  %767 = vmatmul.bf16.gmra.mxu0 %v217
  %v768 = vpop.f32.mrf.mxu0
  %v769 = vadd.f32 %v750, %v768
  %v770 = vpop.f32.mrf.mxu0
  %v771 = vadd.f32 %v752, %v770
  %772 = vmatmul.bf16.gmra.mxu0 %v225
  %v773 = vpop.f32.mrf.mxu0
  %v774 = vadd.f32 %v755, %v773
  %v775 = vpop.f32.mrf.mxu0
  %v776 = vadd.f32 %v757, %v775
  %777 = vdwg.mxu0
  %778 = vst [vmem:[%s3] sm:$0xff] %v769
  %779 = vst [vmem:[%s3 + $0x8] sm:$0xff] %v771
  %780 = vst [vmem:[%s3 + $0x10] sm:$0xff] %v774
  %781 = vst [vmem:[%s3 + $0x18] sm:$0xff] %v776
  // Predicated region
  $region14: #{unet_forward.13} parent=0 // pred_check
    _
  $region15: #{unet_forward.13} parent=0 // pred_check_branch
    %783 = sbr.rel (0) target = $region17
  $region16: #{unet_forward.13} parent=0 // pred_region
    _
  $region17: #{unet_forward.13} parent=0 // pred_fallthru
    _
  // Predicated region
  $region18: #{unet_forward.13} parent=0 // pred_check
    _
  $region19: #{unet_forward.13} parent=0 // pred_check_branch
    %785 = sbr.rel (0) target = $region21
  $region20: #{unet_forward.13} parent=0 // pred_region
    _
  $region21: #{unet_forward.13} parent=0 // pred_fallthru
    _

// kernel: unet_forward.14
$region0: #{unet_forward.14}
  #allocation0 [shape = 'u32[]', space=smem, size = 0x4, offset = 0x4, fixed_abs, tag = 'smem constant byte address 0x4 - core index']
  #allocation1 [shape = 'u32[72,128]{1,0:T(1,128)}', space=vmem, size = 0x9000, scoped, tag = 'internal scratch']
  %s0 = inlined_call_operand.vmem [shape: bf16[64,512], index: 0, kind: input, shape index: {}]
  %s1 = inlined_call_operand.vmem [shape: bf16[512,128], index: 1, kind: input, shape index: {}]
  %s2 = inlined_call_operand.vmem [shape: f32[1,128], index: 2, kind: input, shape index: {}]
  %s3 = inlined_call_operand.vmem [shape: f32[64,128], index: 3, kind: output, shape index: {}]
  %s4 = sld [smem:[#allocation0]]
  $region22: #{unet_forward.14} parent=0
    _
  %s6 = ssub.s32 1, %s4
  %s7 = scalar_select 0, %s6, %s4
  // Predicated region
  $region2: #{unet_forward.14} parent=0 // pred_check
    _
  $region3: #{unet_forward.14} parent=0 // pred_check_branch
    %9 = sbr.rel (0) target = $region5
  $region4: #{unet_forward.14} parent=0 // pred_region
    _
  $region5: #{unet_forward.14} parent=0 // pred_fallthru
    _
  // Predicated region
  $region6: #{unet_forward.14} parent=0 // pred_check
    _
  $region7: #{unet_forward.14} parent=0 // pred_check_branch
    %11 = sbr.rel (0) target = $region9
  $region8: #{unet_forward.14} parent=0 // pred_region
    _
  $region9: #{unet_forward.14} parent=0 // pred_fallthru
    _
  // Predicated region
  $region10: #{unet_forward.14} parent=0 // pred_check
    _
  $region11: #{unet_forward.14} parent=0 // pred_check_branch
    %13 = sbr.rel (0) target = $region13
  $region12: #{unet_forward.14} parent=0 // pred_region
    _
  $region13: #{unet_forward.14} parent=0 // pred_fallthru
    _
  %v14 = vld [vmem:[%s0] sm:$0xff]
  %v15 = vld [vmem:[%s0 + $0x8] sm:$0xff]
  %v16 = vld [vmem:[%s0 + $0x10] sm:$0xff]
  %v17 = vld [vmem:[%s0 + $0x18] sm:$0xff]
  %v18 = vld [vmem:[%s0 + $0x20] sm:$0xff]
  %v19 = vld [vmem:[%s0 + $0x28] sm:$0xff]
  %v20 = vld [vmem:[%s0 + $0x30] sm:$0xff]
  %v21 = vld [vmem:[%s0 + $0x38] sm:$0xff]
  %v22 = vld [vmem:[%s0 + $0x40] sm:$0xff]
  %v23 = vld [vmem:[%s0 + $0x48] sm:$0xff]
  %v24 = vld [vmem:[%s0 + $0x50] sm:$0xff]
  %v25 = vld [vmem:[%s0 + $0x58] sm:$0xff]
  %v26 = vld [vmem:[%s0 + $0x60] sm:$0xff]
  %v27 = vld [vmem:[%s0 + $0x68] sm:$0xff]
  %v28 = vld [vmem:[%s0 + $0x70] sm:$0xff]
  %v29 = vld [vmem:[%s0 + $0x78] sm:$0xff]
  %v30 = vld [vmem:[%s1] sm:$0xf]
  %v31 = vld [vmem:[%s1 + $0x4] sm:$0xf]
  %v32 = vld [vmem:[%s1 + $0x8] sm:$0xf]
  %v33 = vld [vmem:[%s1 + $0xc] sm:$0xf]
  %v34 = vld [vmem:[%s1 + $0x10] sm:$0xf]
  %v35 = vld [vmem:[%s1 + $0x14] sm:$0xf]
  %v36 = vld [vmem:[%s1 + $0x18] sm:$0xf]
  %v37 = vld [vmem:[%s1 + $0x1c] sm:$0xf]
  %v38 = vld [vmem:[%s1 + $0x20] sm:$0xf]
  %v39 = vld [vmem:[%s1 + $0x24] sm:$0xf]
  %v40 = vld [vmem:[%s1 + $0x28] sm:$0xf]
  %v41 = vld [vmem:[%s1 + $0x2c] sm:$0xf]
  %v42 = vld [vmem:[%s1 + $0x30] sm:$0xf]
  %v43 = vld [vmem:[%s1 + $0x34] sm:$0xf]
  %v44 = vld [vmem:[%s1 + $0x38] sm:$0xf]
  %v45 = vld [vmem:[%s1 + $0x3c] sm:$0xf]
  %v46 = vld [vmem:[%s1 + $0x40] sm:$0xf]
  %v47 = vld [vmem:[%s1 + $0x44] sm:$0xf]
  %v48 = vld [vmem:[%s1 + $0x48] sm:$0xf]
  %v49 = vld [vmem:[%s1 + $0x4c] sm:$0xf]
  %v50 = vld [vmem:[%s1 + $0x50] sm:$0xf]
  %v51 = vld [vmem:[%s1 + $0x54] sm:$0xf]
  %v52 = vld [vmem:[%s1 + $0x58] sm:$0xf]
  %v53 = vld [vmem:[%s1 + $0x5c] sm:$0xf]
  %v54 = vld [vmem:[%s1 + $0x60] sm:$0xf]
  %v55 = vld [vmem:[%s1 + $0x64] sm:$0xf]
  %v56 = vld [vmem:[%s1 + $0x68] sm:$0xf]
  %v57 = vld [vmem:[%s1 + $0x6c] sm:$0xf]
  %v58 = vld [vmem:[%s1 + $0x70] sm:$0xf]
  %v59 = vld [vmem:[%s1 + $0x74] sm:$0xf]
  %v60 = vld [vmem:[%s1 + $0x78] sm:$0xf]
  %v61 = vld [vmem:[%s1 + $0x7c] sm:$0xf]
  %v62 = vld [vmem:[%s1 + $0x80] sm:$0xf]
  %v63 = vld [vmem:[%s1 + $0x84] sm:$0xf]
  %v64 = vld [vmem:[%s1 + $0x88] sm:$0xf]
  %v65 = vld [vmem:[%s1 + $0x8c] sm:$0xf]
  %v66 = vld [vmem:[%s1 + $0x90] sm:$0xf]
  %v67 = vld [vmem:[%s1 + $0x94] sm:$0xf]
  %v68 = vld [vmem:[%s1 + $0x98] sm:$0xf]
  %v69 = vld [vmem:[%s1 + $0x9c] sm:$0xf]
  %v70 = vld [vmem:[%s1 + $0xa0] sm:$0xf]
  %v71 = vld [vmem:[%s1 + $0xa4] sm:$0xf]
  %v72 = vld [vmem:[%s1 + $0xa8] sm:$0xf]
  %v73 = vld [vmem:[%s1 + $0xac] sm:$0xf]
  %v74 = vld [vmem:[%s1 + $0xb0] sm:$0xf]
  %v75 = vld [vmem:[%s1 + $0xb4] sm:$0xf]
  %v76 = vld [vmem:[%s1 + $0xb8] sm:$0xf]
  %v77 = vld [vmem:[%s1 + $0xbc] sm:$0xf]
  %v78 = vld [vmem:[%s1 + $0xc0] sm:$0xf]
  %v79 = vld [vmem:[%s1 + $0xc4] sm:$0xf]
  %v80 = vld [vmem:[%s1 + $0xc8] sm:$0xf]
  %v81 = vld [vmem:[%s1 + $0xcc] sm:$0xf]
  %v82 = vld [vmem:[%s1 + $0xd0] sm:$0xf]
  %v83 = vld [vmem:[%s1 + $0xd4] sm:$0xf]
  %v84 = vld [vmem:[%s1 + $0xd8] sm:$0xf]
  %v85 = vld [vmem:[%s1 + $0xdc] sm:$0xf]
  %v86 = vld [vmem:[%s1 + $0xe0] sm:$0xf]
  %v87 = vld [vmem:[%s1 + $0xe4] sm:$0xf]
  %v88 = vld [vmem:[%s1 + $0xe8] sm:$0xf]
  %v89 = vld [vmem:[%s1 + $0xec] sm:$0xf]
  %v90 = vld [vmem:[%s1 + $0xf0] sm:$0xf]
  %v91 = vld [vmem:[%s1 + $0xf4] sm:$0xf]
  %v92 = vld [vmem:[%s1 + $0xf8] sm:$0xf]
  %v93 = vld [vmem:[%s1 + $0xfc] sm:$0xf]
  %v94 = vld [vmem:[%s2] sm:$0x1]
  %v96 = vperm.slane %v94, 0
  %v114 = vunpack.c.l.b16 %v14
  %v115 = vunpack.c.h.b16 %v14
  %v116 = vunpack.c.l.b16 %v15
  %v117 = vunpack.c.h.b16 %v15
  %v118 = vunpack.c.l.b16 %v16
  %v119 = vunpack.c.h.b16 %v16
  %v120 = vunpack.c.l.b16 %v17
  %v121 = vunpack.c.h.b16 %v17
  %v122 = vunpack.c.l.b16 %v18
  %v123 = vunpack.c.h.b16 %v18
  %v124 = vunpack.c.l.b16 %v19
  %v125 = vunpack.c.h.b16 %v19
  %v126 = vunpack.c.l.b16 %v20
  %v127 = vunpack.c.h.b16 %v20
  %v128 = vunpack.c.l.b16 %v21
  %v129 = vunpack.c.h.b16 %v21
  %v130 = vunpack.c.l.b16 %v22
  %v131 = vunpack.c.h.b16 %v22
  %v132 = vunpack.c.l.b16 %v23
  %v133 = vunpack.c.h.b16 %v23
  %v134 = vunpack.c.l.b16 %v24
  %v135 = vunpack.c.h.b16 %v24
  %v136 = vunpack.c.l.b16 %v25
  %v137 = vunpack.c.h.b16 %v25
  %v138 = vunpack.c.l.b16 %v26
  %v139 = vunpack.c.h.b16 %v26
  %v140 = vunpack.c.l.b16 %v27
  %v141 = vunpack.c.h.b16 %v27
  %v142 = vunpack.c.l.b16 %v28
  %v143 = vunpack.c.h.b16 %v28
  %v144 = vunpack.c.l.b16 %v29
  %v145 = vunpack.c.h.b16 %v29
  %v146 = vpack.c.b16 %v118, %v114
  %v147 = vpack.c.b16 %v119, %v115
  %v148 = vpack.c.b16 %v120, %v116
  %v149 = vpack.c.b16 %v121, %v117
  %v150 = vpack.c.b16 %v126, %v122
  %v151 = vpack.c.b16 %v127, %v123
  %v152 = vpack.c.b16 %v128, %v124
  %v153 = vpack.c.b16 %v129, %v125
  %v154 = vpack.c.b16 %v134, %v130
  %v155 = vpack.c.b16 %v135, %v131
  %v156 = vpack.c.b16 %v136, %v132
  %v157 = vpack.c.b16 %v137, %v133
  %v158 = vpack.c.b16 %v142, %v138
  %v159 = vpack.c.b16 %v143, %v139
  %v160 = vpack.c.b16 %v144, %v140
  %v161 = vpack.c.b16 %v145, %v141
  %v242 = vunpack.c.l.b16 %v30
  %v243 = vunpack.c.l.b16 %v31
  %v244 = vunpack.c.l.b16 %v32
  %v245 = vunpack.c.l.b16 %v33
  %v246 = vunpack.c.l.b16 %v34
  %v247 = vunpack.c.l.b16 %v35
  %v248 = vunpack.c.l.b16 %v36
  %v249 = vunpack.c.l.b16 %v37
  %v250 = vunpack.c.l.b16 %v38
  %v251 = vunpack.c.l.b16 %v39
  %v252 = vunpack.c.l.b16 %v40
  %v253 = vunpack.c.l.b16 %v41
  %v254 = vunpack.c.l.b16 %v42
  %v255 = vunpack.c.l.b16 %v43
  %v256 = vunpack.c.l.b16 %v44
  %v257 = vunpack.c.l.b16 %v45
  %v258 = vunpack.c.l.b16 %v46
  %v259 = vunpack.c.l.b16 %v47
  %v260 = vunpack.c.l.b16 %v48
  %v261 = vunpack.c.l.b16 %v49
  %v262 = vunpack.c.l.b16 %v50
  %v263 = vunpack.c.l.b16 %v51
  %v264 = vunpack.c.l.b16 %v52
  %v265 = vunpack.c.l.b16 %v53
  %v266 = vunpack.c.l.b16 %v54
  %v267 = vunpack.c.l.b16 %v55
  %v268 = vunpack.c.l.b16 %v56
  %v269 = vunpack.c.l.b16 %v57
  %v270 = vunpack.c.l.b16 %v58
  %v271 = vunpack.c.l.b16 %v59
  %v272 = vunpack.c.l.b16 %v60
  %v273 = vunpack.c.l.b16 %v61
  %v274 = vunpack.c.l.b16 %v62
  %v275 = vunpack.c.l.b16 %v63
  %v276 = vunpack.c.l.b16 %v64
  %v277 = vunpack.c.l.b16 %v65
  %v278 = vunpack.c.l.b16 %v66
  %v279 = vunpack.c.l.b16 %v67
  %v280 = vunpack.c.l.b16 %v68
  %v281 = vunpack.c.l.b16 %v69
  %v282 = vunpack.c.l.b16 %v70
  %v283 = vunpack.c.l.b16 %v71
  %v284 = vunpack.c.l.b16 %v72
  %v285 = vunpack.c.l.b16 %v73
  %v286 = vunpack.c.l.b16 %v74
  %v287 = vunpack.c.l.b16 %v75
  %v288 = vunpack.c.l.b16 %v76
  %v289 = vunpack.c.l.b16 %v77
  %v290 = vunpack.c.l.b16 %v78
  %v291 = vunpack.c.l.b16 %v79
  %v292 = vunpack.c.l.b16 %v80
  %v293 = vunpack.c.l.b16 %v81
  %v294 = vunpack.c.l.b16 %v82
  %v295 = vunpack.c.l.b16 %v83
  %v296 = vunpack.c.l.b16 %v84
  %v297 = vunpack.c.l.b16 %v85
  %v298 = vunpack.c.l.b16 %v86
  %v299 = vunpack.c.l.b16 %v87
  %v300 = vunpack.c.l.b16 %v88
  %v301 = vunpack.c.l.b16 %v89
  %v302 = vunpack.c.l.b16 %v90
  %v303 = vunpack.c.l.b16 %v91
  %v304 = vunpack.c.l.b16 %v92
  %v305 = vunpack.c.l.b16 %v93
  %v306 = vpack.c.b16 %v243, %v242
  %v307 = vpack.c.b16 %v245, %v244
  %v308 = vpack.c.b16 %v247, %v246
  %v309 = vpack.c.b16 %v249, %v248
  %v310 = vpack.c.b16 %v251, %v250
  %v311 = vpack.c.b16 %v253, %v252
  %v312 = vpack.c.b16 %v255, %v254
  %v313 = vpack.c.b16 %v257, %v256
  %v314 = vpack.c.b16 %v259, %v258
  %v315 = vpack.c.b16 %v261, %v260
  %v316 = vpack.c.b16 %v263, %v262
  %v317 = vpack.c.b16 %v265, %v264
  %v318 = vpack.c.b16 %v267, %v266
  %v319 = vpack.c.b16 %v269, %v268
  %v320 = vpack.c.b16 %v271, %v270
  %v321 = vpack.c.b16 %v273, %v272
  %v322 = vpack.c.b16 %v275, %v274
  %v323 = vpack.c.b16 %v277, %v276
  %v324 = vpack.c.b16 %v279, %v278
  %v325 = vpack.c.b16 %v281, %v280
  %v326 = vpack.c.b16 %v283, %v282
  %v327 = vpack.c.b16 %v285, %v284
  %v328 = vpack.c.b16 %v287, %v286
  %v329 = vpack.c.b16 %v289, %v288
  %v330 = vpack.c.b16 %v291, %v290
  %v331 = vpack.c.b16 %v293, %v292
  %v332 = vpack.c.b16 %v295, %v294
  %v333 = vpack.c.b16 %v297, %v296
  %v334 = vpack.c.b16 %v299, %v298
  %v335 = vpack.c.b16 %v301, %v300
  %v336 = vpack.c.b16 %v303, %v302
  %v337 = vpack.c.b16 %v305, %v304
  %370 = vmatpush.bf16.msra.mxu0 %v313
  %371 = vmatpush.bf16.msra.mxu0 %v312
  %372 = vmatpush.bf16.msra.mxu0 %v311
  %373 = vmatpush.bf16.msra.mxu0 %v310
  %374 = vmatpush.bf16.msra.mxu0 %v309
  %375 = vmatpush.bf16.msra.mxu0 %v308
  %376 = vmatpush.bf16.msra.mxu0 %v307
  %377 = vmatpush.bf16.msra.mxu0 %v306
  %378 = vmatmul.bf16.gmra.mxu0 %v146
  %v379 = vpop.f32.mrf.mxu0
  %v380 = vadd.f32 %v96, %v379
  %v381 = vpop.f32.mrf.mxu0
  %v382 = vadd.f32 %v96, %v381
  %383 = vmatmul.bf16.gmra.mxu0 %v150
  %v384 = vpop.f32.mrf.mxu0
  %v385 = vadd.f32 %v96, %v384
  %v386 = vpop.f32.mrf.mxu0
  %v387 = vadd.f32 %v96, %v386
  %388 = vmatmul.bf16.gmra.mxu0 %v154
  %v389 = vpop.f32.mrf.mxu0
  %v390 = vadd.f32 %v96, %v389
  %v391 = vpop.f32.mrf.mxu0
  %v392 = vadd.f32 %v96, %v391
  %393 = vmatmul.bf16.gmra.mxu0 %v158
  %v394 = vpop.f32.mrf.mxu0
  %v395 = vadd.f32 %v96, %v394
  %v396 = vpop.f32.mrf.mxu0
  %v397 = vadd.f32 %v96, %v396
  %398 = vdwg.mxu0
  %399 = vmatpush.bf16.msra.mxu0 %v321
  %400 = vmatpush.bf16.msra.mxu0 %v320
  %401 = vmatpush.bf16.msra.mxu0 %v319
  %402 = vmatpush.bf16.msra.mxu0 %v318
  %403 = vmatpush.bf16.msra.mxu0 %v317
  %404 = vmatpush.bf16.msra.mxu0 %v316
  %405 = vmatpush.bf16.msra.mxu0 %v315
  %406 = vmatpush.bf16.msra.mxu0 %v314
  %407 = vmatmul.bf16.gmra.mxu0 %v147
  %v408 = vpop.f32.mrf.mxu0
  %v409 = vadd.f32 %v380, %v408
  %v410 = vpop.f32.mrf.mxu0
  %v411 = vadd.f32 %v382, %v410
  %412 = vmatmul.bf16.gmra.mxu0 %v151
  %v413 = vpop.f32.mrf.mxu0
  %v414 = vadd.f32 %v385, %v413
  %v415 = vpop.f32.mrf.mxu0
  %v416 = vadd.f32 %v387, %v415
  %417 = vmatmul.bf16.gmra.mxu0 %v155
  %v418 = vpop.f32.mrf.mxu0
  %v419 = vadd.f32 %v390, %v418
  %v420 = vpop.f32.mrf.mxu0
  %v421 = vadd.f32 %v392, %v420
  %422 = vmatmul.bf16.gmra.mxu0 %v159
  %v423 = vpop.f32.mrf.mxu0
  %v424 = vadd.f32 %v395, %v423
  %v425 = vpop.f32.mrf.mxu0
  %v426 = vadd.f32 %v397, %v425
  %427 = vdwg.mxu0
  %428 = vmatpush.bf16.msra.mxu0 %v329
  %429 = vmatpush.bf16.msra.mxu0 %v328
  %430 = vmatpush.bf16.msra.mxu0 %v327
  %431 = vmatpush.bf16.msra.mxu0 %v326
  %432 = vmatpush.bf16.msra.mxu0 %v325
  %433 = vmatpush.bf16.msra.mxu0 %v324
  %434 = vmatpush.bf16.msra.mxu0 %v323
  %435 = vmatpush.bf16.msra.mxu0 %v322
  %436 = vmatmul.bf16.gmra.mxu0 %v148
  %v437 = vpop.f32.mrf.mxu0
  %v438 = vadd.f32 %v409, %v437
  %v439 = vpop.f32.mrf.mxu0
  %v440 = vadd.f32 %v411, %v439
  %441 = vmatmul.bf16.gmra.mxu0 %v152
  %v442 = vpop.f32.mrf.mxu0
  %v443 = vadd.f32 %v414, %v442
  %v444 = vpop.f32.mrf.mxu0
  %v445 = vadd.f32 %v416, %v444
  %446 = vmatmul.bf16.gmra.mxu0 %v156
  %v447 = vpop.f32.mrf.mxu0
  %v448 = vadd.f32 %v419, %v447
  %v449 = vpop.f32.mrf.mxu0
  %v450 = vadd.f32 %v421, %v449
  %451 = vmatmul.bf16.gmra.mxu0 %v160
  %v452 = vpop.f32.mrf.mxu0
  %v453 = vadd.f32 %v424, %v452
  %v454 = vpop.f32.mrf.mxu0
  %v455 = vadd.f32 %v426, %v454
  %456 = vdwg.mxu0
  %457 = vmatpush.bf16.msra.mxu0 %v337
  %458 = vmatpush.bf16.msra.mxu0 %v336
  %459 = vmatpush.bf16.msra.mxu0 %v335
  %460 = vmatpush.bf16.msra.mxu0 %v334
  %461 = vmatpush.bf16.msra.mxu0 %v333
  %462 = vmatpush.bf16.msra.mxu0 %v332
  %463 = vmatpush.bf16.msra.mxu0 %v331
  %464 = vmatpush.bf16.msra.mxu0 %v330
  %465 = vmatmul.bf16.gmra.mxu0 %v149
  %v466 = vpop.f32.mrf.mxu0
  %v467 = vadd.f32 %v438, %v466
  %v468 = vpop.f32.mrf.mxu0
  %v469 = vadd.f32 %v440, %v468
  %470 = vmatmul.bf16.gmra.mxu0 %v153
  %v471 = vpop.f32.mrf.mxu0
  %v472 = vadd.f32 %v443, %v471
  %v473 = vpop.f32.mrf.mxu0
  %v474 = vadd.f32 %v445, %v473
  %475 = vmatmul.bf16.gmra.mxu0 %v157
  %v476 = vpop.f32.mrf.mxu0
  %v477 = vadd.f32 %v448, %v476
  %v478 = vpop.f32.mrf.mxu0
  %v479 = vadd.f32 %v450, %v478
  %480 = vmatmul.bf16.gmra.mxu0 %v161
  %v481 = vpop.f32.mrf.mxu0
  %v482 = vadd.f32 %v453, %v481
  %v483 = vpop.f32.mrf.mxu0
  %v484 = vadd.f32 %v455, %v483
  %485 = vdwg.mxu0
  %486 = vst [vmem:[%s3] sm:$0xff] %v467
  %487 = vst [vmem:[%s3 + $0x8] sm:$0xff] %v469
  %488 = vst [vmem:[%s3 + $0x10] sm:$0xff] %v472
  %489 = vst [vmem:[%s3 + $0x18] sm:$0xff] %v474
  %490 = vst [vmem:[%s3 + $0x20] sm:$0xff] %v477
  %491 = vst [vmem:[%s3 + $0x28] sm:$0xff] %v479
  %492 = vst [vmem:[%s3 + $0x30] sm:$0xff] %v482
  %493 = vst [vmem:[%s3 + $0x38] sm:$0xff] %v484
  // Predicated region
  $region14: #{unet_forward.14} parent=0 // pred_check
    _
  $region15: #{unet_forward.14} parent=0 // pred_check_branch
    %495 = sbr.rel (0) target = $region17
  $region16: #{unet_forward.14} parent=0 // pred_region
    _
  $region17: #{unet_forward.14} parent=0 // pred_fallthru
    _
  // Predicated region
  $region18: #{unet_forward.14} parent=0 // pred_check
    _
  $region19: #{unet_forward.14} parent=0 // pred_check_branch
    %497 = sbr.rel (0) target = $region21
  $region20: #{unet_forward.14} parent=0 // pred_region
    _
  $region21: #{unet_forward.14} parent=0 // pred_fallthru
    _

// kernel: unet_forward.15
$region0: #{unet_forward.15}
  #allocation0 [shape = 'u32[]', space=smem, size = 0x4, offset = 0x4, fixed_abs, tag = 'smem constant byte address 0x4 - core index']
  #allocation1 [shape = 'u32[72,128]{1,0:T(1,128)}', space=vmem, size = 0x9000, scoped, tag = 'internal scratch']
  %s0 = inlined_call_operand.vmem [shape: bf16[32,2304], index: 0, kind: input, shape index: {}]
  %s1 = inlined_call_operand.vmem [shape: bf16[2304,128], index: 1, kind: input, shape index: {}]
  %s2 = inlined_call_operand.vmem [shape: f32[1,128], index: 2, kind: input, shape index: {}]
  %s3 = inlined_call_operand.vmem [shape: f32[32,128], index: 3, kind: output, shape index: {}]
  %s4 = sld [smem:[#allocation0]]
  $region22: #{unet_forward.15} parent=0
    _
  %s6 = ssub.s32 1, %s4
  %s7 = scalar_select 0, %s6, %s4
  // Predicated region
  $region2: #{unet_forward.15} parent=0 // pred_check
    _
  $region3: #{unet_forward.15} parent=0 // pred_check_branch
    %9 = sbr.rel (0) target = $region5
  $region4: #{unet_forward.15} parent=0 // pred_region
    _
  $region5: #{unet_forward.15} parent=0 // pred_fallthru
    _
  // Predicated region
  $region6: #{unet_forward.15} parent=0 // pred_check
    _
  $region7: #{unet_forward.15} parent=0 // pred_check_branch
    %11 = sbr.rel (0) target = $region9
  $region8: #{unet_forward.15} parent=0 // pred_region
    _
  $region9: #{unet_forward.15} parent=0 // pred_fallthru
    _
  // Predicated region
  $region10: #{unet_forward.15} parent=0 // pred_check
    _
  $region11: #{unet_forward.15} parent=0 // pred_check_branch
    %13 = sbr.rel (0) target = $region13
  $region12: #{unet_forward.15} parent=0 // pred_region
    _
  $region13: #{unet_forward.15} parent=0 // pred_fallthru
    _
  %v14 = vld [vmem:[%s0] sm:$0xff]
  %v15 = vld [vmem:[%s0 + $0x8] sm:$0xff]
  %v16 = vld [vmem:[%s0 + $0x10] sm:$0xff]
  %v17 = vld [vmem:[%s0 + $0x18] sm:$0xff]
  %v18 = vld [vmem:[%s0 + $0x20] sm:$0xff]
  %v19 = vld [vmem:[%s0 + $0x28] sm:$0xff]
  %v20 = vld [vmem:[%s0 + $0x30] sm:$0xff]
  %v21 = vld [vmem:[%s0 + $0x38] sm:$0xff]
  %v22 = vld [vmem:[%s0 + $0x40] sm:$0xff]
  %v23 = vld [vmem:[%s0 + $0x48] sm:$0xff]
  %v24 = vld [vmem:[%s0 + $0x50] sm:$0xff]
  %v25 = vld [vmem:[%s0 + $0x58] sm:$0xff]
  %v26 = vld [vmem:[%s0 + $0x60] sm:$0xff]
  %v27 = vld [vmem:[%s0 + $0x68] sm:$0xff]
  %v28 = vld [vmem:[%s0 + $0x70] sm:$0xff]
  %v29 = vld [vmem:[%s0 + $0x78] sm:$0xff]
  %v30 = vld [vmem:[%s0 + $0x80] sm:$0xff]
  %v31 = vld [vmem:[%s0 + $0x88] sm:$0xff]
  %v32 = vld [vmem:[%s0 + $0x90] sm:$0xff]
  %v33 = vld [vmem:[%s0 + $0x98] sm:$0xff]
  %v34 = vld [vmem:[%s0 + $0xa0] sm:$0xff]
  %v35 = vld [vmem:[%s0 + $0xa8] sm:$0xff]
  %v36 = vld [vmem:[%s0 + $0xb0] sm:$0xff]
  %v37 = vld [vmem:[%s0 + $0xb8] sm:$0xff]
  %v38 = vld [vmem:[%s0 + $0xc0] sm:$0xff]
  %v39 = vld [vmem:[%s0 + $0xc8] sm:$0xff]
  %v40 = vld [vmem:[%s0 + $0xd0] sm:$0xff]
  %v41 = vld [vmem:[%s0 + $0xd8] sm:$0xff]
  %v42 = vld [vmem:[%s0 + $0xe0] sm:$0xff]
  %v43 = vld [vmem:[%s0 + $0xe8] sm:$0xff]
  %v44 = vld [vmem:[%s0 + $0xf0] sm:$0xff]
  %v45 = vld [vmem:[%s0 + $0xf8] sm:$0xff]
  %v46 = vld [vmem:[%s0 + $0x100] sm:$0xff]
  %v47 = vld [vmem:[%s0 + $0x108] sm:$0xff]
  %v48 = vld [vmem:[%s0 + $0x110] sm:$0xff]
  %v49 = vld [vmem:[%s0 + $0x118] sm:$0xff]
  %v50 = vld [vmem:[%s1] sm:$0xf]
  %v51 = vld [vmem:[%s1 + $0x4] sm:$0xf]
  %v52 = vld [vmem:[%s1 + $0x8] sm:$0xf]
  %v53 = vld [vmem:[%s1 + $0xc] sm:$0xf]
  %v54 = vld [vmem:[%s1 + $0x10] sm:$0xf]
  %v55 = vld [vmem:[%s1 + $0x14] sm:$0xf]
  %v56 = vld [vmem:[%s1 + $0x18] sm:$0xf]
  %v57 = vld [vmem:[%s1 + $0x1c] sm:$0xf]
  %v58 = vld [vmem:[%s1 + $0x20] sm:$0xf]
  %v59 = vld [vmem:[%s1 + $0x24] sm:$0xf]
  %v60 = vld [vmem:[%s1 + $0x28] sm:$0xf]
  %v61 = vld [vmem:[%s1 + $0x2c] sm:$0xf]
  %v62 = vld [vmem:[%s1 + $0x30] sm:$0xf]
  %v63 = vld [vmem:[%s1 + $0x34] sm:$0xf]
  %v64 = vld [vmem:[%s1 + $0x38] sm:$0xf]
  %v65 = vld [vmem:[%s1 + $0x3c] sm:$0xf]
  %v66 = vld [vmem:[%s1 + $0x40] sm:$0xf]
  %v67 = vld [vmem:[%s1 + $0x44] sm:$0xf]
  %v68 = vld [vmem:[%s1 + $0x48] sm:$0xf]
  %v69 = vld [vmem:[%s1 + $0x4c] sm:$0xf]
  %v70 = vld [vmem:[%s1 + $0x50] sm:$0xf]
  %v71 = vld [vmem:[%s1 + $0x54] sm:$0xf]
  %v72 = vld [vmem:[%s1 + $0x58] sm:$0xf]
  %v73 = vld [vmem:[%s1 + $0x5c] sm:$0xf]
  %v74 = vld [vmem:[%s1 + $0x60] sm:$0xf]
  %v75 = vld [vmem:[%s1 + $0x64] sm:$0xf]
  %v76 = vld [vmem:[%s1 + $0x68] sm:$0xf]
  %v77 = vld [vmem:[%s1 + $0x6c] sm:$0xf]
  %v78 = vld [vmem:[%s1 + $0x70] sm:$0xf]
  %v79 = vld [vmem:[%s1 + $0x74] sm:$0xf]
  %v80 = vld [vmem:[%s1 + $0x78] sm:$0xf]
  %v81 = vld [vmem:[%s1 + $0x7c] sm:$0xf]
  %v82 = vld [vmem:[%s1 + $0x80] sm:$0xf]
  %v83 = vld [vmem:[%s1 + $0x84] sm:$0xf]
  %v84 = vld [vmem:[%s1 + $0x88] sm:$0xf]
  %v85 = vld [vmem:[%s1 + $0x8c] sm:$0xf]
  %v86 = vld [vmem:[%s1 + $0x90] sm:$0xf]
  %v87 = vld [vmem:[%s1 + $0x94] sm:$0xf]
  %v88 = vld [vmem:[%s1 + $0x98] sm:$0xf]
  %v89 = vld [vmem:[%s1 + $0x9c] sm:$0xf]
  %v90 = vld [vmem:[%s1 + $0xa0] sm:$0xf]
  %v91 = vld [vmem:[%s1 + $0xa4] sm:$0xf]
  %v92 = vld [vmem:[%s1 + $0xa8] sm:$0xf]
  %v93 = vld [vmem:[%s1 + $0xac] sm:$0xf]
  %v94 = vld [vmem:[%s1 + $0xb0] sm:$0xf]
  %v95 = vld [vmem:[%s1 + $0xb4] sm:$0xf]
  %v96 = vld [vmem:[%s1 + $0xb8] sm:$0xf]
  %v97 = vld [vmem:[%s1 + $0xbc] sm:$0xf]
  %v98 = vld [vmem:[%s1 + $0xc0] sm:$0xf]
  %v99 = vld [vmem:[%s1 + $0xc4] sm:$0xf]
  %v100 = vld [vmem:[%s1 + $0xc8] sm:$0xf]
  %v101 = vld [vmem:[%s1 + $0xcc] sm:$0xf]
  %v102 = vld [vmem:[%s1 + $0xd0] sm:$0xf]
  %v103 = vld [vmem:[%s1 + $0xd4] sm:$0xf]
  %v104 = vld [vmem:[%s1 + $0xd8] sm:$0xf]
  %v105 = vld [vmem:[%s1 + $0xdc] sm:$0xf]
  %v106 = vld [vmem:[%s1 + $0xe0] sm:$0xf]
  %v107 = vld [vmem:[%s1 + $0xe4] sm:$0xf]
  %v108 = vld [vmem:[%s1 + $0xe8] sm:$0xf]
  %v109 = vld [vmem:[%s1 + $0xec] sm:$0xf]
  %v110 = vld [vmem:[%s1 + $0xf0] sm:$0xf]
  %v111 = vld [vmem:[%s1 + $0xf4] sm:$0xf]
  %v112 = vld [vmem:[%s1 + $0xf8] sm:$0xf]
  %v113 = vld [vmem:[%s1 + $0xfc] sm:$0xf]
  %v114 = vld [vmem:[%s1 + $0x100] sm:$0xf]
  %v115 = vld [vmem:[%s1 + $0x104] sm:$0xf]
  %v116 = vld [vmem:[%s1 + $0x108] sm:$0xf]
  %v117 = vld [vmem:[%s1 + $0x10c] sm:$0xf]
  %v118 = vld [vmem:[%s1 + $0x110] sm:$0xf]
  %v119 = vld [vmem:[%s1 + $0x114] sm:$0xf]
  %v120 = vld [vmem:[%s1 + $0x118] sm:$0xf]
  %v121 = vld [vmem:[%s1 + $0x11c] sm:$0xf]
  %v122 = vld [vmem:[%s1 + $0x120] sm:$0xf]
  %v123 = vld [vmem:[%s1 + $0x124] sm:$0xf]
  %v124 = vld [vmem:[%s1 + $0x128] sm:$0xf]
  %v125 = vld [vmem:[%s1 + $0x12c] sm:$0xf]
  %v126 = vld [vmem:[%s1 + $0x130] sm:$0xf]
  %v127 = vld [vmem:[%s1 + $0x134] sm:$0xf]
  %v128 = vld [vmem:[%s1 + $0x138] sm:$0xf]
  %v129 = vld [vmem:[%s1 + $0x13c] sm:$0xf]
  %v130 = vld [vmem:[%s1 + $0x140] sm:$0xf]
  %v131 = vld [vmem:[%s1 + $0x144] sm:$0xf]
  %v132 = vld [vmem:[%s1 + $0x148] sm:$0xf]
  %v133 = vld [vmem:[%s1 + $0x14c] sm:$0xf]
  %v134 = vld [vmem:[%s1 + $0x150] sm:$0xf]
  %v135 = vld [vmem:[%s1 + $0x154] sm:$0xf]
  %v136 = vld [vmem:[%s1 + $0x158] sm:$0xf]
  %v137 = vld [vmem:[%s1 + $0x15c] sm:$0xf]
  %v138 = vld [vmem:[%s1 + $0x160] sm:$0xf]
  %v139 = vld [vmem:[%s1 + $0x164] sm:$0xf]
  %v140 = vld [vmem:[%s1 + $0x168] sm:$0xf]
  %v141 = vld [vmem:[%s1 + $0x16c] sm:$0xf]
  %v142 = vld [vmem:[%s1 + $0x170] sm:$0xf]
  %v143 = vld [vmem:[%s1 + $0x174] sm:$0xf]
  %v144 = vld [vmem:[%s1 + $0x178] sm:$0xf]
  %v145 = vld [vmem:[%s1 + $0x17c] sm:$0xf]
  %v146 = vld [vmem:[%s1 + $0x180] sm:$0xf]
  %v147 = vld [vmem:[%s1 + $0x184] sm:$0xf]
  %v148 = vld [vmem:[%s1 + $0x188] sm:$0xf]
  %v149 = vld [vmem:[%s1 + $0x18c] sm:$0xf]
  %v150 = vld [vmem:[%s1 + $0x190] sm:$0xf]
  %v151 = vld [vmem:[%s1 + $0x194] sm:$0xf]
  %v152 = vld [vmem:[%s1 + $0x198] sm:$0xf]
  %v153 = vld [vmem:[%s1 + $0x19c] sm:$0xf]
  %v154 = vld [vmem:[%s1 + $0x1a0] sm:$0xf]
  %v155 = vld [vmem:[%s1 + $0x1a4] sm:$0xf]
  %v156 = vld [vmem:[%s1 + $0x1a8] sm:$0xf]
  %v157 = vld [vmem:[%s1 + $0x1ac] sm:$0xf]
  %v158 = vld [vmem:[%s1 + $0x1b0] sm:$0xf]
  %v159 = vld [vmem:[%s1 + $0x1b4] sm:$0xf]
  %v160 = vld [vmem:[%s1 + $0x1b8] sm:$0xf]
  %v161 = vld [vmem:[%s1 + $0x1bc] sm:$0xf]
  %v162 = vld [vmem:[%s1 + $0x1c0] sm:$0xf]
  %v163 = vld [vmem:[%s1 + $0x1c4] sm:$0xf]
  %v164 = vld [vmem:[%s1 + $0x1c8] sm:$0xf]
  %v165 = vld [vmem:[%s1 + $0x1cc] sm:$0xf]
  %v166 = vld [vmem:[%s1 + $0x1d0] sm:$0xf]
  %v167 = vld [vmem:[%s1 + $0x1d4] sm:$0xf]
  %v168 = vld [vmem:[%s1 + $0x1d8] sm:$0xf]
  %v169 = vld [vmem:[%s1 + $0x1dc] sm:$0xf]
  %v170 = vld [vmem:[%s1 + $0x1e0] sm:$0xf]
  %v171 = vld [vmem:[%s1 + $0x1e4] sm:$0xf]
  %v172 = vld [vmem:[%s1 + $0x1e8] sm:$0xf]
  %v173 = vld [vmem:[%s1 + $0x1ec] sm:$0xf]
  %v174 = vld [vmem:[%s1 + $0x1f0] sm:$0xf]
  %v175 = vld [vmem:[%s1 + $0x1f4] sm:$0xf]
  %v176 = vld [vmem:[%s1 + $0x1f8] sm:$0xf]
  %v177 = vld [vmem:[%s1 + $0x1fc] sm:$0xf]
  %v178 = vld [vmem:[%s1 + $0x200] sm:$0xf]
  %v179 = vld [vmem:[%s1 + $0x204] sm:$0xf]
  %v180 = vld [vmem:[%s1 + $0x208] sm:$0xf]
  %v181 = vld [vmem:[%s1 + $0x20c] sm:$0xf]
  %v182 = vld [vmem:[%s1 + $0x210] sm:$0xf]
  %v183 = vld [vmem:[%s1 + $0x214] sm:$0xf]
  %v184 = vld [vmem:[%s1 + $0x218] sm:$0xf]
  %v185 = vld [vmem:[%s1 + $0x21c] sm:$0xf]
  %v186 = vld [vmem:[%s1 + $0x220] sm:$0xf]
  %v187 = vld [vmem:[%s1 + $0x224] sm:$0xf]
  %v188 = vld [vmem:[%s1 + $0x228] sm:$0xf]
  %v189 = vld [vmem:[%s1 + $0x22c] sm:$0xf]
  %v190 = vld [vmem:[%s1 + $0x230] sm:$0xf]
  %v191 = vld [vmem:[%s1 + $0x234] sm:$0xf]
  %v192 = vld [vmem:[%s1 + $0x238] sm:$0xf]
  %v193 = vld [vmem:[%s1 + $0x23c] sm:$0xf]
  %v194 = vld [vmem:[%s1 + $0x240] sm:$0xf]
  %v195 = vld [vmem:[%s1 + $0x244] sm:$0xf]
  %v196 = vld [vmem:[%s1 + $0x248] sm:$0xf]
  %v197 = vld [vmem:[%s1 + $0x24c] sm:$0xf]
  %v198 = vld [vmem:[%s1 + $0x250] sm:$0xf]
  %v199 = vld [vmem:[%s1 + $0x254] sm:$0xf]
  %v200 = vld [vmem:[%s1 + $0x258] sm:$0xf]
  %v201 = vld [vmem:[%s1 + $0x25c] sm:$0xf]
  %v202 = vld [vmem:[%s1 + $0x260] sm:$0xf]
  %v203 = vld [vmem:[%s1 + $0x264] sm:$0xf]
  %v204 = vld [vmem:[%s1 + $0x268] sm:$0xf]
  %v205 = vld [vmem:[%s1 + $0x26c] sm:$0xf]
  %v206 = vld [vmem:[%s1 + $0x270] sm:$0xf]
  %v207 = vld [vmem:[%s1 + $0x274] sm:$0xf]
  %v208 = vld [vmem:[%s1 + $0x278] sm:$0xf]
  %v209 = vld [vmem:[%s1 + $0x27c] sm:$0xf]
  %v210 = vld [vmem:[%s1 + $0x280] sm:$0xf]
  %v211 = vld [vmem:[%s1 + $0x284] sm:$0xf]
  %v212 = vld [vmem:[%s1 + $0x288] sm:$0xf]
  %v213 = vld [vmem:[%s1 + $0x28c] sm:$0xf]
  %v214 = vld [vmem:[%s1 + $0x290] sm:$0xf]
  %v215 = vld [vmem:[%s1 + $0x294] sm:$0xf]
  %v216 = vld [vmem:[%s1 + $0x298] sm:$0xf]
  %v217 = vld [vmem:[%s1 + $0x29c] sm:$0xf]
  %v218 = vld [vmem:[%s1 + $0x2a0] sm:$0xf]
  %v219 = vld [vmem:[%s1 + $0x2a4] sm:$0xf]
  %v220 = vld [vmem:[%s1 + $0x2a8] sm:$0xf]
  %v221 = vld [vmem:[%s1 + $0x2ac] sm:$0xf]
  %v222 = vld [vmem:[%s1 + $0x2b0] sm:$0xf]
  %v223 = vld [vmem:[%s1 + $0x2b4] sm:$0xf]
  %v224 = vld [vmem:[%s1 + $0x2b8] sm:$0xf]
  %v225 = vld [vmem:[%s1 + $0x2bc] sm:$0xf]
  %v226 = vld [vmem:[%s1 + $0x2c0] sm:$0xf]
  %v227 = vld [vmem:[%s1 + $0x2c4] sm:$0xf]
  %v228 = vld [vmem:[%s1 + $0x2c8] sm:$0xf]
  %v229 = vld [vmem:[%s1 + $0x2cc] sm:$0xf]
  %v230 = vld [vmem:[%s1 + $0x2d0] sm:$0xf]
  %v231 = vld [vmem:[%s1 + $0x2d4] sm:$0xf]
  %v232 = vld [vmem:[%s1 + $0x2d8] sm:$0xf]
  %v233 = vld [vmem:[%s1 + $0x2dc] sm:$0xf]
  %v234 = vld [vmem:[%s1 + $0x2e0] sm:$0xf]
  %v235 = vld [vmem:[%s1 + $0x2e4] sm:$0xf]
  %v236 = vld [vmem:[%s1 + $0x2e8] sm:$0xf]
  %v237 = vld [vmem:[%s1 + $0x2ec] sm:$0xf]
  %v238 = vld [vmem:[%s1 + $0x2f0] sm:$0xf]
  %v239 = vld [vmem:[%s1 + $0x2f4] sm:$0xf]
  %v240 = vld [vmem:[%s1 + $0x2f8] sm:$0xf]
  %v241 = vld [vmem:[%s1 + $0x2fc] sm:$0xf]
  %v242 = vld [vmem:[%s1 + $0x300] sm:$0xf]
  %v243 = vld [vmem:[%s1 + $0x304] sm:$0xf]
  %v244 = vld [vmem:[%s1 + $0x308] sm:$0xf]
  %v245 = vld [vmem:[%s1 + $0x30c] sm:$0xf]
  %v246 = vld [vmem:[%s1 + $0x310] sm:$0xf]
  %v247 = vld [vmem:[%s1 + $0x314] sm:$0xf]
  %v248 = vld [vmem:[%s1 + $0x318] sm:$0xf]
  %v249 = vld [vmem:[%s1 + $0x31c] sm:$0xf]
  %v250 = vld [vmem:[%s1 + $0x320] sm:$0xf]
  %v251 = vld [vmem:[%s1 + $0x324] sm:$0xf]
  %v252 = vld [vmem:[%s1 + $0x328] sm:$0xf]
  %v253 = vld [vmem:[%s1 + $0x32c] sm:$0xf]
  %v254 = vld [vmem:[%s1 + $0x330] sm:$0xf]
  %v255 = vld [vmem:[%s1 + $0x334] sm:$0xf]
  %v256 = vld [vmem:[%s1 + $0x338] sm:$0xf]
  %v257 = vld [vmem:[%s1 + $0x33c] sm:$0xf]
  %v258 = vld [vmem:[%s1 + $0x340] sm:$0xf]
  %v259 = vld [vmem:[%s1 + $0x344] sm:$0xf]
  %v260 = vld [vmem:[%s1 + $0x348] sm:$0xf]
  %v261 = vld [vmem:[%s1 + $0x34c] sm:$0xf]
  %v262 = vld [vmem:[%s1 + $0x350] sm:$0xf]
  %v263 = vld [vmem:[%s1 + $0x354] sm:$0xf]
  %v264 = vld [vmem:[%s1 + $0x358] sm:$0xf]
  %v265 = vld [vmem:[%s1 + $0x35c] sm:$0xf]
  %v266 = vld [vmem:[%s1 + $0x360] sm:$0xf]
  %v267 = vld [vmem:[%s1 + $0x364] sm:$0xf]
  %v268 = vld [vmem:[%s1 + $0x368] sm:$0xf]
  %v269 = vld [vmem:[%s1 + $0x36c] sm:$0xf]
  %v270 = vld [vmem:[%s1 + $0x370] sm:$0xf]
  %v271 = vld [vmem:[%s1 + $0x374] sm:$0xf]
  %v272 = vld [vmem:[%s1 + $0x378] sm:$0xf]
  %v273 = vld [vmem:[%s1 + $0x37c] sm:$0xf]
  %v274 = vld [vmem:[%s1 + $0x380] sm:$0xf]
  %v275 = vld [vmem:[%s1 + $0x384] sm:$0xf]
  %v276 = vld [vmem:[%s1 + $0x388] sm:$0xf]
  %v277 = vld [vmem:[%s1 + $0x38c] sm:$0xf]
  %v278 = vld [vmem:[%s1 + $0x390] sm:$0xf]
  %v279 = vld [vmem:[%s1 + $0x394] sm:$0xf]
  %v280 = vld [vmem:[%s1 + $0x398] sm:$0xf]
  %v281 = vld [vmem:[%s1 + $0x39c] sm:$0xf]
  %v282 = vld [vmem:[%s1 + $0x3a0] sm:$0xf]
  %v283 = vld [vmem:[%s1 + $0x3a4] sm:$0xf]
  %v284 = vld [vmem:[%s1 + $0x3a8] sm:$0xf]
  %v285 = vld [vmem:[%s1 + $0x3ac] sm:$0xf]
  %v286 = vld [vmem:[%s1 + $0x3b0] sm:$0xf]
  %v287 = vld [vmem:[%s1 + $0x3b4] sm:$0xf]
  %v288 = vld [vmem:[%s1 + $0x3b8] sm:$0xf]
  %v289 = vld [vmem:[%s1 + $0x3bc] sm:$0xf]
  %v290 = vld [vmem:[%s1 + $0x3c0] sm:$0xf]
  %v291 = vld [vmem:[%s1 + $0x3c4] sm:$0xf]
  %v292 = vld [vmem:[%s1 + $0x3c8] sm:$0xf]
  %v293 = vld [vmem:[%s1 + $0x3cc] sm:$0xf]
  %v294 = vld [vmem:[%s1 + $0x3d0] sm:$0xf]
  %v295 = vld [vmem:[%s1 + $0x3d4] sm:$0xf]
  %v296 = vld [vmem:[%s1 + $0x3d8] sm:$0xf]
  %v297 = vld [vmem:[%s1 + $0x3dc] sm:$0xf]
  %v298 = vld [vmem:[%s1 + $0x3e0] sm:$0xf]
  %v299 = vld [vmem:[%s1 + $0x3e4] sm:$0xf]
  %v300 = vld [vmem:[%s1 + $0x3e8] sm:$0xf]
  %v301 = vld [vmem:[%s1 + $0x3ec] sm:$0xf]
  %v302 = vld [vmem:[%s1 + $0x3f0] sm:$0xf]
  %v303 = vld [vmem:[%s1 + $0x3f4] sm:$0xf]
  %v304 = vld [vmem:[%s1 + $0x3f8] sm:$0xf]
  %v305 = vld [vmem:[%s1 + $0x3fc] sm:$0xf]
  %v306 = vld [vmem:[%s1 + $0x400] sm:$0xf]
  %v307 = vld [vmem:[%s1 + $0x404] sm:$0xf]
  %v308 = vld [vmem:[%s1 + $0x408] sm:$0xf]
  %v309 = vld [vmem:[%s1 + $0x40c] sm:$0xf]
  %v310 = vld [vmem:[%s1 + $0x410] sm:$0xf]
  %v311 = vld [vmem:[%s1 + $0x414] sm:$0xf]
  %v312 = vld [vmem:[%s1 + $0x418] sm:$0xf]
  %v313 = vld [vmem:[%s1 + $0x41c] sm:$0xf]
  %v314 = vld [vmem:[%s1 + $0x420] sm:$0xf]
  %v315 = vld [vmem:[%s1 + $0x424] sm:$0xf]
  %v316 = vld [vmem:[%s1 + $0x428] sm:$0xf]
  %v317 = vld [vmem:[%s1 + $0x42c] sm:$0xf]
  %v318 = vld [vmem:[%s1 + $0x430] sm:$0xf]
  %v319 = vld [vmem:[%s1 + $0x434] sm:$0xf]
  %v320 = vld [vmem:[%s1 + $0x438] sm:$0xf]
  %v321 = vld [vmem:[%s1 + $0x43c] sm:$0xf]
  %v322 = vld [vmem:[%s1 + $0x440] sm:$0xf]
  %v323 = vld [vmem:[%s1 + $0x444] sm:$0xf]
  %v324 = vld [vmem:[%s1 + $0x448] sm:$0xf]
  %v325 = vld [vmem:[%s1 + $0x44c] sm:$0xf]
  %v326 = vld [vmem:[%s1 + $0x450] sm:$0xf]
  %v327 = vld [vmem:[%s1 + $0x454] sm:$0xf]
  %v328 = vld [vmem:[%s1 + $0x458] sm:$0xf]
  %v329 = vld [vmem:[%s1 + $0x45c] sm:$0xf]
  %v330 = vld [vmem:[%s1 + $0x460] sm:$0xf]
  %v331 = vld [vmem:[%s1 + $0x464] sm:$0xf]
  %v332 = vld [vmem:[%s1 + $0x468] sm:$0xf]
  %v333 = vld [vmem:[%s1 + $0x46c] sm:$0xf]
  %v334 = vld [vmem:[%s1 + $0x470] sm:$0xf]
  %v335 = vld [vmem:[%s1 + $0x474] sm:$0xf]
  %v336 = vld [vmem:[%s1 + $0x478] sm:$0xf]
  %v337 = vld [vmem:[%s1 + $0x47c] sm:$0xf]
  %v338 = vld [vmem:[%s2] sm:$0x1]
  %v340 = vperm.slane %v338, 0
  %v378 = vunpack.c.l.b16 %v14
  %v379 = vunpack.c.h.b16 %v14
  %v380 = vunpack.c.l.b16 %v15
  %v381 = vunpack.c.h.b16 %v15
  %v382 = vunpack.c.l.b16 %v16
  %v383 = vunpack.c.h.b16 %v16
  %v384 = vunpack.c.l.b16 %v17
  %v385 = vunpack.c.h.b16 %v17
  %v386 = vunpack.c.l.b16 %v18
  %v387 = vunpack.c.h.b16 %v18
  %v388 = vunpack.c.l.b16 %v19
  %v389 = vunpack.c.h.b16 %v19
  %v390 = vunpack.c.l.b16 %v20
  %v391 = vunpack.c.h.b16 %v20
  %v392 = vunpack.c.l.b16 %v21
  %v393 = vunpack.c.h.b16 %v21
  %v394 = vunpack.c.l.b16 %v22
  %v395 = vunpack.c.h.b16 %v22
  %v396 = vunpack.c.l.b16 %v23
  %v397 = vunpack.c.h.b16 %v23
  %v398 = vunpack.c.l.b16 %v24
  %v399 = vunpack.c.h.b16 %v24
  %v400 = vunpack.c.l.b16 %v25
  %v401 = vunpack.c.h.b16 %v25
  %v402 = vunpack.c.l.b16 %v26
  %v403 = vunpack.c.h.b16 %v26
  %v404 = vunpack.c.l.b16 %v27
  %v405 = vunpack.c.h.b16 %v27
  %v406 = vunpack.c.l.b16 %v28
  %v407 = vunpack.c.h.b16 %v28
  %v408 = vunpack.c.l.b16 %v29
  %v409 = vunpack.c.h.b16 %v29
  %v410 = vunpack.c.l.b16 %v30
  %v411 = vunpack.c.h.b16 %v30
  %v412 = vunpack.c.l.b16 %v31
  %v413 = vunpack.c.h.b16 %v31
  %v414 = vunpack.c.l.b16 %v32
  %v415 = vunpack.c.h.b16 %v32
  %v416 = vunpack.c.l.b16 %v33
  %v417 = vunpack.c.h.b16 %v33
  %v418 = vunpack.c.l.b16 %v34
  %v419 = vunpack.c.h.b16 %v34
  %v420 = vunpack.c.l.b16 %v35
  %v421 = vunpack.c.h.b16 %v35
  %v422 = vunpack.c.l.b16 %v36
  %v423 = vunpack.c.h.b16 %v36
  %v424 = vunpack.c.l.b16 %v37
  %v425 = vunpack.c.h.b16 %v37
  %v426 = vunpack.c.l.b16 %v38
  %v427 = vunpack.c.h.b16 %v38
  %v428 = vunpack.c.l.b16 %v39
  %v429 = vunpack.c.h.b16 %v39
  %v430 = vunpack.c.l.b16 %v40
  %v431 = vunpack.c.h.b16 %v40
  %v432 = vunpack.c.l.b16 %v41
  %v433 = vunpack.c.h.b16 %v41
  %v434 = vunpack.c.l.b16 %v42
  %v435 = vunpack.c.h.b16 %v42
  %v436 = vunpack.c.l.b16 %v43
  %v437 = vunpack.c.h.b16 %v43
  %v438 = vunpack.c.l.b16 %v44
  %v439 = vunpack.c.h.b16 %v44
  %v440 = vunpack.c.l.b16 %v45
  %v441 = vunpack.c.h.b16 %v45
  %v442 = vunpack.c.l.b16 %v46
  %v443 = vunpack.c.h.b16 %v46
  %v444 = vunpack.c.l.b16 %v47
  %v445 = vunpack.c.h.b16 %v47
  %v446 = vunpack.c.l.b16 %v48
  %v447 = vunpack.c.h.b16 %v48
  %v448 = vunpack.c.l.b16 %v49
  %v449 = vunpack.c.h.b16 %v49
  %v450 = vpack.c.b16 %v396, %v378
  %v451 = vpack.c.b16 %v397, %v379
  %v452 = vpack.c.b16 %v398, %v380
  %v453 = vpack.c.b16 %v399, %v381
  %v454 = vpack.c.b16 %v400, %v382
  %v455 = vpack.c.b16 %v401, %v383
  %v456 = vpack.c.b16 %v402, %v384
  %v457 = vpack.c.b16 %v403, %v385
  %v458 = vpack.c.b16 %v404, %v386
  %v459 = vpack.c.b16 %v405, %v387
  %v460 = vpack.c.b16 %v406, %v388
  %v461 = vpack.c.b16 %v407, %v389
  %v462 = vpack.c.b16 %v408, %v390
  %v463 = vpack.c.b16 %v409, %v391
  %v464 = vpack.c.b16 %v410, %v392
  %v465 = vpack.c.b16 %v411, %v393
  %v466 = vpack.c.b16 %v412, %v394
  %v467 = vpack.c.b16 %v413, %v395
  %v468 = vpack.c.b16 %v432, %v414
  %v469 = vpack.c.b16 %v433, %v415
  %v470 = vpack.c.b16 %v434, %v416
  %v471 = vpack.c.b16 %v435, %v417
  %v472 = vpack.c.b16 %v436, %v418
  %v473 = vpack.c.b16 %v437, %v419
  %v474 = vpack.c.b16 %v438, %v420
  %v475 = vpack.c.b16 %v439, %v421
  %v476 = vpack.c.b16 %v440, %v422
  %v477 = vpack.c.b16 %v441, %v423
  %v478 = vpack.c.b16 %v442, %v424
  %v479 = vpack.c.b16 %v443, %v425
  %v480 = vpack.c.b16 %v444, %v426
  %v481 = vpack.c.b16 %v445, %v427
  %v482 = vpack.c.b16 %v446, %v428
  %v483 = vpack.c.b16 %v447, %v429
  %v484 = vpack.c.b16 %v448, %v430
  %v485 = vpack.c.b16 %v449, %v431
  %v810 = vunpack.c.l.b16 %v50
  %v811 = vunpack.c.l.b16 %v51
  %v812 = vunpack.c.l.b16 %v52
  %v813 = vunpack.c.l.b16 %v53
  %v814 = vunpack.c.l.b16 %v54
  %v815 = vunpack.c.l.b16 %v55
  %v816 = vunpack.c.l.b16 %v56
  %v817 = vunpack.c.l.b16 %v57
  %v818 = vunpack.c.l.b16 %v58
  %v819 = vunpack.c.l.b16 %v59
  %v820 = vunpack.c.l.b16 %v60
  %v821 = vunpack.c.l.b16 %v61
  %v822 = vunpack.c.l.b16 %v62
  %v823 = vunpack.c.l.b16 %v63
  %v824 = vunpack.c.l.b16 %v64
  %v825 = vunpack.c.l.b16 %v65
  %v826 = vunpack.c.l.b16 %v66
  %v827 = vunpack.c.l.b16 %v67
  %v828 = vunpack.c.l.b16 %v68
  %v829 = vunpack.c.l.b16 %v69
  %v830 = vunpack.c.l.b16 %v70
  %v831 = vunpack.c.l.b16 %v71
  %v832 = vunpack.c.l.b16 %v72
  %v833 = vunpack.c.l.b16 %v73
  %v834 = vunpack.c.l.b16 %v74
  %v835 = vunpack.c.l.b16 %v75
  %v836 = vunpack.c.l.b16 %v76
  %v837 = vunpack.c.l.b16 %v77
  %v838 = vunpack.c.l.b16 %v78
  %v839 = vunpack.c.l.b16 %v79
  %v840 = vunpack.c.l.b16 %v80
  %v841 = vunpack.c.l.b16 %v81
  %v842 = vunpack.c.l.b16 %v82
  %v843 = vunpack.c.l.b16 %v83
  %v844 = vunpack.c.l.b16 %v84
  %v845 = vunpack.c.l.b16 %v85
  %v846 = vunpack.c.l.b16 %v86
  %v847 = vunpack.c.l.b16 %v87
  %v848 = vunpack.c.l.b16 %v88
  %v849 = vunpack.c.l.b16 %v89
  %v850 = vunpack.c.l.b16 %v90
  %v851 = vunpack.c.l.b16 %v91
  %v852 = vunpack.c.l.b16 %v92
  %v853 = vunpack.c.l.b16 %v93
  %v854 = vunpack.c.l.b16 %v94
  %v855 = vunpack.c.l.b16 %v95
  %v856 = vunpack.c.l.b16 %v96
  %v857 = vunpack.c.l.b16 %v97
  %v858 = vunpack.c.l.b16 %v98
  %v859 = vunpack.c.l.b16 %v99
  %v860 = vunpack.c.l.b16 %v100
  %v861 = vunpack.c.l.b16 %v101
  %v862 = vunpack.c.l.b16 %v102
  %v863 = vunpack.c.l.b16 %v103
  %v864 = vunpack.c.l.b16 %v104
  %v865 = vunpack.c.l.b16 %v105
  %v866 = vunpack.c.l.b16 %v106
  %v867 = vunpack.c.l.b16 %v107
  %v868 = vunpack.c.l.b16 %v108
  %v869 = vunpack.c.l.b16 %v109
  %v870 = vunpack.c.l.b16 %v110
  %v871 = vunpack.c.l.b16 %v111
  %v872 = vunpack.c.l.b16 %v112
  %v873 = vunpack.c.l.b16 %v113
  %v874 = vunpack.c.l.b16 %v114
  %v875 = vunpack.c.l.b16 %v115
  %v876 = vunpack.c.l.b16 %v116
  %v877 = vunpack.c.l.b16 %v117
  %v878 = vunpack.c.l.b16 %v118
  %v879 = vunpack.c.l.b16 %v119
  %v880 = vunpack.c.l.b16 %v120
  %v881 = vunpack.c.l.b16 %v121
  %v882 = vunpack.c.l.b16 %v122
  %v883 = vunpack.c.l.b16 %v123
  %v884 = vunpack.c.l.b16 %v124
  %v885 = vunpack.c.l.b16 %v125
  %v886 = vunpack.c.l.b16 %v126
  %v887 = vunpack.c.l.b16 %v127
  %v888 = vunpack.c.l.b16 %v128
  %v889 = vunpack.c.l.b16 %v129
  %v890 = vunpack.c.l.b16 %v130
  %v891 = vunpack.c.l.b16 %v131
  %v892 = vunpack.c.l.b16 %v132
  %v893 = vunpack.c.l.b16 %v133
  %v894 = vunpack.c.l.b16 %v134
  %v895 = vunpack.c.l.b16 %v135
  %v896 = vunpack.c.l.b16 %v136
  %v897 = vunpack.c.l.b16 %v137
  %v898 = vunpack.c.l.b16 %v138
  %v899 = vunpack.c.l.b16 %v139
  %v900 = vunpack.c.l.b16 %v140
  %v901 = vunpack.c.l.b16 %v141
  %v902 = vunpack.c.l.b16 %v142
  %v903 = vunpack.c.l.b16 %v143
  %v904 = vunpack.c.l.b16 %v144
  %v905 = vunpack.c.l.b16 %v145
  %v906 = vunpack.c.l.b16 %v146
  %v907 = vunpack.c.l.b16 %v147
  %v908 = vunpack.c.l.b16 %v148
  %v909 = vunpack.c.l.b16 %v149
  %v910 = vunpack.c.l.b16 %v150
  %v911 = vunpack.c.l.b16 %v151
  %v912 = vunpack.c.l.b16 %v152
  %v913 = vunpack.c.l.b16 %v153
  %v914 = vunpack.c.l.b16 %v154
  %v915 = vunpack.c.l.b16 %v155
  %v916 = vunpack.c.l.b16 %v156
  %v917 = vunpack.c.l.b16 %v157
  %v918 = vunpack.c.l.b16 %v158
  %v919 = vunpack.c.l.b16 %v159
  %v920 = vunpack.c.l.b16 %v160
  %v921 = vunpack.c.l.b16 %v161
  %v922 = vunpack.c.l.b16 %v162
  %v923 = vunpack.c.l.b16 %v163
  %v924 = vunpack.c.l.b16 %v164
  %v925 = vunpack.c.l.b16 %v165
  %v926 = vunpack.c.l.b16 %v166
  %v927 = vunpack.c.l.b16 %v167
  %v928 = vunpack.c.l.b16 %v168
  %v929 = vunpack.c.l.b16 %v169
  %v930 = vunpack.c.l.b16 %v170
  %v931 = vunpack.c.l.b16 %v171
  %v932 = vunpack.c.l.b16 %v172
  %v933 = vunpack.c.l.b16 %v173
  %v934 = vunpack.c.l.b16 %v174
  %v935 = vunpack.c.l.b16 %v175
  %v936 = vunpack.c.l.b16 %v176
  %v937 = vunpack.c.l.b16 %v177
  %v938 = vunpack.c.l.b16 %v178
  %v939 = vunpack.c.l.b16 %v179
  %v940 = vunpack.c.l.b16 %v180
  %v941 = vunpack.c.l.b16 %v181
  %v942 = vunpack.c.l.b16 %v182
  %v943 = vunpack.c.l.b16 %v183
  %v944 = vunpack.c.l.b16 %v184
  %v945 = vunpack.c.l.b16 %v185
  %v946 = vunpack.c.l.b16 %v186
  %v947 = vunpack.c.l.b16 %v187
  %v948 = vunpack.c.l.b16 %v188
  %v949 = vunpack.c.l.b16 %v189
  %v950 = vunpack.c.l.b16 %v190
  %v951 = vunpack.c.l.b16 %v191
  %v952 = vunpack.c.l.b16 %v192
  %v953 = vunpack.c.l.b16 %v193
  %v954 = vunpack.c.l.b16 %v194
  %v955 = vunpack.c.l.b16 %v195
  %v956 = vunpack.c.l.b16 %v196
  %v957 = vunpack.c.l.b16 %v197
  %v958 = vunpack.c.l.b16 %v198
  %v959 = vunpack.c.l.b16 %v199
  %v960 = vunpack.c.l.b16 %v200
  %v961 = vunpack.c.l.b16 %v201
  %v962 = vunpack.c.l.b16 %v202
  %v963 = vunpack.c.l.b16 %v203
  %v964 = vunpack.c.l.b16 %v204
  %v965 = vunpack.c.l.b16 %v205
  %v966 = vunpack.c.l.b16 %v206
  %v967 = vunpack.c.l.b16 %v207
  %v968 = vunpack.c.l.b16 %v208
  %v969 = vunpack.c.l.b16 %v209
  %v970 = vunpack.c.l.b16 %v210
  %v971 = vunpack.c.l.b16 %v211
  %v972 = vunpack.c.l.b16 %v212
  %v973 = vunpack.c.l.b16 %v213
  %v974 = vunpack.c.l.b16 %v214
  %v975 = vunpack.c.l.b16 %v215
  %v976 = vunpack.c.l.b16 %v216
  %v977 = vunpack.c.l.b16 %v217
  %v978 = vunpack.c.l.b16 %v218
  %v979 = vunpack.c.l.b16 %v219
  %v980 = vunpack.c.l.b16 %v220
  %v981 = vunpack.c.l.b16 %v221
  %v982 = vunpack.c.l.b16 %v222
  %v983 = vunpack.c.l.b16 %v223
  %v984 = vunpack.c.l.b16 %v224
  %v985 = vunpack.c.l.b16 %v225
  %v986 = vunpack.c.l.b16 %v226
  %v987 = vunpack.c.l.b16 %v227
  %v988 = vunpack.c.l.b16 %v228
  %v989 = vunpack.c.l.b16 %v229
  %v990 = vunpack.c.l.b16 %v230
  %v991 = vunpack.c.l.b16 %v231
  %v992 = vunpack.c.l.b16 %v232
  %v993 = vunpack.c.l.b16 %v233
  %v994 = vunpack.c.l.b16 %v234
  %v995 = vunpack.c.l.b16 %v235
  %v996 = vunpack.c.l.b16 %v236
  %v997 = vunpack.c.l.b16 %v237
  %v998 = vunpack.c.l.b16 %v238
  %v999 = vunpack.c.l.b16 %v239
  %v1000 = vunpack.c.l.b16 %v240
  %v1001 = vunpack.c.l.b16 %v241
  %v1002 = vunpack.c.l.b16 %v242
  %v1003 = vunpack.c.l.b16 %v243
  %v1004 = vunpack.c.l.b16 %v244
  %v1005 = vunpack.c.l.b16 %v245
  %v1006 = vunpack.c.l.b16 %v246
  %v1007 = vunpack.c.l.b16 %v247
  %v1008 = vunpack.c.l.b16 %v248
  %v1009 = vunpack.c.l.b16 %v249
  %v1010 = vunpack.c.l.b16 %v250
  %v1011 = vunpack.c.l.b16 %v251
  %v1012 = vunpack.c.l.b16 %v252
  %v1013 = vunpack.c.l.b16 %v253
  %v1014 = vunpack.c.l.b16 %v254
  %v1015 = vunpack.c.l.b16 %v255
  %v1016 = vunpack.c.l.b16 %v256
  %v1017 = vunpack.c.l.b16 %v257
  %v1018 = vunpack.c.l.b16 %v258
  %v1019 = vunpack.c.l.b16 %v259
  %v1020 = vunpack.c.l.b16 %v260
  %v1021 = vunpack.c.l.b16 %v261
  %v1022 = vunpack.c.l.b16 %v262
  %v1023 = vunpack.c.l.b16 %v263
  %v1024 = vunpack.c.l.b16 %v264
  %v1025 = vunpack.c.l.b16 %v265
  %v1026 = vunpack.c.l.b16 %v266
  %v1027 = vunpack.c.l.b16 %v267
  %v1028 = vunpack.c.l.b16 %v268
  %v1029 = vunpack.c.l.b16 %v269
  %v1030 = vunpack.c.l.b16 %v270
  %v1031 = vunpack.c.l.b16 %v271
  %v1032 = vunpack.c.l.b16 %v272
  %v1033 = vunpack.c.l.b16 %v273
  %v1034 = vunpack.c.l.b16 %v274
  %v1035 = vunpack.c.l.b16 %v275
  %v1036 = vunpack.c.l.b16 %v276
  %v1037 = vunpack.c.l.b16 %v277
  %v1038 = vunpack.c.l.b16 %v278
  %v1039 = vunpack.c.l.b16 %v279
  %v1040 = vunpack.c.l.b16 %v280
  %v1041 = vunpack.c.l.b16 %v281
  %v1042 = vunpack.c.l.b16 %v282
  %v1043 = vunpack.c.l.b16 %v283
  %v1044 = vunpack.c.l.b16 %v284
  %v1045 = vunpack.c.l.b16 %v285
  %v1046 = vunpack.c.l.b16 %v286
  %v1047 = vunpack.c.l.b16 %v287
  %v1048 = vunpack.c.l.b16 %v288
  %v1049 = vunpack.c.l.b16 %v289
  %v1050 = vunpack.c.l.b16 %v290
  %v1051 = vunpack.c.l.b16 %v291
  %v1052 = vunpack.c.l.b16 %v292
  %v1053 = vunpack.c.l.b16 %v293
  %v1054 = vunpack.c.l.b16 %v294
  %v1055 = vunpack.c.l.b16 %v295
  %v1056 = vunpack.c.l.b16 %v296
  %v1057 = vunpack.c.l.b16 %v297
  %v1058 = vunpack.c.l.b16 %v298
  %v1059 = vunpack.c.l.b16 %v299
  %v1060 = vunpack.c.l.b16 %v300
  %v1061 = vunpack.c.l.b16 %v301
  %v1062 = vunpack.c.l.b16 %v302
  %v1063 = vunpack.c.l.b16 %v303
  %v1064 = vunpack.c.l.b16 %v304
  %v1065 = vunpack.c.l.b16 %v305
  %v1066 = vunpack.c.l.b16 %v306
  %v1067 = vunpack.c.l.b16 %v307
  %v1068 = vunpack.c.l.b16 %v308
  %v1069 = vunpack.c.l.b16 %v309
  %v1070 = vunpack.c.l.b16 %v310
  %v1071 = vunpack.c.l.b16 %v311
  %v1072 = vunpack.c.l.b16 %v312
  %v1073 = vunpack.c.l.b16 %v313
  %v1074 = vunpack.c.l.b16 %v314
  %v1075 = vunpack.c.l.b16 %v315
  %v1076 = vunpack.c.l.b16 %v316
  %v1077 = vunpack.c.l.b16 %v317
  %v1078 = vunpack.c.l.b16 %v318
  %v1079 = vunpack.c.l.b16 %v319
  %v1080 = vunpack.c.l.b16 %v320
  %v1081 = vunpack.c.l.b16 %v321
  %v1082 = vunpack.c.l.b16 %v322
  %v1083 = vunpack.c.l.b16 %v323
  %v1084 = vunpack.c.l.b16 %v324
  %v1085 = vunpack.c.l.b16 %v325
  %v1086 = vunpack.c.l.b16 %v326
  %v1087 = vunpack.c.l.b16 %v327
  %v1088 = vunpack.c.l.b16 %v328
  %v1089 = vunpack.c.l.b16 %v329
  %v1090 = vunpack.c.l.b16 %v330
  %v1091 = vunpack.c.l.b16 %v331
  %v1092 = vunpack.c.l.b16 %v332
  %v1093 = vunpack.c.l.b16 %v333
  %v1094 = vunpack.c.l.b16 %v334
  %v1095 = vunpack.c.l.b16 %v335
  %v1096 = vunpack.c.l.b16 %v336
  %v1097 = vunpack.c.l.b16 %v337
  %v1098 = vpack.c.b16 %v811, %v810
  %v1099 = vpack.c.b16 %v813, %v812
  %v1100 = vpack.c.b16 %v815, %v814
  %v1101 = vpack.c.b16 %v817, %v816
  %v1102 = vpack.c.b16 %v819, %v818
  %v1103 = vpack.c.b16 %v821, %v820
  %v1104 = vpack.c.b16 %v823, %v822
  %v1105 = vpack.c.b16 %v825, %v824
  %v1106 = vpack.c.b16 %v827, %v826
  %v1107 = vpack.c.b16 %v829, %v828
  %v1108 = vpack.c.b16 %v831, %v830
  %v1109 = vpack.c.b16 %v833, %v832
  %v1110 = vpack.c.b16 %v835, %v834
  %v1111 = vpack.c.b16 %v837, %v836
  %v1112 = vpack.c.b16 %v839, %v838
  %v1113 = vpack.c.b16 %v841, %v840
  %v1114 = vpack.c.b16 %v843, %v842
  %v1115 = vpack.c.b16 %v845, %v844
  %v1116 = vpack.c.b16 %v847, %v846
  %v1117 = vpack.c.b16 %v849, %v848
  %v1118 = vpack.c.b16 %v851, %v850
  %v1119 = vpack.c.b16 %v853, %v852
  %v1120 = vpack.c.b16 %v855, %v854
  %v1121 = vpack.c.b16 %v857, %v856
  %v1122 = vpack.c.b16 %v859, %v858
  %v1123 = vpack.c.b16 %v861, %v860
  %v1124 = vpack.c.b16 %v863, %v862
  %v1125 = vpack.c.b16 %v865, %v864
  %v1126 = vpack.c.b16 %v867, %v866
  %v1127 = vpack.c.b16 %v869, %v868
  %v1128 = vpack.c.b16 %v871, %v870
  %v1129 = vpack.c.b16 %v873, %v872
  %v1130 = vpack.c.b16 %v875, %v874
  %v1131 = vpack.c.b16 %v877, %v876
  %v1132 = vpack.c.b16 %v879, %v878
  %v1133 = vpack.c.b16 %v881, %v880
  %v1134 = vpack.c.b16 %v883, %v882
  %v1135 = vpack.c.b16 %v885, %v884
  %v1136 = vpack.c.b16 %v887, %v886
  %v1137 = vpack.c.b16 %v889, %v888
  %v1138 = vpack.c.b16 %v891, %v890
  %v1139 = vpack.c.b16 %v893, %v892
  %v1140 = vpack.c.b16 %v895, %v894
  %v1141 = vpack.c.b16 %v897, %v896
  %v1142 = vpack.c.b16 %v899, %v898
  %v1143 = vpack.c.b16 %v901, %v900
  %v1144 = vpack.c.b16 %v903, %v902
  %v1145 = vpack.c.b16 %v905, %v904
  %v1146 = vpack.c.b16 %v907, %v906
  %v1147 = vpack.c.b16 %v909, %v908
  %v1148 = vpack.c.b16 %v911, %v910
  %v1149 = vpack.c.b16 %v913, %v912
  %v1150 = vpack.c.b16 %v915, %v914
  %v1151 = vpack.c.b16 %v917, %v916
  %v1152 = vpack.c.b16 %v919, %v918
  %v1153 = vpack.c.b16 %v921, %v920
  %v1154 = vpack.c.b16 %v923, %v922
  %v1155 = vpack.c.b16 %v925, %v924
  %v1156 = vpack.c.b16 %v927, %v926
  %v1157 = vpack.c.b16 %v929, %v928
  %v1158 = vpack.c.b16 %v931, %v930
  %v1159 = vpack.c.b16 %v933, %v932
  %v1160 = vpack.c.b16 %v935, %v934
  %v1161 = vpack.c.b16 %v937, %v936
  %v1162 = vpack.c.b16 %v939, %v938
  %v1163 = vpack.c.b16 %v941, %v940
  %v1164 = vpack.c.b16 %v943, %v942
  %v1165 = vpack.c.b16 %v945, %v944
  %v1166 = vpack.c.b16 %v947, %v946
  %v1167 = vpack.c.b16 %v949, %v948
  %v1168 = vpack.c.b16 %v951, %v950
  %v1169 = vpack.c.b16 %v953, %v952
  %v1170 = vpack.c.b16 %v955, %v954
  %v1171 = vpack.c.b16 %v957, %v956
  %v1172 = vpack.c.b16 %v959, %v958
  %v1173 = vpack.c.b16 %v961, %v960
  %v1174 = vpack.c.b16 %v963, %v962
  %v1175 = vpack.c.b16 %v965, %v964
  %v1176 = vpack.c.b16 %v967, %v966
  %v1177 = vpack.c.b16 %v969, %v968
  %v1178 = vpack.c.b16 %v971, %v970
  %v1179 = vpack.c.b16 %v973, %v972
  %v1180 = vpack.c.b16 %v975, %v974
  %v1181 = vpack.c.b16 %v977, %v976
  %v1182 = vpack.c.b16 %v979, %v978
  %v1183 = vpack.c.b16 %v981, %v980
  %v1184 = vpack.c.b16 %v983, %v982
  %v1185 = vpack.c.b16 %v985, %v984
  %v1186 = vpack.c.b16 %v987, %v986
  %v1187 = vpack.c.b16 %v989, %v988
  %v1188 = vpack.c.b16 %v991, %v990
  %v1189 = vpack.c.b16 %v993, %v992
  %v1190 = vpack.c.b16 %v995, %v994
  %v1191 = vpack.c.b16 %v997, %v996
  %v1192 = vpack.c.b16 %v999, %v998
  %v1193 = vpack.c.b16 %v1001, %v1000
  %v1194 = vpack.c.b16 %v1003, %v1002
  %v1195 = vpack.c.b16 %v1005, %v1004
  %v1196 = vpack.c.b16 %v1007, %v1006
  %v1197 = vpack.c.b16 %v1009, %v1008
  %v1198 = vpack.c.b16 %v1011, %v1010
  %v1199 = vpack.c.b16 %v1013, %v1012
  %v1200 = vpack.c.b16 %v1015, %v1014
  %v1201 = vpack.c.b16 %v1017, %v1016
  %v1202 = vpack.c.b16 %v1019, %v1018
  %v1203 = vpack.c.b16 %v1021, %v1020
  %v1204 = vpack.c.b16 %v1023, %v1022
  %v1205 = vpack.c.b16 %v1025, %v1024
  %v1206 = vpack.c.b16 %v1027, %v1026
  %v1207 = vpack.c.b16 %v1029, %v1028
  %v1208 = vpack.c.b16 %v1031, %v1030
  %v1209 = vpack.c.b16 %v1033, %v1032
  %v1210 = vpack.c.b16 %v1035, %v1034
  %v1211 = vpack.c.b16 %v1037, %v1036
  %v1212 = vpack.c.b16 %v1039, %v1038
  %v1213 = vpack.c.b16 %v1041, %v1040
  %v1214 = vpack.c.b16 %v1043, %v1042
  %v1215 = vpack.c.b16 %v1045, %v1044
  %v1216 = vpack.c.b16 %v1047, %v1046
  %v1217 = vpack.c.b16 %v1049, %v1048
  %v1218 = vpack.c.b16 %v1051, %v1050
  %v1219 = vpack.c.b16 %v1053, %v1052
  %v1220 = vpack.c.b16 %v1055, %v1054
  %v1221 = vpack.c.b16 %v1057, %v1056
  %v1222 = vpack.c.b16 %v1059, %v1058
  %v1223 = vpack.c.b16 %v1061, %v1060
  %v1224 = vpack.c.b16 %v1063, %v1062
  %v1225 = vpack.c.b16 %v1065, %v1064
  %v1226 = vpack.c.b16 %v1067, %v1066
  %v1227 = vpack.c.b16 %v1069, %v1068
  %v1228 = vpack.c.b16 %v1071, %v1070
  %v1229 = vpack.c.b16 %v1073, %v1072
  %v1230 = vpack.c.b16 %v1075, %v1074
  %v1231 = vpack.c.b16 %v1077, %v1076
  %v1232 = vpack.c.b16 %v1079, %v1078
  %v1233 = vpack.c.b16 %v1081, %v1080
  %v1234 = vpack.c.b16 %v1083, %v1082
  %v1235 = vpack.c.b16 %v1085, %v1084
  %v1236 = vpack.c.b16 %v1087, %v1086
  %v1237 = vpack.c.b16 %v1089, %v1088
  %v1238 = vpack.c.b16 %v1091, %v1090
  %v1239 = vpack.c.b16 %v1093, %v1092
  %v1240 = vpack.c.b16 %v1095, %v1094
  %v1241 = vpack.c.b16 %v1097, %v1096
  %1386 = vmatpush.bf16.msra.mxu0 %v1105
  %1387 = vmatpush.bf16.msra.mxu0 %v1104
  %1388 = vmatpush.bf16.msra.mxu0 %v1103
  %1389 = vmatpush.bf16.msra.mxu0 %v1102
  %1390 = vmatpush.bf16.msra.mxu0 %v1101
  %1391 = vmatpush.bf16.msra.mxu0 %v1100
  %1392 = vmatpush.bf16.msra.mxu0 %v1099
  %1393 = vmatpush.bf16.msra.mxu0 %v1098
  %1394 = vmatmul.bf16.gmra.mxu0 %v450
  %v1395 = vpop.f32.mrf.mxu0
  %v1396 = vadd.f32 %v340, %v1395
  %v1397 = vpop.f32.mrf.mxu0
  %v1398 = vadd.f32 %v340, %v1397
  %1399 = vmatmul.bf16.gmra.mxu0 %v468
  %v1400 = vpop.f32.mrf.mxu0
  %v1401 = vadd.f32 %v340, %v1400
  %v1402 = vpop.f32.mrf.mxu0
  %v1403 = vadd.f32 %v340, %v1402
  %1404 = vdwg.mxu0
  %1405 = vmatpush.bf16.msra.mxu0 %v1113
  %1406 = vmatpush.bf16.msra.mxu0 %v1112
  %1407 = vmatpush.bf16.msra.mxu0 %v1111
  %1408 = vmatpush.bf16.msra.mxu0 %v1110
  %1409 = vmatpush.bf16.msra.mxu0 %v1109
  %1410 = vmatpush.bf16.msra.mxu0 %v1108
  %1411 = vmatpush.bf16.msra.mxu0 %v1107
  %1412 = vmatpush.bf16.msra.mxu0 %v1106
  %1413 = vmatmul.bf16.gmra.mxu0 %v451
  %v1414 = vpop.f32.mrf.mxu0
  %v1415 = vadd.f32 %v1396, %v1414
  %v1416 = vpop.f32.mrf.mxu0
  %v1417 = vadd.f32 %v1398, %v1416
  %1418 = vmatmul.bf16.gmra.mxu0 %v469
  %v1419 = vpop.f32.mrf.mxu0
  %v1420 = vadd.f32 %v1401, %v1419
  %v1421 = vpop.f32.mrf.mxu0
  %v1422 = vadd.f32 %v1403, %v1421
  %1423 = vdwg.mxu0
  %1424 = vmatpush.bf16.msra.mxu0 %v1121
  %1425 = vmatpush.bf16.msra.mxu0 %v1120
  %1426 = vmatpush.bf16.msra.mxu0 %v1119
  %1427 = vmatpush.bf16.msra.mxu0 %v1118
  %1428 = vmatpush.bf16.msra.mxu0 %v1117
  %1429 = vmatpush.bf16.msra.mxu0 %v1116
  %1430 = vmatpush.bf16.msra.mxu0 %v1115
  %1431 = vmatpush.bf16.msra.mxu0 %v1114
  %1432 = vmatmul.bf16.gmra.mxu0 %v452
  %v1433 = vpop.f32.mrf.mxu0
  %v1434 = vadd.f32 %v1415, %v1433
  %v1435 = vpop.f32.mrf.mxu0
  %v1436 = vadd.f32 %v1417, %v1435
  %1437 = vmatmul.bf16.gmra.mxu0 %v470
  %v1438 = vpop.f32.mrf.mxu0
  %v1439 = vadd.f32 %v1420, %v1438
  %v1440 = vpop.f32.mrf.mxu0
  %v1441 = vadd.f32 %v1422, %v1440
  %1442 = vdwg.mxu0
  %1443 = vmatpush.bf16.msra.mxu0 %v1129
  %1444 = vmatpush.bf16.msra.mxu0 %v1128
  %1445 = vmatpush.bf16.msra.mxu0 %v1127
  %1446 = vmatpush.bf16.msra.mxu0 %v1126
  %1447 = vmatpush.bf16.msra.mxu0 %v1125
  %1448 = vmatpush.bf16.msra.mxu0 %v1124
  %1449 = vmatpush.bf16.msra.mxu0 %v1123
  %1450 = vmatpush.bf16.msra.mxu0 %v1122
  %1451 = vmatmul.bf16.gmra.mxu0 %v453
  %v1452 = vpop.f32.mrf.mxu0
  %v1453 = vadd.f32 %v1434, %v1452
  %v1454 = vpop.f32.mrf.mxu0
  %v1455 = vadd.f32 %v1436, %v1454
  %1456 = vmatmul.bf16.gmra.mxu0 %v471
  %v1457 = vpop.f32.mrf.mxu0
  %v1458 = vadd.f32 %v1439, %v1457
  %v1459 = vpop.f32.mrf.mxu0
  %v1460 = vadd.f32 %v1441, %v1459
  %1461 = vdwg.mxu0
  %1462 = vmatpush.bf16.msra.mxu0 %v1137
  %1463 = vmatpush.bf16.msra.mxu0 %v1136
  %1464 = vmatpush.bf16.msra.mxu0 %v1135
  %1465 = vmatpush.bf16.msra.mxu0 %v1134
  %1466 = vmatpush.bf16.msra.mxu0 %v1133
  %1467 = vmatpush.bf16.msra.mxu0 %v1132
  %1468 = vmatpush.bf16.msra.mxu0 %v1131
  %1469 = vmatpush.bf16.msra.mxu0 %v1130
  %1470 = vmatmul.bf16.gmra.mxu0 %v454
  %v1471 = vpop.f32.mrf.mxu0
  %v1472 = vadd.f32 %v1453, %v1471
  %v1473 = vpop.f32.mrf.mxu0
  %v1474 = vadd.f32 %v1455, %v1473
  %1475 = vmatmul.bf16.gmra.mxu0 %v472
  %v1476 = vpop.f32.mrf.mxu0
  %v1477 = vadd.f32 %v1458, %v1476
  %v1478 = vpop.f32.mrf.mxu0
  %v1479 = vadd.f32 %v1460, %v1478
  %1480 = vdwg.mxu0
  %1481 = vmatpush.bf16.msra.mxu0 %v1145
  %1482 = vmatpush.bf16.msra.mxu0 %v1144
  %1483 = vmatpush.bf16.msra.mxu0 %v1143
  %1484 = vmatpush.bf16.msra.mxu0 %v1142
  %1485 = vmatpush.bf16.msra.mxu0 %v1141
  %1486 = vmatpush.bf16.msra.mxu0 %v1140
  %1487 = vmatpush.bf16.msra.mxu0 %v1139
  %1488 = vmatpush.bf16.msra.mxu0 %v1138
  %1489 = vmatmul.bf16.gmra.mxu0 %v455
  %v1490 = vpop.f32.mrf.mxu0
  %v1491 = vadd.f32 %v1472, %v1490
  %v1492 = vpop.f32.mrf.mxu0
  %v1493 = vadd.f32 %v1474, %v1492
  %1494 = vmatmul.bf16.gmra.mxu0 %v473
  %v1495 = vpop.f32.mrf.mxu0
  %v1496 = vadd.f32 %v1477, %v1495
  %v1497 = vpop.f32.mrf.mxu0
  %v1498 = vadd.f32 %v1479, %v1497
  %1499 = vdwg.mxu0
  %1500 = vmatpush.bf16.msra.mxu0 %v1153
  %1501 = vmatpush.bf16.msra.mxu0 %v1152
  %1502 = vmatpush.bf16.msra.mxu0 %v1151
  %1503 = vmatpush.bf16.msra.mxu0 %v1150
  %1504 = vmatpush.bf16.msra.mxu0 %v1149
  %1505 = vmatpush.bf16.msra.mxu0 %v1148
  %1506 = vmatpush.bf16.msra.mxu0 %v1147
  %1507 = vmatpush.bf16.msra.mxu0 %v1146
  %1508 = vmatmul.bf16.gmra.mxu0 %v456
  %v1509 = vpop.f32.mrf.mxu0
  %v1510 = vadd.f32 %v1491, %v1509
  %v1511 = vpop.f32.mrf.mxu0
  %v1512 = vadd.f32 %v1493, %v1511
  %1513 = vmatmul.bf16.gmra.mxu0 %v474
  %v1514 = vpop.f32.mrf.mxu0
  %v1515 = vadd.f32 %v1496, %v1514
  %v1516 = vpop.f32.mrf.mxu0
  %v1517 = vadd.f32 %v1498, %v1516
  %1518 = vdwg.mxu0
  %1519 = vmatpush.bf16.msra.mxu0 %v1161
  %1520 = vmatpush.bf16.msra.mxu0 %v1160
  %1521 = vmatpush.bf16.msra.mxu0 %v1159
  %1522 = vmatpush.bf16.msra.mxu0 %v1158
  %1523 = vmatpush.bf16.msra.mxu0 %v1157
  %1524 = vmatpush.bf16.msra.mxu0 %v1156
  %1525 = vmatpush.bf16.msra.mxu0 %v1155
  %1526 = vmatpush.bf16.msra.mxu0 %v1154
  %1527 = vmatmul.bf16.gmra.mxu0 %v457
  %v1528 = vpop.f32.mrf.mxu0
  %v1529 = vadd.f32 %v1510, %v1528
  %v1530 = vpop.f32.mrf.mxu0
  %v1531 = vadd.f32 %v1512, %v1530
  %1532 = vmatmul.bf16.gmra.mxu0 %v475
  %v1533 = vpop.f32.mrf.mxu0
  %v1534 = vadd.f32 %v1515, %v1533
  %v1535 = vpop.f32.mrf.mxu0
  %v1536 = vadd.f32 %v1517, %v1535
  %1537 = vdwg.mxu0
  %1538 = vmatpush.bf16.msra.mxu0 %v1169
  %1539 = vmatpush.bf16.msra.mxu0 %v1168
  %1540 = vmatpush.bf16.msra.mxu0 %v1167
  %1541 = vmatpush.bf16.msra.mxu0 %v1166
  %1542 = vmatpush.bf16.msra.mxu0 %v1165
  %1543 = vmatpush.bf16.msra.mxu0 %v1164
  %1544 = vmatpush.bf16.msra.mxu0 %v1163
  %1545 = vmatpush.bf16.msra.mxu0 %v1162
  %1546 = vmatmul.bf16.gmra.mxu0 %v458
  %v1547 = vpop.f32.mrf.mxu0
  %v1548 = vadd.f32 %v1529, %v1547
  %v1549 = vpop.f32.mrf.mxu0
  %v1550 = vadd.f32 %v1531, %v1549
  %1551 = vmatmul.bf16.gmra.mxu0 %v476
  %v1552 = vpop.f32.mrf.mxu0
  %v1553 = vadd.f32 %v1534, %v1552
  %v1554 = vpop.f32.mrf.mxu0
  %v1555 = vadd.f32 %v1536, %v1554
  %1556 = vdwg.mxu0
  %1557 = vmatpush.bf16.msra.mxu0 %v1177
  %1558 = vmatpush.bf16.msra.mxu0 %v1176
  %1559 = vmatpush.bf16.msra.mxu0 %v1175
  %1560 = vmatpush.bf16.msra.mxu0 %v1174
  %1561 = vmatpush.bf16.msra.mxu0 %v1173
  %1562 = vmatpush.bf16.msra.mxu0 %v1172
  %1563 = vmatpush.bf16.msra.mxu0 %v1171
  %1564 = vmatpush.bf16.msra.mxu0 %v1170
  %1565 = vmatmul.bf16.gmra.mxu0 %v459
  %v1566 = vpop.f32.mrf.mxu0
  %v1567 = vadd.f32 %v1548, %v1566
  %v1568 = vpop.f32.mrf.mxu0
  %v1569 = vadd.f32 %v1550, %v1568
  %1570 = vmatmul.bf16.gmra.mxu0 %v477
  %v1571 = vpop.f32.mrf.mxu0
  %v1572 = vadd.f32 %v1553, %v1571
  %v1573 = vpop.f32.mrf.mxu0
  %v1574 = vadd.f32 %v1555, %v1573
  %1575 = vdwg.mxu0
  %1576 = vmatpush.bf16.msra.mxu0 %v1185
  %1577 = vmatpush.bf16.msra.mxu0 %v1184
  %1578 = vmatpush.bf16.msra.mxu0 %v1183
  %1579 = vmatpush.bf16.msra.mxu0 %v1182
  %1580 = vmatpush.bf16.msra.mxu0 %v1181
  %1581 = vmatpush.bf16.msra.mxu0 %v1180
  %1582 = vmatpush.bf16.msra.mxu0 %v1179
  %1583 = vmatpush.bf16.msra.mxu0 %v1178
  %1584 = vmatmul.bf16.gmra.mxu0 %v460
  %v1585 = vpop.f32.mrf.mxu0
  %v1586 = vadd.f32 %v1567, %v1585
  %v1587 = vpop.f32.mrf.mxu0
  %v1588 = vadd.f32 %v1569, %v1587
  %1589 = vmatmul.bf16.gmra.mxu0 %v478
  %v1590 = vpop.f32.mrf.mxu0
  %v1591 = vadd.f32 %v1572, %v1590
  %v1592 = vpop.f32.mrf.mxu0
  %v1593 = vadd.f32 %v1574, %v1592
  %1594 = vdwg.mxu0
  %1595 = vmatpush.bf16.msra.mxu0 %v1193
  %1596 = vmatpush.bf16.msra.mxu0 %v1192
  %1597 = vmatpush.bf16.msra.mxu0 %v1191
  %1598 = vmatpush.bf16.msra.mxu0 %v1190
  %1599 = vmatpush.bf16.msra.mxu0 %v1189
  %1600 = vmatpush.bf16.msra.mxu0 %v1188
  %1601 = vmatpush.bf16.msra.mxu0 %v1187
  %1602 = vmatpush.bf16.msra.mxu0 %v1186
  %1603 = vmatmul.bf16.gmra.mxu0 %v461
  %v1604 = vpop.f32.mrf.mxu0
  %v1605 = vadd.f32 %v1586, %v1604
  %v1606 = vpop.f32.mrf.mxu0
  %v1607 = vadd.f32 %v1588, %v1606
  %1608 = vmatmul.bf16.gmra.mxu0 %v479
  %v1609 = vpop.f32.mrf.mxu0
  %v1610 = vadd.f32 %v1591, %v1609
  %v1611 = vpop.f32.mrf.mxu0
  %v1612 = vadd.f32 %v1593, %v1611
  %1613 = vdwg.mxu0
  %1614 = vmatpush.bf16.msra.mxu0 %v1201
  %1615 = vmatpush.bf16.msra.mxu0 %v1200
  %1616 = vmatpush.bf16.msra.mxu0 %v1199
  %1617 = vmatpush.bf16.msra.mxu0 %v1198
  %1618 = vmatpush.bf16.msra.mxu0 %v1197
  %1619 = vmatpush.bf16.msra.mxu0 %v1196
  %1620 = vmatpush.bf16.msra.mxu0 %v1195
  %1621 = vmatpush.bf16.msra.mxu0 %v1194
  %1622 = vmatmul.bf16.gmra.mxu0 %v462
  %v1623 = vpop.f32.mrf.mxu0
  %v1624 = vadd.f32 %v1605, %v1623
  %v1625 = vpop.f32.mrf.mxu0
  %v1626 = vadd.f32 %v1607, %v1625
  %1627 = vmatmul.bf16.gmra.mxu0 %v480
  %v1628 = vpop.f32.mrf.mxu0
  %v1629 = vadd.f32 %v1610, %v1628
  %v1630 = vpop.f32.mrf.mxu0
  %v1631 = vadd.f32 %v1612, %v1630
  %1632 = vdwg.mxu0
  %1633 = vmatpush.bf16.msra.mxu0 %v1209
  %1634 = vmatpush.bf16.msra.mxu0 %v1208
  %1635 = vmatpush.bf16.msra.mxu0 %v1207
  %1636 = vmatpush.bf16.msra.mxu0 %v1206
  %1637 = vmatpush.bf16.msra.mxu0 %v1205
  %1638 = vmatpush.bf16.msra.mxu0 %v1204
  %1639 = vmatpush.bf16.msra.mxu0 %v1203
  %1640 = vmatpush.bf16.msra.mxu0 %v1202
  %1641 = vmatmul.bf16.gmra.mxu0 %v463
  %v1642 = vpop.f32.mrf.mxu0
  %v1643 = vadd.f32 %v1624, %v1642
  %v1644 = vpop.f32.mrf.mxu0
  %v1645 = vadd.f32 %v1626, %v1644
  %1646 = vmatmul.bf16.gmra.mxu0 %v481
  %v1647 = vpop.f32.mrf.mxu0
  %v1648 = vadd.f32 %v1629, %v1647
  %v1649 = vpop.f32.mrf.mxu0
  %v1650 = vadd.f32 %v1631, %v1649
  %1651 = vdwg.mxu0
  %1652 = vmatpush.bf16.msra.mxu0 %v1217
  %1653 = vmatpush.bf16.msra.mxu0 %v1216
  %1654 = vmatpush.bf16.msra.mxu0 %v1215
  %1655 = vmatpush.bf16.msra.mxu0 %v1214
  %1656 = vmatpush.bf16.msra.mxu0 %v1213
  %1657 = vmatpush.bf16.msra.mxu0 %v1212
  %1658 = vmatpush.bf16.msra.mxu0 %v1211
  %1659 = vmatpush.bf16.msra.mxu0 %v1210
  %1660 = vmatmul.bf16.gmra.mxu0 %v464
  %v1661 = vpop.f32.mrf.mxu0
  %v1662 = vadd.f32 %v1643, %v1661
  %v1663 = vpop.f32.mrf.mxu0
  %v1664 = vadd.f32 %v1645, %v1663
  %1665 = vmatmul.bf16.gmra.mxu0 %v482
  %v1666 = vpop.f32.mrf.mxu0
  %v1667 = vadd.f32 %v1648, %v1666
  %v1668 = vpop.f32.mrf.mxu0
  %v1669 = vadd.f32 %v1650, %v1668
  %1670 = vdwg.mxu0
  %1671 = vmatpush.bf16.msra.mxu0 %v1225
  %1672 = vmatpush.bf16.msra.mxu0 %v1224
  %1673 = vmatpush.bf16.msra.mxu0 %v1223
  %1674 = vmatpush.bf16.msra.mxu0 %v1222
  %1675 = vmatpush.bf16.msra.mxu0 %v1221
  %1676 = vmatpush.bf16.msra.mxu0 %v1220
  %1677 = vmatpush.bf16.msra.mxu0 %v1219
  %1678 = vmatpush.bf16.msra.mxu0 %v1218
  %1679 = vmatmul.bf16.gmra.mxu0 %v465
  %v1680 = vpop.f32.mrf.mxu0
  %v1681 = vadd.f32 %v1662, %v1680
  %v1682 = vpop.f32.mrf.mxu0
  %v1683 = vadd.f32 %v1664, %v1682
  %1684 = vmatmul.bf16.gmra.mxu0 %v483
  %v1685 = vpop.f32.mrf.mxu0
  %v1686 = vadd.f32 %v1667, %v1685
  %v1687 = vpop.f32.mrf.mxu0
  %v1688 = vadd.f32 %v1669, %v1687
  %1689 = vdwg.mxu0
  %1690 = vmatpush.bf16.msra.mxu0 %v1233
  %1691 = vmatpush.bf16.msra.mxu0 %v1232
  %1692 = vmatpush.bf16.msra.mxu0 %v1231
  %1693 = vmatpush.bf16.msra.mxu0 %v1230
  %1694 = vmatpush.bf16.msra.mxu0 %v1229
  %1695 = vmatpush.bf16.msra.mxu0 %v1228
  %1696 = vmatpush.bf16.msra.mxu0 %v1227
  %1697 = vmatpush.bf16.msra.mxu0 %v1226
  %1698 = vmatmul.bf16.gmra.mxu0 %v466
  %v1699 = vpop.f32.mrf.mxu0
  %v1700 = vadd.f32 %v1681, %v1699
  %v1701 = vpop.f32.mrf.mxu0
  %v1702 = vadd.f32 %v1683, %v1701
  %1703 = vmatmul.bf16.gmra.mxu0 %v484
  %v1704 = vpop.f32.mrf.mxu0
  %v1705 = vadd.f32 %v1686, %v1704
  %v1706 = vpop.f32.mrf.mxu0
  %v1707 = vadd.f32 %v1688, %v1706
  %1708 = vdwg.mxu0
  %1709 = vmatpush.bf16.msra.mxu0 %v1241
  %1710 = vmatpush.bf16.msra.mxu0 %v1240
  %1711 = vmatpush.bf16.msra.mxu0 %v1239
  %1712 = vmatpush.bf16.msra.mxu0 %v1238
  %1713 = vmatpush.bf16.msra.mxu0 %v1237
  %1714 = vmatpush.bf16.msra.mxu0 %v1236
  %1715 = vmatpush.bf16.msra.mxu0 %v1235
  %1716 = vmatpush.bf16.msra.mxu0 %v1234
  %1717 = vmatmul.bf16.gmra.mxu0 %v467
  %v1718 = vpop.f32.mrf.mxu0
  %v1719 = vadd.f32 %v1700, %v1718
  %v1720 = vpop.f32.mrf.mxu0
  %v1721 = vadd.f32 %v1702, %v1720
  %1722 = vmatmul.bf16.gmra.mxu0 %v485
  %v1723 = vpop.f32.mrf.mxu0
  %v1724 = vadd.f32 %v1705, %v1723
  %v1725 = vpop.f32.mrf.mxu0
  %v1726 = vadd.f32 %v1707, %v1725
  %1727 = vdwg.mxu0
  %1728 = vst [vmem:[%s3] sm:$0xff] %v1719
  %1729 = vst [vmem:[%s3 + $0x8] sm:$0xff] %v1721
  %1730 = vst [vmem:[%s3 + $0x10] sm:$0xff] %v1724
  %1731 = vst [vmem:[%s3 + $0x18] sm:$0xff] %v1726
  // Predicated region
  $region14: #{unet_forward.15} parent=0 // pred_check
    _
  $region15: #{unet_forward.15} parent=0 // pred_check_branch
    %1733 = sbr.rel (0) target = $region17
  $region16: #{unet_forward.15} parent=0 // pred_region
    _
  $region17: #{unet_forward.15} parent=0 // pred_fallthru
    _
  // Predicated region
  $region18: #{unet_forward.15} parent=0 // pred_check
    _
  $region19: #{unet_forward.15} parent=0 // pred_check_branch
    %1735 = sbr.rel (0) target = $region21
  $region20: #{unet_forward.15} parent=0 // pred_region
    _
  $region21: #{unet_forward.15} parent=0 // pred_fallthru
    _

// kernel: unet_forward.16
$region0: #{unet_forward.16}
  #allocation0 [shape = 'u32[]', space=smem, size = 0x4, offset = 0x4, fixed_abs, tag = 'smem constant byte address 0x4 - core index']
  #allocation1 [shape = 'u32[72,128]{1,0:T(1,128)}', space=vmem, size = 0x9000, scoped, tag = 'internal scratch']
  %s0 = inlined_call_operand.vmem [shape: bf16[128,2304], index: 0, kind: input, shape index: {}]
  %s1 = inlined_call_operand.vmem [shape: bf16[2304,64], index: 1, kind: input, shape index: {}]
  %s2 = inlined_call_operand.vmem [shape: f32[1,64], index: 2, kind: input, shape index: {}]
  %s3 = inlined_call_operand.vmem [shape: f32[128,64], index: 3, kind: output, shape index: {}]
  %s4 = sld [smem:[#allocation0]]
  $region22: #{unet_forward.16} parent=0
    _
  %s6 = ssub.s32 1, %s4
  %s7 = scalar_select 0, %s6, %s4
  // Predicated region
  $region2: #{unet_forward.16} parent=0 // pred_check
    _
  $region3: #{unet_forward.16} parent=0 // pred_check_branch
    %9 = sbr.rel (0) target = $region5
  $region4: #{unet_forward.16} parent=0 // pred_region
    _
  $region5: #{unet_forward.16} parent=0 // pred_fallthru
    _
  // Predicated region
  $region6: #{unet_forward.16} parent=0 // pred_check
    _
  $region7: #{unet_forward.16} parent=0 // pred_check_branch
    %11 = sbr.rel (0) target = $region9
  $region8: #{unet_forward.16} parent=0 // pred_region
    _
  $region9: #{unet_forward.16} parent=0 // pred_fallthru
    _
  // Predicated region
  $region10: #{unet_forward.16} parent=0 // pred_check
    _
  $region11: #{unet_forward.16} parent=0 // pred_check_branch
    %13 = sbr.rel (0) target = $region13
  $region12: #{unet_forward.16} parent=0 // pred_region
    _
  $region13: #{unet_forward.16} parent=0 // pred_fallthru
    _
  %v14 = vld [vmem:[%s0] sm:$0xff]
  %v15 = vld [vmem:[%s0 + $0x8] sm:$0xff]
  %v16 = vld [vmem:[%s0 + $0x10] sm:$0xff]
  %v17 = vld [vmem:[%s0 + $0x18] sm:$0xff]
  %v18 = vld [vmem:[%s0 + $0x20] sm:$0xff]
  %v19 = vld [vmem:[%s0 + $0x28] sm:$0xff]
  %v20 = vld [vmem:[%s0 + $0x30] sm:$0xff]
  %v21 = vld [vmem:[%s0 + $0x38] sm:$0xff]
  %v22 = vld [vmem:[%s0 + $0x40] sm:$0xff]
  %v23 = vld [vmem:[%s0 + $0x48] sm:$0xff]
  %v24 = vld [vmem:[%s0 + $0x50] sm:$0xff]
  %v25 = vld [vmem:[%s0 + $0x58] sm:$0xff]
  %v26 = vld [vmem:[%s0 + $0x60] sm:$0xff]
  %v27 = vld [vmem:[%s0 + $0x68] sm:$0xff]
  %v28 = vld [vmem:[%s0 + $0x70] sm:$0xff]
  %v29 = vld [vmem:[%s0 + $0x78] sm:$0xff]
  %v30 = vld [vmem:[%s0 + $0x80] sm:$0xff]
  %v31 = vld [vmem:[%s0 + $0x88] sm:$0xff]
  %v32 = vld [vmem:[%s0 + $0x90] sm:$0xff]
  %v33 = vld [vmem:[%s0 + $0x98] sm:$0xff]
  %v34 = vld [vmem:[%s0 + $0xa0] sm:$0xff]
  %v35 = vld [vmem:[%s0 + $0xa8] sm:$0xff]
  %v36 = vld [vmem:[%s0 + $0xb0] sm:$0xff]
  %v37 = vld [vmem:[%s0 + $0xb8] sm:$0xff]
  %v38 = vld [vmem:[%s0 + $0xc0] sm:$0xff]
  %v39 = vld [vmem:[%s0 + $0xc8] sm:$0xff]
  %v40 = vld [vmem:[%s0 + $0xd0] sm:$0xff]
  %v41 = vld [vmem:[%s0 + $0xd8] sm:$0xff]
  %v42 = vld [vmem:[%s0 + $0xe0] sm:$0xff]
  %v43 = vld [vmem:[%s0 + $0xe8] sm:$0xff]
  %v44 = vld [vmem:[%s0 + $0xf0] sm:$0xff]
  %v45 = vld [vmem:[%s0 + $0xf8] sm:$0xff]
  %v46 = vld [vmem:[%s0 + $0x100] sm:$0xff]
  %v47 = vld [vmem:[%s0 + $0x108] sm:$0xff]
  %v48 = vld [vmem:[%s0 + $0x110] sm:$0xff]
  %v49 = vld [vmem:[%s0 + $0x118] sm:$0xff]
  %v50 = vld [vmem:[%s0 + $0x120] sm:$0xff]
  %v51 = vld [vmem:[%s0 + $0x128] sm:$0xff]
  %v52 = vld [vmem:[%s0 + $0x130] sm:$0xff]
  %v53 = vld [vmem:[%s0 + $0x138] sm:$0xff]
  %v54 = vld [vmem:[%s0 + $0x140] sm:$0xff]
  %v55 = vld [vmem:[%s0 + $0x148] sm:$0xff]
  %v56 = vld [vmem:[%s0 + $0x150] sm:$0xff]
  %v57 = vld [vmem:[%s0 + $0x158] sm:$0xff]
  %v58 = vld [vmem:[%s0 + $0x160] sm:$0xff]
  %v59 = vld [vmem:[%s0 + $0x168] sm:$0xff]
  %v60 = vld [vmem:[%s0 + $0x170] sm:$0xff]
  %v61 = vld [vmem:[%s0 + $0x178] sm:$0xff]
  %v62 = vld [vmem:[%s0 + $0x180] sm:$0xff]
  %v63 = vld [vmem:[%s0 + $0x188] sm:$0xff]
  %v64 = vld [vmem:[%s0 + $0x190] sm:$0xff]
  %v65 = vld [vmem:[%s0 + $0x198] sm:$0xff]
  %v66 = vld [vmem:[%s0 + $0x1a0] sm:$0xff]
  %v67 = vld [vmem:[%s0 + $0x1a8] sm:$0xff]
  %v68 = vld [vmem:[%s0 + $0x1b0] sm:$0xff]
  %v69 = vld [vmem:[%s0 + $0x1b8] sm:$0xff]
  %v70 = vld [vmem:[%s0 + $0x1c0] sm:$0xff]
  %v71 = vld [vmem:[%s0 + $0x1c8] sm:$0xff]
  %v72 = vld [vmem:[%s0 + $0x1d0] sm:$0xff]
  %v73 = vld [vmem:[%s0 + $0x1d8] sm:$0xff]
  %v74 = vld [vmem:[%s0 + $0x1e0] sm:$0xff]
  %v75 = vld [vmem:[%s0 + $0x1e8] sm:$0xff]
  %v76 = vld [vmem:[%s0 + $0x1f0] sm:$0xff]
  %v77 = vld [vmem:[%s0 + $0x1f8] sm:$0xff]
  %v78 = vld [vmem:[%s0 + $0x200] sm:$0xff]
  %v79 = vld [vmem:[%s0 + $0x208] sm:$0xff]
  %v80 = vld [vmem:[%s0 + $0x210] sm:$0xff]
  %v81 = vld [vmem:[%s0 + $0x218] sm:$0xff]
  %v82 = vld [vmem:[%s0 + $0x220] sm:$0xff]
  %v83 = vld [vmem:[%s0 + $0x228] sm:$0xff]
  %v84 = vld [vmem:[%s0 + $0x230] sm:$0xff]
  %v85 = vld [vmem:[%s0 + $0x238] sm:$0xff]
  %v86 = vld [vmem:[%s0 + $0x240] sm:$0xff]
  %v87 = vld [vmem:[%s0 + $0x248] sm:$0xff]
  %v88 = vld [vmem:[%s0 + $0x250] sm:$0xff]
  %v89 = vld [vmem:[%s0 + $0x258] sm:$0xff]
  %v90 = vld [vmem:[%s0 + $0x260] sm:$0xff]
  %v91 = vld [vmem:[%s0 + $0x268] sm:$0xff]
  %v92 = vld [vmem:[%s0 + $0x270] sm:$0xff]
  %v93 = vld [vmem:[%s0 + $0x278] sm:$0xff]
  %v94 = vld [vmem:[%s0 + $0x280] sm:$0xff]
  %v95 = vld [vmem:[%s0 + $0x288] sm:$0xff]
  %v96 = vld [vmem:[%s0 + $0x290] sm:$0xff]
  %v97 = vld [vmem:[%s0 + $0x298] sm:$0xff]
  %v98 = vld [vmem:[%s0 + $0x2a0] sm:$0xff]
  %v99 = vld [vmem:[%s0 + $0x2a8] sm:$0xff]
  %v100 = vld [vmem:[%s0 + $0x2b0] sm:$0xff]
  %v101 = vld [vmem:[%s0 + $0x2b8] sm:$0xff]
  %v102 = vld [vmem:[%s0 + $0x2c0] sm:$0xff]
  %v103 = vld [vmem:[%s0 + $0x2c8] sm:$0xff]
  %v104 = vld [vmem:[%s0 + $0x2d0] sm:$0xff]
  %v105 = vld [vmem:[%s0 + $0x2d8] sm:$0xff]
  %v106 = vld [vmem:[%s0 + $0x2e0] sm:$0xff]
  %v107 = vld [vmem:[%s0 + $0x2e8] sm:$0xff]
  %v108 = vld [vmem:[%s0 + $0x2f0] sm:$0xff]
  %v109 = vld [vmem:[%s0 + $0x2f8] sm:$0xff]
  %v110 = vld [vmem:[%s0 + $0x300] sm:$0xff]
  %v111 = vld [vmem:[%s0 + $0x308] sm:$0xff]
  %v112 = vld [vmem:[%s0 + $0x310] sm:$0xff]
  %v113 = vld [vmem:[%s0 + $0x318] sm:$0xff]
  %v114 = vld [vmem:[%s0 + $0x320] sm:$0xff]
  %v115 = vld [vmem:[%s0 + $0x328] sm:$0xff]
  %v116 = vld [vmem:[%s0 + $0x330] sm:$0xff]
  %v117 = vld [vmem:[%s0 + $0x338] sm:$0xff]
  %v118 = vld [vmem:[%s0 + $0x340] sm:$0xff]
  %v119 = vld [vmem:[%s0 + $0x348] sm:$0xff]
  %v120 = vld [vmem:[%s0 + $0x350] sm:$0xff]
  %v121 = vld [vmem:[%s0 + $0x358] sm:$0xff]
  %v122 = vld [vmem:[%s0 + $0x360] sm:$0xff]
  %v123 = vld [vmem:[%s0 + $0x368] sm:$0xff]
  %v124 = vld [vmem:[%s0 + $0x370] sm:$0xff]
  %v125 = vld [vmem:[%s0 + $0x378] sm:$0xff]
  %v126 = vld [vmem:[%s0 + $0x380] sm:$0xff]
  %v127 = vld [vmem:[%s0 + $0x388] sm:$0xff]
  %v128 = vld [vmem:[%s0 + $0x390] sm:$0xff]
  %v129 = vld [vmem:[%s0 + $0x398] sm:$0xff]
  %v130 = vld [vmem:[%s0 + $0x3a0] sm:$0xff]
  %v131 = vld [vmem:[%s0 + $0x3a8] sm:$0xff]
  %v132 = vld [vmem:[%s0 + $0x3b0] sm:$0xff]
  %v133 = vld [vmem:[%s0 + $0x3b8] sm:$0xff]
  %v134 = vld [vmem:[%s0 + $0x3c0] sm:$0xff]
  %v135 = vld [vmem:[%s0 + $0x3c8] sm:$0xff]
  %v136 = vld [vmem:[%s0 + $0x3d0] sm:$0xff]
  %v137 = vld [vmem:[%s0 + $0x3d8] sm:$0xff]
  %v138 = vld [vmem:[%s0 + $0x3e0] sm:$0xff]
  %v139 = vld [vmem:[%s0 + $0x3e8] sm:$0xff]
  %v140 = vld [vmem:[%s0 + $0x3f0] sm:$0xff]
  %v141 = vld [vmem:[%s0 + $0x3f8] sm:$0xff]
  %v142 = vld [vmem:[%s0 + $0x400] sm:$0xff]
  %v143 = vld [vmem:[%s0 + $0x408] sm:$0xff]
  %v144 = vld [vmem:[%s0 + $0x410] sm:$0xff]
  %v145 = vld [vmem:[%s0 + $0x418] sm:$0xff]
  %v146 = vld [vmem:[%s0 + $0x420] sm:$0xff]
  %v147 = vld [vmem:[%s0 + $0x428] sm:$0xff]
  %v148 = vld [vmem:[%s0 + $0x430] sm:$0xff]
  %v149 = vld [vmem:[%s0 + $0x438] sm:$0xff]
  %v150 = vld [vmem:[%s0 + $0x440] sm:$0xff]
  %v151 = vld [vmem:[%s0 + $0x448] sm:$0xff]
  %v152 = vld [vmem:[%s0 + $0x450] sm:$0xff]
  %v153 = vld [vmem:[%s0 + $0x458] sm:$0xff]
  %v154 = vld [vmem:[%s0 + $0x460] sm:$0xff]
  %v155 = vld [vmem:[%s0 + $0x468] sm:$0xff]
  %v156 = vld [vmem:[%s0 + $0x470] sm:$0xff]
  %v157 = vld [vmem:[%s0 + $0x478] sm:$0xff]
  %v158 = vld [vmem:[%s1] sm:$0xf]
  %v159 = vld [vmem:[%s1 + $0x4] sm:$0xf]
  %v160 = vld [vmem:[%s1 + $0x8] sm:$0xf]
  %v161 = vld [vmem:[%s1 + $0xc] sm:$0xf]
  %v162 = vld [vmem:[%s1 + $0x10] sm:$0xf]
  %v163 = vld [vmem:[%s1 + $0x14] sm:$0xf]
  %v164 = vld [vmem:[%s1 + $0x18] sm:$0xf]
  %v165 = vld [vmem:[%s1 + $0x1c] sm:$0xf]
  %v166 = vld [vmem:[%s1 + $0x20] sm:$0xf]
  %v167 = vld [vmem:[%s1 + $0x24] sm:$0xf]
  %v168 = vld [vmem:[%s1 + $0x28] sm:$0xf]
  %v169 = vld [vmem:[%s1 + $0x2c] sm:$0xf]
  %v170 = vld [vmem:[%s1 + $0x30] sm:$0xf]
  %v171 = vld [vmem:[%s1 + $0x34] sm:$0xf]
  %v172 = vld [vmem:[%s1 + $0x38] sm:$0xf]
  %v173 = vld [vmem:[%s1 + $0x3c] sm:$0xf]
  %v174 = vld [vmem:[%s1 + $0x40] sm:$0xf]
  %v175 = vld [vmem:[%s1 + $0x44] sm:$0xf]
  %v176 = vld [vmem:[%s1 + $0x48] sm:$0xf]
  %v177 = vld [vmem:[%s1 + $0x4c] sm:$0xf]
  %v178 = vld [vmem:[%s1 + $0x50] sm:$0xf]
  %v179 = vld [vmem:[%s1 + $0x54] sm:$0xf]
  %v180 = vld [vmem:[%s1 + $0x58] sm:$0xf]
  %v181 = vld [vmem:[%s1 + $0x5c] sm:$0xf]
  %v182 = vld [vmem:[%s1 + $0x60] sm:$0xf]
  %v183 = vld [vmem:[%s1 + $0x64] sm:$0xf]
  %v184 = vld [vmem:[%s1 + $0x68] sm:$0xf]
  %v185 = vld [vmem:[%s1 + $0x6c] sm:$0xf]
  %v186 = vld [vmem:[%s1 + $0x70] sm:$0xf]
  %v187 = vld [vmem:[%s1 + $0x74] sm:$0xf]
  %v188 = vld [vmem:[%s1 + $0x78] sm:$0xf]
  %v189 = vld [vmem:[%s1 + $0x7c] sm:$0xf]
  %v190 = vld [vmem:[%s1 + $0x80] sm:$0xf]
  %v191 = vld [vmem:[%s1 + $0x84] sm:$0xf]
  %v192 = vld [vmem:[%s1 + $0x88] sm:$0xf]
  %v193 = vld [vmem:[%s1 + $0x8c] sm:$0xf]
  %v194 = vld [vmem:[%s1 + $0x90] sm:$0xf]
  %v195 = vld [vmem:[%s1 + $0x94] sm:$0xf]
  %v196 = vld [vmem:[%s1 + $0x98] sm:$0xf]
  %v197 = vld [vmem:[%s1 + $0x9c] sm:$0xf]
  %v198 = vld [vmem:[%s1 + $0xa0] sm:$0xf]
  %v199 = vld [vmem:[%s1 + $0xa4] sm:$0xf]
  %v200 = vld [vmem:[%s1 + $0xa8] sm:$0xf]
  %v201 = vld [vmem:[%s1 + $0xac] sm:$0xf]
  %v202 = vld [vmem:[%s1 + $0xb0] sm:$0xf]
  %v203 = vld [vmem:[%s1 + $0xb4] sm:$0xf]
  %v204 = vld [vmem:[%s1 + $0xb8] sm:$0xf]
  %v205 = vld [vmem:[%s1 + $0xbc] sm:$0xf]
  %v206 = vld [vmem:[%s1 + $0xc0] sm:$0xf]
  %v207 = vld [vmem:[%s1 + $0xc4] sm:$0xf]
  %v208 = vld [vmem:[%s1 + $0xc8] sm:$0xf]
  %v209 = vld [vmem:[%s1 + $0xcc] sm:$0xf]
  %v210 = vld [vmem:[%s1 + $0xd0] sm:$0xf]
  %v211 = vld [vmem:[%s1 + $0xd4] sm:$0xf]
  %v212 = vld [vmem:[%s1 + $0xd8] sm:$0xf]
  %v213 = vld [vmem:[%s1 + $0xdc] sm:$0xf]
  %v214 = vld [vmem:[%s1 + $0xe0] sm:$0xf]
  %v215 = vld [vmem:[%s1 + $0xe4] sm:$0xf]
  %v216 = vld [vmem:[%s1 + $0xe8] sm:$0xf]
  %v217 = vld [vmem:[%s1 + $0xec] sm:$0xf]
  %v218 = vld [vmem:[%s1 + $0xf0] sm:$0xf]
  %v219 = vld [vmem:[%s1 + $0xf4] sm:$0xf]
  %v220 = vld [vmem:[%s1 + $0xf8] sm:$0xf]
  %v221 = vld [vmem:[%s1 + $0xfc] sm:$0xf]
  %v222 = vld [vmem:[%s1 + $0x100] sm:$0xf]
  %v223 = vld [vmem:[%s1 + $0x104] sm:$0xf]
  %v224 = vld [vmem:[%s1 + $0x108] sm:$0xf]
  %v225 = vld [vmem:[%s1 + $0x10c] sm:$0xf]
  %v226 = vld [vmem:[%s1 + $0x110] sm:$0xf]
  %v227 = vld [vmem:[%s1 + $0x114] sm:$0xf]
  %v228 = vld [vmem:[%s1 + $0x118] sm:$0xf]
  %v229 = vld [vmem:[%s1 + $0x11c] sm:$0xf]
  %v230 = vld [vmem:[%s1 + $0x120] sm:$0xf]
  %v231 = vld [vmem:[%s1 + $0x124] sm:$0xf]
  %v232 = vld [vmem:[%s1 + $0x128] sm:$0xf]
  %v233 = vld [vmem:[%s1 + $0x12c] sm:$0xf]
  %v234 = vld [vmem:[%s1 + $0x130] sm:$0xf]
  %v235 = vld [vmem:[%s1 + $0x134] sm:$0xf]
  %v236 = vld [vmem:[%s1 + $0x138] sm:$0xf]
  %v237 = vld [vmem:[%s1 + $0x13c] sm:$0xf]
  %v238 = vld [vmem:[%s1 + $0x140] sm:$0xf]
  %v239 = vld [vmem:[%s1 + $0x144] sm:$0xf]
  %v240 = vld [vmem:[%s1 + $0x148] sm:$0xf]
  %v241 = vld [vmem:[%s1 + $0x14c] sm:$0xf]
  %v242 = vld [vmem:[%s1 + $0x150] sm:$0xf]
  %v243 = vld [vmem:[%s1 + $0x154] sm:$0xf]
  %v244 = vld [vmem:[%s1 + $0x158] sm:$0xf]
  %v245 = vld [vmem:[%s1 + $0x15c] sm:$0xf]
  %v246 = vld [vmem:[%s1 + $0x160] sm:$0xf]
  %v247 = vld [vmem:[%s1 + $0x164] sm:$0xf]
  %v248 = vld [vmem:[%s1 + $0x168] sm:$0xf]
  %v249 = vld [vmem:[%s1 + $0x16c] sm:$0xf]
  %v250 = vld [vmem:[%s1 + $0x170] sm:$0xf]
  %v251 = vld [vmem:[%s1 + $0x174] sm:$0xf]
  %v252 = vld [vmem:[%s1 + $0x178] sm:$0xf]
  %v253 = vld [vmem:[%s1 + $0x17c] sm:$0xf]
  %v254 = vld [vmem:[%s1 + $0x180] sm:$0xf]
  %v255 = vld [vmem:[%s1 + $0x184] sm:$0xf]
  %v256 = vld [vmem:[%s1 + $0x188] sm:$0xf]
  %v257 = vld [vmem:[%s1 + $0x18c] sm:$0xf]
  %v258 = vld [vmem:[%s1 + $0x190] sm:$0xf]
  %v259 = vld [vmem:[%s1 + $0x194] sm:$0xf]
  %v260 = vld [vmem:[%s1 + $0x198] sm:$0xf]
  %v261 = vld [vmem:[%s1 + $0x19c] sm:$0xf]
  %v262 = vld [vmem:[%s1 + $0x1a0] sm:$0xf]
  %v263 = vld [vmem:[%s1 + $0x1a4] sm:$0xf]
  %v264 = vld [vmem:[%s1 + $0x1a8] sm:$0xf]
  %v265 = vld [vmem:[%s1 + $0x1ac] sm:$0xf]
  %v266 = vld [vmem:[%s1 + $0x1b0] sm:$0xf]
  %v267 = vld [vmem:[%s1 + $0x1b4] sm:$0xf]
  %v268 = vld [vmem:[%s1 + $0x1b8] sm:$0xf]
  %v269 = vld [vmem:[%s1 + $0x1bc] sm:$0xf]
  %v270 = vld [vmem:[%s1 + $0x1c0] sm:$0xf]
  %v271 = vld [vmem:[%s1 + $0x1c4] sm:$0xf]
  %v272 = vld [vmem:[%s1 + $0x1c8] sm:$0xf]
  %v273 = vld [vmem:[%s1 + $0x1cc] sm:$0xf]
  %v274 = vld [vmem:[%s1 + $0x1d0] sm:$0xf]
  %v275 = vld [vmem:[%s1 + $0x1d4] sm:$0xf]
  %v276 = vld [vmem:[%s1 + $0x1d8] sm:$0xf]
  %v277 = vld [vmem:[%s1 + $0x1dc] sm:$0xf]
  %v278 = vld [vmem:[%s1 + $0x1e0] sm:$0xf]
  %v279 = vld [vmem:[%s1 + $0x1e4] sm:$0xf]
  %v280 = vld [vmem:[%s1 + $0x1e8] sm:$0xf]
  %v281 = vld [vmem:[%s1 + $0x1ec] sm:$0xf]
  %v282 = vld [vmem:[%s1 + $0x1f0] sm:$0xf]
  %v283 = vld [vmem:[%s1 + $0x1f4] sm:$0xf]
  %v284 = vld [vmem:[%s1 + $0x1f8] sm:$0xf]
  %v285 = vld [vmem:[%s1 + $0x1fc] sm:$0xf]
  %v286 = vld [vmem:[%s1 + $0x200] sm:$0xf]
  %v287 = vld [vmem:[%s1 + $0x204] sm:$0xf]
  %v288 = vld [vmem:[%s1 + $0x208] sm:$0xf]
  %v289 = vld [vmem:[%s1 + $0x20c] sm:$0xf]
  %v290 = vld [vmem:[%s1 + $0x210] sm:$0xf]
  %v291 = vld [vmem:[%s1 + $0x214] sm:$0xf]
  %v292 = vld [vmem:[%s1 + $0x218] sm:$0xf]
  %v293 = vld [vmem:[%s1 + $0x21c] sm:$0xf]
  %v294 = vld [vmem:[%s1 + $0x220] sm:$0xf]
  %v295 = vld [vmem:[%s1 + $0x224] sm:$0xf]
  %v296 = vld [vmem:[%s1 + $0x228] sm:$0xf]
  %v297 = vld [vmem:[%s1 + $0x22c] sm:$0xf]
  %v298 = vld [vmem:[%s1 + $0x230] sm:$0xf]
  %v299 = vld [vmem:[%s1 + $0x234] sm:$0xf]
  %v300 = vld [vmem:[%s1 + $0x238] sm:$0xf]
  %v301 = vld [vmem:[%s1 + $0x23c] sm:$0xf]
  %v302 = vld [vmem:[%s1 + $0x240] sm:$0xf]
  %v303 = vld [vmem:[%s1 + $0x244] sm:$0xf]
  %v304 = vld [vmem:[%s1 + $0x248] sm:$0xf]
  %v305 = vld [vmem:[%s1 + $0x24c] sm:$0xf]
  %v306 = vld [vmem:[%s1 + $0x250] sm:$0xf]
  %v307 = vld [vmem:[%s1 + $0x254] sm:$0xf]
  %v308 = vld [vmem:[%s1 + $0x258] sm:$0xf]
  %v309 = vld [vmem:[%s1 + $0x25c] sm:$0xf]
  %v310 = vld [vmem:[%s1 + $0x260] sm:$0xf]
  %v311 = vld [vmem:[%s1 + $0x264] sm:$0xf]
  %v312 = vld [vmem:[%s1 + $0x268] sm:$0xf]
  %v313 = vld [vmem:[%s1 + $0x26c] sm:$0xf]
  %v314 = vld [vmem:[%s1 + $0x270] sm:$0xf]
  %v315 = vld [vmem:[%s1 + $0x274] sm:$0xf]
  %v316 = vld [vmem:[%s1 + $0x278] sm:$0xf]
  %v317 = vld [vmem:[%s1 + $0x27c] sm:$0xf]
  %v318 = vld [vmem:[%s1 + $0x280] sm:$0xf]
  %v319 = vld [vmem:[%s1 + $0x284] sm:$0xf]
  %v320 = vld [vmem:[%s1 + $0x288] sm:$0xf]
  %v321 = vld [vmem:[%s1 + $0x28c] sm:$0xf]
  %v322 = vld [vmem:[%s1 + $0x290] sm:$0xf]
  %v323 = vld [vmem:[%s1 + $0x294] sm:$0xf]
  %v324 = vld [vmem:[%s1 + $0x298] sm:$0xf]
  %v325 = vld [vmem:[%s1 + $0x29c] sm:$0xf]
  %v326 = vld [vmem:[%s1 + $0x2a0] sm:$0xf]
  %v327 = vld [vmem:[%s1 + $0x2a4] sm:$0xf]
  %v328 = vld [vmem:[%s1 + $0x2a8] sm:$0xf]
  %v329 = vld [vmem:[%s1 + $0x2ac] sm:$0xf]
  %v330 = vld [vmem:[%s1 + $0x2b0] sm:$0xf]
  %v331 = vld [vmem:[%s1 + $0x2b4] sm:$0xf]
  %v332 = vld [vmem:[%s1 + $0x2b8] sm:$0xf]
  %v333 = vld [vmem:[%s1 + $0x2bc] sm:$0xf]
  %v334 = vld [vmem:[%s1 + $0x2c0] sm:$0xf]
  %v335 = vld [vmem:[%s1 + $0x2c4] sm:$0xf]
  %v336 = vld [vmem:[%s1 + $0x2c8] sm:$0xf]
  %v337 = vld [vmem:[%s1 + $0x2cc] sm:$0xf]
  %v338 = vld [vmem:[%s1 + $0x2d0] sm:$0xf]
  %v339 = vld [vmem:[%s1 + $0x2d4] sm:$0xf]
  %v340 = vld [vmem:[%s1 + $0x2d8] sm:$0xf]
  %v341 = vld [vmem:[%s1 + $0x2dc] sm:$0xf]
  %v342 = vld [vmem:[%s1 + $0x2e0] sm:$0xf]
  %v343 = vld [vmem:[%s1 + $0x2e4] sm:$0xf]
  %v344 = vld [vmem:[%s1 + $0x2e8] sm:$0xf]
  %v345 = vld [vmem:[%s1 + $0x2ec] sm:$0xf]
  %v346 = vld [vmem:[%s1 + $0x2f0] sm:$0xf]
  %v347 = vld [vmem:[%s1 + $0x2f4] sm:$0xf]
  %v348 = vld [vmem:[%s1 + $0x2f8] sm:$0xf]
  %v349 = vld [vmem:[%s1 + $0x2fc] sm:$0xf]
  %v350 = vld [vmem:[%s1 + $0x300] sm:$0xf]
  %v351 = vld [vmem:[%s1 + $0x304] sm:$0xf]
  %v352 = vld [vmem:[%s1 + $0x308] sm:$0xf]
  %v353 = vld [vmem:[%s1 + $0x30c] sm:$0xf]
  %v354 = vld [vmem:[%s1 + $0x310] sm:$0xf]
  %v355 = vld [vmem:[%s1 + $0x314] sm:$0xf]
  %v356 = vld [vmem:[%s1 + $0x318] sm:$0xf]
  %v357 = vld [vmem:[%s1 + $0x31c] sm:$0xf]
  %v358 = vld [vmem:[%s1 + $0x320] sm:$0xf]
  %v359 = vld [vmem:[%s1 + $0x324] sm:$0xf]
  %v360 = vld [vmem:[%s1 + $0x328] sm:$0xf]
  %v361 = vld [vmem:[%s1 + $0x32c] sm:$0xf]
  %v362 = vld [vmem:[%s1 + $0x330] sm:$0xf]
  %v363 = vld [vmem:[%s1 + $0x334] sm:$0xf]
  %v364 = vld [vmem:[%s1 + $0x338] sm:$0xf]
  %v365 = vld [vmem:[%s1 + $0x33c] sm:$0xf]
  %v366 = vld [vmem:[%s1 + $0x340] sm:$0xf]
  %v367 = vld [vmem:[%s1 + $0x344] sm:$0xf]
  %v368 = vld [vmem:[%s1 + $0x348] sm:$0xf]
  %v369 = vld [vmem:[%s1 + $0x34c] sm:$0xf]
  %v370 = vld [vmem:[%s1 + $0x350] sm:$0xf]
  %v371 = vld [vmem:[%s1 + $0x354] sm:$0xf]
  %v372 = vld [vmem:[%s1 + $0x358] sm:$0xf]
  %v373 = vld [vmem:[%s1 + $0x35c] sm:$0xf]
  %v374 = vld [vmem:[%s1 + $0x360] sm:$0xf]
  %v375 = vld [vmem:[%s1 + $0x364] sm:$0xf]
  %v376 = vld [vmem:[%s1 + $0x368] sm:$0xf]
  %v377 = vld [vmem:[%s1 + $0x36c] sm:$0xf]
  %v378 = vld [vmem:[%s1 + $0x370] sm:$0xf]
  %v379 = vld [vmem:[%s1 + $0x374] sm:$0xf]
  %v380 = vld [vmem:[%s1 + $0x378] sm:$0xf]
  %v381 = vld [vmem:[%s1 + $0x37c] sm:$0xf]
  %v382 = vld [vmem:[%s1 + $0x380] sm:$0xf]
  %v383 = vld [vmem:[%s1 + $0x384] sm:$0xf]
  %v384 = vld [vmem:[%s1 + $0x388] sm:$0xf]
  %v385 = vld [vmem:[%s1 + $0x38c] sm:$0xf]
  %v386 = vld [vmem:[%s1 + $0x390] sm:$0xf]
  %v387 = vld [vmem:[%s1 + $0x394] sm:$0xf]
  %v388 = vld [vmem:[%s1 + $0x398] sm:$0xf]
  %v389 = vld [vmem:[%s1 + $0x39c] sm:$0xf]
  %v390 = vld [vmem:[%s1 + $0x3a0] sm:$0xf]
  %v391 = vld [vmem:[%s1 + $0x3a4] sm:$0xf]
  %v392 = vld [vmem:[%s1 + $0x3a8] sm:$0xf]
  %v393 = vld [vmem:[%s1 + $0x3ac] sm:$0xf]
  %v394 = vld [vmem:[%s1 + $0x3b0] sm:$0xf]
  %v395 = vld [vmem:[%s1 + $0x3b4] sm:$0xf]
  %v396 = vld [vmem:[%s1 + $0x3b8] sm:$0xf]
  %v397 = vld [vmem:[%s1 + $0x3bc] sm:$0xf]
  %v398 = vld [vmem:[%s1 + $0x3c0] sm:$0xf]
  %v399 = vld [vmem:[%s1 + $0x3c4] sm:$0xf]
  %v400 = vld [vmem:[%s1 + $0x3c8] sm:$0xf]
  %v401 = vld [vmem:[%s1 + $0x3cc] sm:$0xf]
  %v402 = vld [vmem:[%s1 + $0x3d0] sm:$0xf]
  %v403 = vld [vmem:[%s1 + $0x3d4] sm:$0xf]
  %v404 = vld [vmem:[%s1 + $0x3d8] sm:$0xf]
  %v405 = vld [vmem:[%s1 + $0x3dc] sm:$0xf]
  %v406 = vld [vmem:[%s1 + $0x3e0] sm:$0xf]
  %v407 = vld [vmem:[%s1 + $0x3e4] sm:$0xf]
  %v408 = vld [vmem:[%s1 + $0x3e8] sm:$0xf]
  %v409 = vld [vmem:[%s1 + $0x3ec] sm:$0xf]
  %v410 = vld [vmem:[%s1 + $0x3f0] sm:$0xf]
  %v411 = vld [vmem:[%s1 + $0x3f4] sm:$0xf]
  %v412 = vld [vmem:[%s1 + $0x3f8] sm:$0xf]
  %v413 = vld [vmem:[%s1 + $0x3fc] sm:$0xf]
  %v414 = vld [vmem:[%s1 + $0x400] sm:$0xf]
  %v415 = vld [vmem:[%s1 + $0x404] sm:$0xf]
  %v416 = vld [vmem:[%s1 + $0x408] sm:$0xf]
  %v417 = vld [vmem:[%s1 + $0x40c] sm:$0xf]
  %v418 = vld [vmem:[%s1 + $0x410] sm:$0xf]
  %v419 = vld [vmem:[%s1 + $0x414] sm:$0xf]
  %v420 = vld [vmem:[%s1 + $0x418] sm:$0xf]
  %v421 = vld [vmem:[%s1 + $0x41c] sm:$0xf]
  %v422 = vld [vmem:[%s1 + $0x420] sm:$0xf]
  %v423 = vld [vmem:[%s1 + $0x424] sm:$0xf]
  %v424 = vld [vmem:[%s1 + $0x428] sm:$0xf]
  %v425 = vld [vmem:[%s1 + $0x42c] sm:$0xf]
  %v426 = vld [vmem:[%s1 + $0x430] sm:$0xf]
  %v427 = vld [vmem:[%s1 + $0x434] sm:$0xf]
  %v428 = vld [vmem:[%s1 + $0x438] sm:$0xf]
  %v429 = vld [vmem:[%s1 + $0x43c] sm:$0xf]
  %v430 = vld [vmem:[%s1 + $0x440] sm:$0xf]
  %v431 = vld [vmem:[%s1 + $0x444] sm:$0xf]
  %v432 = vld [vmem:[%s1 + $0x448] sm:$0xf]
  %v433 = vld [vmem:[%s1 + $0x44c] sm:$0xf]
  %v434 = vld [vmem:[%s1 + $0x450] sm:$0xf]
  %v435 = vld [vmem:[%s1 + $0x454] sm:$0xf]
  %v436 = vld [vmem:[%s1 + $0x458] sm:$0xf]
  %v437 = vld [vmem:[%s1 + $0x45c] sm:$0xf]
  %v438 = vld [vmem:[%s1 + $0x460] sm:$0xf]
  %v439 = vld [vmem:[%s1 + $0x464] sm:$0xf]
  %v440 = vld [vmem:[%s1 + $0x468] sm:$0xf]
  %v441 = vld [vmem:[%s1 + $0x46c] sm:$0xf]
  %v442 = vld [vmem:[%s1 + $0x470] sm:$0xf]
  %v443 = vld [vmem:[%s1 + $0x474] sm:$0xf]
  %v444 = vld [vmem:[%s1 + $0x478] sm:$0xf]
  %v445 = vld [vmem:[%s1 + $0x47c] sm:$0xf]
  %v446 = vld [vmem:[%s2] sm:$0x1]
  %v448 = vperm.slane %v446, 0
  %v594 = vunpack.c.l.b16 %v14
  %v595 = vunpack.c.h.b16 %v14
  %v596 = vunpack.c.l.b16 %v15
  %v597 = vunpack.c.h.b16 %v15
  %v598 = vunpack.c.l.b16 %v16
  %v599 = vunpack.c.h.b16 %v16
  %v600 = vunpack.c.l.b16 %v17
  %v601 = vunpack.c.h.b16 %v17
  %v602 = vunpack.c.l.b16 %v18
  %v603 = vunpack.c.h.b16 %v18
  %v604 = vunpack.c.l.b16 %v19
  %v605 = vunpack.c.h.b16 %v19
  %v606 = vunpack.c.l.b16 %v20
  %v607 = vunpack.c.h.b16 %v20
  %v608 = vunpack.c.l.b16 %v21
  %v609 = vunpack.c.h.b16 %v21
  %v610 = vunpack.c.l.b16 %v22
  %v611 = vunpack.c.h.b16 %v22
  %v612 = vunpack.c.l.b16 %v23
  %v613 = vunpack.c.h.b16 %v23
  %v614 = vunpack.c.l.b16 %v24
  %v615 = vunpack.c.h.b16 %v24
  %v616 = vunpack.c.l.b16 %v25
  %v617 = vunpack.c.h.b16 %v25
  %v618 = vunpack.c.l.b16 %v26
  %v619 = vunpack.c.h.b16 %v26
  %v620 = vunpack.c.l.b16 %v27
  %v621 = vunpack.c.h.b16 %v27
  %v622 = vunpack.c.l.b16 %v28
  %v623 = vunpack.c.h.b16 %v28
  %v624 = vunpack.c.l.b16 %v29
  %v625 = vunpack.c.h.b16 %v29
  %v626 = vunpack.c.l.b16 %v30
  %v627 = vunpack.c.h.b16 %v30
  %v628 = vunpack.c.l.b16 %v31
  %v629 = vunpack.c.h.b16 %v31
  %v630 = vunpack.c.l.b16 %v32
  %v631 = vunpack.c.h.b16 %v32
  %v632 = vunpack.c.l.b16 %v33
  %v633 = vunpack.c.h.b16 %v33
  %v634 = vunpack.c.l.b16 %v34
  %v635 = vunpack.c.h.b16 %v34
  %v636 = vunpack.c.l.b16 %v35
  %v637 = vunpack.c.h.b16 %v35
  %v638 = vunpack.c.l.b16 %v36
  %v639 = vunpack.c.h.b16 %v36
  %v640 = vunpack.c.l.b16 %v37
  %v641 = vunpack.c.h.b16 %v37
  %v642 = vunpack.c.l.b16 %v38
  %v643 = vunpack.c.h.b16 %v38
  %v644 = vunpack.c.l.b16 %v39
  %v645 = vunpack.c.h.b16 %v39
  %v646 = vunpack.c.l.b16 %v40
  %v647 = vunpack.c.h.b16 %v40
  %v648 = vunpack.c.l.b16 %v41
  %v649 = vunpack.c.h.b16 %v41
  %v650 = vunpack.c.l.b16 %v42
  %v651 = vunpack.c.h.b16 %v42
  %v652 = vunpack.c.l.b16 %v43
  %v653 = vunpack.c.h.b16 %v43
  %v654 = vunpack.c.l.b16 %v44
  %v655 = vunpack.c.h.b16 %v44
  %v656 = vunpack.c.l.b16 %v45
  %v657 = vunpack.c.h.b16 %v45
  %v658 = vunpack.c.l.b16 %v46
  %v659 = vunpack.c.h.b16 %v46
  %v660 = vunpack.c.l.b16 %v47
  %v661 = vunpack.c.h.b16 %v47
  %v662 = vunpack.c.l.b16 %v48
  %v663 = vunpack.c.h.b16 %v48
  %v664 = vunpack.c.l.b16 %v49
  %v665 = vunpack.c.h.b16 %v49
  %v666 = vunpack.c.l.b16 %v50
  %v667 = vunpack.c.h.b16 %v50
  %v668 = vunpack.c.l.b16 %v51
  %v669 = vunpack.c.h.b16 %v51
  %v670 = vunpack.c.l.b16 %v52
  %v671 = vunpack.c.h.b16 %v52
  %v672 = vunpack.c.l.b16 %v53
  %v673 = vunpack.c.h.b16 %v53
  %v674 = vunpack.c.l.b16 %v54
  %v675 = vunpack.c.h.b16 %v54
  %v676 = vunpack.c.l.b16 %v55
  %v677 = vunpack.c.h.b16 %v55
  %v678 = vunpack.c.l.b16 %v56
  %v679 = vunpack.c.h.b16 %v56
  %v680 = vunpack.c.l.b16 %v57
  %v681 = vunpack.c.h.b16 %v57
  %v682 = vunpack.c.l.b16 %v58
  %v683 = vunpack.c.h.b16 %v58
  %v684 = vunpack.c.l.b16 %v59
  %v685 = vunpack.c.h.b16 %v59
  %v686 = vunpack.c.l.b16 %v60
  %v687 = vunpack.c.h.b16 %v60
  %v688 = vunpack.c.l.b16 %v61
  %v689 = vunpack.c.h.b16 %v61
  %v690 = vunpack.c.l.b16 %v62
  %v691 = vunpack.c.h.b16 %v62
  %v692 = vunpack.c.l.b16 %v63
  %v693 = vunpack.c.h.b16 %v63
  %v694 = vunpack.c.l.b16 %v64
  %v695 = vunpack.c.h.b16 %v64
  %v696 = vunpack.c.l.b16 %v65
  %v697 = vunpack.c.h.b16 %v65
  %v698 = vunpack.c.l.b16 %v66
  %v699 = vunpack.c.h.b16 %v66
  %v700 = vunpack.c.l.b16 %v67
  %v701 = vunpack.c.h.b16 %v67
  %v702 = vunpack.c.l.b16 %v68
  %v703 = vunpack.c.h.b16 %v68
  %v704 = vunpack.c.l.b16 %v69
  %v705 = vunpack.c.h.b16 %v69
  %v706 = vunpack.c.l.b16 %v70
  %v707 = vunpack.c.h.b16 %v70
  %v708 = vunpack.c.l.b16 %v71
  %v709 = vunpack.c.h.b16 %v71
  %v710 = vunpack.c.l.b16 %v72
  %v711 = vunpack.c.h.b16 %v72
  %v712 = vunpack.c.l.b16 %v73
  %v713 = vunpack.c.h.b16 %v73
  %v714 = vunpack.c.l.b16 %v74
  %v715 = vunpack.c.h.b16 %v74
  %v716 = vunpack.c.l.b16 %v75
  %v717 = vunpack.c.h.b16 %v75
  %v718 = vunpack.c.l.b16 %v76
  %v719 = vunpack.c.h.b16 %v76
  %v720 = vunpack.c.l.b16 %v77
  %v721 = vunpack.c.h.b16 %v77
  %v722 = vunpack.c.l.b16 %v78
  %v723 = vunpack.c.h.b16 %v78
  %v724 = vunpack.c.l.b16 %v79
  %v725 = vunpack.c.h.b16 %v79
  %v726 = vunpack.c.l.b16 %v80
  %v727 = vunpack.c.h.b16 %v80
  %v728 = vunpack.c.l.b16 %v81
  %v729 = vunpack.c.h.b16 %v81
  %v730 = vunpack.c.l.b16 %v82
  %v731 = vunpack.c.h.b16 %v82
  %v732 = vunpack.c.l.b16 %v83
  %v733 = vunpack.c.h.b16 %v83
  %v734 = vunpack.c.l.b16 %v84
  %v735 = vunpack.c.h.b16 %v84
  %v736 = vunpack.c.l.b16 %v85
  %v737 = vunpack.c.h.b16 %v85
  %v738 = vunpack.c.l.b16 %v86
  %v739 = vunpack.c.h.b16 %v86
  %v740 = vunpack.c.l.b16 %v87
  %v741 = vunpack.c.h.b16 %v87
  %v742 = vunpack.c.l.b16 %v88
  %v743 = vunpack.c.h.b16 %v88
  %v744 = vunpack.c.l.b16 %v89
  %v745 = vunpack.c.h.b16 %v89
  %v746 = vunpack.c.l.b16 %v90
  %v747 = vunpack.c.h.b16 %v90
  %v748 = vunpack.c.l.b16 %v91
  %v749 = vunpack.c.h.b16 %v91
  %v750 = vunpack.c.l.b16 %v92
  %v751 = vunpack.c.h.b16 %v92
  %v752 = vunpack.c.l.b16 %v93
  %v753 = vunpack.c.h.b16 %v93
  %v754 = vunpack.c.l.b16 %v94
  %v755 = vunpack.c.h.b16 %v94
  %v756 = vunpack.c.l.b16 %v95
  %v757 = vunpack.c.h.b16 %v95
  %v758 = vunpack.c.l.b16 %v96
  %v759 = vunpack.c.h.b16 %v96
  %v760 = vunpack.c.l.b16 %v97
  %v761 = vunpack.c.h.b16 %v97
  %v762 = vunpack.c.l.b16 %v98
  %v763 = vunpack.c.h.b16 %v98
  %v764 = vunpack.c.l.b16 %v99
  %v765 = vunpack.c.h.b16 %v99
  %v766 = vunpack.c.l.b16 %v100
  %v767 = vunpack.c.h.b16 %v100
  %v768 = vunpack.c.l.b16 %v101
  %v769 = vunpack.c.h.b16 %v101
  %v770 = vunpack.c.l.b16 %v102
  %v771 = vunpack.c.h.b16 %v102
  %v772 = vunpack.c.l.b16 %v103
  %v773 = vunpack.c.h.b16 %v103
  %v774 = vunpack.c.l.b16 %v104
  %v775 = vunpack.c.h.b16 %v104
  %v776 = vunpack.c.l.b16 %v105
  %v777 = vunpack.c.h.b16 %v105
  %v778 = vunpack.c.l.b16 %v106
  %v779 = vunpack.c.h.b16 %v106
  %v780 = vunpack.c.l.b16 %v107
  %v781 = vunpack.c.h.b16 %v107
  %v782 = vunpack.c.l.b16 %v108
  %v783 = vunpack.c.h.b16 %v108
  %v784 = vunpack.c.l.b16 %v109
  %v785 = vunpack.c.h.b16 %v109
  %v786 = vunpack.c.l.b16 %v110
  %v787 = vunpack.c.h.b16 %v110
  %v788 = vunpack.c.l.b16 %v111
  %v789 = vunpack.c.h.b16 %v111
  %v790 = vunpack.c.l.b16 %v112
  %v791 = vunpack.c.h.b16 %v112
  %v792 = vunpack.c.l.b16 %v113
  %v793 = vunpack.c.h.b16 %v113
  %v794 = vunpack.c.l.b16 %v114
  %v795 = vunpack.c.h.b16 %v114
  %v796 = vunpack.c.l.b16 %v115
  %v797 = vunpack.c.h.b16 %v115
  %v798 = vunpack.c.l.b16 %v116
  %v799 = vunpack.c.h.b16 %v116
  %v800 = vunpack.c.l.b16 %v117
  %v801 = vunpack.c.h.b16 %v117
  %v802 = vunpack.c.l.b16 %v118
  %v803 = vunpack.c.h.b16 %v118
  %v804 = vunpack.c.l.b16 %v119
  %v805 = vunpack.c.h.b16 %v119
  %v806 = vunpack.c.l.b16 %v120
  %v807 = vunpack.c.h.b16 %v120
  %v808 = vunpack.c.l.b16 %v121
  %v809 = vunpack.c.h.b16 %v121
  %v810 = vunpack.c.l.b16 %v122
  %v811 = vunpack.c.h.b16 %v122
  %v812 = vunpack.c.l.b16 %v123
  %v813 = vunpack.c.h.b16 %v123
  %v814 = vunpack.c.l.b16 %v124
  %v815 = vunpack.c.h.b16 %v124
  %v816 = vunpack.c.l.b16 %v125
  %v817 = vunpack.c.h.b16 %v125
  %v818 = vunpack.c.l.b16 %v126
  %v819 = vunpack.c.h.b16 %v126
  %v820 = vunpack.c.l.b16 %v127
  %v821 = vunpack.c.h.b16 %v127
  %v822 = vunpack.c.l.b16 %v128
  %v823 = vunpack.c.h.b16 %v128
  %v824 = vunpack.c.l.b16 %v129
  %v825 = vunpack.c.h.b16 %v129
  %v826 = vunpack.c.l.b16 %v130
  %v827 = vunpack.c.h.b16 %v130
  %v828 = vunpack.c.l.b16 %v131
  %v829 = vunpack.c.h.b16 %v131
  %v830 = vunpack.c.l.b16 %v132
  %v831 = vunpack.c.h.b16 %v132
  %v832 = vunpack.c.l.b16 %v133
  %v833 = vunpack.c.h.b16 %v133
  %v834 = vunpack.c.l.b16 %v134
  %v835 = vunpack.c.h.b16 %v134
  %v836 = vunpack.c.l.b16 %v135
  %v837 = vunpack.c.h.b16 %v135
  %v838 = vunpack.c.l.b16 %v136
  %v839 = vunpack.c.h.b16 %v136
  %v840 = vunpack.c.l.b16 %v137
  %v841 = vunpack.c.h.b16 %v137
  %v842 = vunpack.c.l.b16 %v138
  %v843 = vunpack.c.h.b16 %v138
  %v844 = vunpack.c.l.b16 %v139
  %v845 = vunpack.c.h.b16 %v139
  %v846 = vunpack.c.l.b16 %v140
  %v847 = vunpack.c.h.b16 %v140
  %v848 = vunpack.c.l.b16 %v141
  %v849 = vunpack.c.h.b16 %v141
  %v850 = vunpack.c.l.b16 %v142
  %v851 = vunpack.c.h.b16 %v142
  %v852 = vunpack.c.l.b16 %v143
  %v853 = vunpack.c.h.b16 %v143
  %v854 = vunpack.c.l.b16 %v144
  %v855 = vunpack.c.h.b16 %v144
  %v856 = vunpack.c.l.b16 %v145
  %v857 = vunpack.c.h.b16 %v145
  %v858 = vunpack.c.l.b16 %v146
  %v859 = vunpack.c.h.b16 %v146
  %v860 = vunpack.c.l.b16 %v147
  %v861 = vunpack.c.h.b16 %v147
  %v862 = vunpack.c.l.b16 %v148
  %v863 = vunpack.c.h.b16 %v148
  %v864 = vunpack.c.l.b16 %v149
  %v865 = vunpack.c.h.b16 %v149
  %v866 = vunpack.c.l.b16 %v150
  %v867 = vunpack.c.h.b16 %v150
  %v868 = vunpack.c.l.b16 %v151
  %v869 = vunpack.c.h.b16 %v151
  %v870 = vunpack.c.l.b16 %v152
  %v871 = vunpack.c.h.b16 %v152
  %v872 = vunpack.c.l.b16 %v153
  %v873 = vunpack.c.h.b16 %v153
  %v874 = vunpack.c.l.b16 %v154
  %v875 = vunpack.c.h.b16 %v154
  %v876 = vunpack.c.l.b16 %v155
  %v877 = vunpack.c.h.b16 %v155
  %v878 = vunpack.c.l.b16 %v156
  %v879 = vunpack.c.h.b16 %v156
  %v880 = vunpack.c.l.b16 %v157
  %v881 = vunpack.c.h.b16 %v157
  %v882 = vpack.c.b16 %v612, %v594
  %v883 = vpack.c.b16 %v613, %v595
  %v884 = vpack.c.b16 %v614, %v596
  %v885 = vpack.c.b16 %v615, %v597
  %v886 = vpack.c.b16 %v616, %v598
  %v887 = vpack.c.b16 %v617, %v599
  %v888 = vpack.c.b16 %v618, %v600
  %v889 = vpack.c.b16 %v619, %v601
  %v890 = vpack.c.b16 %v620, %v602
  %v891 = vpack.c.b16 %v621, %v603
  %v892 = vpack.c.b16 %v622, %v604
  %v893 = vpack.c.b16 %v623, %v605
  %v894 = vpack.c.b16 %v624, %v606
  %v895 = vpack.c.b16 %v625, %v607
  %v896 = vpack.c.b16 %v626, %v608
  %v897 = vpack.c.b16 %v627, %v609
  %v898 = vpack.c.b16 %v628, %v610
  %v899 = vpack.c.b16 %v629, %v611
  %v900 = vpack.c.b16 %v648, %v630
  %v901 = vpack.c.b16 %v649, %v631
  %v902 = vpack.c.b16 %v650, %v632
  %v903 = vpack.c.b16 %v651, %v633
  %v904 = vpack.c.b16 %v652, %v634
  %v905 = vpack.c.b16 %v653, %v635
  %v906 = vpack.c.b16 %v654, %v636
  %v907 = vpack.c.b16 %v655, %v637
  %v908 = vpack.c.b16 %v656, %v638
  %v909 = vpack.c.b16 %v657, %v639
  %v910 = vpack.c.b16 %v658, %v640
  %v911 = vpack.c.b16 %v659, %v641
  %v912 = vpack.c.b16 %v660, %v642
  %v913 = vpack.c.b16 %v661, %v643
  %v914 = vpack.c.b16 %v662, %v644
  %v915 = vpack.c.b16 %v663, %v645
  %v916 = vpack.c.b16 %v664, %v646
  %v917 = vpack.c.b16 %v665, %v647
  %v918 = vpack.c.b16 %v684, %v666
  %v919 = vpack.c.b16 %v685, %v667
  %v920 = vpack.c.b16 %v686, %v668
  %v921 = vpack.c.b16 %v687, %v669
  %v922 = vpack.c.b16 %v688, %v670
  %v923 = vpack.c.b16 %v689, %v671
  %v924 = vpack.c.b16 %v690, %v672
  %v925 = vpack.c.b16 %v691, %v673
  %v926 = vpack.c.b16 %v692, %v674
  %v927 = vpack.c.b16 %v693, %v675
  %v928 = vpack.c.b16 %v694, %v676
  %v929 = vpack.c.b16 %v695, %v677
  %v930 = vpack.c.b16 %v696, %v678
  %v931 = vpack.c.b16 %v697, %v679
  %v932 = vpack.c.b16 %v698, %v680
  %v933 = vpack.c.b16 %v699, %v681
  %v934 = vpack.c.b16 %v700, %v682
  %v935 = vpack.c.b16 %v701, %v683
  %v936 = vpack.c.b16 %v720, %v702
  %v937 = vpack.c.b16 %v721, %v703
  %v938 = vpack.c.b16 %v722, %v704
  %v939 = vpack.c.b16 %v723, %v705
  %v940 = vpack.c.b16 %v724, %v706
  %v941 = vpack.c.b16 %v725, %v707
  %v942 = vpack.c.b16 %v726, %v708
  %v943 = vpack.c.b16 %v727, %v709
  %v944 = vpack.c.b16 %v728, %v710
  %v945 = vpack.c.b16 %v729, %v711
  %v946 = vpack.c.b16 %v730, %v712
  %v947 = vpack.c.b16 %v731, %v713
  %v948 = vpack.c.b16 %v732, %v714
  %v949 = vpack.c.b16 %v733, %v715
  %v950 = vpack.c.b16 %v734, %v716
  %v951 = vpack.c.b16 %v735, %v717
  %v952 = vpack.c.b16 %v736, %v718
  %v953 = vpack.c.b16 %v737, %v719
  %v954 = vpack.c.b16 %v756, %v738
  %v955 = vpack.c.b16 %v757, %v739
  %v956 = vpack.c.b16 %v758, %v740
  %v957 = vpack.c.b16 %v759, %v741
  %v958 = vpack.c.b16 %v760, %v742
  %v959 = vpack.c.b16 %v761, %v743
  %v960 = vpack.c.b16 %v762, %v744
  %v961 = vpack.c.b16 %v763, %v745
  %v962 = vpack.c.b16 %v764, %v746
  %v963 = vpack.c.b16 %v765, %v747
  %v964 = vpack.c.b16 %v766, %v748
  %v965 = vpack.c.b16 %v767, %v749
  %v966 = vpack.c.b16 %v768, %v750
  %v967 = vpack.c.b16 %v769, %v751
  %v968 = vpack.c.b16 %v770, %v752
  %v969 = vpack.c.b16 %v771, %v753
  %v970 = vpack.c.b16 %v772, %v754
  %v971 = vpack.c.b16 %v773, %v755
  %v972 = vpack.c.b16 %v792, %v774
  %v973 = vpack.c.b16 %v793, %v775
  %v974 = vpack.c.b16 %v794, %v776
  %v975 = vpack.c.b16 %v795, %v777
  %v976 = vpack.c.b16 %v796, %v778
  %v977 = vpack.c.b16 %v797, %v779
  %v978 = vpack.c.b16 %v798, %v780
  %v979 = vpack.c.b16 %v799, %v781
  %v980 = vpack.c.b16 %v800, %v782
  %v981 = vpack.c.b16 %v801, %v783
  %v982 = vpack.c.b16 %v802, %v784
  %v983 = vpack.c.b16 %v803, %v785
  %v984 = vpack.c.b16 %v804, %v786
  %v985 = vpack.c.b16 %v805, %v787
  %v986 = vpack.c.b16 %v806, %v788
  %v987 = vpack.c.b16 %v807, %v789
  %v988 = vpack.c.b16 %v808, %v790
  %v989 = vpack.c.b16 %v809, %v791
  %v990 = vpack.c.b16 %v828, %v810
  %v991 = vpack.c.b16 %v829, %v811
  %v992 = vpack.c.b16 %v830, %v812
  %v993 = vpack.c.b16 %v831, %v813
  %v994 = vpack.c.b16 %v832, %v814
  %v995 = vpack.c.b16 %v833, %v815
  %v996 = vpack.c.b16 %v834, %v816
  %v997 = vpack.c.b16 %v835, %v817
  %v998 = vpack.c.b16 %v836, %v818
  %v999 = vpack.c.b16 %v837, %v819
  %v1000 = vpack.c.b16 %v838, %v820
  %v1001 = vpack.c.b16 %v839, %v821
  %v1002 = vpack.c.b16 %v840, %v822
  %v1003 = vpack.c.b16 %v841, %v823
  %v1004 = vpack.c.b16 %v842, %v824
  %v1005 = vpack.c.b16 %v843, %v825
  %v1006 = vpack.c.b16 %v844, %v826
  %v1007 = vpack.c.b16 %v845, %v827
  %v1008 = vpack.c.b16 %v864, %v846
  %v1009 = vpack.c.b16 %v865, %v847
  %v1010 = vpack.c.b16 %v866, %v848
  %v1011 = vpack.c.b16 %v867, %v849
  %v1012 = vpack.c.b16 %v868, %v850
  %v1013 = vpack.c.b16 %v869, %v851
  %v1014 = vpack.c.b16 %v870, %v852
  %v1015 = vpack.c.b16 %v871, %v853
  %v1016 = vpack.c.b16 %v872, %v854
  %v1017 = vpack.c.b16 %v873, %v855
  %v1018 = vpack.c.b16 %v874, %v856
  %v1019 = vpack.c.b16 %v875, %v857
  %v1020 = vpack.c.b16 %v876, %v858
  %v1021 = vpack.c.b16 %v877, %v859
  %v1022 = vpack.c.b16 %v878, %v860
  %v1023 = vpack.c.b16 %v879, %v861
  %v1024 = vpack.c.b16 %v880, %v862
  %v1025 = vpack.c.b16 %v881, %v863
  %v1458 = vunpack.c.l.b16 %v158
  %v1459 = vunpack.c.l.b16 %v159
  %v1460 = vunpack.c.l.b16 %v160
  %v1461 = vunpack.c.l.b16 %v161
  %v1462 = vunpack.c.l.b16 %v162
  %v1463 = vunpack.c.l.b16 %v163
  %v1464 = vunpack.c.l.b16 %v164
  %v1465 = vunpack.c.l.b16 %v165
  %v1466 = vunpack.c.l.b16 %v166
  %v1467 = vunpack.c.l.b16 %v167
  %v1468 = vunpack.c.l.b16 %v168
  %v1469 = vunpack.c.l.b16 %v169
  %v1470 = vunpack.c.l.b16 %v170
  %v1471 = vunpack.c.l.b16 %v171
  %v1472 = vunpack.c.l.b16 %v172
  %v1473 = vunpack.c.l.b16 %v173
  %v1474 = vunpack.c.l.b16 %v174
  %v1475 = vunpack.c.l.b16 %v175
  %v1476 = vunpack.c.l.b16 %v176
  %v1477 = vunpack.c.l.b16 %v177
  %v1478 = vunpack.c.l.b16 %v178
  %v1479 = vunpack.c.l.b16 %v179
  %v1480 = vunpack.c.l.b16 %v180
  %v1481 = vunpack.c.l.b16 %v181
  %v1482 = vunpack.c.l.b16 %v182
  %v1483 = vunpack.c.l.b16 %v183
  %v1484 = vunpack.c.l.b16 %v184
  %v1485 = vunpack.c.l.b16 %v185
  %v1486 = vunpack.c.l.b16 %v186
  %v1487 = vunpack.c.l.b16 %v187
  %v1488 = vunpack.c.l.b16 %v188
  %v1489 = vunpack.c.l.b16 %v189
  %v1490 = vunpack.c.l.b16 %v190
  %v1491 = vunpack.c.l.b16 %v191
  %v1492 = vunpack.c.l.b16 %v192
  %v1493 = vunpack.c.l.b16 %v193
  %v1494 = vunpack.c.l.b16 %v194
  %v1495 = vunpack.c.l.b16 %v195
  %v1496 = vunpack.c.l.b16 %v196
  %v1497 = vunpack.c.l.b16 %v197
  %v1498 = vunpack.c.l.b16 %v198
  %v1499 = vunpack.c.l.b16 %v199
  %v1500 = vunpack.c.l.b16 %v200
  %v1501 = vunpack.c.l.b16 %v201
  %v1502 = vunpack.c.l.b16 %v202
  %v1503 = vunpack.c.l.b16 %v203
  %v1504 = vunpack.c.l.b16 %v204
  %v1505 = vunpack.c.l.b16 %v205
  %v1506 = vunpack.c.l.b16 %v206
  %v1507 = vunpack.c.l.b16 %v207
  %v1508 = vunpack.c.l.b16 %v208
  %v1509 = vunpack.c.l.b16 %v209
  %v1510 = vunpack.c.l.b16 %v210
  %v1511 = vunpack.c.l.b16 %v211
  %v1512 = vunpack.c.l.b16 %v212
  %v1513 = vunpack.c.l.b16 %v213
  %v1514 = vunpack.c.l.b16 %v214
  %v1515 = vunpack.c.l.b16 %v215
  %v1516 = vunpack.c.l.b16 %v216
  %v1517 = vunpack.c.l.b16 %v217
  %v1518 = vunpack.c.l.b16 %v218
  %v1519 = vunpack.c.l.b16 %v219
  %v1520 = vunpack.c.l.b16 %v220
  %v1521 = vunpack.c.l.b16 %v221
  %v1522 = vunpack.c.l.b16 %v222
  %v1523 = vunpack.c.l.b16 %v223
  %v1524 = vunpack.c.l.b16 %v224
  %v1525 = vunpack.c.l.b16 %v225
  %v1526 = vunpack.c.l.b16 %v226
  %v1527 = vunpack.c.l.b16 %v227
  %v1528 = vunpack.c.l.b16 %v228
  %v1529 = vunpack.c.l.b16 %v229
  %v1530 = vunpack.c.l.b16 %v230
  %v1531 = vunpack.c.l.b16 %v231
  %v1532 = vunpack.c.l.b16 %v232
  %v1533 = vunpack.c.l.b16 %v233
  %v1534 = vunpack.c.l.b16 %v234
  %v1535 = vunpack.c.l.b16 %v235
  %v1536 = vunpack.c.l.b16 %v236
  %v1537 = vunpack.c.l.b16 %v237
  %v1538 = vunpack.c.l.b16 %v238
  %v1539 = vunpack.c.l.b16 %v239
  %v1540 = vunpack.c.l.b16 %v240
  %v1541 = vunpack.c.l.b16 %v241
  %v1542 = vunpack.c.l.b16 %v242
  %v1543 = vunpack.c.l.b16 %v243
  %v1544 = vunpack.c.l.b16 %v244
  %v1545 = vunpack.c.l.b16 %v245
  %v1546 = vunpack.c.l.b16 %v246
  %v1547 = vunpack.c.l.b16 %v247
  %v1548 = vunpack.c.l.b16 %v248
  %v1549 = vunpack.c.l.b16 %v249
  %v1550 = vunpack.c.l.b16 %v250
  %v1551 = vunpack.c.l.b16 %v251
  %v1552 = vunpack.c.l.b16 %v252
  %v1553 = vunpack.c.l.b16 %v253
  %v1554 = vunpack.c.l.b16 %v254
  %v1555 = vunpack.c.l.b16 %v255
  %v1556 = vunpack.c.l.b16 %v256
  %v1557 = vunpack.c.l.b16 %v257
  %v1558 = vunpack.c.l.b16 %v258
  %v1559 = vunpack.c.l.b16 %v259
  %v1560 = vunpack.c.l.b16 %v260
  %v1561 = vunpack.c.l.b16 %v261
  %v1562 = vunpack.c.l.b16 %v262
  %v1563 = vunpack.c.l.b16 %v263
  %v1564 = vunpack.c.l.b16 %v264
  %v1565 = vunpack.c.l.b16 %v265
  %v1566 = vunpack.c.l.b16 %v266
  %v1567 = vunpack.c.l.b16 %v267
  %v1568 = vunpack.c.l.b16 %v268
  %v1569 = vunpack.c.l.b16 %v269
  %v1570 = vunpack.c.l.b16 %v270
  %v1571 = vunpack.c.l.b16 %v271
  %v1572 = vunpack.c.l.b16 %v272
  %v1573 = vunpack.c.l.b16 %v273
  %v1574 = vunpack.c.l.b16 %v274
  %v1575 = vunpack.c.l.b16 %v275
  %v1576 = vunpack.c.l.b16 %v276
  %v1577 = vunpack.c.l.b16 %v277
  %v1578 = vunpack.c.l.b16 %v278
  %v1579 = vunpack.c.l.b16 %v279
  %v1580 = vunpack.c.l.b16 %v280
  %v1581 = vunpack.c.l.b16 %v281
  %v1582 = vunpack.c.l.b16 %v282
  %v1583 = vunpack.c.l.b16 %v283
  %v1584 = vunpack.c.l.b16 %v284
  %v1585 = vunpack.c.l.b16 %v285
  %v1586 = vunpack.c.l.b16 %v286
  %v1587 = vunpack.c.l.b16 %v287
  %v1588 = vunpack.c.l.b16 %v288
  %v1589 = vunpack.c.l.b16 %v289
  %v1590 = vunpack.c.l.b16 %v290
  %v1591 = vunpack.c.l.b16 %v291
  %v1592 = vunpack.c.l.b16 %v292
  %v1593 = vunpack.c.l.b16 %v293
  %v1594 = vunpack.c.l.b16 %v294
  %v1595 = vunpack.c.l.b16 %v295
  %v1596 = vunpack.c.l.b16 %v296
  %v1597 = vunpack.c.l.b16 %v297
  %v1598 = vunpack.c.l.b16 %v298
  %v1599 = vunpack.c.l.b16 %v299
  %v1600 = vunpack.c.l.b16 %v300
  %v1601 = vunpack.c.l.b16 %v301
  %v1602 = vunpack.c.l.b16 %v302
  %v1603 = vunpack.c.l.b16 %v303
  %v1604 = vunpack.c.l.b16 %v304
  %v1605 = vunpack.c.l.b16 %v305
  %v1606 = vunpack.c.l.b16 %v306
  %v1607 = vunpack.c.l.b16 %v307
  %v1608 = vunpack.c.l.b16 %v308
  %v1609 = vunpack.c.l.b16 %v309
  %v1610 = vunpack.c.l.b16 %v310
  %v1611 = vunpack.c.l.b16 %v311
  %v1612 = vunpack.c.l.b16 %v312
  %v1613 = vunpack.c.l.b16 %v313
  %v1614 = vunpack.c.l.b16 %v314
  %v1615 = vunpack.c.l.b16 %v315
  %v1616 = vunpack.c.l.b16 %v316
  %v1617 = vunpack.c.l.b16 %v317
  %v1618 = vunpack.c.l.b16 %v318
  %v1619 = vunpack.c.l.b16 %v319
  %v1620 = vunpack.c.l.b16 %v320
  %v1621 = vunpack.c.l.b16 %v321
  %v1622 = vunpack.c.l.b16 %v322
  %v1623 = vunpack.c.l.b16 %v323
  %v1624 = vunpack.c.l.b16 %v324
  %v1625 = vunpack.c.l.b16 %v325
  %v1626 = vunpack.c.l.b16 %v326
  %v1627 = vunpack.c.l.b16 %v327
  %v1628 = vunpack.c.l.b16 %v328
  %v1629 = vunpack.c.l.b16 %v329
  %v1630 = vunpack.c.l.b16 %v330
  %v1631 = vunpack.c.l.b16 %v331
  %v1632 = vunpack.c.l.b16 %v332
  %v1633 = vunpack.c.l.b16 %v333
  %v1634 = vunpack.c.l.b16 %v334
  %v1635 = vunpack.c.l.b16 %v335
  %v1636 = vunpack.c.l.b16 %v336
  %v1637 = vunpack.c.l.b16 %v337
  %v1638 = vunpack.c.l.b16 %v338
  %v1639 = vunpack.c.l.b16 %v339
  %v1640 = vunpack.c.l.b16 %v340
  %v1641 = vunpack.c.l.b16 %v341
  %v1642 = vunpack.c.l.b16 %v342
  %v1643 = vunpack.c.l.b16 %v343
  %v1644 = vunpack.c.l.b16 %v344
  %v1645 = vunpack.c.l.b16 %v345
  %v1646 = vunpack.c.l.b16 %v346
  %v1647 = vunpack.c.l.b16 %v347
  %v1648 = vunpack.c.l.b16 %v348
  %v1649 = vunpack.c.l.b16 %v349
  %v1650 = vunpack.c.l.b16 %v350
  %v1651 = vunpack.c.l.b16 %v351
  %v1652 = vunpack.c.l.b16 %v352
  %v1653 = vunpack.c.l.b16 %v353
  %v1654 = vunpack.c.l.b16 %v354
  %v1655 = vunpack.c.l.b16 %v355
  %v1656 = vunpack.c.l.b16 %v356
  %v1657 = vunpack.c.l.b16 %v357
  %v1658 = vunpack.c.l.b16 %v358
  %v1659 = vunpack.c.l.b16 %v359
  %v1660 = vunpack.c.l.b16 %v360
  %v1661 = vunpack.c.l.b16 %v361
  %v1662 = vunpack.c.l.b16 %v362
  %v1663 = vunpack.c.l.b16 %v363
  %v1664 = vunpack.c.l.b16 %v364
  %v1665 = vunpack.c.l.b16 %v365
  %v1666 = vunpack.c.l.b16 %v366
  %v1667 = vunpack.c.l.b16 %v367
  %v1668 = vunpack.c.l.b16 %v368
  %v1669 = vunpack.c.l.b16 %v369
  %v1670 = vunpack.c.l.b16 %v370
  %v1671 = vunpack.c.l.b16 %v371
  %v1672 = vunpack.c.l.b16 %v372
  %v1673 = vunpack.c.l.b16 %v373
  %v1674 = vunpack.c.l.b16 %v374
  %v1675 = vunpack.c.l.b16 %v375
  %v1676 = vunpack.c.l.b16 %v376
  %v1677 = vunpack.c.l.b16 %v377
  %v1678 = vunpack.c.l.b16 %v378
  %v1679 = vunpack.c.l.b16 %v379
  %v1680 = vunpack.c.l.b16 %v380
  %v1681 = vunpack.c.l.b16 %v381
  %v1682 = vunpack.c.l.b16 %v382
  %v1683 = vunpack.c.l.b16 %v383
  %v1684 = vunpack.c.l.b16 %v384
  %v1685 = vunpack.c.l.b16 %v385
  %v1686 = vunpack.c.l.b16 %v386
  %v1687 = vunpack.c.l.b16 %v387
  %v1688 = vunpack.c.l.b16 %v388
  %v1689 = vunpack.c.l.b16 %v389
  %v1690 = vunpack.c.l.b16 %v390
  %v1691 = vunpack.c.l.b16 %v391
  %v1692 = vunpack.c.l.b16 %v392
  %v1693 = vunpack.c.l.b16 %v393
  %v1694 = vunpack.c.l.b16 %v394
  %v1695 = vunpack.c.l.b16 %v395
  %v1696 = vunpack.c.l.b16 %v396
  %v1697 = vunpack.c.l.b16 %v397
  %v1698 = vunpack.c.l.b16 %v398
  %v1699 = vunpack.c.l.b16 %v399
  %v1700 = vunpack.c.l.b16 %v400
  %v1701 = vunpack.c.l.b16 %v401
  %v1702 = vunpack.c.l.b16 %v402
  %v1703 = vunpack.c.l.b16 %v403
  %v1704 = vunpack.c.l.b16 %v404
  %v1705 = vunpack.c.l.b16 %v405
  %v1706 = vunpack.c.l.b16 %v406
  %v1707 = vunpack.c.l.b16 %v407
  %v1708 = vunpack.c.l.b16 %v408
  %v1709 = vunpack.c.l.b16 %v409
  %v1710 = vunpack.c.l.b16 %v410
  %v1711 = vunpack.c.l.b16 %v411
  %v1712 = vunpack.c.l.b16 %v412
  %v1713 = vunpack.c.l.b16 %v413
  %v1714 = vunpack.c.l.b16 %v414
  %v1715 = vunpack.c.l.b16 %v415
  %v1716 = vunpack.c.l.b16 %v416
  %v1717 = vunpack.c.l.b16 %v417
  %v1718 = vunpack.c.l.b16 %v418
  %v1719 = vunpack.c.l.b16 %v419
  %v1720 = vunpack.c.l.b16 %v420
  %v1721 = vunpack.c.l.b16 %v421
  %v1722 = vunpack.c.l.b16 %v422
  %v1723 = vunpack.c.l.b16 %v423
  %v1724 = vunpack.c.l.b16 %v424
  %v1725 = vunpack.c.l.b16 %v425
  %v1726 = vunpack.c.l.b16 %v426
  %v1727 = vunpack.c.l.b16 %v427
  %v1728 = vunpack.c.l.b16 %v428
  %v1729 = vunpack.c.l.b16 %v429
  %v1730 = vunpack.c.l.b16 %v430
  %v1731 = vunpack.c.l.b16 %v431
  %v1732 = vunpack.c.l.b16 %v432
  %v1733 = vunpack.c.l.b16 %v433
  %v1734 = vunpack.c.l.b16 %v434
  %v1735 = vunpack.c.l.b16 %v435
  %v1736 = vunpack.c.l.b16 %v436
  %v1737 = vunpack.c.l.b16 %v437
  %v1738 = vunpack.c.l.b16 %v438
  %v1739 = vunpack.c.l.b16 %v439
  %v1740 = vunpack.c.l.b16 %v440
  %v1741 = vunpack.c.l.b16 %v441
  %v1742 = vunpack.c.l.b16 %v442
  %v1743 = vunpack.c.l.b16 %v443
  %v1744 = vunpack.c.l.b16 %v444
  %v1745 = vunpack.c.l.b16 %v445
  %v1746 = vpack.c.b16 %v1459, %v1458
  %v1747 = vpack.c.b16 %v1461, %v1460
  %v1748 = vpack.c.b16 %v1463, %v1462
  %v1749 = vpack.c.b16 %v1465, %v1464
  %v1750 = vpack.c.b16 %v1467, %v1466
  %v1751 = vpack.c.b16 %v1469, %v1468
  %v1752 = vpack.c.b16 %v1471, %v1470
  %v1753 = vpack.c.b16 %v1473, %v1472
  %v1754 = vpack.c.b16 %v1475, %v1474
  %v1755 = vpack.c.b16 %v1477, %v1476
  %v1756 = vpack.c.b16 %v1479, %v1478
  %v1757 = vpack.c.b16 %v1481, %v1480
  %v1758 = vpack.c.b16 %v1483, %v1482
  %v1759 = vpack.c.b16 %v1485, %v1484
  %v1760 = vpack.c.b16 %v1487, %v1486
  %v1761 = vpack.c.b16 %v1489, %v1488
  %v1762 = vpack.c.b16 %v1491, %v1490
  %v1763 = vpack.c.b16 %v1493, %v1492
  %v1764 = vpack.c.b16 %v1495, %v1494
  %v1765 = vpack.c.b16 %v1497, %v1496
  %v1766 = vpack.c.b16 %v1499, %v1498
  %v1767 = vpack.c.b16 %v1501, %v1500
  %v1768 = vpack.c.b16 %v1503, %v1502
  %v1769 = vpack.c.b16 %v1505, %v1504
  %v1770 = vpack.c.b16 %v1507, %v1506
  %v1771 = vpack.c.b16 %v1509, %v1508
  %v1772 = vpack.c.b16 %v1511, %v1510
  %v1773 = vpack.c.b16 %v1513, %v1512
  %v1774 = vpack.c.b16 %v1515, %v1514
  %v1775 = vpack.c.b16 %v1517, %v1516
  %v1776 = vpack.c.b16 %v1519, %v1518
  %v1777 = vpack.c.b16 %v1521, %v1520
  %v1778 = vpack.c.b16 %v1523, %v1522
  %v1779 = vpack.c.b16 %v1525, %v1524
  %v1780 = vpack.c.b16 %v1527, %v1526
  %v1781 = vpack.c.b16 %v1529, %v1528
  %v1782 = vpack.c.b16 %v1531, %v1530
  %v1783 = vpack.c.b16 %v1533, %v1532
  %v1784 = vpack.c.b16 %v1535, %v1534
  %v1785 = vpack.c.b16 %v1537, %v1536
  %v1786 = vpack.c.b16 %v1539, %v1538
  %v1787 = vpack.c.b16 %v1541, %v1540
  %v1788 = vpack.c.b16 %v1543, %v1542
  %v1789 = vpack.c.b16 %v1545, %v1544
  %v1790 = vpack.c.b16 %v1547, %v1546
  %v1791 = vpack.c.b16 %v1549, %v1548
  %v1792 = vpack.c.b16 %v1551, %v1550
  %v1793 = vpack.c.b16 %v1553, %v1552
  %v1794 = vpack.c.b16 %v1555, %v1554
  %v1795 = vpack.c.b16 %v1557, %v1556
  %v1796 = vpack.c.b16 %v1559, %v1558
  %v1797 = vpack.c.b16 %v1561, %v1560
  %v1798 = vpack.c.b16 %v1563, %v1562
  %v1799 = vpack.c.b16 %v1565, %v1564
  %v1800 = vpack.c.b16 %v1567, %v1566
  %v1801 = vpack.c.b16 %v1569, %v1568
  %v1802 = vpack.c.b16 %v1571, %v1570
  %v1803 = vpack.c.b16 %v1573, %v1572
  %v1804 = vpack.c.b16 %v1575, %v1574
  %v1805 = vpack.c.b16 %v1577, %v1576
  %v1806 = vpack.c.b16 %v1579, %v1578
  %v1807 = vpack.c.b16 %v1581, %v1580
  %v1808 = vpack.c.b16 %v1583, %v1582
  %v1809 = vpack.c.b16 %v1585, %v1584
  %v1810 = vpack.c.b16 %v1587, %v1586
  %v1811 = vpack.c.b16 %v1589, %v1588
  %v1812 = vpack.c.b16 %v1591, %v1590
  %v1813 = vpack.c.b16 %v1593, %v1592
  %v1814 = vpack.c.b16 %v1595, %v1594
  %v1815 = vpack.c.b16 %v1597, %v1596
  %v1816 = vpack.c.b16 %v1599, %v1598
  %v1817 = vpack.c.b16 %v1601, %v1600
  %v1818 = vpack.c.b16 %v1603, %v1602
  %v1819 = vpack.c.b16 %v1605, %v1604
  %v1820 = vpack.c.b16 %v1607, %v1606
  %v1821 = vpack.c.b16 %v1609, %v1608
  %v1822 = vpack.c.b16 %v1611, %v1610
  %v1823 = vpack.c.b16 %v1613, %v1612
  %v1824 = vpack.c.b16 %v1615, %v1614
  %v1825 = vpack.c.b16 %v1617, %v1616
  %v1826 = vpack.c.b16 %v1619, %v1618
  %v1827 = vpack.c.b16 %v1621, %v1620
  %v1828 = vpack.c.b16 %v1623, %v1622
  %v1829 = vpack.c.b16 %v1625, %v1624
  %v1830 = vpack.c.b16 %v1627, %v1626
  %v1831 = vpack.c.b16 %v1629, %v1628
  %v1832 = vpack.c.b16 %v1631, %v1630
  %v1833 = vpack.c.b16 %v1633, %v1632
  %v1834 = vpack.c.b16 %v1635, %v1634
  %v1835 = vpack.c.b16 %v1637, %v1636
  %v1836 = vpack.c.b16 %v1639, %v1638
  %v1837 = vpack.c.b16 %v1641, %v1640
  %v1838 = vpack.c.b16 %v1643, %v1642
  %v1839 = vpack.c.b16 %v1645, %v1644
  %v1840 = vpack.c.b16 %v1647, %v1646
  %v1841 = vpack.c.b16 %v1649, %v1648
  %v1842 = vpack.c.b16 %v1651, %v1650
  %v1843 = vpack.c.b16 %v1653, %v1652
  %v1844 = vpack.c.b16 %v1655, %v1654
  %v1845 = vpack.c.b16 %v1657, %v1656
  %v1846 = vpack.c.b16 %v1659, %v1658
  %v1847 = vpack.c.b16 %v1661, %v1660
  %v1848 = vpack.c.b16 %v1663, %v1662
  %v1849 = vpack.c.b16 %v1665, %v1664
  %v1850 = vpack.c.b16 %v1667, %v1666
  %v1851 = vpack.c.b16 %v1669, %v1668
  %v1852 = vpack.c.b16 %v1671, %v1670
  %v1853 = vpack.c.b16 %v1673, %v1672
  %v1854 = vpack.c.b16 %v1675, %v1674
  %v1855 = vpack.c.b16 %v1677, %v1676
  %v1856 = vpack.c.b16 %v1679, %v1678
  %v1857 = vpack.c.b16 %v1681, %v1680
  %v1858 = vpack.c.b16 %v1683, %v1682
  %v1859 = vpack.c.b16 %v1685, %v1684
  %v1860 = vpack.c.b16 %v1687, %v1686
  %v1861 = vpack.c.b16 %v1689, %v1688
  %v1862 = vpack.c.b16 %v1691, %v1690
  %v1863 = vpack.c.b16 %v1693, %v1692
  %v1864 = vpack.c.b16 %v1695, %v1694
  %v1865 = vpack.c.b16 %v1697, %v1696
  %v1866 = vpack.c.b16 %v1699, %v1698
  %v1867 = vpack.c.b16 %v1701, %v1700
  %v1868 = vpack.c.b16 %v1703, %v1702
  %v1869 = vpack.c.b16 %v1705, %v1704
  %v1870 = vpack.c.b16 %v1707, %v1706
  %v1871 = vpack.c.b16 %v1709, %v1708
  %v1872 = vpack.c.b16 %v1711, %v1710
  %v1873 = vpack.c.b16 %v1713, %v1712
  %v1874 = vpack.c.b16 %v1715, %v1714
  %v1875 = vpack.c.b16 %v1717, %v1716
  %v1876 = vpack.c.b16 %v1719, %v1718
  %v1877 = vpack.c.b16 %v1721, %v1720
  %v1878 = vpack.c.b16 %v1723, %v1722
  %v1879 = vpack.c.b16 %v1725, %v1724
  %v1880 = vpack.c.b16 %v1727, %v1726
  %v1881 = vpack.c.b16 %v1729, %v1728
  %v1882 = vpack.c.b16 %v1731, %v1730
  %v1883 = vpack.c.b16 %v1733, %v1732
  %v1884 = vpack.c.b16 %v1735, %v1734
  %v1885 = vpack.c.b16 %v1737, %v1736
  %v1886 = vpack.c.b16 %v1739, %v1738
  %v1887 = vpack.c.b16 %v1741, %v1740
  %v1888 = vpack.c.b16 %v1743, %v1742
  %v1889 = vpack.c.b16 %v1745, %v1744
  %2034 = vmatpush.bf16.msra.mxu0 %v1753
  %2035 = vmatpush.bf16.msra.mxu0 %v1752
  %2036 = vmatpush.bf16.msra.mxu0 %v1751
  %2037 = vmatpush.bf16.msra.mxu0 %v1750
  %2038 = vmatpush.bf16.msra.mxu0 %v1749
  %2039 = vmatpush.bf16.msra.mxu0 %v1748
  %2040 = vmatpush.bf16.msra.mxu0 %v1747
  %2041 = vmatpush.bf16.msra.mxu0 %v1746
  %2042 = vmatmul.bf16.gmra.mxu0 %v882
  %v2043 = vpop.f32.mrf.mxu0
  %v2044 = vadd.f32 %v448, %v2043
  %v2045 = vpop.f32.mrf.mxu0
  %v2046 = vadd.f32 %v448, %v2045
  %2047 = vmatmul.bf16.gmra.mxu0 %v900
  %v2048 = vpop.f32.mrf.mxu0
  %v2049 = vadd.f32 %v448, %v2048
  %v2050 = vpop.f32.mrf.mxu0
  %v2051 = vadd.f32 %v448, %v2050
  %2052 = vmatmul.bf16.gmra.mxu0 %v918
  %v2053 = vpop.f32.mrf.mxu0
  %v2054 = vadd.f32 %v448, %v2053
  %v2055 = vpop.f32.mrf.mxu0
  %v2056 = vadd.f32 %v448, %v2055
  %2057 = vmatmul.bf16.gmra.mxu0 %v936
  %v2058 = vpop.f32.mrf.mxu0
  %v2059 = vadd.f32 %v448, %v2058
  %v2060 = vpop.f32.mrf.mxu0
  %v2061 = vadd.f32 %v448, %v2060
  %2062 = vmatmul.bf16.gmra.mxu0 %v954
  %v2063 = vpop.f32.mrf.mxu0
  %v2064 = vadd.f32 %v448, %v2063
  %v2065 = vpop.f32.mrf.mxu0
  %v2066 = vadd.f32 %v448, %v2065
  %2067 = vmatmul.bf16.gmra.mxu0 %v972
  %v2068 = vpop.f32.mrf.mxu0
  %v2069 = vadd.f32 %v448, %v2068
  %v2070 = vpop.f32.mrf.mxu0
  %v2071 = vadd.f32 %v448, %v2070
  %2072 = vmatmul.bf16.gmra.mxu0 %v990
  %v2073 = vpop.f32.mrf.mxu0
  %v2074 = vadd.f32 %v448, %v2073
  %v2075 = vpop.f32.mrf.mxu0
  %v2076 = vadd.f32 %v448, %v2075
  %2077 = vmatmul.bf16.gmra.mxu0 %v1008
  %v2078 = vpop.f32.mrf.mxu0
  %v2079 = vadd.f32 %v448, %v2078
  %v2080 = vpop.f32.mrf.mxu0
  %v2081 = vadd.f32 %v448, %v2080
  %2082 = vdwg.mxu0
  %2083 = vmatpush.bf16.msra.mxu0 %v1761
  %2084 = vmatpush.bf16.msra.mxu0 %v1760
  %2085 = vmatpush.bf16.msra.mxu0 %v1759
  %2086 = vmatpush.bf16.msra.mxu0 %v1758
  %2087 = vmatpush.bf16.msra.mxu0 %v1757
  %2088 = vmatpush.bf16.msra.mxu0 %v1756
  %2089 = vmatpush.bf16.msra.mxu0 %v1755
  %2090 = vmatpush.bf16.msra.mxu0 %v1754
  %2091 = vmatmul.bf16.gmra.mxu0 %v883
  %v2092 = vpop.f32.mrf.mxu0
  %v2093 = vadd.f32 %v2044, %v2092
  %v2094 = vpop.f32.mrf.mxu0
  %v2095 = vadd.f32 %v2046, %v2094
  %2096 = vmatmul.bf16.gmra.mxu0 %v901
  %v2097 = vpop.f32.mrf.mxu0
  %v2098 = vadd.f32 %v2049, %v2097
  %v2099 = vpop.f32.mrf.mxu0
  %v2100 = vadd.f32 %v2051, %v2099
  %2101 = vmatmul.bf16.gmra.mxu0 %v919
  %v2102 = vpop.f32.mrf.mxu0
  %v2103 = vadd.f32 %v2054, %v2102
  %v2104 = vpop.f32.mrf.mxu0
  %v2105 = vadd.f32 %v2056, %v2104
  %2106 = vmatmul.bf16.gmra.mxu0 %v937
  %v2107 = vpop.f32.mrf.mxu0
  %v2108 = vadd.f32 %v2059, %v2107
  %v2109 = vpop.f32.mrf.mxu0
  %v2110 = vadd.f32 %v2061, %v2109
  %2111 = vmatmul.bf16.gmra.mxu0 %v955
  %v2112 = vpop.f32.mrf.mxu0
  %v2113 = vadd.f32 %v2064, %v2112
  %v2114 = vpop.f32.mrf.mxu0
  %v2115 = vadd.f32 %v2066, %v2114
  %2116 = vmatmul.bf16.gmra.mxu0 %v973
  %v2117 = vpop.f32.mrf.mxu0
  %v2118 = vadd.f32 %v2069, %v2117
  %v2119 = vpop.f32.mrf.mxu0
  %v2120 = vadd.f32 %v2071, %v2119
  %2121 = vmatmul.bf16.gmra.mxu0 %v991
  %v2122 = vpop.f32.mrf.mxu0
  %v2123 = vadd.f32 %v2074, %v2122
  %v2124 = vpop.f32.mrf.mxu0
  %v2125 = vadd.f32 %v2076, %v2124
  %2126 = vmatmul.bf16.gmra.mxu0 %v1009
  %v2127 = vpop.f32.mrf.mxu0
  %v2128 = vadd.f32 %v2079, %v2127
  %v2129 = vpop.f32.mrf.mxu0
  %v2130 = vadd.f32 %v2081, %v2129
  %2131 = vdwg.mxu0
  %2132 = vmatpush.bf16.msra.mxu0 %v1769
  %2133 = vmatpush.bf16.msra.mxu0 %v1768
  %2134 = vmatpush.bf16.msra.mxu0 %v1767
  %2135 = vmatpush.bf16.msra.mxu0 %v1766
  %2136 = vmatpush.bf16.msra.mxu0 %v1765
  %2137 = vmatpush.bf16.msra.mxu0 %v1764
  %2138 = vmatpush.bf16.msra.mxu0 %v1763
  %2139 = vmatpush.bf16.msra.mxu0 %v1762
  %2140 = vmatmul.bf16.gmra.mxu0 %v884
  %v2141 = vpop.f32.mrf.mxu0
  %v2142 = vadd.f32 %v2093, %v2141
  %v2143 = vpop.f32.mrf.mxu0
  %v2144 = vadd.f32 %v2095, %v2143
  %2145 = vmatmul.bf16.gmra.mxu0 %v902
  %v2146 = vpop.f32.mrf.mxu0
  %v2147 = vadd.f32 %v2098, %v2146
  %v2148 = vpop.f32.mrf.mxu0
  %v2149 = vadd.f32 %v2100, %v2148
  %2150 = vmatmul.bf16.gmra.mxu0 %v920
  %v2151 = vpop.f32.mrf.mxu0
  %v2152 = vadd.f32 %v2103, %v2151
  %v2153 = vpop.f32.mrf.mxu0
  %v2154 = vadd.f32 %v2105, %v2153
  %2155 = vmatmul.bf16.gmra.mxu0 %v938
  %v2156 = vpop.f32.mrf.mxu0
  %v2157 = vadd.f32 %v2108, %v2156
  %v2158 = vpop.f32.mrf.mxu0
  %v2159 = vadd.f32 %v2110, %v2158
  %2160 = vmatmul.bf16.gmra.mxu0 %v956
  %v2161 = vpop.f32.mrf.mxu0
  %v2162 = vadd.f32 %v2113, %v2161
  %v2163 = vpop.f32.mrf.mxu0
  %v2164 = vadd.f32 %v2115, %v2163
  %2165 = vmatmul.bf16.gmra.mxu0 %v974
  %v2166 = vpop.f32.mrf.mxu0
  %v2167 = vadd.f32 %v2118, %v2166
  %v2168 = vpop.f32.mrf.mxu0
  %v2169 = vadd.f32 %v2120, %v2168
  %2170 = vmatmul.bf16.gmra.mxu0 %v992
  %v2171 = vpop.f32.mrf.mxu0
  %v2172 = vadd.f32 %v2123, %v2171
  %v2173 = vpop.f32.mrf.mxu0
  %v2174 = vadd.f32 %v2125, %v2173
  %2175 = vmatmul.bf16.gmra.mxu0 %v1010
  %v2176 = vpop.f32.mrf.mxu0
  %v2177 = vadd.f32 %v2128, %v2176
  %v2178 = vpop.f32.mrf.mxu0
  %v2179 = vadd.f32 %v2130, %v2178
  %2180 = vdwg.mxu0
  %2181 = vmatpush.bf16.msra.mxu0 %v1777
  %2182 = vmatpush.bf16.msra.mxu0 %v1776
  %2183 = vmatpush.bf16.msra.mxu0 %v1775
  %2184 = vmatpush.bf16.msra.mxu0 %v1774
  %2185 = vmatpush.bf16.msra.mxu0 %v1773
  %2186 = vmatpush.bf16.msra.mxu0 %v1772
  %2187 = vmatpush.bf16.msra.mxu0 %v1771
  %2188 = vmatpush.bf16.msra.mxu0 %v1770
  %2189 = vmatmul.bf16.gmra.mxu0 %v885
  %v2190 = vpop.f32.mrf.mxu0
  %v2191 = vadd.f32 %v2142, %v2190
  %v2192 = vpop.f32.mrf.mxu0
  %v2193 = vadd.f32 %v2144, %v2192
  %2194 = vmatmul.bf16.gmra.mxu0 %v903
  %v2195 = vpop.f32.mrf.mxu0
  %v2196 = vadd.f32 %v2147, %v2195
  %v2197 = vpop.f32.mrf.mxu0
  %v2198 = vadd.f32 %v2149, %v2197
  %2199 = vmatmul.bf16.gmra.mxu0 %v921
  %v2200 = vpop.f32.mrf.mxu0
  %v2201 = vadd.f32 %v2152, %v2200
  %v2202 = vpop.f32.mrf.mxu0
  %v2203 = vadd.f32 %v2154, %v2202
  %2204 = vmatmul.bf16.gmra.mxu0 %v939
  %v2205 = vpop.f32.mrf.mxu0
  %v2206 = vadd.f32 %v2157, %v2205
  %v2207 = vpop.f32.mrf.mxu0
  %v2208 = vadd.f32 %v2159, %v2207
  %2209 = vmatmul.bf16.gmra.mxu0 %v957
  %v2210 = vpop.f32.mrf.mxu0
  %v2211 = vadd.f32 %v2162, %v2210
  %v2212 = vpop.f32.mrf.mxu0
  %v2213 = vadd.f32 %v2164, %v2212
  %2214 = vmatmul.bf16.gmra.mxu0 %v975
  %v2215 = vpop.f32.mrf.mxu0
  %v2216 = vadd.f32 %v2167, %v2215
  %v2217 = vpop.f32.mrf.mxu0
  %v2218 = vadd.f32 %v2169, %v2217
  %2219 = vmatmul.bf16.gmra.mxu0 %v993
  %v2220 = vpop.f32.mrf.mxu0
  %v2221 = vadd.f32 %v2172, %v2220
  %v2222 = vpop.f32.mrf.mxu0
  %v2223 = vadd.f32 %v2174, %v2222
  %2224 = vmatmul.bf16.gmra.mxu0 %v1011
  %v2225 = vpop.f32.mrf.mxu0
  %v2226 = vadd.f32 %v2177, %v2225
  %v2227 = vpop.f32.mrf.mxu0
  %v2228 = vadd.f32 %v2179, %v2227
  %2229 = vdwg.mxu0
  %2230 = vmatpush.bf16.msra.mxu0 %v1785
  %2231 = vmatpush.bf16.msra.mxu0 %v1784
  %2232 = vmatpush.bf16.msra.mxu0 %v1783
  %2233 = vmatpush.bf16.msra.mxu0 %v1782
  %2234 = vmatpush.bf16.msra.mxu0 %v1781
  %2235 = vmatpush.bf16.msra.mxu0 %v1780
  %2236 = vmatpush.bf16.msra.mxu0 %v1779
  %2237 = vmatpush.bf16.msra.mxu0 %v1778
  %2238 = vmatmul.bf16.gmra.mxu0 %v886
  %v2239 = vpop.f32.mrf.mxu0
  %v2240 = vadd.f32 %v2191, %v2239
  %v2241 = vpop.f32.mrf.mxu0
  %v2242 = vadd.f32 %v2193, %v2241
  %2243 = vmatmul.bf16.gmra.mxu0 %v904
  %v2244 = vpop.f32.mrf.mxu0
  %v2245 = vadd.f32 %v2196, %v2244
  %v2246 = vpop.f32.mrf.mxu0
  %v2247 = vadd.f32 %v2198, %v2246
  %2248 = vmatmul.bf16.gmra.mxu0 %v922
  %v2249 = vpop.f32.mrf.mxu0
  %v2250 = vadd.f32 %v2201, %v2249
  %v2251 = vpop.f32.mrf.mxu0
  %v2252 = vadd.f32 %v2203, %v2251
  %2253 = vmatmul.bf16.gmra.mxu0 %v940
  %v2254 = vpop.f32.mrf.mxu0
  %v2255 = vadd.f32 %v2206, %v2254
  %v2256 = vpop.f32.mrf.mxu0
  %v2257 = vadd.f32 %v2208, %v2256
  %2258 = vmatmul.bf16.gmra.mxu0 %v958
  %v2259 = vpop.f32.mrf.mxu0
  %v2260 = vadd.f32 %v2211, %v2259
  %v2261 = vpop.f32.mrf.mxu0
  %v2262 = vadd.f32 %v2213, %v2261
  %2263 = vmatmul.bf16.gmra.mxu0 %v976
  %v2264 = vpop.f32.mrf.mxu0
  %v2265 = vadd.f32 %v2216, %v2264
  %v2266 = vpop.f32.mrf.mxu0
  %v2267 = vadd.f32 %v2218, %v2266
  %2268 = vmatmul.bf16.gmra.mxu0 %v994
  %v2269 = vpop.f32.mrf.mxu0
  %v2270 = vadd.f32 %v2221, %v2269
  %v2271 = vpop.f32.mrf.mxu0
  %v2272 = vadd.f32 %v2223, %v2271
  %2273 = vmatmul.bf16.gmra.mxu0 %v1012
  %v2274 = vpop.f32.mrf.mxu0
  %v2275 = vadd.f32 %v2226, %v2274
  %v2276 = vpop.f32.mrf.mxu0
  %v2277 = vadd.f32 %v2228, %v2276
  %2278 = vdwg.mxu0
  %2279 = vmatpush.bf16.msra.mxu0 %v1793
  %2280 = vmatpush.bf16.msra.mxu0 %v1792
  %2281 = vmatpush.bf16.msra.mxu0 %v1791
  %2282 = vmatpush.bf16.msra.mxu0 %v1790
  %2283 = vmatpush.bf16.msra.mxu0 %v1789
  %2284 = vmatpush.bf16.msra.mxu0 %v1788
  %2285 = vmatpush.bf16.msra.mxu0 %v1787
  %2286 = vmatpush.bf16.msra.mxu0 %v1786
  %2287 = vmatmul.bf16.gmra.mxu0 %v887
  %v2288 = vpop.f32.mrf.mxu0
  %v2289 = vadd.f32 %v2240, %v2288
  %v2290 = vpop.f32.mrf.mxu0
  %v2291 = vadd.f32 %v2242, %v2290
  %2292 = vmatmul.bf16.gmra.mxu0 %v905
  %v2293 = vpop.f32.mrf.mxu0
  %v2294 = vadd.f32 %v2245, %v2293
  %v2295 = vpop.f32.mrf.mxu0
  %v2296 = vadd.f32 %v2247, %v2295
  %2297 = vmatmul.bf16.gmra.mxu0 %v923
  %v2298 = vpop.f32.mrf.mxu0
  %v2299 = vadd.f32 %v2250, %v2298
  %v2300 = vpop.f32.mrf.mxu0
  %v2301 = vadd.f32 %v2252, %v2300
  %2302 = vmatmul.bf16.gmra.mxu0 %v941
  %v2303 = vpop.f32.mrf.mxu0
  %v2304 = vadd.f32 %v2255, %v2303
  %v2305 = vpop.f32.mrf.mxu0
  %v2306 = vadd.f32 %v2257, %v2305
  %2307 = vmatmul.bf16.gmra.mxu0 %v959
  %v2308 = vpop.f32.mrf.mxu0
  %v2309 = vadd.f32 %v2260, %v2308
  %v2310 = vpop.f32.mrf.mxu0
  %v2311 = vadd.f32 %v2262, %v2310
  %2312 = vmatmul.bf16.gmra.mxu0 %v977
  %v2313 = vpop.f32.mrf.mxu0
  %v2314 = vadd.f32 %v2265, %v2313
  %v2315 = vpop.f32.mrf.mxu0
  %v2316 = vadd.f32 %v2267, %v2315
  %2317 = vmatmul.bf16.gmra.mxu0 %v995
  %v2318 = vpop.f32.mrf.mxu0
  %v2319 = vadd.f32 %v2270, %v2318
  %v2320 = vpop.f32.mrf.mxu0
  %v2321 = vadd.f32 %v2272, %v2320
  %2322 = vmatmul.bf16.gmra.mxu0 %v1013
  %v2323 = vpop.f32.mrf.mxu0
  %v2324 = vadd.f32 %v2275, %v2323
  %v2325 = vpop.f32.mrf.mxu0
  %v2326 = vadd.f32 %v2277, %v2325
  %2327 = vdwg.mxu0
  %2328 = vmatpush.bf16.msra.mxu0 %v1801
  %2329 = vmatpush.bf16.msra.mxu0 %v1800
  %2330 = vmatpush.bf16.msra.mxu0 %v1799
  %2331 = vmatpush.bf16.msra.mxu0 %v1798
  %2332 = vmatpush.bf16.msra.mxu0 %v1797
  %2333 = vmatpush.bf16.msra.mxu0 %v1796
  %2334 = vmatpush.bf16.msra.mxu0 %v1795
  %2335 = vmatpush.bf16.msra.mxu0 %v1794
  %2336 = vmatmul.bf16.gmra.mxu0 %v888
  %v2337 = vpop.f32.mrf.mxu0
  %v2338 = vadd.f32 %v2289, %v2337
  %v2339 = vpop.f32.mrf.mxu0
  %v2340 = vadd.f32 %v2291, %v2339
  %2341 = vmatmul.bf16.gmra.mxu0 %v906
  %v2342 = vpop.f32.mrf.mxu0
  %v2343 = vadd.f32 %v2294, %v2342
  %v2344 = vpop.f32.mrf.mxu0
  %v2345 = vadd.f32 %v2296, %v2344
  %2346 = vmatmul.bf16.gmra.mxu0 %v924
  %v2347 = vpop.f32.mrf.mxu0
  %v2348 = vadd.f32 %v2299, %v2347
  %v2349 = vpop.f32.mrf.mxu0
  %v2350 = vadd.f32 %v2301, %v2349
  %2351 = vmatmul.bf16.gmra.mxu0 %v942
  %v2352 = vpop.f32.mrf.mxu0
  %v2353 = vadd.f32 %v2304, %v2352
  %v2354 = vpop.f32.mrf.mxu0
  %v2355 = vadd.f32 %v2306, %v2354
  %2356 = vmatmul.bf16.gmra.mxu0 %v960
  %v2357 = vpop.f32.mrf.mxu0
  %v2358 = vadd.f32 %v2309, %v2357
  %v2359 = vpop.f32.mrf.mxu0
  %v2360 = vadd.f32 %v2311, %v2359
  %2361 = vmatmul.bf16.gmra.mxu0 %v978
  %v2362 = vpop.f32.mrf.mxu0
  %v2363 = vadd.f32 %v2314, %v2362
  %v2364 = vpop.f32.mrf.mxu0
  %v2365 = vadd.f32 %v2316, %v2364
  %2366 = vmatmul.bf16.gmra.mxu0 %v996
  %v2367 = vpop.f32.mrf.mxu0
  %v2368 = vadd.f32 %v2319, %v2367
  %v2369 = vpop.f32.mrf.mxu0
  %v2370 = vadd.f32 %v2321, %v2369
  %2371 = vmatmul.bf16.gmra.mxu0 %v1014
  %v2372 = vpop.f32.mrf.mxu0
  %v2373 = vadd.f32 %v2324, %v2372
  %v2374 = vpop.f32.mrf.mxu0
  %v2375 = vadd.f32 %v2326, %v2374
  %2376 = vdwg.mxu0
  %2377 = vmatpush.bf16.msra.mxu0 %v1809
  %2378 = vmatpush.bf16.msra.mxu0 %v1808
  %2379 = vmatpush.bf16.msra.mxu0 %v1807
  %2380 = vmatpush.bf16.msra.mxu0 %v1806
  %2381 = vmatpush.bf16.msra.mxu0 %v1805
  %2382 = vmatpush.bf16.msra.mxu0 %v1804
  %2383 = vmatpush.bf16.msra.mxu0 %v1803
  %2384 = vmatpush.bf16.msra.mxu0 %v1802
  %2385 = vmatmul.bf16.gmra.mxu0 %v889
  %v2386 = vpop.f32.mrf.mxu0
  %v2387 = vadd.f32 %v2338, %v2386
  %v2388 = vpop.f32.mrf.mxu0
  %v2389 = vadd.f32 %v2340, %v2388
  %2390 = vmatmul.bf16.gmra.mxu0 %v907
  %v2391 = vpop.f32.mrf.mxu0
  %v2392 = vadd.f32 %v2343, %v2391
  %v2393 = vpop.f32.mrf.mxu0
  %v2394 = vadd.f32 %v2345, %v2393
  %2395 = vmatmul.bf16.gmra.mxu0 %v925
  %v2396 = vpop.f32.mrf.mxu0
  %v2397 = vadd.f32 %v2348, %v2396
  %v2398 = vpop.f32.mrf.mxu0
  %v2399 = vadd.f32 %v2350, %v2398
  %2400 = vmatmul.bf16.gmra.mxu0 %v943
  %v2401 = vpop.f32.mrf.mxu0
  %v2402 = vadd.f32 %v2353, %v2401
  %v2403 = vpop.f32.mrf.mxu0
  %v2404 = vadd.f32 %v2355, %v2403
  %2405 = vmatmul.bf16.gmra.mxu0 %v961
  %v2406 = vpop.f32.mrf.mxu0
  %v2407 = vadd.f32 %v2358, %v2406
  %v2408 = vpop.f32.mrf.mxu0
  %v2409 = vadd.f32 %v2360, %v2408
  %2410 = vmatmul.bf16.gmra.mxu0 %v979
  %v2411 = vpop.f32.mrf.mxu0
  %v2412 = vadd.f32 %v2363, %v2411
  %v2413 = vpop.f32.mrf.mxu0
  %v2414 = vadd.f32 %v2365, %v2413
  %2415 = vmatmul.bf16.gmra.mxu0 %v997
  %v2416 = vpop.f32.mrf.mxu0
  %v2417 = vadd.f32 %v2368, %v2416
  %v2418 = vpop.f32.mrf.mxu0
  %v2419 = vadd.f32 %v2370, %v2418
  %2420 = vmatmul.bf16.gmra.mxu0 %v1015
  %v2421 = vpop.f32.mrf.mxu0
  %v2422 = vadd.f32 %v2373, %v2421
  %v2423 = vpop.f32.mrf.mxu0
  %v2424 = vadd.f32 %v2375, %v2423
  %2425 = vdwg.mxu0
  %2426 = vmatpush.bf16.msra.mxu0 %v1817
  %2427 = vmatpush.bf16.msra.mxu0 %v1816
  %2428 = vmatpush.bf16.msra.mxu0 %v1815
  %2429 = vmatpush.bf16.msra.mxu0 %v1814
  %2430 = vmatpush.bf16.msra.mxu0 %v1813
  %2431 = vmatpush.bf16.msra.mxu0 %v1812
  %2432 = vmatpush.bf16.msra.mxu0 %v1811
  %2433 = vmatpush.bf16.msra.mxu0 %v1810
  %2434 = vmatmul.bf16.gmra.mxu0 %v890
  %v2435 = vpop.f32.mrf.mxu0
  %v2436 = vadd.f32 %v2387, %v2435
  %v2437 = vpop.f32.mrf.mxu0
  %v2438 = vadd.f32 %v2389, %v2437
  %2439 = vmatmul.bf16.gmra.mxu0 %v908
  %v2440 = vpop.f32.mrf.mxu0
  %v2441 = vadd.f32 %v2392, %v2440
  %v2442 = vpop.f32.mrf.mxu0
  %v2443 = vadd.f32 %v2394, %v2442
  %2444 = vmatmul.bf16.gmra.mxu0 %v926
  %v2445 = vpop.f32.mrf.mxu0
  %v2446 = vadd.f32 %v2397, %v2445
  %v2447 = vpop.f32.mrf.mxu0
  %v2448 = vadd.f32 %v2399, %v2447
  %2449 = vmatmul.bf16.gmra.mxu0 %v944
  %v2450 = vpop.f32.mrf.mxu0
  %v2451 = vadd.f32 %v2402, %v2450
  %v2452 = vpop.f32.mrf.mxu0
  %v2453 = vadd.f32 %v2404, %v2452
  %2454 = vmatmul.bf16.gmra.mxu0 %v962
  %v2455 = vpop.f32.mrf.mxu0
  %v2456 = vadd.f32 %v2407, %v2455
  %v2457 = vpop.f32.mrf.mxu0
  %v2458 = vadd.f32 %v2409, %v2457
  %2459 = vmatmul.bf16.gmra.mxu0 %v980
  %v2460 = vpop.f32.mrf.mxu0
  %v2461 = vadd.f32 %v2412, %v2460
  %v2462 = vpop.f32.mrf.mxu0
  %v2463 = vadd.f32 %v2414, %v2462
  %2464 = vmatmul.bf16.gmra.mxu0 %v998
  %v2465 = vpop.f32.mrf.mxu0
  %v2466 = vadd.f32 %v2417, %v2465
  %v2467 = vpop.f32.mrf.mxu0
  %v2468 = vadd.f32 %v2419, %v2467
  %2469 = vmatmul.bf16.gmra.mxu0 %v1016
  %v2470 = vpop.f32.mrf.mxu0
  %v2471 = vadd.f32 %v2422, %v2470
  %v2472 = vpop.f32.mrf.mxu0
  %v2473 = vadd.f32 %v2424, %v2472
  %2474 = vdwg.mxu0
  %2475 = vmatpush.bf16.msra.mxu0 %v1825
  %2476 = vmatpush.bf16.msra.mxu0 %v1824
  %2477 = vmatpush.bf16.msra.mxu0 %v1823
  %2478 = vmatpush.bf16.msra.mxu0 %v1822
  %2479 = vmatpush.bf16.msra.mxu0 %v1821
  %2480 = vmatpush.bf16.msra.mxu0 %v1820
  %2481 = vmatpush.bf16.msra.mxu0 %v1819
  %2482 = vmatpush.bf16.msra.mxu0 %v1818
  %2483 = vmatmul.bf16.gmra.mxu0 %v891
  %v2484 = vpop.f32.mrf.mxu0
  %v2485 = vadd.f32 %v2436, %v2484
  %v2486 = vpop.f32.mrf.mxu0
  %v2487 = vadd.f32 %v2438, %v2486
  %2488 = vmatmul.bf16.gmra.mxu0 %v909
  %v2489 = vpop.f32.mrf.mxu0
  %v2490 = vadd.f32 %v2441, %v2489
  %v2491 = vpop.f32.mrf.mxu0
  %v2492 = vadd.f32 %v2443, %v2491
  %2493 = vmatmul.bf16.gmra.mxu0 %v927
  %v2494 = vpop.f32.mrf.mxu0
  %v2495 = vadd.f32 %v2446, %v2494
  %v2496 = vpop.f32.mrf.mxu0
  %v2497 = vadd.f32 %v2448, %v2496
  %2498 = vmatmul.bf16.gmra.mxu0 %v945
  %v2499 = vpop.f32.mrf.mxu0
  %v2500 = vadd.f32 %v2451, %v2499
  %v2501 = vpop.f32.mrf.mxu0
  %v2502 = vadd.f32 %v2453, %v2501
  %2503 = vmatmul.bf16.gmra.mxu0 %v963
  %v2504 = vpop.f32.mrf.mxu0
  %v2505 = vadd.f32 %v2456, %v2504
  %v2506 = vpop.f32.mrf.mxu0
  %v2507 = vadd.f32 %v2458, %v2506
  %2508 = vmatmul.bf16.gmra.mxu0 %v981
  %v2509 = vpop.f32.mrf.mxu0
  %v2510 = vadd.f32 %v2461, %v2509
  %v2511 = vpop.f32.mrf.mxu0
  %v2512 = vadd.f32 %v2463, %v2511
  %2513 = vmatmul.bf16.gmra.mxu0 %v999
  %v2514 = vpop.f32.mrf.mxu0
  %v2515 = vadd.f32 %v2466, %v2514
  %v2516 = vpop.f32.mrf.mxu0
  %v2517 = vadd.f32 %v2468, %v2516
  %2518 = vmatmul.bf16.gmra.mxu0 %v1017
  %v2519 = vpop.f32.mrf.mxu0
  %v2520 = vadd.f32 %v2471, %v2519
  %v2521 = vpop.f32.mrf.mxu0
  %v2522 = vadd.f32 %v2473, %v2521
  %2523 = vdwg.mxu0
  %2524 = vmatpush.bf16.msra.mxu0 %v1833
  %2525 = vmatpush.bf16.msra.mxu0 %v1832
  %2526 = vmatpush.bf16.msra.mxu0 %v1831
  %2527 = vmatpush.bf16.msra.mxu0 %v1830
  %2528 = vmatpush.bf16.msra.mxu0 %v1829
  %2529 = vmatpush.bf16.msra.mxu0 %v1828
  %2530 = vmatpush.bf16.msra.mxu0 %v1827
  %2531 = vmatpush.bf16.msra.mxu0 %v1826
  %2532 = vmatmul.bf16.gmra.mxu0 %v892
  %v2533 = vpop.f32.mrf.mxu0
  %v2534 = vadd.f32 %v2485, %v2533
  %v2535 = vpop.f32.mrf.mxu0
  %v2536 = vadd.f32 %v2487, %v2535
  %2537 = vmatmul.bf16.gmra.mxu0 %v910
  %v2538 = vpop.f32.mrf.mxu0
  %v2539 = vadd.f32 %v2490, %v2538
  %v2540 = vpop.f32.mrf.mxu0
  %v2541 = vadd.f32 %v2492, %v2540
  %2542 = vmatmul.bf16.gmra.mxu0 %v928
  %v2543 = vpop.f32.mrf.mxu0
  %v2544 = vadd.f32 %v2495, %v2543
  %v2545 = vpop.f32.mrf.mxu0
  %v2546 = vadd.f32 %v2497, %v2545
  %2547 = vmatmul.bf16.gmra.mxu0 %v946
  %v2548 = vpop.f32.mrf.mxu0
  %v2549 = vadd.f32 %v2500, %v2548
  %v2550 = vpop.f32.mrf.mxu0
  %v2551 = vadd.f32 %v2502, %v2550
  %2552 = vmatmul.bf16.gmra.mxu0 %v964
  %v2553 = vpop.f32.mrf.mxu0
  %v2554 = vadd.f32 %v2505, %v2553
  %v2555 = vpop.f32.mrf.mxu0
  %v2556 = vadd.f32 %v2507, %v2555
  %2557 = vmatmul.bf16.gmra.mxu0 %v982
  %v2558 = vpop.f32.mrf.mxu0
  %v2559 = vadd.f32 %v2510, %v2558
  %v2560 = vpop.f32.mrf.mxu0
  %v2561 = vadd.f32 %v2512, %v2560
  %2562 = vmatmul.bf16.gmra.mxu0 %v1000
  %v2563 = vpop.f32.mrf.mxu0
  %v2564 = vadd.f32 %v2515, %v2563
  %v2565 = vpop.f32.mrf.mxu0
  %v2566 = vadd.f32 %v2517, %v2565
  %2567 = vmatmul.bf16.gmra.mxu0 %v1018
  %v2568 = vpop.f32.mrf.mxu0
  %v2569 = vadd.f32 %v2520, %v2568
  %v2570 = vpop.f32.mrf.mxu0
  %v2571 = vadd.f32 %v2522, %v2570
  %2572 = vdwg.mxu0
  %2573 = vmatpush.bf16.msra.mxu0 %v1841
  %2574 = vmatpush.bf16.msra.mxu0 %v1840
  %2575 = vmatpush.bf16.msra.mxu0 %v1839
  %2576 = vmatpush.bf16.msra.mxu0 %v1838
  %2577 = vmatpush.bf16.msra.mxu0 %v1837
  %2578 = vmatpush.bf16.msra.mxu0 %v1836
  %2579 = vmatpush.bf16.msra.mxu0 %v1835
  %2580 = vmatpush.bf16.msra.mxu0 %v1834
  %2581 = vmatmul.bf16.gmra.mxu0 %v893
  %v2582 = vpop.f32.mrf.mxu0
  %v2583 = vadd.f32 %v2534, %v2582
  %v2584 = vpop.f32.mrf.mxu0
  %v2585 = vadd.f32 %v2536, %v2584
  %2586 = vmatmul.bf16.gmra.mxu0 %v911
  %v2587 = vpop.f32.mrf.mxu0
  %v2588 = vadd.f32 %v2539, %v2587
  %v2589 = vpop.f32.mrf.mxu0
  %v2590 = vadd.f32 %v2541, %v2589
  %2591 = vmatmul.bf16.gmra.mxu0 %v929
  %v2592 = vpop.f32.mrf.mxu0
  %v2593 = vadd.f32 %v2544, %v2592
  %v2594 = vpop.f32.mrf.mxu0
  %v2595 = vadd.f32 %v2546, %v2594
  %2596 = vmatmul.bf16.gmra.mxu0 %v947
  %v2597 = vpop.f32.mrf.mxu0
  %v2598 = vadd.f32 %v2549, %v2597
  %v2599 = vpop.f32.mrf.mxu0
  %v2600 = vadd.f32 %v2551, %v2599
  %2601 = vmatmul.bf16.gmra.mxu0 %v965
  %v2602 = vpop.f32.mrf.mxu0
  %v2603 = vadd.f32 %v2554, %v2602
  %v2604 = vpop.f32.mrf.mxu0
  %v2605 = vadd.f32 %v2556, %v2604
  %2606 = vmatmul.bf16.gmra.mxu0 %v983
  %v2607 = vpop.f32.mrf.mxu0
  %v2608 = vadd.f32 %v2559, %v2607
  %v2609 = vpop.f32.mrf.mxu0
  %v2610 = vadd.f32 %v2561, %v2609
  %2611 = vmatmul.bf16.gmra.mxu0 %v1001
  %v2612 = vpop.f32.mrf.mxu0
  %v2613 = vadd.f32 %v2564, %v2612
  %v2614 = vpop.f32.mrf.mxu0
  %v2615 = vadd.f32 %v2566, %v2614
  %2616 = vmatmul.bf16.gmra.mxu0 %v1019
  %v2617 = vpop.f32.mrf.mxu0
  %v2618 = vadd.f32 %v2569, %v2617
  %v2619 = vpop.f32.mrf.mxu0
  %v2620 = vadd.f32 %v2571, %v2619
  %2621 = vdwg.mxu0
  %2622 = vmatpush.bf16.msra.mxu0 %v1849
  %2623 = vmatpush.bf16.msra.mxu0 %v1848
  %2624 = vmatpush.bf16.msra.mxu0 %v1847
  %2625 = vmatpush.bf16.msra.mxu0 %v1846
  %2626 = vmatpush.bf16.msra.mxu0 %v1845
  %2627 = vmatpush.bf16.msra.mxu0 %v1844
  %2628 = vmatpush.bf16.msra.mxu0 %v1843
  %2629 = vmatpush.bf16.msra.mxu0 %v1842
  %2630 = vmatmul.bf16.gmra.mxu0 %v894
  %v2631 = vpop.f32.mrf.mxu0
  %v2632 = vadd.f32 %v2583, %v2631
  %v2633 = vpop.f32.mrf.mxu0
  %v2634 = vadd.f32 %v2585, %v2633
  %2635 = vmatmul.bf16.gmra.mxu0 %v912
  %v2636 = vpop.f32.mrf.mxu0
  %v2637 = vadd.f32 %v2588, %v2636
  %v2638 = vpop.f32.mrf.mxu0
  %v2639 = vadd.f32 %v2590, %v2638
  %2640 = vmatmul.bf16.gmra.mxu0 %v930
  %v2641 = vpop.f32.mrf.mxu0
  %v2642 = vadd.f32 %v2593, %v2641
  %v2643 = vpop.f32.mrf.mxu0
  %v2644 = vadd.f32 %v2595, %v2643
  %2645 = vmatmul.bf16.gmra.mxu0 %v948
  %v2646 = vpop.f32.mrf.mxu0
  %v2647 = vadd.f32 %v2598, %v2646
  %v2648 = vpop.f32.mrf.mxu0
  %v2649 = vadd.f32 %v2600, %v2648
  %2650 = vmatmul.bf16.gmra.mxu0 %v966
  %v2651 = vpop.f32.mrf.mxu0
  %v2652 = vadd.f32 %v2603, %v2651
  %v2653 = vpop.f32.mrf.mxu0
  %v2654 = vadd.f32 %v2605, %v2653
  %2655 = vmatmul.bf16.gmra.mxu0 %v984
  %v2656 = vpop.f32.mrf.mxu0
  %v2657 = vadd.f32 %v2608, %v2656
  %v2658 = vpop.f32.mrf.mxu0
  %v2659 = vadd.f32 %v2610, %v2658
  %2660 = vmatmul.bf16.gmra.mxu0 %v1002
  %v2661 = vpop.f32.mrf.mxu0
  %v2662 = vadd.f32 %v2613, %v2661
  %v2663 = vpop.f32.mrf.mxu0
  %v2664 = vadd.f32 %v2615, %v2663
  %2665 = vmatmul.bf16.gmra.mxu0 %v1020
  %v2666 = vpop.f32.mrf.mxu0
  %v2667 = vadd.f32 %v2618, %v2666
  %v2668 = vpop.f32.mrf.mxu0
  %v2669 = vadd.f32 %v2620, %v2668
  %2670 = vdwg.mxu0
  %2671 = vmatpush.bf16.msra.mxu0 %v1857
  %2672 = vmatpush.bf16.msra.mxu0 %v1856
  %2673 = vmatpush.bf16.msra.mxu0 %v1855
  %2674 = vmatpush.bf16.msra.mxu0 %v1854
  %2675 = vmatpush.bf16.msra.mxu0 %v1853
  %2676 = vmatpush.bf16.msra.mxu0 %v1852
  %2677 = vmatpush.bf16.msra.mxu0 %v1851
  %2678 = vmatpush.bf16.msra.mxu0 %v1850
  %2679 = vmatmul.bf16.gmra.mxu0 %v895
  %v2680 = vpop.f32.mrf.mxu0
  %v2681 = vadd.f32 %v2632, %v2680
  %v2682 = vpop.f32.mrf.mxu0
  %v2683 = vadd.f32 %v2634, %v2682
  %2684 = vmatmul.bf16.gmra.mxu0 %v913
  %v2685 = vpop.f32.mrf.mxu0
  %v2686 = vadd.f32 %v2637, %v2685
  %v2687 = vpop.f32.mrf.mxu0
  %v2688 = vadd.f32 %v2639, %v2687
  %2689 = vmatmul.bf16.gmra.mxu0 %v931
  %v2690 = vpop.f32.mrf.mxu0
  %v2691 = vadd.f32 %v2642, %v2690
  %v2692 = vpop.f32.mrf.mxu0
  %v2693 = vadd.f32 %v2644, %v2692
  %2694 = vmatmul.bf16.gmra.mxu0 %v949
  %v2695 = vpop.f32.mrf.mxu0
  %v2696 = vadd.f32 %v2647, %v2695
  %v2697 = vpop.f32.mrf.mxu0
  %v2698 = vadd.f32 %v2649, %v2697
  %2699 = vmatmul.bf16.gmra.mxu0 %v967
  %v2700 = vpop.f32.mrf.mxu0
  %v2701 = vadd.f32 %v2652, %v2700
  %v2702 = vpop.f32.mrf.mxu0
  %v2703 = vadd.f32 %v2654, %v2702
  %2704 = vmatmul.bf16.gmra.mxu0 %v985
  %v2705 = vpop.f32.mrf.mxu0
  %v2706 = vadd.f32 %v2657, %v2705
  %v2707 = vpop.f32.mrf.mxu0
  %v2708 = vadd.f32 %v2659, %v2707
  %2709 = vmatmul.bf16.gmra.mxu0 %v1003
  %v2710 = vpop.f32.mrf.mxu0
  %v2711 = vadd.f32 %v2662, %v2710
  %v2712 = vpop.f32.mrf.mxu0
  %v2713 = vadd.f32 %v2664, %v2712
  %2714 = vmatmul.bf16.gmra.mxu0 %v1021
  %v2715 = vpop.f32.mrf.mxu0
  %v2716 = vadd.f32 %v2667, %v2715
  %v2717 = vpop.f32.mrf.mxu0
  %v2718 = vadd.f32 %v2669, %v2717
  %2719 = vdwg.mxu0
  %2720 = vmatpush.bf16.msra.mxu0 %v1865
  %2721 = vmatpush.bf16.msra.mxu0 %v1864
  %2722 = vmatpush.bf16.msra.mxu0 %v1863
  %2723 = vmatpush.bf16.msra.mxu0 %v1862
  %2724 = vmatpush.bf16.msra.mxu0 %v1861
  %2725 = vmatpush.bf16.msra.mxu0 %v1860
  %2726 = vmatpush.bf16.msra.mxu0 %v1859
  %2727 = vmatpush.bf16.msra.mxu0 %v1858
  %2728 = vmatmul.bf16.gmra.mxu0 %v896
  %v2729 = vpop.f32.mrf.mxu0
  %v2730 = vadd.f32 %v2681, %v2729
  %v2731 = vpop.f32.mrf.mxu0
  %v2732 = vadd.f32 %v2683, %v2731
  %2733 = vmatmul.bf16.gmra.mxu0 %v914
  %v2734 = vpop.f32.mrf.mxu0
  %v2735 = vadd.f32 %v2686, %v2734
  %v2736 = vpop.f32.mrf.mxu0
  %v2737 = vadd.f32 %v2688, %v2736
  %2738 = vmatmul.bf16.gmra.mxu0 %v932
  %v2739 = vpop.f32.mrf.mxu0
  %v2740 = vadd.f32 %v2691, %v2739
  %v2741 = vpop.f32.mrf.mxu0
  %v2742 = vadd.f32 %v2693, %v2741
  %2743 = vmatmul.bf16.gmra.mxu0 %v950
  %v2744 = vpop.f32.mrf.mxu0
  %v2745 = vadd.f32 %v2696, %v2744
  %v2746 = vpop.f32.mrf.mxu0
  %v2747 = vadd.f32 %v2698, %v2746
  %2748 = vmatmul.bf16.gmra.mxu0 %v968
  %v2749 = vpop.f32.mrf.mxu0
  %v2750 = vadd.f32 %v2701, %v2749
  %v2751 = vpop.f32.mrf.mxu0
  %v2752 = vadd.f32 %v2703, %v2751
  %2753 = vmatmul.bf16.gmra.mxu0 %v986
  %v2754 = vpop.f32.mrf.mxu0
  %v2755 = vadd.f32 %v2706, %v2754
  %v2756 = vpop.f32.mrf.mxu0
  %v2757 = vadd.f32 %v2708, %v2756
  %2758 = vmatmul.bf16.gmra.mxu0 %v1004
  %v2759 = vpop.f32.mrf.mxu0
  %v2760 = vadd.f32 %v2711, %v2759
  %v2761 = vpop.f32.mrf.mxu0
  %v2762 = vadd.f32 %v2713, %v2761
  %2763 = vmatmul.bf16.gmra.mxu0 %v1022
  %v2764 = vpop.f32.mrf.mxu0
  %v2765 = vadd.f32 %v2716, %v2764
  %v2766 = vpop.f32.mrf.mxu0
  %v2767 = vadd.f32 %v2718, %v2766
  %2768 = vdwg.mxu0
  %2769 = vmatpush.bf16.msra.mxu0 %v1873
  %2770 = vmatpush.bf16.msra.mxu0 %v1872
  %2771 = vmatpush.bf16.msra.mxu0 %v1871
  %2772 = vmatpush.bf16.msra.mxu0 %v1870
  %2773 = vmatpush.bf16.msra.mxu0 %v1869
  %2774 = vmatpush.bf16.msra.mxu0 %v1868
  %2775 = vmatpush.bf16.msra.mxu0 %v1867
  %2776 = vmatpush.bf16.msra.mxu0 %v1866
  %2777 = vmatmul.bf16.gmra.mxu0 %v897
  %v2778 = vpop.f32.mrf.mxu0
  %v2779 = vadd.f32 %v2730, %v2778
  %v2780 = vpop.f32.mrf.mxu0
  %v2781 = vadd.f32 %v2732, %v2780
  %2782 = vmatmul.bf16.gmra.mxu0 %v915
  %v2783 = vpop.f32.mrf.mxu0
  %v2784 = vadd.f32 %v2735, %v2783
  %v2785 = vpop.f32.mrf.mxu0
  %v2786 = vadd.f32 %v2737, %v2785
  %2787 = vmatmul.bf16.gmra.mxu0 %v933
  %v2788 = vpop.f32.mrf.mxu0
  %v2789 = vadd.f32 %v2740, %v2788
  %v2790 = vpop.f32.mrf.mxu0
  %v2791 = vadd.f32 %v2742, %v2790
  %2792 = vmatmul.bf16.gmra.mxu0 %v951
  %v2793 = vpop.f32.mrf.mxu0
  %v2794 = vadd.f32 %v2745, %v2793
  %v2795 = vpop.f32.mrf.mxu0
  %v2796 = vadd.f32 %v2747, %v2795
  %2797 = vmatmul.bf16.gmra.mxu0 %v969
  %v2798 = vpop.f32.mrf.mxu0
  %v2799 = vadd.f32 %v2750, %v2798
  %v2800 = vpop.f32.mrf.mxu0
  %v2801 = vadd.f32 %v2752, %v2800
  %2802 = vmatmul.bf16.gmra.mxu0 %v987
  %v2803 = vpop.f32.mrf.mxu0
  %v2804 = vadd.f32 %v2755, %v2803
  %v2805 = vpop.f32.mrf.mxu0
  %v2806 = vadd.f32 %v2757, %v2805
  %2807 = vmatmul.bf16.gmra.mxu0 %v1005
  %v2808 = vpop.f32.mrf.mxu0
  %v2809 = vadd.f32 %v2760, %v2808
  %v2810 = vpop.f32.mrf.mxu0
  %v2811 = vadd.f32 %v2762, %v2810
  %2812 = vmatmul.bf16.gmra.mxu0 %v1023
  %v2813 = vpop.f32.mrf.mxu0
  %v2814 = vadd.f32 %v2765, %v2813
  %v2815 = vpop.f32.mrf.mxu0
  %v2816 = vadd.f32 %v2767, %v2815
  %2817 = vdwg.mxu0
  %2818 = vmatpush.bf16.msra.mxu0 %v1881
  %2819 = vmatpush.bf16.msra.mxu0 %v1880
  %2820 = vmatpush.bf16.msra.mxu0 %v1879
  %2821 = vmatpush.bf16.msra.mxu0 %v1878
  %2822 = vmatpush.bf16.msra.mxu0 %v1877
  %2823 = vmatpush.bf16.msra.mxu0 %v1876
  %2824 = vmatpush.bf16.msra.mxu0 %v1875
  %2825 = vmatpush.bf16.msra.mxu0 %v1874
  %2826 = vmatmul.bf16.gmra.mxu0 %v898
  %v2827 = vpop.f32.mrf.mxu0
  %v2828 = vadd.f32 %v2779, %v2827
  %v2829 = vpop.f32.mrf.mxu0
  %v2830 = vadd.f32 %v2781, %v2829
  %2831 = vmatmul.bf16.gmra.mxu0 %v916
  %v2832 = vpop.f32.mrf.mxu0
  %v2833 = vadd.f32 %v2784, %v2832
  %v2834 = vpop.f32.mrf.mxu0
  %v2835 = vadd.f32 %v2786, %v2834
  %2836 = vmatmul.bf16.gmra.mxu0 %v934
  %v2837 = vpop.f32.mrf.mxu0
  %v2838 = vadd.f32 %v2789, %v2837
  %v2839 = vpop.f32.mrf.mxu0
  %v2840 = vadd.f32 %v2791, %v2839
  %2841 = vmatmul.bf16.gmra.mxu0 %v952
  %v2842 = vpop.f32.mrf.mxu0
  %v2843 = vadd.f32 %v2794, %v2842
  %v2844 = vpop.f32.mrf.mxu0
  %v2845 = vadd.f32 %v2796, %v2844
  %2846 = vmatmul.bf16.gmra.mxu0 %v970
  %v2847 = vpop.f32.mrf.mxu0
  %v2848 = vadd.f32 %v2799, %v2847
  %v2849 = vpop.f32.mrf.mxu0
  %v2850 = vadd.f32 %v2801, %v2849
  %2851 = vmatmul.bf16.gmra.mxu0 %v988
  %v2852 = vpop.f32.mrf.mxu0
  %v2853 = vadd.f32 %v2804, %v2852
  %v2854 = vpop.f32.mrf.mxu0
  %v2855 = vadd.f32 %v2806, %v2854
  %2856 = vmatmul.bf16.gmra.mxu0 %v1006
  %v2857 = vpop.f32.mrf.mxu0
  %v2858 = vadd.f32 %v2809, %v2857
  %v2859 = vpop.f32.mrf.mxu0
  %v2860 = vadd.f32 %v2811, %v2859
  %2861 = vmatmul.bf16.gmra.mxu0 %v1024
  %v2862 = vpop.f32.mrf.mxu0
  %v2863 = vadd.f32 %v2814, %v2862
  %v2864 = vpop.f32.mrf.mxu0
  %v2865 = vadd.f32 %v2816, %v2864
  %2866 = vdwg.mxu0
  %2867 = vmatpush.bf16.msra.mxu0 %v1889
  %2868 = vmatpush.bf16.msra.mxu0 %v1888
  %2869 = vmatpush.bf16.msra.mxu0 %v1887
  %2870 = vmatpush.bf16.msra.mxu0 %v1886
  %2871 = vmatpush.bf16.msra.mxu0 %v1885
  %2872 = vmatpush.bf16.msra.mxu0 %v1884
  %2873 = vmatpush.bf16.msra.mxu0 %v1883
  %2874 = vmatpush.bf16.msra.mxu0 %v1882
  %2875 = vmatmul.bf16.gmra.mxu0 %v899
  %v2876 = vpop.f32.mrf.mxu0
  %v2877 = vadd.f32 %v2828, %v2876
  %v2878 = vpop.f32.mrf.mxu0
  %v2879 = vadd.f32 %v2830, %v2878
  %2880 = vmatmul.bf16.gmra.mxu0 %v917
  %v2881 = vpop.f32.mrf.mxu0
  %v2882 = vadd.f32 %v2833, %v2881
  %v2883 = vpop.f32.mrf.mxu0
  %v2884 = vadd.f32 %v2835, %v2883
  %2885 = vmatmul.bf16.gmra.mxu0 %v935
  %v2886 = vpop.f32.mrf.mxu0
  %v2887 = vadd.f32 %v2838, %v2886
  %v2888 = vpop.f32.mrf.mxu0
  %v2889 = vadd.f32 %v2840, %v2888
  %2890 = vmatmul.bf16.gmra.mxu0 %v953
  %v2891 = vpop.f32.mrf.mxu0
  %v2892 = vadd.f32 %v2843, %v2891
  %v2893 = vpop.f32.mrf.mxu0
  %v2894 = vadd.f32 %v2845, %v2893
  %2895 = vmatmul.bf16.gmra.mxu0 %v971
  %v2896 = vpop.f32.mrf.mxu0
  %v2897 = vadd.f32 %v2848, %v2896
  %v2898 = vpop.f32.mrf.mxu0
  %v2899 = vadd.f32 %v2850, %v2898
  %2900 = vmatmul.bf16.gmra.mxu0 %v989
  %v2901 = vpop.f32.mrf.mxu0
  %v2902 = vadd.f32 %v2853, %v2901
  %v2903 = vpop.f32.mrf.mxu0
  %v2904 = vadd.f32 %v2855, %v2903
  %2905 = vmatmul.bf16.gmra.mxu0 %v1007
  %v2906 = vpop.f32.mrf.mxu0
  %v2907 = vadd.f32 %v2858, %v2906
  %v2908 = vpop.f32.mrf.mxu0
  %v2909 = vadd.f32 %v2860, %v2908
  %2910 = vmatmul.bf16.gmra.mxu0 %v1025
  %v2911 = vpop.f32.mrf.mxu0
  %v2912 = vadd.f32 %v2863, %v2911
  %v2913 = vpop.f32.mrf.mxu0
  %v2914 = vadd.f32 %v2865, %v2913
  %2915 = vdwg.mxu0
  %vm2916 = vcmask 523264
  %2917 = vst.msk [vmem:[%s3] sm:$0xff] %vm2916, %v2877
  %2918 = vst.msk [vmem:[%s3 + $0x8] sm:$0xff] %vm2916, %v2879
  %2919 = vst.msk [vmem:[%s3 + $0x10] sm:$0xff] %vm2916, %v2882
  %2920 = vst.msk [vmem:[%s3 + $0x18] sm:$0xff] %vm2916, %v2884
  %2921 = vst.msk [vmem:[%s3 + $0x20] sm:$0xff] %vm2916, %v2887
  %2922 = vst.msk [vmem:[%s3 + $0x28] sm:$0xff] %vm2916, %v2889
  %2923 = vst.msk [vmem:[%s3 + $0x30] sm:$0xff] %vm2916, %v2892
  %2924 = vst.msk [vmem:[%s3 + $0x38] sm:$0xff] %vm2916, %v2894
  %2925 = vst.msk [vmem:[%s3 + $0x40] sm:$0xff] %vm2916, %v2897
  %2926 = vst.msk [vmem:[%s3 + $0x48] sm:$0xff] %vm2916, %v2899
  %2927 = vst.msk [vmem:[%s3 + $0x50] sm:$0xff] %vm2916, %v2902
  %2928 = vst.msk [vmem:[%s3 + $0x58] sm:$0xff] %vm2916, %v2904
  %2929 = vst.msk [vmem:[%s3 + $0x60] sm:$0xff] %vm2916, %v2907
  %2930 = vst.msk [vmem:[%s3 + $0x68] sm:$0xff] %vm2916, %v2909
  %2931 = vst.msk [vmem:[%s3 + $0x70] sm:$0xff] %vm2916, %v2912
  %2932 = vst.msk [vmem:[%s3 + $0x78] sm:$0xff] %vm2916, %v2914
  // Predicated region
  $region14: #{unet_forward.16} parent=0 // pred_check
    _
  $region15: #{unet_forward.16} parent=0 // pred_check_branch
    %2934 = sbr.rel (0) target = $region17
  $region16: #{unet_forward.16} parent=0 // pred_region
    _
  $region17: #{unet_forward.16} parent=0 // pred_fallthru
    _
  // Predicated region
  $region18: #{unet_forward.16} parent=0 // pred_check
    _
  $region19: #{unet_forward.16} parent=0 // pred_check_branch
    %2936 = sbr.rel (0) target = $region21
  $region20: #{unet_forward.16} parent=0 // pred_region
    _
  $region21: #{unet_forward.16} parent=0 // pred_fallthru
    _

// kernel: unet_forward.17
$region0: #{unet_forward.17}
  #allocation0 [shape = 'u32[]', space=smem, size = 0x4, offset = 0x4, fixed_abs, tag = 'smem constant byte address 0x4 - core index']
  #allocation1 [shape = 'u32[72,128]{1,0:T(1,128)}', space=vmem, size = 0x9000, scoped, tag = 'internal scratch']
  %s0 = inlined_call_operand.vmem [shape: bf16[512,1152], index: 0, kind: input, shape index: {}]
  %s1 = inlined_call_operand.vmem [shape: bf16[1152,32], index: 1, kind: input, shape index: {}]
  %s2 = inlined_call_operand.vmem [shape: f32[1,32], index: 2, kind: input, shape index: {}]
  %s3 = inlined_call_operand.vmem [shape: f32[512,32], index: 3, kind: output, shape index: {}]
  %s4 = sld [smem:[#allocation0]]
  $region45: #{unet_forward.17} parent=0
    _
  %s6 = ssub.s32 1, %s4
  %s7 = scalar_select 0, %s6, %s4
  loop: start=0, step=1, limit=4
  $region2: #{unet_forward.17} parent=0 // loop_pre_header
    _
  $region3: #{unet_forward.17} parent=0 // loop_header
    %s9 = sphi 0, %s13
    %p10 = scmp.ge.s32.totalorder %s9, 4
    %s19 = sphi 0, %s21
    %s22 = sphi 0, %s19
    %s23 = sphi 0, %s22
    %s39 = sphi 0, %s23
    %s43 = sphi 0, %s43
    %s45 = sphi 0, %s43
    %s46 = sphi 0, %s45
    %s60 = sphi 0, %s46
    %s64 = sphi 0, %s64
    %s66 = sphi 0, %s64
    %s67 = sphi 0, %s66
    %s81 = sphi 0, %s67
    %s87 = sphi 0, %s89
    %s90 = sphi 0, %s87
    %s91 = sphi 0, %s90
    %s107 = sphi 0, %s91
  $region4: #{unet_forward.17} parent=0 // loop_header_branch
    %12 = sbr.rel (%p10) target = $region8
  $region5: #{unet_forward.17} parent=0 // loop_body
    %s14 = ssub.s32 %s9, 1
    %s15 = ssub.s32 %s9, 2
    %s16 = sadd.s32 %s9, 1
    %s17 = ssub.s32 %s9, %s16
    %p18 = scmp.eq.s32.totalorder %s17, 0
    %s20 = sadd.s32 %s19, 1
    %s21 = scalar_select %p18, %s19, %s20
    %p24 = pneg %p18
    %p25 = scmp.eq.s32.totalorder %s9, 1
    %p26 = por %p24, %p25
    %p27 = scmp.ne.s32.totalorder %s19, %s22
    %p28 = scmp.eq.s32.totalorder %s9, 0
    %p29 = por %p27, %p28
    %p30 = scmp.ne.s32.totalorder %s19, %s22
    %p31 = scmp.eq.s32.totalorder %s14, 1
    %p32 = por %p30, %p31
    %p33 = scmp.ne.s32.totalorder %s22, %s23
    %p34 = scmp.eq.s32.totalorder %s14, 0
    %p35 = por %p33, %p34
    %p36 = scmp.ne.s32.totalorder %s22, %s23
    %p37 = scmp.eq.s32.totalorder %s15, 1
    %p38 = por %p36, %p37
    %p40 = scmp.ne.s32.totalorder %s23, %s39
    %p41 = scmp.eq.s32.totalorder %s15, 0
    %p42 = por %p40, %p41
    %s44 = sadd.s32 %s43, 1
    %p47 = scmp.eq.s32.totalorder %s9, 1
    %p48 = scmp.ne.s32.totalorder %s43, %s45
    %p49 = scmp.eq.s32.totalorder %s9, 0
    %p50 = por %p48, %p49
    %p51 = scmp.ne.s32.totalorder %s43, %s45
    %p52 = scmp.eq.s32.totalorder %s14, 1
    %p53 = por %p51, %p52
    %p54 = scmp.ne.s32.totalorder %s45, %s46
    %p55 = scmp.eq.s32.totalorder %s14, 0
    %p56 = por %p54, %p55
    %p57 = scmp.ne.s32.totalorder %s45, %s46
    %p58 = scmp.eq.s32.totalorder %s15, 1
    %p59 = por %p57, %p58
    %p61 = scmp.ne.s32.totalorder %s46, %s60
    %p62 = scmp.eq.s32.totalorder %s15, 0
    %p63 = por %p61, %p62
    %s65 = sadd.s32 %s64, 1
    %p68 = scmp.eq.s32.totalorder %s9, 1
    %p69 = scmp.ne.s32.totalorder %s64, %s66
    %p70 = scmp.eq.s32.totalorder %s9, 0
    %p71 = por %p69, %p70
    %p72 = scmp.ne.s32.totalorder %s64, %s66
    %p73 = scmp.eq.s32.totalorder %s14, 1
    %p74 = por %p72, %p73
    %p75 = scmp.ne.s32.totalorder %s66, %s67
    %p76 = scmp.eq.s32.totalorder %s14, 0
    %p77 = por %p75, %p76
    %p78 = scmp.ne.s32.totalorder %s66, %s67
    %p79 = scmp.eq.s32.totalorder %s15, 1
    %p80 = por %p78, %p79
    %p82 = scmp.ne.s32.totalorder %s67, %s81
    %p83 = scmp.eq.s32.totalorder %s15, 0
    %p84 = por %p82, %p83
    %s85 = ssub.s32 %s9, %s16
    %p86 = scmp.eq.s32.totalorder %s85, 0
    %s88 = sadd.s32 %s87, 1
    %s89 = scalar_select %p86, %s87, %s88
    %p92 = pneg %p86
    %p93 = scmp.eq.s32.totalorder %s9, 1
    %p94 = por %p92, %p93
    %p95 = scmp.ne.s32.totalorder %s87, %s90
    %p96 = scmp.eq.s32.totalorder %s9, 0
    %p97 = por %p95, %p96
    %p98 = scmp.ne.s32.totalorder %s87, %s90
    %p99 = scmp.eq.s32.totalorder %s14, 1
    %p100 = por %p98, %p99
    %p101 = scmp.ne.s32.totalorder %s90, %s91
    %p102 = scmp.eq.s32.totalorder %s14, 0
    %p103 = por %p101, %p102
    %p104 = scmp.ne.s32.totalorder %s90, %s91
    %p105 = scmp.eq.s32.totalorder %s15, 1
    %p106 = por %p104, %p105
    %p108 = scmp.ne.s32.totalorder %s91, %s107
    %p109 = scmp.eq.s32.totalorder %s15, 0
    %p110 = por %p108, %p109
    %p111 = scmp.le.s32.totalorder 1, %s9
    %p112 = scmp.lt.s32.totalorder %s9, 3
    %p113 = pnand %p111, %p112
    %p114 = pneg %p113
    // Predicated region
    $region9: #{unet_forward.17} parent=5 // pred_check
      _
    $region10: #{unet_forward.17} parent=5 // pred_check_branch
      %116 = sbr.rel (%p113) target = $region12
    $region11: #{unet_forward.17} parent=5 // pred_region
      %s117 = ssub.s32 %s9, 1
      // Predicated region
      $region13: #{unet_forward.17} parent=11 // pred_check
        %p118 = pneg %p56
      $region14: #{unet_forward.17} parent=11 // pred_check_branch
        %120 = sbr.rel (%p118) target = $region16
      $region15: #{unet_forward.17} parent=11 // pred_region
        _
      $region16: #{unet_forward.17} parent=11 // pred_fallthru
        _
      // Predicated region
      $region17: #{unet_forward.17} parent=11 // pred_check
        %p121 = pneg %p77
      $region18: #{unet_forward.17} parent=11 // pred_check_branch
        %123 = sbr.rel (%p121) target = $region20
      $region19: #{unet_forward.17} parent=11 // pred_region
        _
      $region20: #{unet_forward.17} parent=11 // pred_fallthru
        _
    $region12: #{unet_forward.17} parent=5 // pred_fallthru
      _
    %p124 = scmp.lt.s32.totalorder %s9, 2
    // Predicated region
    $region21: #{unet_forward.17} parent=5 // pred_check
      %p125 = pneg %p124
    $region22: #{unet_forward.17} parent=5 // pred_check_branch
      %127 = sbr.rel (%p125) target = $region24
    $region23: #{unet_forward.17} parent=5 // pred_region
      // Predicated region
      $region25: #{unet_forward.17} parent=23 // pred_check
        %p128 = pneg %p29
      $region26: #{unet_forward.17} parent=23 // pred_check_branch
        %130 = sbr.rel (%p128) target = $region28
      $region27: #{unet_forward.17} parent=23 // pred_region
        %s131 = smul.u32 32, %s9
        %p132 = scmp.lt.s32.totalorder %s131, 63
        %s133 = scalar_select %p132, %s131, 63
        %s134 = smul.addr %s133, 9
        %s135 = smul.addr %s134, 4
        %s136 = scalar_lea.vmem %s0, %s135
        %s137 = smul.u32 32, %s9
      $region28: #{unet_forward.17} parent=23 // pred_fallthru
        _
    $region24: #{unet_forward.17} parent=5 // pred_fallthru
      _
    %p138 = scmp.le.s32.totalorder 1, %s9
    %p139 = scmp.lt.s32.totalorder %s9, 3
    %p140 = pnand %p138, %p139
    %p141 = pneg %p140
    // Predicated region
    $region29: #{unet_forward.17} parent=5 // pred_check
      _
    $region30: #{unet_forward.17} parent=5 // pred_check_branch
      %143 = sbr.rel (%p140) target = $region32
    $region31: #{unet_forward.17} parent=5 // pred_region
      %s144 = ssub.s32 %s9, 1
      %s145 = smul.u32 32, %s14
      %p146 = scmp.lt.s32.totalorder %s145, 63
      %s147 = scalar_select %p146, %s145, 63
      %s148 = smul.addr %s147, 9
      %s149 = smul.addr %s148, 4
      %s150 = scalar_lea.vmem %s0, %s149
      %p151 = pneg %p35
      %p152 = pneg %p32
      %p153 = pneg %p56
      %p154 = pneg %p53
      %p155 = pneg %p77
      %p156 = pneg %p74
      %p157 = pneg %p103
      %p158 = pneg %p100
      %s159 = smul.u32 32, %s14
      %p160 = scmp.lt.s32.totalorder %s159, 63
      %s161 = scalar_select %p160, %s159, 63
      %s162 = smul.addr %s161, 8
      %s163 = scalar_lea.vmem %s3, %s162
      %s164 = smul.u32 32, %s14
      %p165 = scmp.lt.s32.totalorder %s164, 63
      %s166 = scalar_select %p165, %s164, 63
      %s167 = smul.addr %s166, 9
      %s168 = smul.addr %s167, 4
      %s169 = scalar_lea.vmem %s0, %s168
      %s170 = smul.u32 32, %s14
      %s171 = smul.u32 32, %s14
      %p172 = scmp.lt.s32.totalorder %s171, 63
      %s173 = scalar_select %p172, %s171, 63
      %s174 = smul.addr %s173, 8
      %s175 = scalar_lea.vmem %s3, %s174
      %s176 = smul.u32 32, %s14
      %v177 = vld [vmem:[%s169] sm:$0xff]
      %v178 = vld [vmem:[%s169 + $0x8] sm:$0xff]
      %v179 = vld [vmem:[%s169 + $0x10] sm:$0xff]
      %v180 = vld [vmem:[%s169 + $0x18] sm:$0xff]
      %v181 = vld [vmem:[%s169 + $0x20] sm:$0xf]
      %v182 = vld [vmem:[%s169 + $0x24] sm:$0xff]
      %v183 = vld [vmem:[%s169 + $0x2c] sm:$0xff]
      %v184 = vld [vmem:[%s169 + $0x34] sm:$0xff]
      %v185 = vld [vmem:[%s169 + $0x3c] sm:$0xff]
      %v186 = vld [vmem:[%s169 + $0x44] sm:$0xf]
      %v187 = vld [vmem:[%s169 + $0x48] sm:$0xff]
      %v188 = vld [vmem:[%s169 + $0x50] sm:$0xff]
      %v189 = vld [vmem:[%s169 + $0x58] sm:$0xff]
      %v190 = vld [vmem:[%s169 + $0x60] sm:$0xff]
      %v191 = vld [vmem:[%s169 + $0x68] sm:$0xf]
      %v192 = vld [vmem:[%s169 + $0x6c] sm:$0xff]
      %v193 = vld [vmem:[%s169 + $0x74] sm:$0xff]
      %v194 = vld [vmem:[%s169 + $0x7c] sm:$0xff]
      %v195 = vld [vmem:[%s169 + $0x84] sm:$0xff]
      %v196 = vld [vmem:[%s169 + $0x8c] sm:$0xf]
      %v197 = vld [vmem:[%s169 + $0x90] sm:$0xff]
      %v198 = vld [vmem:[%s169 + $0x98] sm:$0xff]
      %v199 = vld [vmem:[%s169 + $0xa0] sm:$0xff]
      %v200 = vld [vmem:[%s169 + $0xa8] sm:$0xff]
      %v201 = vld [vmem:[%s169 + $0xb0] sm:$0xf]
      %v202 = vld [vmem:[%s169 + $0xb4] sm:$0xff]
      %v203 = vld [vmem:[%s169 + $0xbc] sm:$0xff]
      %v204 = vld [vmem:[%s169 + $0xc4] sm:$0xff]
      %v205 = vld [vmem:[%s169 + $0xcc] sm:$0xff]
      %v206 = vld [vmem:[%s169 + $0xd4] sm:$0xf]
      %v207 = vld [vmem:[%s169 + $0xd8] sm:$0xff]
      %v208 = vld [vmem:[%s169 + $0xe0] sm:$0xff]
      %v209 = vld [vmem:[%s169 + $0xe8] sm:$0xff]
      %v210 = vld [vmem:[%s169 + $0xf0] sm:$0xff]
      %v211 = vld [vmem:[%s169 + $0xf8] sm:$0xf]
      %v212 = vld [vmem:[%s169 + $0xfc] sm:$0xff]
      %v213 = vld [vmem:[%s169 + $0x104] sm:$0xff]
      %v214 = vld [vmem:[%s169 + $0x10c] sm:$0xff]
      %v215 = vld [vmem:[%s169 + $0x114] sm:$0xff]
      %v216 = vld [vmem:[%s169 + $0x11c] sm:$0xf]
      %v217 = vld [vmem:[%s169 + $0x120] sm:$0xff]
      %v218 = vld [vmem:[%s169 + $0x128] sm:$0xff]
      %v219 = vld [vmem:[%s169 + $0x130] sm:$0xff]
      %v220 = vld [vmem:[%s169 + $0x138] sm:$0xff]
      %v221 = vld [vmem:[%s169 + $0x140] sm:$0xf]
      %v222 = vld [vmem:[%s169 + $0x144] sm:$0xff]
      %v223 = vld [vmem:[%s169 + $0x14c] sm:$0xff]
      %v224 = vld [vmem:[%s169 + $0x154] sm:$0xff]
      %v225 = vld [vmem:[%s169 + $0x15c] sm:$0xff]
      %v226 = vld [vmem:[%s169 + $0x164] sm:$0xf]
      %v227 = vld [vmem:[%s169 + $0x168] sm:$0xff]
      %v228 = vld [vmem:[%s169 + $0x170] sm:$0xff]
      %v229 = vld [vmem:[%s169 + $0x178] sm:$0xff]
      %v230 = vld [vmem:[%s169 + $0x180] sm:$0xff]
      %v231 = vld [vmem:[%s169 + $0x188] sm:$0xf]
      %v232 = vld [vmem:[%s169 + $0x18c] sm:$0xff]
      %v233 = vld [vmem:[%s169 + $0x194] sm:$0xff]
      %v234 = vld [vmem:[%s169 + $0x19c] sm:$0xff]
      %v235 = vld [vmem:[%s169 + $0x1a4] sm:$0xff]
      %v236 = vld [vmem:[%s169 + $0x1ac] sm:$0xf]
      %v237 = vld [vmem:[%s169 + $0x1b0] sm:$0xff]
      %v238 = vld [vmem:[%s169 + $0x1b8] sm:$0xff]
      %v239 = vld [vmem:[%s169 + $0x1c0] sm:$0xff]
      %v240 = vld [vmem:[%s169 + $0x1c8] sm:$0xff]
      %v241 = vld [vmem:[%s169 + $0x1d0] sm:$0xf]
      %v242 = vld [vmem:[%s169 + $0x1d4] sm:$0xff]
      %v243 = vld [vmem:[%s169 + $0x1dc] sm:$0xff]
      %v244 = vld [vmem:[%s169 + $0x1e4] sm:$0xff]
      %v245 = vld [vmem:[%s169 + $0x1ec] sm:$0xff]
      %v246 = vld [vmem:[%s169 + $0x1f4] sm:$0xf]
      %v247 = vld [vmem:[%s169 + $0x1f8] sm:$0xff]
      %v248 = vld [vmem:[%s169 + $0x200] sm:$0xff]
      %v249 = vld [vmem:[%s169 + $0x208] sm:$0xff]
      %v250 = vld [vmem:[%s169 + $0x210] sm:$0xff]
      %v251 = vld [vmem:[%s169 + $0x218] sm:$0xf]
      %v252 = vld [vmem:[%s169 + $0x21c] sm:$0xff]
      %v253 = vld [vmem:[%s169 + $0x224] sm:$0xff]
      %v254 = vld [vmem:[%s169 + $0x22c] sm:$0xff]
      %v255 = vld [vmem:[%s169 + $0x234] sm:$0xff]
      %v256 = vld [vmem:[%s169 + $0x23c] sm:$0xf]
      %v257 = vld [vmem:[%s169 + $0x240] sm:$0xff]
      %v258 = vld [vmem:[%s169 + $0x248] sm:$0xff]
      %v259 = vld [vmem:[%s169 + $0x250] sm:$0xff]
      %v260 = vld [vmem:[%s169 + $0x258] sm:$0xff]
      %v261 = vld [vmem:[%s169 + $0x260] sm:$0xf]
      %v262 = vld [vmem:[%s169 + $0x264] sm:$0xff]
      %v263 = vld [vmem:[%s169 + $0x26c] sm:$0xff]
      %v264 = vld [vmem:[%s169 + $0x274] sm:$0xff]
      %v265 = vld [vmem:[%s169 + $0x27c] sm:$0xff]
      %v266 = vld [vmem:[%s169 + $0x284] sm:$0xf]
      %v267 = vld [vmem:[%s169 + $0x288] sm:$0xff]
      %v268 = vld [vmem:[%s169 + $0x290] sm:$0xff]
      %v269 = vld [vmem:[%s169 + $0x298] sm:$0xff]
      %v270 = vld [vmem:[%s169 + $0x2a0] sm:$0xff]
      %v271 = vld [vmem:[%s169 + $0x2a8] sm:$0xf]
      %v272 = vld [vmem:[%s169 + $0x2ac] sm:$0xff]
      %v273 = vld [vmem:[%s169 + $0x2b4] sm:$0xff]
      %v274 = vld [vmem:[%s169 + $0x2bc] sm:$0xff]
      %v275 = vld [vmem:[%s169 + $0x2c4] sm:$0xff]
      %v276 = vld [vmem:[%s169 + $0x2cc] sm:$0xf]
      %v277 = vld [vmem:[%s169 + $0x2d0] sm:$0xff]
      %v278 = vld [vmem:[%s169 + $0x2d8] sm:$0xff]
      %v279 = vld [vmem:[%s169 + $0x2e0] sm:$0xff]
      %v280 = vld [vmem:[%s169 + $0x2e8] sm:$0xff]
      %v281 = vld [vmem:[%s169 + $0x2f0] sm:$0xf]
      %v282 = vld [vmem:[%s169 + $0x2f4] sm:$0xff]
      %v283 = vld [vmem:[%s169 + $0x2fc] sm:$0xff]
      %v284 = vld [vmem:[%s169 + $0x304] sm:$0xff]
      %v285 = vld [vmem:[%s169 + $0x30c] sm:$0xff]
      %v286 = vld [vmem:[%s169 + $0x314] sm:$0xf]
      %v287 = vld [vmem:[%s169 + $0x318] sm:$0xff]
      %v288 = vld [vmem:[%s169 + $0x320] sm:$0xff]
      %v289 = vld [vmem:[%s169 + $0x328] sm:$0xff]
      %v290 = vld [vmem:[%s169 + $0x330] sm:$0xff]
      %v291 = vld [vmem:[%s169 + $0x338] sm:$0xf]
      %v292 = vld [vmem:[%s169 + $0x33c] sm:$0xff]
      %v293 = vld [vmem:[%s169 + $0x344] sm:$0xff]
      %v294 = vld [vmem:[%s169 + $0x34c] sm:$0xff]
      %v295 = vld [vmem:[%s169 + $0x354] sm:$0xff]
      %v296 = vld [vmem:[%s169 + $0x35c] sm:$0xf]
      %v297 = vld [vmem:[%s169 + $0x360] sm:$0xff]
      %v298 = vld [vmem:[%s169 + $0x368] sm:$0xff]
      %v299 = vld [vmem:[%s169 + $0x370] sm:$0xff]
      %v300 = vld [vmem:[%s169 + $0x378] sm:$0xff]
      %v301 = vld [vmem:[%s169 + $0x380] sm:$0xf]
      %v302 = vld [vmem:[%s169 + $0x384] sm:$0xff]
      %v303 = vld [vmem:[%s169 + $0x38c] sm:$0xff]
      %v304 = vld [vmem:[%s169 + $0x394] sm:$0xff]
      %v305 = vld [vmem:[%s169 + $0x39c] sm:$0xff]
      %v306 = vld [vmem:[%s169 + $0x3a4] sm:$0xf]
      %v307 = vld [vmem:[%s169 + $0x3a8] sm:$0xff]
      %v308 = vld [vmem:[%s169 + $0x3b0] sm:$0xff]
      %v309 = vld [vmem:[%s169 + $0x3b8] sm:$0xff]
      %v310 = vld [vmem:[%s169 + $0x3c0] sm:$0xff]
      %v311 = vld [vmem:[%s169 + $0x3c8] sm:$0xf]
      %v312 = vld [vmem:[%s169 + $0x3cc] sm:$0xff]
      %v313 = vld [vmem:[%s169 + $0x3d4] sm:$0xff]
      %v314 = vld [vmem:[%s169 + $0x3dc] sm:$0xff]
      %v315 = vld [vmem:[%s169 + $0x3e4] sm:$0xff]
      %v316 = vld [vmem:[%s169 + $0x3ec] sm:$0xf]
      %v317 = vld [vmem:[%s169 + $0x3f0] sm:$0xff]
      %v318 = vld [vmem:[%s169 + $0x3f8] sm:$0xff]
      %v319 = vld [vmem:[%s169 + $0x400] sm:$0xff]
      %v320 = vld [vmem:[%s169 + $0x408] sm:$0xff]
      %v321 = vld [vmem:[%s169 + $0x410] sm:$0xf]
      %v322 = vld [vmem:[%s169 + $0x414] sm:$0xff]
      %v323 = vld [vmem:[%s169 + $0x41c] sm:$0xff]
      %v324 = vld [vmem:[%s169 + $0x424] sm:$0xff]
      %v325 = vld [vmem:[%s169 + $0x42c] sm:$0xff]
      %v326 = vld [vmem:[%s169 + $0x434] sm:$0xf]
      %v327 = vld [vmem:[%s169 + $0x438] sm:$0xff]
      %v328 = vld [vmem:[%s169 + $0x440] sm:$0xff]
      %v329 = vld [vmem:[%s169 + $0x448] sm:$0xff]
      %v330 = vld [vmem:[%s169 + $0x450] sm:$0xff]
      %v331 = vld [vmem:[%s169 + $0x458] sm:$0xf]
      %v332 = vld [vmem:[%s169 + $0x45c] sm:$0xff]
      %v333 = vld [vmem:[%s169 + $0x464] sm:$0xff]
      %v334 = vld [vmem:[%s169 + $0x46c] sm:$0xff]
      %v335 = vld [vmem:[%s169 + $0x474] sm:$0xff]
      %v336 = vld [vmem:[%s169 + $0x47c] sm:$0xf]
      %v337 = vld [vmem:[%s1] sm:$0xf]
      %v338 = vld [vmem:[%s1 + $0x4] sm:$0xf]
      %v339 = vld [vmem:[%s1 + $0x8] sm:$0xf]
      %v340 = vld [vmem:[%s1 + $0xc] sm:$0xf]
      %v341 = vld [vmem:[%s1 + $0x10] sm:$0xf]
      %v342 = vld [vmem:[%s1 + $0x14] sm:$0xf]
      %v343 = vld [vmem:[%s1 + $0x18] sm:$0xf]
      %v344 = vld [vmem:[%s1 + $0x1c] sm:$0xf]
      %v345 = vld [vmem:[%s1 + $0x20] sm:$0xf]
      %v346 = vld [vmem:[%s1 + $0x24] sm:$0xf]
      %v347 = vld [vmem:[%s1 + $0x28] sm:$0xf]
      %v348 = vld [vmem:[%s1 + $0x2c] sm:$0xf]
      %v349 = vld [vmem:[%s1 + $0x30] sm:$0xf]
      %v350 = vld [vmem:[%s1 + $0x34] sm:$0xf]
      %v351 = vld [vmem:[%s1 + $0x38] sm:$0xf]
      %v352 = vld [vmem:[%s1 + $0x3c] sm:$0xf]
      %v353 = vld [vmem:[%s1 + $0x40] sm:$0xf]
      %v354 = vld [vmem:[%s1 + $0x44] sm:$0xf]
      %v355 = vld [vmem:[%s1 + $0x48] sm:$0xf]
      %v356 = vld [vmem:[%s1 + $0x4c] sm:$0xf]
      %v357 = vld [vmem:[%s1 + $0x50] sm:$0xf]
      %v358 = vld [vmem:[%s1 + $0x54] sm:$0xf]
      %v359 = vld [vmem:[%s1 + $0x58] sm:$0xf]
      %v360 = vld [vmem:[%s1 + $0x5c] sm:$0xf]
      %v361 = vld [vmem:[%s1 + $0x60] sm:$0xf]
      %v362 = vld [vmem:[%s1 + $0x64] sm:$0xf]
      %v363 = vld [vmem:[%s1 + $0x68] sm:$0xf]
      %v364 = vld [vmem:[%s1 + $0x6c] sm:$0xf]
      %v365 = vld [vmem:[%s1 + $0x70] sm:$0xf]
      %v366 = vld [vmem:[%s1 + $0x74] sm:$0xf]
      %v367 = vld [vmem:[%s1 + $0x78] sm:$0xf]
      %v368 = vld [vmem:[%s1 + $0x7c] sm:$0xf]
      %v369 = vld [vmem:[%s1 + $0x80] sm:$0xf]
      %v370 = vld [vmem:[%s1 + $0x84] sm:$0xf]
      %v371 = vld [vmem:[%s1 + $0x88] sm:$0xf]
      %v372 = vld [vmem:[%s1 + $0x8c] sm:$0xf]
      %v373 = vld [vmem:[%s1 + $0x90] sm:$0xf]
      %v374 = vld [vmem:[%s1 + $0x94] sm:$0xf]
      %v375 = vld [vmem:[%s1 + $0x98] sm:$0xf]
      %v376 = vld [vmem:[%s1 + $0x9c] sm:$0xf]
      %v377 = vld [vmem:[%s1 + $0xa0] sm:$0xf]
      %v378 = vld [vmem:[%s1 + $0xa4] sm:$0xf]
      %v379 = vld [vmem:[%s1 + $0xa8] sm:$0xf]
      %v380 = vld [vmem:[%s1 + $0xac] sm:$0xf]
      %v381 = vld [vmem:[%s1 + $0xb0] sm:$0xf]
      %v382 = vld [vmem:[%s1 + $0xb4] sm:$0xf]
      %v383 = vld [vmem:[%s1 + $0xb8] sm:$0xf]
      %v384 = vld [vmem:[%s1 + $0xbc] sm:$0xf]
      %v385 = vld [vmem:[%s1 + $0xc0] sm:$0xf]
      %v386 = vld [vmem:[%s1 + $0xc4] sm:$0xf]
      %v387 = vld [vmem:[%s1 + $0xc8] sm:$0xf]
      %v388 = vld [vmem:[%s1 + $0xcc] sm:$0xf]
      %v389 = vld [vmem:[%s1 + $0xd0] sm:$0xf]
      %v390 = vld [vmem:[%s1 + $0xd4] sm:$0xf]
      %v391 = vld [vmem:[%s1 + $0xd8] sm:$0xf]
      %v392 = vld [vmem:[%s1 + $0xdc] sm:$0xf]
      %v393 = vld [vmem:[%s1 + $0xe0] sm:$0xf]
      %v394 = vld [vmem:[%s1 + $0xe4] sm:$0xf]
      %v395 = vld [vmem:[%s1 + $0xe8] sm:$0xf]
      %v396 = vld [vmem:[%s1 + $0xec] sm:$0xf]
      %v397 = vld [vmem:[%s1 + $0xf0] sm:$0xf]
      %v398 = vld [vmem:[%s1 + $0xf4] sm:$0xf]
      %v399 = vld [vmem:[%s1 + $0xf8] sm:$0xf]
      %v400 = vld [vmem:[%s1 + $0xfc] sm:$0xf]
      %v401 = vld [vmem:[%s1 + $0x100] sm:$0xf]
      %v402 = vld [vmem:[%s1 + $0x104] sm:$0xf]
      %v403 = vld [vmem:[%s1 + $0x108] sm:$0xf]
      %v404 = vld [vmem:[%s1 + $0x10c] sm:$0xf]
      %v405 = vld [vmem:[%s1 + $0x110] sm:$0xf]
      %v406 = vld [vmem:[%s1 + $0x114] sm:$0xf]
      %v407 = vld [vmem:[%s1 + $0x118] sm:$0xf]
      %v408 = vld [vmem:[%s1 + $0x11c] sm:$0xf]
      %v409 = vld [vmem:[%s1 + $0x120] sm:$0xf]
      %v410 = vld [vmem:[%s1 + $0x124] sm:$0xf]
      %v411 = vld [vmem:[%s1 + $0x128] sm:$0xf]
      %v412 = vld [vmem:[%s1 + $0x12c] sm:$0xf]
      %v413 = vld [vmem:[%s1 + $0x130] sm:$0xf]
      %v414 = vld [vmem:[%s1 + $0x134] sm:$0xf]
      %v415 = vld [vmem:[%s1 + $0x138] sm:$0xf]
      %v416 = vld [vmem:[%s1 + $0x13c] sm:$0xf]
      %v417 = vld [vmem:[%s1 + $0x140] sm:$0xf]
      %v418 = vld [vmem:[%s1 + $0x144] sm:$0xf]
      %v419 = vld [vmem:[%s1 + $0x148] sm:$0xf]
      %v420 = vld [vmem:[%s1 + $0x14c] sm:$0xf]
      %v421 = vld [vmem:[%s1 + $0x150] sm:$0xf]
      %v422 = vld [vmem:[%s1 + $0x154] sm:$0xf]
      %v423 = vld [vmem:[%s1 + $0x158] sm:$0xf]
      %v424 = vld [vmem:[%s1 + $0x15c] sm:$0xf]
      %v425 = vld [vmem:[%s1 + $0x160] sm:$0xf]
      %v426 = vld [vmem:[%s1 + $0x164] sm:$0xf]
      %v427 = vld [vmem:[%s1 + $0x168] sm:$0xf]
      %v428 = vld [vmem:[%s1 + $0x16c] sm:$0xf]
      %v429 = vld [vmem:[%s1 + $0x170] sm:$0xf]
      %v430 = vld [vmem:[%s1 + $0x174] sm:$0xf]
      %v431 = vld [vmem:[%s1 + $0x178] sm:$0xf]
      %v432 = vld [vmem:[%s1 + $0x17c] sm:$0xf]
      %v433 = vld [vmem:[%s1 + $0x180] sm:$0xf]
      %v434 = vld [vmem:[%s1 + $0x184] sm:$0xf]
      %v435 = vld [vmem:[%s1 + $0x188] sm:$0xf]
      %v436 = vld [vmem:[%s1 + $0x18c] sm:$0xf]
      %v437 = vld [vmem:[%s1 + $0x190] sm:$0xf]
      %v438 = vld [vmem:[%s1 + $0x194] sm:$0xf]
      %v439 = vld [vmem:[%s1 + $0x198] sm:$0xf]
      %v440 = vld [vmem:[%s1 + $0x19c] sm:$0xf]
      %v441 = vld [vmem:[%s1 + $0x1a0] sm:$0xf]
      %v442 = vld [vmem:[%s1 + $0x1a4] sm:$0xf]
      %v443 = vld [vmem:[%s1 + $0x1a8] sm:$0xf]
      %v444 = vld [vmem:[%s1 + $0x1ac] sm:$0xf]
      %v445 = vld [vmem:[%s1 + $0x1b0] sm:$0xf]
      %v446 = vld [vmem:[%s1 + $0x1b4] sm:$0xf]
      %v447 = vld [vmem:[%s1 + $0x1b8] sm:$0xf]
      %v448 = vld [vmem:[%s1 + $0x1bc] sm:$0xf]
      %v449 = vld [vmem:[%s1 + $0x1c0] sm:$0xf]
      %v450 = vld [vmem:[%s1 + $0x1c4] sm:$0xf]
      %v451 = vld [vmem:[%s1 + $0x1c8] sm:$0xf]
      %v452 = vld [vmem:[%s1 + $0x1cc] sm:$0xf]
      %v453 = vld [vmem:[%s1 + $0x1d0] sm:$0xf]
      %v454 = vld [vmem:[%s1 + $0x1d4] sm:$0xf]
      %v455 = vld [vmem:[%s1 + $0x1d8] sm:$0xf]
      %v456 = vld [vmem:[%s1 + $0x1dc] sm:$0xf]
      %v457 = vld [vmem:[%s1 + $0x1e0] sm:$0xf]
      %v458 = vld [vmem:[%s1 + $0x1e4] sm:$0xf]
      %v459 = vld [vmem:[%s1 + $0x1e8] sm:$0xf]
      %v460 = vld [vmem:[%s1 + $0x1ec] sm:$0xf]
      %v461 = vld [vmem:[%s1 + $0x1f0] sm:$0xf]
      %v462 = vld [vmem:[%s1 + $0x1f4] sm:$0xf]
      %v463 = vld [vmem:[%s1 + $0x1f8] sm:$0xf]
      %v464 = vld [vmem:[%s1 + $0x1fc] sm:$0xf]
      %v465 = vld [vmem:[%s1 + $0x200] sm:$0xf]
      %v466 = vld [vmem:[%s1 + $0x204] sm:$0xf]
      %v467 = vld [vmem:[%s1 + $0x208] sm:$0xf]
      %v468 = vld [vmem:[%s1 + $0x20c] sm:$0xf]
      %v469 = vld [vmem:[%s1 + $0x210] sm:$0xf]
      %v470 = vld [vmem:[%s1 + $0x214] sm:$0xf]
      %v471 = vld [vmem:[%s1 + $0x218] sm:$0xf]
      %v472 = vld [vmem:[%s1 + $0x21c] sm:$0xf]
      %v473 = vld [vmem:[%s1 + $0x220] sm:$0xf]
      %v474 = vld [vmem:[%s1 + $0x224] sm:$0xf]
      %v475 = vld [vmem:[%s1 + $0x228] sm:$0xf]
      %v476 = vld [vmem:[%s1 + $0x22c] sm:$0xf]
      %v477 = vld [vmem:[%s1 + $0x230] sm:$0xf]
      %v478 = vld [vmem:[%s1 + $0x234] sm:$0xf]
      %v479 = vld [vmem:[%s1 + $0x238] sm:$0xf]
      %v480 = vld [vmem:[%s1 + $0x23c] sm:$0xf]
      %v481 = vld [vmem:[%s2] sm:$0x1]
      %v483 = vperm.slane %v481, 0
      %v645 = vunpack.c.l.b16 %v177
      %v646 = vunpack.c.h.b16 %v177
      %v647 = vunpack.c.l.b16 %v178
      %v648 = vunpack.c.h.b16 %v178
      %v649 = vunpack.c.l.b16 %v179
      %v650 = vunpack.c.h.b16 %v179
      %v651 = vunpack.c.l.b16 %v180
      %v652 = vunpack.c.h.b16 %v180
      %v653 = vunpack.c.l.b16 %v181
      %v654 = vunpack.c.l.b16 %v182
      %v655 = vunpack.c.h.b16 %v182
      %v656 = vunpack.c.l.b16 %v183
      %v657 = vunpack.c.h.b16 %v183
      %v658 = vunpack.c.l.b16 %v184
      %v659 = vunpack.c.h.b16 %v184
      %v660 = vunpack.c.l.b16 %v185
      %v661 = vunpack.c.h.b16 %v185
      %v662 = vunpack.c.l.b16 %v186
      %v663 = vunpack.c.l.b16 %v187
      %v664 = vunpack.c.h.b16 %v187
      %v665 = vunpack.c.l.b16 %v188
      %v666 = vunpack.c.h.b16 %v188
      %v667 = vunpack.c.l.b16 %v189
      %v668 = vunpack.c.h.b16 %v189
      %v669 = vunpack.c.l.b16 %v190
      %v670 = vunpack.c.h.b16 %v190
      %v671 = vunpack.c.l.b16 %v191
      %v672 = vunpack.c.l.b16 %v192
      %v673 = vunpack.c.h.b16 %v192
      %v674 = vunpack.c.l.b16 %v193
      %v675 = vunpack.c.h.b16 %v193
      %v676 = vunpack.c.l.b16 %v194
      %v677 = vunpack.c.h.b16 %v194
      %v678 = vunpack.c.l.b16 %v195
      %v679 = vunpack.c.h.b16 %v195
      %v680 = vunpack.c.l.b16 %v196
      %v681 = vunpack.c.l.b16 %v197
      %v682 = vunpack.c.h.b16 %v197
      %v683 = vunpack.c.l.b16 %v198
      %v684 = vunpack.c.h.b16 %v198
      %v685 = vunpack.c.l.b16 %v199
      %v686 = vunpack.c.h.b16 %v199
      %v687 = vunpack.c.l.b16 %v200
      %v688 = vunpack.c.h.b16 %v200
      %v689 = vunpack.c.l.b16 %v201
      %v690 = vunpack.c.l.b16 %v202
      %v691 = vunpack.c.h.b16 %v202
      %v692 = vunpack.c.l.b16 %v203
      %v693 = vunpack.c.h.b16 %v203
      %v694 = vunpack.c.l.b16 %v204
      %v695 = vunpack.c.h.b16 %v204
      %v696 = vunpack.c.l.b16 %v205
      %v697 = vunpack.c.h.b16 %v205
      %v698 = vunpack.c.l.b16 %v206
      %v699 = vunpack.c.l.b16 %v207
      %v700 = vunpack.c.h.b16 %v207
      %v701 = vunpack.c.l.b16 %v208
      %v702 = vunpack.c.h.b16 %v208
      %v703 = vunpack.c.l.b16 %v209
      %v704 = vunpack.c.h.b16 %v209
      %v705 = vunpack.c.l.b16 %v210
      %v706 = vunpack.c.h.b16 %v210
      %v707 = vunpack.c.l.b16 %v211
      %v708 = vunpack.c.l.b16 %v212
      %v709 = vunpack.c.h.b16 %v212
      %v710 = vunpack.c.l.b16 %v213
      %v711 = vunpack.c.h.b16 %v213
      %v712 = vunpack.c.l.b16 %v214
      %v713 = vunpack.c.h.b16 %v214
      %v714 = vunpack.c.l.b16 %v215
      %v715 = vunpack.c.h.b16 %v215
      %v716 = vunpack.c.l.b16 %v216
      %v717 = vunpack.c.l.b16 %v217
      %v718 = vunpack.c.h.b16 %v217
      %v719 = vunpack.c.l.b16 %v218
      %v720 = vunpack.c.h.b16 %v218
      %v721 = vunpack.c.l.b16 %v219
      %v722 = vunpack.c.h.b16 %v219
      %v723 = vunpack.c.l.b16 %v220
      %v724 = vunpack.c.h.b16 %v220
      %v725 = vunpack.c.l.b16 %v221
      %v726 = vunpack.c.l.b16 %v222
      %v727 = vunpack.c.h.b16 %v222
      %v728 = vunpack.c.l.b16 %v223
      %v729 = vunpack.c.h.b16 %v223
      %v730 = vunpack.c.l.b16 %v224
      %v731 = vunpack.c.h.b16 %v224
      %v732 = vunpack.c.l.b16 %v225
      %v733 = vunpack.c.h.b16 %v225
      %v734 = vunpack.c.l.b16 %v226
      %v735 = vunpack.c.l.b16 %v227
      %v736 = vunpack.c.h.b16 %v227
      %v737 = vunpack.c.l.b16 %v228
      %v738 = vunpack.c.h.b16 %v228
      %v739 = vunpack.c.l.b16 %v229
      %v740 = vunpack.c.h.b16 %v229
      %v741 = vunpack.c.l.b16 %v230
      %v742 = vunpack.c.h.b16 %v230
      %v743 = vunpack.c.l.b16 %v231
      %v744 = vunpack.c.l.b16 %v232
      %v745 = vunpack.c.h.b16 %v232
      %v746 = vunpack.c.l.b16 %v233
      %v747 = vunpack.c.h.b16 %v233
      %v748 = vunpack.c.l.b16 %v234
      %v749 = vunpack.c.h.b16 %v234
      %v750 = vunpack.c.l.b16 %v235
      %v751 = vunpack.c.h.b16 %v235
      %v752 = vunpack.c.l.b16 %v236
      %v753 = vunpack.c.l.b16 %v237
      %v754 = vunpack.c.h.b16 %v237
      %v755 = vunpack.c.l.b16 %v238
      %v756 = vunpack.c.h.b16 %v238
      %v757 = vunpack.c.l.b16 %v239
      %v758 = vunpack.c.h.b16 %v239
      %v759 = vunpack.c.l.b16 %v240
      %v760 = vunpack.c.h.b16 %v240
      %v761 = vunpack.c.l.b16 %v241
      %v762 = vunpack.c.l.b16 %v242
      %v763 = vunpack.c.h.b16 %v242
      %v764 = vunpack.c.l.b16 %v243
      %v765 = vunpack.c.h.b16 %v243
      %v766 = vunpack.c.l.b16 %v244
      %v767 = vunpack.c.h.b16 %v244
      %v768 = vunpack.c.l.b16 %v245
      %v769 = vunpack.c.h.b16 %v245
      %v770 = vunpack.c.l.b16 %v246
      %v771 = vunpack.c.l.b16 %v247
      %v772 = vunpack.c.h.b16 %v247
      %v773 = vunpack.c.l.b16 %v248
      %v774 = vunpack.c.h.b16 %v248
      %v775 = vunpack.c.l.b16 %v249
      %v776 = vunpack.c.h.b16 %v249
      %v777 = vunpack.c.l.b16 %v250
      %v778 = vunpack.c.h.b16 %v250
      %v779 = vunpack.c.l.b16 %v251
      %v780 = vunpack.c.l.b16 %v252
      %v781 = vunpack.c.h.b16 %v252
      %v782 = vunpack.c.l.b16 %v253
      %v783 = vunpack.c.h.b16 %v253
      %v784 = vunpack.c.l.b16 %v254
      %v785 = vunpack.c.h.b16 %v254
      %v786 = vunpack.c.l.b16 %v255
      %v787 = vunpack.c.h.b16 %v255
      %v788 = vunpack.c.l.b16 %v256
      %v789 = vunpack.c.l.b16 %v257
      %v790 = vunpack.c.h.b16 %v257
      %v791 = vunpack.c.l.b16 %v258
      %v792 = vunpack.c.h.b16 %v258
      %v793 = vunpack.c.l.b16 %v259
      %v794 = vunpack.c.h.b16 %v259
      %v795 = vunpack.c.l.b16 %v260
      %v796 = vunpack.c.h.b16 %v260
      %v797 = vunpack.c.l.b16 %v261
      %v798 = vunpack.c.l.b16 %v262
      %v799 = vunpack.c.h.b16 %v262
      %v800 = vunpack.c.l.b16 %v263
      %v801 = vunpack.c.h.b16 %v263
      %v802 = vunpack.c.l.b16 %v264
      %v803 = vunpack.c.h.b16 %v264
      %v804 = vunpack.c.l.b16 %v265
      %v805 = vunpack.c.h.b16 %v265
      %v806 = vunpack.c.l.b16 %v266
      %v807 = vunpack.c.l.b16 %v267
      %v808 = vunpack.c.h.b16 %v267
      %v809 = vunpack.c.l.b16 %v268
      %v810 = vunpack.c.h.b16 %v268
      %v811 = vunpack.c.l.b16 %v269
      %v812 = vunpack.c.h.b16 %v269
      %v813 = vunpack.c.l.b16 %v270
      %v814 = vunpack.c.h.b16 %v270
      %v815 = vunpack.c.l.b16 %v271
      %v816 = vunpack.c.l.b16 %v272
      %v817 = vunpack.c.h.b16 %v272
      %v818 = vunpack.c.l.b16 %v273
      %v819 = vunpack.c.h.b16 %v273
      %v820 = vunpack.c.l.b16 %v274
      %v821 = vunpack.c.h.b16 %v274
      %v822 = vunpack.c.l.b16 %v275
      %v823 = vunpack.c.h.b16 %v275
      %v824 = vunpack.c.l.b16 %v276
      %v825 = vunpack.c.l.b16 %v277
      %v826 = vunpack.c.h.b16 %v277
      %v827 = vunpack.c.l.b16 %v278
      %v828 = vunpack.c.h.b16 %v278
      %v829 = vunpack.c.l.b16 %v279
      %v830 = vunpack.c.h.b16 %v279
      %v831 = vunpack.c.l.b16 %v280
      %v832 = vunpack.c.h.b16 %v280
      %v833 = vunpack.c.l.b16 %v281
      %v834 = vunpack.c.l.b16 %v282
      %v835 = vunpack.c.h.b16 %v282
      %v836 = vunpack.c.l.b16 %v283
      %v837 = vunpack.c.h.b16 %v283
      %v838 = vunpack.c.l.b16 %v284
      %v839 = vunpack.c.h.b16 %v284
      %v840 = vunpack.c.l.b16 %v285
      %v841 = vunpack.c.h.b16 %v285
      %v842 = vunpack.c.l.b16 %v286
      %v843 = vunpack.c.l.b16 %v287
      %v844 = vunpack.c.h.b16 %v287
      %v845 = vunpack.c.l.b16 %v288
      %v846 = vunpack.c.h.b16 %v288
      %v847 = vunpack.c.l.b16 %v289
      %v848 = vunpack.c.h.b16 %v289
      %v849 = vunpack.c.l.b16 %v290
      %v850 = vunpack.c.h.b16 %v290
      %v851 = vunpack.c.l.b16 %v291
      %v852 = vunpack.c.l.b16 %v292
      %v853 = vunpack.c.h.b16 %v292
      %v854 = vunpack.c.l.b16 %v293
      %v855 = vunpack.c.h.b16 %v293
      %v856 = vunpack.c.l.b16 %v294
      %v857 = vunpack.c.h.b16 %v294
      %v858 = vunpack.c.l.b16 %v295
      %v859 = vunpack.c.h.b16 %v295
      %v860 = vunpack.c.l.b16 %v296
      %v861 = vunpack.c.l.b16 %v297
      %v862 = vunpack.c.h.b16 %v297
      %v863 = vunpack.c.l.b16 %v298
      %v864 = vunpack.c.h.b16 %v298
      %v865 = vunpack.c.l.b16 %v299
      %v866 = vunpack.c.h.b16 %v299
      %v867 = vunpack.c.l.b16 %v300
      %v868 = vunpack.c.h.b16 %v300
      %v869 = vunpack.c.l.b16 %v301
      %v870 = vunpack.c.l.b16 %v302
      %v871 = vunpack.c.h.b16 %v302
      %v872 = vunpack.c.l.b16 %v303
      %v873 = vunpack.c.h.b16 %v303
      %v874 = vunpack.c.l.b16 %v304
      %v875 = vunpack.c.h.b16 %v304
      %v876 = vunpack.c.l.b16 %v305
      %v877 = vunpack.c.h.b16 %v305
      %v878 = vunpack.c.l.b16 %v306
      %v879 = vunpack.c.l.b16 %v307
      %v880 = vunpack.c.h.b16 %v307
      %v881 = vunpack.c.l.b16 %v308
      %v882 = vunpack.c.h.b16 %v308
      %v883 = vunpack.c.l.b16 %v309
      %v884 = vunpack.c.h.b16 %v309
      %v885 = vunpack.c.l.b16 %v310
      %v886 = vunpack.c.h.b16 %v310
      %v887 = vunpack.c.l.b16 %v311
      %v888 = vunpack.c.l.b16 %v312
      %v889 = vunpack.c.h.b16 %v312
      %v890 = vunpack.c.l.b16 %v313
      %v891 = vunpack.c.h.b16 %v313
      %v892 = vunpack.c.l.b16 %v314
      %v893 = vunpack.c.h.b16 %v314
      %v894 = vunpack.c.l.b16 %v315
      %v895 = vunpack.c.h.b16 %v315
      %v896 = vunpack.c.l.b16 %v316
      %v897 = vunpack.c.l.b16 %v317
      %v898 = vunpack.c.h.b16 %v317
      %v899 = vunpack.c.l.b16 %v318
      %v900 = vunpack.c.h.b16 %v318
      %v901 = vunpack.c.l.b16 %v319
      %v902 = vunpack.c.h.b16 %v319
      %v903 = vunpack.c.l.b16 %v320
      %v904 = vunpack.c.h.b16 %v320
      %v905 = vunpack.c.l.b16 %v321
      %v906 = vunpack.c.l.b16 %v322
      %v907 = vunpack.c.h.b16 %v322
      %v908 = vunpack.c.l.b16 %v323
      %v909 = vunpack.c.h.b16 %v323
      %v910 = vunpack.c.l.b16 %v324
      %v911 = vunpack.c.h.b16 %v324
      %v912 = vunpack.c.l.b16 %v325
      %v913 = vunpack.c.h.b16 %v325
      %v914 = vunpack.c.l.b16 %v326
      %v915 = vunpack.c.l.b16 %v327
      %v916 = vunpack.c.h.b16 %v327
      %v917 = vunpack.c.l.b16 %v328
      %v918 = vunpack.c.h.b16 %v328
      %v919 = vunpack.c.l.b16 %v329
      %v920 = vunpack.c.h.b16 %v329
      %v921 = vunpack.c.l.b16 %v330
      %v922 = vunpack.c.h.b16 %v330
      %v923 = vunpack.c.l.b16 %v331
      %v924 = vunpack.c.l.b16 %v332
      %v925 = vunpack.c.h.b16 %v332
      %v926 = vunpack.c.l.b16 %v333
      %v927 = vunpack.c.h.b16 %v333
      %v928 = vunpack.c.l.b16 %v334
      %v929 = vunpack.c.h.b16 %v334
      %v930 = vunpack.c.l.b16 %v335
      %v931 = vunpack.c.h.b16 %v335
      %v932 = vunpack.c.l.b16 %v336
      %v933 = vpack.c.b16 %v654, %v645
      %v934 = vpack.c.b16 %v655, %v646
      %v935 = vpack.c.b16 %v656, %v647
      %v936 = vpack.c.b16 %v657, %v648
      %v937 = vpack.c.b16 %v658, %v649
      %v938 = vpack.c.b16 %v659, %v650
      %v939 = vpack.c.b16 %v660, %v651
      %v940 = vpack.c.b16 %v661, %v652
      %v941 = vpack.c.b16 %v662, %v653
      %v942 = vpack.c.b16 %v672, %v663
      %v943 = vpack.c.b16 %v673, %v664
      %v944 = vpack.c.b16 %v674, %v665
      %v945 = vpack.c.b16 %v675, %v666
      %v946 = vpack.c.b16 %v676, %v667
      %v947 = vpack.c.b16 %v677, %v668
      %v948 = vpack.c.b16 %v678, %v669
      %v949 = vpack.c.b16 %v679, %v670
      %v950 = vpack.c.b16 %v680, %v671
      %v951 = vpack.c.b16 %v690, %v681
      %v952 = vpack.c.b16 %v691, %v682
      %v953 = vpack.c.b16 %v692, %v683
      %v954 = vpack.c.b16 %v693, %v684
      %v955 = vpack.c.b16 %v694, %v685
      %v956 = vpack.c.b16 %v695, %v686
      %v957 = vpack.c.b16 %v696, %v687
      %v958 = vpack.c.b16 %v697, %v688
      %v959 = vpack.c.b16 %v698, %v689
      %v960 = vpack.c.b16 %v708, %v699
      %v961 = vpack.c.b16 %v709, %v700
      %v962 = vpack.c.b16 %v710, %v701
      %v963 = vpack.c.b16 %v711, %v702
      %v964 = vpack.c.b16 %v712, %v703
      %v965 = vpack.c.b16 %v713, %v704
      %v966 = vpack.c.b16 %v714, %v705
      %v967 = vpack.c.b16 %v715, %v706
      %v968 = vpack.c.b16 %v716, %v707
      %v969 = vpack.c.b16 %v726, %v717
      %v970 = vpack.c.b16 %v727, %v718
      %v971 = vpack.c.b16 %v728, %v719
      %v972 = vpack.c.b16 %v729, %v720
      %v973 = vpack.c.b16 %v730, %v721
      %v974 = vpack.c.b16 %v731, %v722
      %v975 = vpack.c.b16 %v732, %v723
      %v976 = vpack.c.b16 %v733, %v724
      %v977 = vpack.c.b16 %v734, %v725
      %v978 = vpack.c.b16 %v744, %v735
      %v979 = vpack.c.b16 %v745, %v736
      %v980 = vpack.c.b16 %v746, %v737
      %v981 = vpack.c.b16 %v747, %v738
      %v982 = vpack.c.b16 %v748, %v739
      %v983 = vpack.c.b16 %v749, %v740
      %v984 = vpack.c.b16 %v750, %v741
      %v985 = vpack.c.b16 %v751, %v742
      %v986 = vpack.c.b16 %v752, %v743
      %v987 = vpack.c.b16 %v762, %v753
      %v988 = vpack.c.b16 %v763, %v754
      %v989 = vpack.c.b16 %v764, %v755
      %v990 = vpack.c.b16 %v765, %v756
      %v991 = vpack.c.b16 %v766, %v757
      %v992 = vpack.c.b16 %v767, %v758
      %v993 = vpack.c.b16 %v768, %v759
      %v994 = vpack.c.b16 %v769, %v760
      %v995 = vpack.c.b16 %v770, %v761
      %v996 = vpack.c.b16 %v780, %v771
      %v997 = vpack.c.b16 %v781, %v772
      %v998 = vpack.c.b16 %v782, %v773
      %v999 = vpack.c.b16 %v783, %v774
      %v1000 = vpack.c.b16 %v784, %v775
      %v1001 = vpack.c.b16 %v785, %v776
      %v1002 = vpack.c.b16 %v786, %v777
      %v1003 = vpack.c.b16 %v787, %v778
      %v1004 = vpack.c.b16 %v788, %v779
      %v1005 = vpack.c.b16 %v798, %v789
      %v1006 = vpack.c.b16 %v799, %v790
      %v1007 = vpack.c.b16 %v800, %v791
      %v1008 = vpack.c.b16 %v801, %v792
      %v1009 = vpack.c.b16 %v802, %v793
      %v1010 = vpack.c.b16 %v803, %v794
      %v1011 = vpack.c.b16 %v804, %v795
      %v1012 = vpack.c.b16 %v805, %v796
      %v1013 = vpack.c.b16 %v806, %v797
      %v1014 = vpack.c.b16 %v816, %v807
      %v1015 = vpack.c.b16 %v817, %v808
      %v1016 = vpack.c.b16 %v818, %v809
      %v1017 = vpack.c.b16 %v819, %v810
      %v1018 = vpack.c.b16 %v820, %v811
      %v1019 = vpack.c.b16 %v821, %v812
      %v1020 = vpack.c.b16 %v822, %v813
      %v1021 = vpack.c.b16 %v823, %v814
      %v1022 = vpack.c.b16 %v824, %v815
      %v1023 = vpack.c.b16 %v834, %v825
      %v1024 = vpack.c.b16 %v835, %v826
      %v1025 = vpack.c.b16 %v836, %v827
      %v1026 = vpack.c.b16 %v837, %v828
      %v1027 = vpack.c.b16 %v838, %v829
      %v1028 = vpack.c.b16 %v839, %v830
      %v1029 = vpack.c.b16 %v840, %v831
      %v1030 = vpack.c.b16 %v841, %v832
      %v1031 = vpack.c.b16 %v842, %v833
      %v1032 = vpack.c.b16 %v852, %v843
      %v1033 = vpack.c.b16 %v853, %v844
      %v1034 = vpack.c.b16 %v854, %v845
      %v1035 = vpack.c.b16 %v855, %v846
      %v1036 = vpack.c.b16 %v856, %v847
      %v1037 = vpack.c.b16 %v857, %v848
      %v1038 = vpack.c.b16 %v858, %v849
      %v1039 = vpack.c.b16 %v859, %v850
      %v1040 = vpack.c.b16 %v860, %v851
      %v1041 = vpack.c.b16 %v870, %v861
      %v1042 = vpack.c.b16 %v871, %v862
      %v1043 = vpack.c.b16 %v872, %v863
      %v1044 = vpack.c.b16 %v873, %v864
      %v1045 = vpack.c.b16 %v874, %v865
      %v1046 = vpack.c.b16 %v875, %v866
      %v1047 = vpack.c.b16 %v876, %v867
      %v1048 = vpack.c.b16 %v877, %v868
      %v1049 = vpack.c.b16 %v878, %v869
      %v1050 = vpack.c.b16 %v888, %v879
      %v1051 = vpack.c.b16 %v889, %v880
      %v1052 = vpack.c.b16 %v890, %v881
      %v1053 = vpack.c.b16 %v891, %v882
      %v1054 = vpack.c.b16 %v892, %v883
      %v1055 = vpack.c.b16 %v893, %v884
      %v1056 = vpack.c.b16 %v894, %v885
      %v1057 = vpack.c.b16 %v895, %v886
      %v1058 = vpack.c.b16 %v896, %v887
      %v1059 = vpack.c.b16 %v906, %v897
      %v1060 = vpack.c.b16 %v907, %v898
      %v1061 = vpack.c.b16 %v908, %v899
      %v1062 = vpack.c.b16 %v909, %v900
      %v1063 = vpack.c.b16 %v910, %v901
      %v1064 = vpack.c.b16 %v911, %v902
      %v1065 = vpack.c.b16 %v912, %v903
      %v1066 = vpack.c.b16 %v913, %v904
      %v1067 = vpack.c.b16 %v914, %v905
      %v1068 = vpack.c.b16 %v924, %v915
      %v1069 = vpack.c.b16 %v925, %v916
      %v1070 = vpack.c.b16 %v926, %v917
      %v1071 = vpack.c.b16 %v927, %v918
      %v1072 = vpack.c.b16 %v928, %v919
      %v1073 = vpack.c.b16 %v929, %v920
      %v1074 = vpack.c.b16 %v930, %v921
      %v1075 = vpack.c.b16 %v931, %v922
      %v1076 = vpack.c.b16 %v932, %v923
      %v1365 = vunpack.c.l.b16 %v337
      %v1366 = vunpack.c.l.b16 %v338
      %v1367 = vunpack.c.l.b16 %v339
      %v1368 = vunpack.c.l.b16 %v340
      %v1369 = vunpack.c.l.b16 %v341
      %v1370 = vunpack.c.l.b16 %v342
      %v1371 = vunpack.c.l.b16 %v343
      %v1372 = vunpack.c.l.b16 %v344
      %v1373 = vunpack.c.l.b16 %v345
      %v1374 = vunpack.c.l.b16 %v346
      %v1375 = vunpack.c.l.b16 %v347
      %v1376 = vunpack.c.l.b16 %v348
      %v1377 = vunpack.c.l.b16 %v349
      %v1378 = vunpack.c.l.b16 %v350
      %v1379 = vunpack.c.l.b16 %v351
      %v1380 = vunpack.c.l.b16 %v352
      %v1381 = vunpack.c.l.b16 %v353
      %v1382 = vunpack.c.l.b16 %v354
      %v1383 = vunpack.c.l.b16 %v355
      %v1384 = vunpack.c.l.b16 %v356
      %v1385 = vunpack.c.l.b16 %v357
      %v1386 = vunpack.c.l.b16 %v358
      %v1387 = vunpack.c.l.b16 %v359
      %v1388 = vunpack.c.l.b16 %v360
      %v1389 = vunpack.c.l.b16 %v361
      %v1390 = vunpack.c.l.b16 %v362
      %v1391 = vunpack.c.l.b16 %v363
      %v1392 = vunpack.c.l.b16 %v364
      %v1393 = vunpack.c.l.b16 %v365
      %v1394 = vunpack.c.l.b16 %v366
      %v1395 = vunpack.c.l.b16 %v367
      %v1396 = vunpack.c.l.b16 %v368
      %v1397 = vunpack.c.l.b16 %v369
      %v1398 = vunpack.c.l.b16 %v370
      %v1399 = vunpack.c.l.b16 %v371
      %v1400 = vunpack.c.l.b16 %v372
      %v1401 = vunpack.c.l.b16 %v373
      %v1402 = vunpack.c.l.b16 %v374
      %v1403 = vunpack.c.l.b16 %v375
      %v1404 = vunpack.c.l.b16 %v376
      %v1405 = vunpack.c.l.b16 %v377
      %v1406 = vunpack.c.l.b16 %v378
      %v1407 = vunpack.c.l.b16 %v379
      %v1408 = vunpack.c.l.b16 %v380
      %v1409 = vunpack.c.l.b16 %v381
      %v1410 = vunpack.c.l.b16 %v382
      %v1411 = vunpack.c.l.b16 %v383
      %v1412 = vunpack.c.l.b16 %v384
      %v1413 = vunpack.c.l.b16 %v385
      %v1414 = vunpack.c.l.b16 %v386
      %v1415 = vunpack.c.l.b16 %v387
      %v1416 = vunpack.c.l.b16 %v388
      %v1417 = vunpack.c.l.b16 %v389
      %v1418 = vunpack.c.l.b16 %v390
      %v1419 = vunpack.c.l.b16 %v391
      %v1420 = vunpack.c.l.b16 %v392
      %v1421 = vunpack.c.l.b16 %v393
      %v1422 = vunpack.c.l.b16 %v394
      %v1423 = vunpack.c.l.b16 %v395
      %v1424 = vunpack.c.l.b16 %v396
      %v1425 = vunpack.c.l.b16 %v397
      %v1426 = vunpack.c.l.b16 %v398
      %v1427 = vunpack.c.l.b16 %v399
      %v1428 = vunpack.c.l.b16 %v400
      %v1429 = vunpack.c.l.b16 %v401
      %v1430 = vunpack.c.l.b16 %v402
      %v1431 = vunpack.c.l.b16 %v403
      %v1432 = vunpack.c.l.b16 %v404
      %v1433 = vunpack.c.l.b16 %v405
      %v1434 = vunpack.c.l.b16 %v406
      %v1435 = vunpack.c.l.b16 %v407
      %v1436 = vunpack.c.l.b16 %v408
      %v1437 = vunpack.c.l.b16 %v409
      %v1438 = vunpack.c.l.b16 %v410
      %v1439 = vunpack.c.l.b16 %v411
      %v1440 = vunpack.c.l.b16 %v412
      %v1441 = vunpack.c.l.b16 %v413
      %v1442 = vunpack.c.l.b16 %v414
      %v1443 = vunpack.c.l.b16 %v415
      %v1444 = vunpack.c.l.b16 %v416
      %v1445 = vunpack.c.l.b16 %v417
      %v1446 = vunpack.c.l.b16 %v418
      %v1447 = vunpack.c.l.b16 %v419
      %v1448 = vunpack.c.l.b16 %v420
      %v1449 = vunpack.c.l.b16 %v421
      %v1450 = vunpack.c.l.b16 %v422
      %v1451 = vunpack.c.l.b16 %v423
      %v1452 = vunpack.c.l.b16 %v424
      %v1453 = vunpack.c.l.b16 %v425
      %v1454 = vunpack.c.l.b16 %v426
      %v1455 = vunpack.c.l.b16 %v427
      %v1456 = vunpack.c.l.b16 %v428
      %v1457 = vunpack.c.l.b16 %v429
      %v1458 = vunpack.c.l.b16 %v430
      %v1459 = vunpack.c.l.b16 %v431
      %v1460 = vunpack.c.l.b16 %v432
      %v1461 = vunpack.c.l.b16 %v433
      %v1462 = vunpack.c.l.b16 %v434
      %v1463 = vunpack.c.l.b16 %v435
      %v1464 = vunpack.c.l.b16 %v436
      %v1465 = vunpack.c.l.b16 %v437
      %v1466 = vunpack.c.l.b16 %v438
      %v1467 = vunpack.c.l.b16 %v439
      %v1468 = vunpack.c.l.b16 %v440
      %v1469 = vunpack.c.l.b16 %v441
      %v1470 = vunpack.c.l.b16 %v442
      %v1471 = vunpack.c.l.b16 %v443
      %v1472 = vunpack.c.l.b16 %v444
      %v1473 = vunpack.c.l.b16 %v445
      %v1474 = vunpack.c.l.b16 %v446
      %v1475 = vunpack.c.l.b16 %v447
      %v1476 = vunpack.c.l.b16 %v448
      %v1477 = vunpack.c.l.b16 %v449
      %v1478 = vunpack.c.l.b16 %v450
      %v1479 = vunpack.c.l.b16 %v451
      %v1480 = vunpack.c.l.b16 %v452
      %v1481 = vunpack.c.l.b16 %v453
      %v1482 = vunpack.c.l.b16 %v454
      %v1483 = vunpack.c.l.b16 %v455
      %v1484 = vunpack.c.l.b16 %v456
      %v1485 = vunpack.c.l.b16 %v457
      %v1486 = vunpack.c.l.b16 %v458
      %v1487 = vunpack.c.l.b16 %v459
      %v1488 = vunpack.c.l.b16 %v460
      %v1489 = vunpack.c.l.b16 %v461
      %v1490 = vunpack.c.l.b16 %v462
      %v1491 = vunpack.c.l.b16 %v463
      %v1492 = vunpack.c.l.b16 %v464
      %v1493 = vunpack.c.l.b16 %v465
      %v1494 = vunpack.c.l.b16 %v466
      %v1495 = vunpack.c.l.b16 %v467
      %v1496 = vunpack.c.l.b16 %v468
      %v1497 = vunpack.c.l.b16 %v469
      %v1498 = vunpack.c.l.b16 %v470
      %v1499 = vunpack.c.l.b16 %v471
      %v1500 = vunpack.c.l.b16 %v472
      %v1501 = vunpack.c.l.b16 %v473
      %v1502 = vunpack.c.l.b16 %v474
      %v1503 = vunpack.c.l.b16 %v475
      %v1504 = vunpack.c.l.b16 %v476
      %v1505 = vunpack.c.l.b16 %v477
      %v1506 = vunpack.c.l.b16 %v478
      %v1507 = vunpack.c.l.b16 %v479
      %v1508 = vunpack.c.l.b16 %v480
      %v1509 = vpack.c.b16 %v1366, %v1365
      %v1510 = vpack.c.b16 %v1368, %v1367
      %v1511 = vpack.c.b16 %v1370, %v1369
      %v1512 = vpack.c.b16 %v1372, %v1371
      %v1513 = vpack.c.b16 %v1374, %v1373
      %v1514 = vpack.c.b16 %v1376, %v1375
      %v1515 = vpack.c.b16 %v1378, %v1377
      %v1516 = vpack.c.b16 %v1380, %v1379
      %v1517 = vpack.c.b16 %v1382, %v1381
      %v1518 = vpack.c.b16 %v1384, %v1383
      %v1519 = vpack.c.b16 %v1386, %v1385
      %v1520 = vpack.c.b16 %v1388, %v1387
      %v1521 = vpack.c.b16 %v1390, %v1389
      %v1522 = vpack.c.b16 %v1392, %v1391
      %v1523 = vpack.c.b16 %v1394, %v1393
      %v1524 = vpack.c.b16 %v1396, %v1395
      %v1525 = vpack.c.b16 %v1398, %v1397
      %v1526 = vpack.c.b16 %v1400, %v1399
      %v1527 = vpack.c.b16 %v1402, %v1401
      %v1528 = vpack.c.b16 %v1404, %v1403
      %v1529 = vpack.c.b16 %v1406, %v1405
      %v1530 = vpack.c.b16 %v1408, %v1407
      %v1531 = vpack.c.b16 %v1410, %v1409
      %v1532 = vpack.c.b16 %v1412, %v1411
      %v1533 = vpack.c.b16 %v1414, %v1413
      %v1534 = vpack.c.b16 %v1416, %v1415
      %v1535 = vpack.c.b16 %v1418, %v1417
      %v1536 = vpack.c.b16 %v1420, %v1419
      %v1537 = vpack.c.b16 %v1422, %v1421
      %v1538 = vpack.c.b16 %v1424, %v1423
      %v1539 = vpack.c.b16 %v1426, %v1425
      %v1540 = vpack.c.b16 %v1428, %v1427
      %v1541 = vpack.c.b16 %v1430, %v1429
      %v1542 = vpack.c.b16 %v1432, %v1431
      %v1543 = vpack.c.b16 %v1434, %v1433
      %v1544 = vpack.c.b16 %v1436, %v1435
      %v1545 = vpack.c.b16 %v1438, %v1437
      %v1546 = vpack.c.b16 %v1440, %v1439
      %v1547 = vpack.c.b16 %v1442, %v1441
      %v1548 = vpack.c.b16 %v1444, %v1443
      %v1549 = vpack.c.b16 %v1446, %v1445
      %v1550 = vpack.c.b16 %v1448, %v1447
      %v1551 = vpack.c.b16 %v1450, %v1449
      %v1552 = vpack.c.b16 %v1452, %v1451
      %v1553 = vpack.c.b16 %v1454, %v1453
      %v1554 = vpack.c.b16 %v1456, %v1455
      %v1555 = vpack.c.b16 %v1458, %v1457
      %v1556 = vpack.c.b16 %v1460, %v1459
      %v1557 = vpack.c.b16 %v1462, %v1461
      %v1558 = vpack.c.b16 %v1464, %v1463
      %v1559 = vpack.c.b16 %v1466, %v1465
      %v1560 = vpack.c.b16 %v1468, %v1467
      %v1561 = vpack.c.b16 %v1470, %v1469
      %v1562 = vpack.c.b16 %v1472, %v1471
      %v1563 = vpack.c.b16 %v1474, %v1473
      %v1564 = vpack.c.b16 %v1476, %v1475
      %v1565 = vpack.c.b16 %v1478, %v1477
      %v1566 = vpack.c.b16 %v1480, %v1479
      %v1567 = vpack.c.b16 %v1482, %v1481
      %v1568 = vpack.c.b16 %v1484, %v1483
      %v1569 = vpack.c.b16 %v1486, %v1485
      %v1570 = vpack.c.b16 %v1488, %v1487
      %v1571 = vpack.c.b16 %v1490, %v1489
      %v1572 = vpack.c.b16 %v1492, %v1491
      %v1573 = vpack.c.b16 %v1494, %v1493
      %v1574 = vpack.c.b16 %v1496, %v1495
      %v1575 = vpack.c.b16 %v1498, %v1497
      %v1576 = vpack.c.b16 %v1500, %v1499
      %v1577 = vpack.c.b16 %v1502, %v1501
      %v1578 = vpack.c.b16 %v1504, %v1503
      %v1579 = vpack.c.b16 %v1506, %v1505
      %v1580 = vpack.c.b16 %v1508, %v1507
      %1653 = vmatpush.bf16.msra.mxu0 %v1516
      %1654 = vmatpush.bf16.msra.mxu0 %v1515
      %1655 = vmatpush.bf16.msra.mxu0 %v1514
      %1656 = vmatpush.bf16.msra.mxu0 %v1513
      %1657 = vmatpush.bf16.msra.mxu0 %v1512
      %1658 = vmatpush.bf16.msra.mxu0 %v1511
      %1659 = vmatpush.bf16.msra.mxu0 %v1510
      %1660 = vmatpush.bf16.msra.mxu0 %v1509
      %1661 = vmatmul.bf16.gmra.mxu0 %v933
      %v1662 = vpop.f32.mrf.mxu0
      %v1663 = vadd.f32 %v483, %v1662
      %v1664 = vpop.f32.mrf.mxu0
      %v1665 = vadd.f32 %v483, %v1664
      %1666 = vmatmul.bf16.gmra.mxu0 %v942
      %v1667 = vpop.f32.mrf.mxu0
      %v1668 = vadd.f32 %v483, %v1667
      %v1669 = vpop.f32.mrf.mxu0
      %v1670 = vadd.f32 %v483, %v1669
      %1671 = vmatmul.bf16.gmra.mxu0 %v951
      %v1672 = vpop.f32.mrf.mxu0
      %v1673 = vadd.f32 %v483, %v1672
      %v1674 = vpop.f32.mrf.mxu0
      %v1675 = vadd.f32 %v483, %v1674
      %1676 = vmatmul.bf16.gmra.mxu0 %v960
      %v1677 = vpop.f32.mrf.mxu0
      %v1678 = vadd.f32 %v483, %v1677
      %v1679 = vpop.f32.mrf.mxu0
      %v1680 = vadd.f32 %v483, %v1679
      %1681 = vmatmul.bf16.gmra.mxu0 %v969
      %v1682 = vpop.f32.mrf.mxu0
      %v1683 = vadd.f32 %v483, %v1682
      %v1684 = vpop.f32.mrf.mxu0
      %v1685 = vadd.f32 %v483, %v1684
      %1686 = vmatmul.bf16.gmra.mxu0 %v978
      %v1687 = vpop.f32.mrf.mxu0
      %v1688 = vadd.f32 %v483, %v1687
      %v1689 = vpop.f32.mrf.mxu0
      %v1690 = vadd.f32 %v483, %v1689
      %1691 = vmatmul.bf16.gmra.mxu0 %v987
      %v1692 = vpop.f32.mrf.mxu0
      %v1693 = vadd.f32 %v483, %v1692
      %v1694 = vpop.f32.mrf.mxu0
      %v1695 = vadd.f32 %v483, %v1694
      %1696 = vmatmul.bf16.gmra.mxu0 %v996
      %v1697 = vpop.f32.mrf.mxu0
      %v1698 = vadd.f32 %v483, %v1697
      %v1699 = vpop.f32.mrf.mxu0
      %v1700 = vadd.f32 %v483, %v1699
      %1701 = vmatmul.bf16.gmra.mxu0 %v1005
      %v1702 = vpop.f32.mrf.mxu0
      %v1703 = vadd.f32 %v483, %v1702
      %v1704 = vpop.f32.mrf.mxu0
      %v1705 = vadd.f32 %v483, %v1704
      %1706 = vmatmul.bf16.gmra.mxu0 %v1014
      %v1707 = vpop.f32.mrf.mxu0
      %v1708 = vadd.f32 %v483, %v1707
      %v1709 = vpop.f32.mrf.mxu0
      %v1710 = vadd.f32 %v483, %v1709
      %1711 = vmatmul.bf16.gmra.mxu0 %v1023
      %v1712 = vpop.f32.mrf.mxu0
      %v1713 = vadd.f32 %v483, %v1712
      %v1714 = vpop.f32.mrf.mxu0
      %v1715 = vadd.f32 %v483, %v1714
      %1716 = vmatmul.bf16.gmra.mxu0 %v1032
      %v1717 = vpop.f32.mrf.mxu0
      %v1718 = vadd.f32 %v483, %v1717
      %v1719 = vpop.f32.mrf.mxu0
      %v1720 = vadd.f32 %v483, %v1719
      %1721 = vmatmul.bf16.gmra.mxu0 %v1041
      %v1722 = vpop.f32.mrf.mxu0
      %v1723 = vadd.f32 %v483, %v1722
      %v1724 = vpop.f32.mrf.mxu0
      %v1725 = vadd.f32 %v483, %v1724
      %1726 = vmatmul.bf16.gmra.mxu0 %v1050
      %v1727 = vpop.f32.mrf.mxu0
      %v1728 = vadd.f32 %v483, %v1727
      %v1729 = vpop.f32.mrf.mxu0
      %v1730 = vadd.f32 %v483, %v1729
      %1731 = vmatmul.bf16.gmra.mxu0 %v1059
      %v1732 = vpop.f32.mrf.mxu0
      %v1733 = vadd.f32 %v483, %v1732
      %v1734 = vpop.f32.mrf.mxu0
      %v1735 = vadd.f32 %v483, %v1734
      %1736 = vmatmul.bf16.gmra.mxu0 %v1068
      %v1737 = vpop.f32.mrf.mxu0
      %v1738 = vadd.f32 %v483, %v1737
      %v1739 = vpop.f32.mrf.mxu0
      %v1740 = vadd.f32 %v483, %v1739
      %1741 = vdwg.mxu0
      %1742 = vmatpush.bf16.msra.mxu0 %v1524
      %1743 = vmatpush.bf16.msra.mxu0 %v1523
      %1744 = vmatpush.bf16.msra.mxu0 %v1522
      %1745 = vmatpush.bf16.msra.mxu0 %v1521
      %1746 = vmatpush.bf16.msra.mxu0 %v1520
      %1747 = vmatpush.bf16.msra.mxu0 %v1519
      %1748 = vmatpush.bf16.msra.mxu0 %v1518
      %1749 = vmatpush.bf16.msra.mxu0 %v1517
      %1750 = vmatmul.bf16.gmra.mxu0 %v934
      %v1751 = vpop.f32.mrf.mxu0
      %v1752 = vadd.f32 %v1663, %v1751
      %v1753 = vpop.f32.mrf.mxu0
      %v1754 = vadd.f32 %v1665, %v1753
      %1755 = vmatmul.bf16.gmra.mxu0 %v943
      %v1756 = vpop.f32.mrf.mxu0
      %v1757 = vadd.f32 %v1668, %v1756
      %v1758 = vpop.f32.mrf.mxu0
      %v1759 = vadd.f32 %v1670, %v1758
      %1760 = vmatmul.bf16.gmra.mxu0 %v952
      %v1761 = vpop.f32.mrf.mxu0
      %v1762 = vadd.f32 %v1673, %v1761
      %v1763 = vpop.f32.mrf.mxu0
      %v1764 = vadd.f32 %v1675, %v1763
      %1765 = vmatmul.bf16.gmra.mxu0 %v961
      %v1766 = vpop.f32.mrf.mxu0
      %v1767 = vadd.f32 %v1678, %v1766
      %v1768 = vpop.f32.mrf.mxu0
      %v1769 = vadd.f32 %v1680, %v1768
      %1770 = vmatmul.bf16.gmra.mxu0 %v970
      %v1771 = vpop.f32.mrf.mxu0
      %v1772 = vadd.f32 %v1683, %v1771
      %v1773 = vpop.f32.mrf.mxu0
      %v1774 = vadd.f32 %v1685, %v1773
      %1775 = vmatmul.bf16.gmra.mxu0 %v979
      %v1776 = vpop.f32.mrf.mxu0
      %v1777 = vadd.f32 %v1688, %v1776
      %v1778 = vpop.f32.mrf.mxu0
      %v1779 = vadd.f32 %v1690, %v1778
      %1780 = vmatmul.bf16.gmra.mxu0 %v988
      %v1781 = vpop.f32.mrf.mxu0
      %v1782 = vadd.f32 %v1693, %v1781
      %v1783 = vpop.f32.mrf.mxu0
      %v1784 = vadd.f32 %v1695, %v1783
      %1785 = vmatmul.bf16.gmra.mxu0 %v997
      %v1786 = vpop.f32.mrf.mxu0
      %v1787 = vadd.f32 %v1698, %v1786
      %v1788 = vpop.f32.mrf.mxu0
      %v1789 = vadd.f32 %v1700, %v1788
      %1790 = vmatmul.bf16.gmra.mxu0 %v1006
      %v1791 = vpop.f32.mrf.mxu0
      %v1792 = vadd.f32 %v1703, %v1791
      %v1793 = vpop.f32.mrf.mxu0
      %v1794 = vadd.f32 %v1705, %v1793
      %1795 = vmatmul.bf16.gmra.mxu0 %v1015
      %v1796 = vpop.f32.mrf.mxu0
      %v1797 = vadd.f32 %v1708, %v1796
      %v1798 = vpop.f32.mrf.mxu0
      %v1799 = vadd.f32 %v1710, %v1798
      %1800 = vmatmul.bf16.gmra.mxu0 %v1024
      %v1801 = vpop.f32.mrf.mxu0
      %v1802 = vadd.f32 %v1713, %v1801
      %v1803 = vpop.f32.mrf.mxu0
      %v1804 = vadd.f32 %v1715, %v1803
      %1805 = vmatmul.bf16.gmra.mxu0 %v1033
      %v1806 = vpop.f32.mrf.mxu0
      %v1807 = vadd.f32 %v1718, %v1806
      %v1808 = vpop.f32.mrf.mxu0
      %v1809 = vadd.f32 %v1720, %v1808
      %1810 = vmatmul.bf16.gmra.mxu0 %v1042
      %v1811 = vpop.f32.mrf.mxu0
      %v1812 = vadd.f32 %v1723, %v1811
      %v1813 = vpop.f32.mrf.mxu0
      %v1814 = vadd.f32 %v1725, %v1813
      %1815 = vmatmul.bf16.gmra.mxu0 %v1051
      %v1816 = vpop.f32.mrf.mxu0
      %v1817 = vadd.f32 %v1728, %v1816
      %v1818 = vpop.f32.mrf.mxu0
      %v1819 = vadd.f32 %v1730, %v1818
      %1820 = vmatmul.bf16.gmra.mxu0 %v1060
      %v1821 = vpop.f32.mrf.mxu0
      %v1822 = vadd.f32 %v1733, %v1821
      %v1823 = vpop.f32.mrf.mxu0
      %v1824 = vadd.f32 %v1735, %v1823
      %1825 = vmatmul.bf16.gmra.mxu0 %v1069
      %v1826 = vpop.f32.mrf.mxu0
      %v1827 = vadd.f32 %v1738, %v1826
      %v1828 = vpop.f32.mrf.mxu0
      %v1829 = vadd.f32 %v1740, %v1828
      %1830 = vdwg.mxu0
      %1831 = vmatpush.bf16.msra.mxu0 %v1532
      %1832 = vmatpush.bf16.msra.mxu0 %v1531
      %1833 = vmatpush.bf16.msra.mxu0 %v1530
      %1834 = vmatpush.bf16.msra.mxu0 %v1529
      %1835 = vmatpush.bf16.msra.mxu0 %v1528
      %1836 = vmatpush.bf16.msra.mxu0 %v1527
      %1837 = vmatpush.bf16.msra.mxu0 %v1526
      %1838 = vmatpush.bf16.msra.mxu0 %v1525
      %1839 = vmatmul.bf16.gmra.mxu0 %v935
      %v1840 = vpop.f32.mrf.mxu0
      %v1841 = vadd.f32 %v1752, %v1840
      %v1842 = vpop.f32.mrf.mxu0
      %v1843 = vadd.f32 %v1754, %v1842
      %1844 = vmatmul.bf16.gmra.mxu0 %v944
      %v1845 = vpop.f32.mrf.mxu0
      %v1846 = vadd.f32 %v1757, %v1845
      %v1847 = vpop.f32.mrf.mxu0
      %v1848 = vadd.f32 %v1759, %v1847
      %1849 = vmatmul.bf16.gmra.mxu0 %v953
      %v1850 = vpop.f32.mrf.mxu0
      %v1851 = vadd.f32 %v1762, %v1850
      %v1852 = vpop.f32.mrf.mxu0
      %v1853 = vadd.f32 %v1764, %v1852
      %1854 = vmatmul.bf16.gmra.mxu0 %v962
      %v1855 = vpop.f32.mrf.mxu0
      %v1856 = vadd.f32 %v1767, %v1855
      %v1857 = vpop.f32.mrf.mxu0
      %v1858 = vadd.f32 %v1769, %v1857
      %1859 = vmatmul.bf16.gmra.mxu0 %v971
      %v1860 = vpop.f32.mrf.mxu0
      %v1861 = vadd.f32 %v1772, %v1860
      %v1862 = vpop.f32.mrf.mxu0
      %v1863 = vadd.f32 %v1774, %v1862
      %1864 = vmatmul.bf16.gmra.mxu0 %v980
      %v1865 = vpop.f32.mrf.mxu0
      %v1866 = vadd.f32 %v1777, %v1865
      %v1867 = vpop.f32.mrf.mxu0
      %v1868 = vadd.f32 %v1779, %v1867
      %1869 = vmatmul.bf16.gmra.mxu0 %v989
      %v1870 = vpop.f32.mrf.mxu0
      %v1871 = vadd.f32 %v1782, %v1870
      %v1872 = vpop.f32.mrf.mxu0
      %v1873 = vadd.f32 %v1784, %v1872
      %1874 = vmatmul.bf16.gmra.mxu0 %v998
      %v1875 = vpop.f32.mrf.mxu0
      %v1876 = vadd.f32 %v1787, %v1875
      %v1877 = vpop.f32.mrf.mxu0
      %v1878 = vadd.f32 %v1789, %v1877
      %1879 = vmatmul.bf16.gmra.mxu0 %v1007
      %v1880 = vpop.f32.mrf.mxu0
      %v1881 = vadd.f32 %v1792, %v1880
      %v1882 = vpop.f32.mrf.mxu0
      %v1883 = vadd.f32 %v1794, %v1882
      %1884 = vmatmul.bf16.gmra.mxu0 %v1016
      %v1885 = vpop.f32.mrf.mxu0
      %v1886 = vadd.f32 %v1797, %v1885
      %v1887 = vpop.f32.mrf.mxu0
      %v1888 = vadd.f32 %v1799, %v1887
      %1889 = vmatmul.bf16.gmra.mxu0 %v1025
      %v1890 = vpop.f32.mrf.mxu0
      %v1891 = vadd.f32 %v1802, %v1890
      %v1892 = vpop.f32.mrf.mxu0
      %v1893 = vadd.f32 %v1804, %v1892
      %1894 = vmatmul.bf16.gmra.mxu0 %v1034
      %v1895 = vpop.f32.mrf.mxu0
      %v1896 = vadd.f32 %v1807, %v1895
      %v1897 = vpop.f32.mrf.mxu0
      %v1898 = vadd.f32 %v1809, %v1897
      %1899 = vmatmul.bf16.gmra.mxu0 %v1043
      %v1900 = vpop.f32.mrf.mxu0
      %v1901 = vadd.f32 %v1812, %v1900
      %v1902 = vpop.f32.mrf.mxu0
      %v1903 = vadd.f32 %v1814, %v1902
      %1904 = vmatmul.bf16.gmra.mxu0 %v1052
      %v1905 = vpop.f32.mrf.mxu0
      %v1906 = vadd.f32 %v1817, %v1905
      %v1907 = vpop.f32.mrf.mxu0
      %v1908 = vadd.f32 %v1819, %v1907
      %1909 = vmatmul.bf16.gmra.mxu0 %v1061
      %v1910 = vpop.f32.mrf.mxu0
      %v1911 = vadd.f32 %v1822, %v1910
      %v1912 = vpop.f32.mrf.mxu0
      %v1913 = vadd.f32 %v1824, %v1912
      %1914 = vmatmul.bf16.gmra.mxu0 %v1070
      %v1915 = vpop.f32.mrf.mxu0
      %v1916 = vadd.f32 %v1827, %v1915
      %v1917 = vpop.f32.mrf.mxu0
      %v1918 = vadd.f32 %v1829, %v1917
      %1919 = vdwg.mxu0
      %1920 = vmatpush.bf16.msra.mxu0 %v1540
      %1921 = vmatpush.bf16.msra.mxu0 %v1539
      %1922 = vmatpush.bf16.msra.mxu0 %v1538
      %1923 = vmatpush.bf16.msra.mxu0 %v1537
      %1924 = vmatpush.bf16.msra.mxu0 %v1536
      %1925 = vmatpush.bf16.msra.mxu0 %v1535
      %1926 = vmatpush.bf16.msra.mxu0 %v1534
      %1927 = vmatpush.bf16.msra.mxu0 %v1533
      %1928 = vmatmul.bf16.gmra.mxu0 %v936
      %v1929 = vpop.f32.mrf.mxu0
      %v1930 = vadd.f32 %v1841, %v1929
      %v1931 = vpop.f32.mrf.mxu0
      %v1932 = vadd.f32 %v1843, %v1931
      %1933 = vmatmul.bf16.gmra.mxu0 %v945
      %v1934 = vpop.f32.mrf.mxu0
      %v1935 = vadd.f32 %v1846, %v1934
      %v1936 = vpop.f32.mrf.mxu0
      %v1937 = vadd.f32 %v1848, %v1936
      %1938 = vmatmul.bf16.gmra.mxu0 %v954
      %v1939 = vpop.f32.mrf.mxu0
      %v1940 = vadd.f32 %v1851, %v1939
      %v1941 = vpop.f32.mrf.mxu0
      %v1942 = vadd.f32 %v1853, %v1941
      %1943 = vmatmul.bf16.gmra.mxu0 %v963
      %v1944 = vpop.f32.mrf.mxu0
      %v1945 = vadd.f32 %v1856, %v1944
      %v1946 = vpop.f32.mrf.mxu0
      %v1947 = vadd.f32 %v1858, %v1946
      %1948 = vmatmul.bf16.gmra.mxu0 %v972
      %v1949 = vpop.f32.mrf.mxu0
      %v1950 = vadd.f32 %v1861, %v1949
      %v1951 = vpop.f32.mrf.mxu0
      %v1952 = vadd.f32 %v1863, %v1951
      %1953 = vmatmul.bf16.gmra.mxu0 %v981
      %v1954 = vpop.f32.mrf.mxu0
      %v1955 = vadd.f32 %v1866, %v1954
      %v1956 = vpop.f32.mrf.mxu0
      %v1957 = vadd.f32 %v1868, %v1956
      %1958 = vmatmul.bf16.gmra.mxu0 %v990
      %v1959 = vpop.f32.mrf.mxu0
      %v1960 = vadd.f32 %v1871, %v1959
      %v1961 = vpop.f32.mrf.mxu0
      %v1962 = vadd.f32 %v1873, %v1961
      %1963 = vmatmul.bf16.gmra.mxu0 %v999
      %v1964 = vpop.f32.mrf.mxu0
      %v1965 = vadd.f32 %v1876, %v1964
      %v1966 = vpop.f32.mrf.mxu0
      %v1967 = vadd.f32 %v1878, %v1966
      %1968 = vmatmul.bf16.gmra.mxu0 %v1008
      %v1969 = vpop.f32.mrf.mxu0
      %v1970 = vadd.f32 %v1881, %v1969
      %v1971 = vpop.f32.mrf.mxu0
      %v1972 = vadd.f32 %v1883, %v1971
      %1973 = vmatmul.bf16.gmra.mxu0 %v1017
      %v1974 = vpop.f32.mrf.mxu0
      %v1975 = vadd.f32 %v1886, %v1974
      %v1976 = vpop.f32.mrf.mxu0
      %v1977 = vadd.f32 %v1888, %v1976
      %1978 = vmatmul.bf16.gmra.mxu0 %v1026
      %v1979 = vpop.f32.mrf.mxu0
      %v1980 = vadd.f32 %v1891, %v1979
      %v1981 = vpop.f32.mrf.mxu0
      %v1982 = vadd.f32 %v1893, %v1981
      %1983 = vmatmul.bf16.gmra.mxu0 %v1035
      %v1984 = vpop.f32.mrf.mxu0
      %v1985 = vadd.f32 %v1896, %v1984
      %v1986 = vpop.f32.mrf.mxu0
      %v1987 = vadd.f32 %v1898, %v1986
      %1988 = vmatmul.bf16.gmra.mxu0 %v1044
      %v1989 = vpop.f32.mrf.mxu0
      %v1990 = vadd.f32 %v1901, %v1989
      %v1991 = vpop.f32.mrf.mxu0
      %v1992 = vadd.f32 %v1903, %v1991
      %1993 = vmatmul.bf16.gmra.mxu0 %v1053
      %v1994 = vpop.f32.mrf.mxu0
      %v1995 = vadd.f32 %v1906, %v1994
      %v1996 = vpop.f32.mrf.mxu0
      %v1997 = vadd.f32 %v1908, %v1996
      %1998 = vmatmul.bf16.gmra.mxu0 %v1062
      %v1999 = vpop.f32.mrf.mxu0
      %v2000 = vadd.f32 %v1911, %v1999
      %v2001 = vpop.f32.mrf.mxu0
      %v2002 = vadd.f32 %v1913, %v2001
      %2003 = vmatmul.bf16.gmra.mxu0 %v1071
      %v2004 = vpop.f32.mrf.mxu0
      %v2005 = vadd.f32 %v1916, %v2004
      %v2006 = vpop.f32.mrf.mxu0
      %v2007 = vadd.f32 %v1918, %v2006
      %2008 = vdwg.mxu0
      %2009 = vmatpush.bf16.msra.mxu0 %v1548
      %2010 = vmatpush.bf16.msra.mxu0 %v1547
      %2011 = vmatpush.bf16.msra.mxu0 %v1546
      %2012 = vmatpush.bf16.msra.mxu0 %v1545
      %2013 = vmatpush.bf16.msra.mxu0 %v1544
      %2014 = vmatpush.bf16.msra.mxu0 %v1543
      %2015 = vmatpush.bf16.msra.mxu0 %v1542
      %2016 = vmatpush.bf16.msra.mxu0 %v1541
      %2017 = vmatmul.bf16.gmra.mxu0 %v937
      %v2018 = vpop.f32.mrf.mxu0
      %v2019 = vadd.f32 %v1930, %v2018
      %v2020 = vpop.f32.mrf.mxu0
      %v2021 = vadd.f32 %v1932, %v2020
      %2022 = vmatmul.bf16.gmra.mxu0 %v946
      %v2023 = vpop.f32.mrf.mxu0
      %v2024 = vadd.f32 %v1935, %v2023
      %v2025 = vpop.f32.mrf.mxu0
      %v2026 = vadd.f32 %v1937, %v2025
      %2027 = vmatmul.bf16.gmra.mxu0 %v955
      %v2028 = vpop.f32.mrf.mxu0
      %v2029 = vadd.f32 %v1940, %v2028
      %v2030 = vpop.f32.mrf.mxu0
      %v2031 = vadd.f32 %v1942, %v2030
      %2032 = vmatmul.bf16.gmra.mxu0 %v964
      %v2033 = vpop.f32.mrf.mxu0
      %v2034 = vadd.f32 %v1945, %v2033
      %v2035 = vpop.f32.mrf.mxu0
      %v2036 = vadd.f32 %v1947, %v2035
      %2037 = vmatmul.bf16.gmra.mxu0 %v973
      %v2038 = vpop.f32.mrf.mxu0
      %v2039 = vadd.f32 %v1950, %v2038
      %v2040 = vpop.f32.mrf.mxu0
      %v2041 = vadd.f32 %v1952, %v2040
      %2042 = vmatmul.bf16.gmra.mxu0 %v982
      %v2043 = vpop.f32.mrf.mxu0
      %v2044 = vadd.f32 %v1955, %v2043
      %v2045 = vpop.f32.mrf.mxu0
      %v2046 = vadd.f32 %v1957, %v2045
      %2047 = vmatmul.bf16.gmra.mxu0 %v991
      %v2048 = vpop.f32.mrf.mxu0
      %v2049 = vadd.f32 %v1960, %v2048
      %v2050 = vpop.f32.mrf.mxu0
      %v2051 = vadd.f32 %v1962, %v2050
      %2052 = vmatmul.bf16.gmra.mxu0 %v1000
      %v2053 = vpop.f32.mrf.mxu0
      %v2054 = vadd.f32 %v1965, %v2053
      %v2055 = vpop.f32.mrf.mxu0
      %v2056 = vadd.f32 %v1967, %v2055
      %2057 = vmatmul.bf16.gmra.mxu0 %v1009
      %v2058 = vpop.f32.mrf.mxu0
      %v2059 = vadd.f32 %v1970, %v2058
      %v2060 = vpop.f32.mrf.mxu0
      %v2061 = vadd.f32 %v1972, %v2060
      %2062 = vmatmul.bf16.gmra.mxu0 %v1018
      %v2063 = vpop.f32.mrf.mxu0
      %v2064 = vadd.f32 %v1975, %v2063
      %v2065 = vpop.f32.mrf.mxu0
      %v2066 = vadd.f32 %v1977, %v2065
      %2067 = vmatmul.bf16.gmra.mxu0 %v1027
      %v2068 = vpop.f32.mrf.mxu0
      %v2069 = vadd.f32 %v1980, %v2068
      %v2070 = vpop.f32.mrf.mxu0
      %v2071 = vadd.f32 %v1982, %v2070
      %2072 = vmatmul.bf16.gmra.mxu0 %v1036
      %v2073 = vpop.f32.mrf.mxu0
      %v2074 = vadd.f32 %v1985, %v2073
      %v2075 = vpop.f32.mrf.mxu0
      %v2076 = vadd.f32 %v1987, %v2075
      %2077 = vmatmul.bf16.gmra.mxu0 %v1045
      %v2078 = vpop.f32.mrf.mxu0
      %v2079 = vadd.f32 %v1990, %v2078
      %v2080 = vpop.f32.mrf.mxu0
      %v2081 = vadd.f32 %v1992, %v2080
      %2082 = vmatmul.bf16.gmra.mxu0 %v1054
      %v2083 = vpop.f32.mrf.mxu0
      %v2084 = vadd.f32 %v1995, %v2083
      %v2085 = vpop.f32.mrf.mxu0
      %v2086 = vadd.f32 %v1997, %v2085
      %2087 = vmatmul.bf16.gmra.mxu0 %v1063
      %v2088 = vpop.f32.mrf.mxu0
      %v2089 = vadd.f32 %v2000, %v2088
      %v2090 = vpop.f32.mrf.mxu0
      %v2091 = vadd.f32 %v2002, %v2090
      %2092 = vmatmul.bf16.gmra.mxu0 %v1072
      %v2093 = vpop.f32.mrf.mxu0
      %v2094 = vadd.f32 %v2005, %v2093
      %v2095 = vpop.f32.mrf.mxu0
      %v2096 = vadd.f32 %v2007, %v2095
      %2097 = vdwg.mxu0
      %2098 = vmatpush.bf16.msra.mxu0 %v1556
      %2099 = vmatpush.bf16.msra.mxu0 %v1555
      %2100 = vmatpush.bf16.msra.mxu0 %v1554
      %2101 = vmatpush.bf16.msra.mxu0 %v1553
      %2102 = vmatpush.bf16.msra.mxu0 %v1552
      %2103 = vmatpush.bf16.msra.mxu0 %v1551
      %2104 = vmatpush.bf16.msra.mxu0 %v1550
      %2105 = vmatpush.bf16.msra.mxu0 %v1549
      %2106 = vmatmul.bf16.gmra.mxu0 %v938
      %v2107 = vpop.f32.mrf.mxu0
      %v2108 = vadd.f32 %v2019, %v2107
      %v2109 = vpop.f32.mrf.mxu0
      %v2110 = vadd.f32 %v2021, %v2109
      %2111 = vmatmul.bf16.gmra.mxu0 %v947
      %v2112 = vpop.f32.mrf.mxu0
      %v2113 = vadd.f32 %v2024, %v2112
      %v2114 = vpop.f32.mrf.mxu0
      %v2115 = vadd.f32 %v2026, %v2114
      %2116 = vmatmul.bf16.gmra.mxu0 %v956
      %v2117 = vpop.f32.mrf.mxu0
      %v2118 = vadd.f32 %v2029, %v2117
      %v2119 = vpop.f32.mrf.mxu0
      %v2120 = vadd.f32 %v2031, %v2119
      %2121 = vmatmul.bf16.gmra.mxu0 %v965
      %v2122 = vpop.f32.mrf.mxu0
      %v2123 = vadd.f32 %v2034, %v2122
      %v2124 = vpop.f32.mrf.mxu0
      %v2125 = vadd.f32 %v2036, %v2124
      %2126 = vmatmul.bf16.gmra.mxu0 %v974
      %v2127 = vpop.f32.mrf.mxu0
      %v2128 = vadd.f32 %v2039, %v2127
      %v2129 = vpop.f32.mrf.mxu0
      %v2130 = vadd.f32 %v2041, %v2129
      %2131 = vmatmul.bf16.gmra.mxu0 %v983
      %v2132 = vpop.f32.mrf.mxu0
      %v2133 = vadd.f32 %v2044, %v2132
      %v2134 = vpop.f32.mrf.mxu0
      %v2135 = vadd.f32 %v2046, %v2134
      %2136 = vmatmul.bf16.gmra.mxu0 %v992
      %v2137 = vpop.f32.mrf.mxu0
      %v2138 = vadd.f32 %v2049, %v2137
      %v2139 = vpop.f32.mrf.mxu0
      %v2140 = vadd.f32 %v2051, %v2139
      %2141 = vmatmul.bf16.gmra.mxu0 %v1001
      %v2142 = vpop.f32.mrf.mxu0
      %v2143 = vadd.f32 %v2054, %v2142
      %v2144 = vpop.f32.mrf.mxu0
      %v2145 = vadd.f32 %v2056, %v2144
      %2146 = vmatmul.bf16.gmra.mxu0 %v1010
      %v2147 = vpop.f32.mrf.mxu0
      %v2148 = vadd.f32 %v2059, %v2147
      %v2149 = vpop.f32.mrf.mxu0
      %v2150 = vadd.f32 %v2061, %v2149
      %2151 = vmatmul.bf16.gmra.mxu0 %v1019
      %v2152 = vpop.f32.mrf.mxu0
      %v2153 = vadd.f32 %v2064, %v2152
      %v2154 = vpop.f32.mrf.mxu0
      %v2155 = vadd.f32 %v2066, %v2154
      %2156 = vmatmul.bf16.gmra.mxu0 %v1028
      %v2157 = vpop.f32.mrf.mxu0
      %v2158 = vadd.f32 %v2069, %v2157
      %v2159 = vpop.f32.mrf.mxu0
      %v2160 = vadd.f32 %v2071, %v2159
      %2161 = vmatmul.bf16.gmra.mxu0 %v1037
      %v2162 = vpop.f32.mrf.mxu0
      %v2163 = vadd.f32 %v2074, %v2162
      %v2164 = vpop.f32.mrf.mxu0
      %v2165 = vadd.f32 %v2076, %v2164
      %2166 = vmatmul.bf16.gmra.mxu0 %v1046
      %v2167 = vpop.f32.mrf.mxu0
      %v2168 = vadd.f32 %v2079, %v2167
      %v2169 = vpop.f32.mrf.mxu0
      %v2170 = vadd.f32 %v2081, %v2169
      %2171 = vmatmul.bf16.gmra.mxu0 %v1055
      %v2172 = vpop.f32.mrf.mxu0
      %v2173 = vadd.f32 %v2084, %v2172
      %v2174 = vpop.f32.mrf.mxu0
      %v2175 = vadd.f32 %v2086, %v2174
      %2176 = vmatmul.bf16.gmra.mxu0 %v1064
      %v2177 = vpop.f32.mrf.mxu0
      %v2178 = vadd.f32 %v2089, %v2177
      %v2179 = vpop.f32.mrf.mxu0
      %v2180 = vadd.f32 %v2091, %v2179
      %2181 = vmatmul.bf16.gmra.mxu0 %v1073
      %v2182 = vpop.f32.mrf.mxu0
      %v2183 = vadd.f32 %v2094, %v2182
      %v2184 = vpop.f32.mrf.mxu0
      %v2185 = vadd.f32 %v2096, %v2184
      %2186 = vdwg.mxu0
      %2187 = vmatpush.bf16.msra.mxu0 %v1564
      %2188 = vmatpush.bf16.msra.mxu0 %v1563
      %2189 = vmatpush.bf16.msra.mxu0 %v1562
      %2190 = vmatpush.bf16.msra.mxu0 %v1561
      %2191 = vmatpush.bf16.msra.mxu0 %v1560
      %2192 = vmatpush.bf16.msra.mxu0 %v1559
      %2193 = vmatpush.bf16.msra.mxu0 %v1558
      %2194 = vmatpush.bf16.msra.mxu0 %v1557
      %2195 = vmatmul.bf16.gmra.mxu0 %v939
      %v2196 = vpop.f32.mrf.mxu0
      %v2197 = vadd.f32 %v2108, %v2196
      %v2198 = vpop.f32.mrf.mxu0
      %v2199 = vadd.f32 %v2110, %v2198
      %2200 = vmatmul.bf16.gmra.mxu0 %v948
      %v2201 = vpop.f32.mrf.mxu0
      %v2202 = vadd.f32 %v2113, %v2201
      %v2203 = vpop.f32.mrf.mxu0
      %v2204 = vadd.f32 %v2115, %v2203
      %2205 = vmatmul.bf16.gmra.mxu0 %v957
      %v2206 = vpop.f32.mrf.mxu0
      %v2207 = vadd.f32 %v2118, %v2206
      %v2208 = vpop.f32.mrf.mxu0
      %v2209 = vadd.f32 %v2120, %v2208
      %2210 = vmatmul.bf16.gmra.mxu0 %v966
      %v2211 = vpop.f32.mrf.mxu0
      %v2212 = vadd.f32 %v2123, %v2211
      %v2213 = vpop.f32.mrf.mxu0
      %v2214 = vadd.f32 %v2125, %v2213
      %2215 = vmatmul.bf16.gmra.mxu0 %v975
      %v2216 = vpop.f32.mrf.mxu0
      %v2217 = vadd.f32 %v2128, %v2216
      %v2218 = vpop.f32.mrf.mxu0
      %v2219 = vadd.f32 %v2130, %v2218
      %2220 = vmatmul.bf16.gmra.mxu0 %v984
      %v2221 = vpop.f32.mrf.mxu0
      %v2222 = vadd.f32 %v2133, %v2221
      %v2223 = vpop.f32.mrf.mxu0
      %v2224 = vadd.f32 %v2135, %v2223
      %2225 = vmatmul.bf16.gmra.mxu0 %v993
      %v2226 = vpop.f32.mrf.mxu0
      %v2227 = vadd.f32 %v2138, %v2226
      %v2228 = vpop.f32.mrf.mxu0
      %v2229 = vadd.f32 %v2140, %v2228
      %2230 = vmatmul.bf16.gmra.mxu0 %v1002
      %v2231 = vpop.f32.mrf.mxu0
      %v2232 = vadd.f32 %v2143, %v2231
      %v2233 = vpop.f32.mrf.mxu0
      %v2234 = vadd.f32 %v2145, %v2233
      %2235 = vmatmul.bf16.gmra.mxu0 %v1011
      %v2236 = vpop.f32.mrf.mxu0
      %v2237 = vadd.f32 %v2148, %v2236
      %v2238 = vpop.f32.mrf.mxu0
      %v2239 = vadd.f32 %v2150, %v2238
      %2240 = vmatmul.bf16.gmra.mxu0 %v1020
      %v2241 = vpop.f32.mrf.mxu0
      %v2242 = vadd.f32 %v2153, %v2241
      %v2243 = vpop.f32.mrf.mxu0
      %v2244 = vadd.f32 %v2155, %v2243
      %2245 = vmatmul.bf16.gmra.mxu0 %v1029
      %v2246 = vpop.f32.mrf.mxu0
      %v2247 = vadd.f32 %v2158, %v2246
      %v2248 = vpop.f32.mrf.mxu0
      %v2249 = vadd.f32 %v2160, %v2248
      %2250 = vmatmul.bf16.gmra.mxu0 %v1038
      %v2251 = vpop.f32.mrf.mxu0
      %v2252 = vadd.f32 %v2163, %v2251
      %v2253 = vpop.f32.mrf.mxu0
      %v2254 = vadd.f32 %v2165, %v2253
      %2255 = vmatmul.bf16.gmra.mxu0 %v1047
      %v2256 = vpop.f32.mrf.mxu0
      %v2257 = vadd.f32 %v2168, %v2256
      %v2258 = vpop.f32.mrf.mxu0
      %v2259 = vadd.f32 %v2170, %v2258
      %2260 = vmatmul.bf16.gmra.mxu0 %v1056
      %v2261 = vpop.f32.mrf.mxu0
      %v2262 = vadd.f32 %v2173, %v2261
      %v2263 = vpop.f32.mrf.mxu0
      %v2264 = vadd.f32 %v2175, %v2263
      %2265 = vmatmul.bf16.gmra.mxu0 %v1065
      %v2266 = vpop.f32.mrf.mxu0
      %v2267 = vadd.f32 %v2178, %v2266
      %v2268 = vpop.f32.mrf.mxu0
      %v2269 = vadd.f32 %v2180, %v2268
      %2270 = vmatmul.bf16.gmra.mxu0 %v1074
      %v2271 = vpop.f32.mrf.mxu0
      %v2272 = vadd.f32 %v2183, %v2271
      %v2273 = vpop.f32.mrf.mxu0
      %v2274 = vadd.f32 %v2185, %v2273
      %2275 = vdwg.mxu0
      %2276 = vmatpush.bf16.msra.mxu0 %v1572
      %2277 = vmatpush.bf16.msra.mxu0 %v1571
      %2278 = vmatpush.bf16.msra.mxu0 %v1570
      %2279 = vmatpush.bf16.msra.mxu0 %v1569
      %2280 = vmatpush.bf16.msra.mxu0 %v1568
      %2281 = vmatpush.bf16.msra.mxu0 %v1567
      %2282 = vmatpush.bf16.msra.mxu0 %v1566
      %2283 = vmatpush.bf16.msra.mxu0 %v1565
      %2284 = vmatmul.bf16.gmra.mxu0 %v940
      %v2285 = vpop.f32.mrf.mxu0
      %v2286 = vadd.f32 %v2197, %v2285
      %v2287 = vpop.f32.mrf.mxu0
      %v2288 = vadd.f32 %v2199, %v2287
      %2289 = vmatmul.bf16.gmra.mxu0 %v949
      %v2290 = vpop.f32.mrf.mxu0
      %v2291 = vadd.f32 %v2202, %v2290
      %v2292 = vpop.f32.mrf.mxu0
      %v2293 = vadd.f32 %v2204, %v2292
      %2294 = vmatmul.bf16.gmra.mxu0 %v958
      %v2295 = vpop.f32.mrf.mxu0
      %v2296 = vadd.f32 %v2207, %v2295
      %v2297 = vpop.f32.mrf.mxu0
      %v2298 = vadd.f32 %v2209, %v2297
      %2299 = vmatmul.bf16.gmra.mxu0 %v967
      %v2300 = vpop.f32.mrf.mxu0
      %v2301 = vadd.f32 %v2212, %v2300
      %v2302 = vpop.f32.mrf.mxu0
      %v2303 = vadd.f32 %v2214, %v2302
      %2304 = vmatmul.bf16.gmra.mxu0 %v976
      %v2305 = vpop.f32.mrf.mxu0
      %v2306 = vadd.f32 %v2217, %v2305
      %v2307 = vpop.f32.mrf.mxu0
      %v2308 = vadd.f32 %v2219, %v2307
      %2309 = vmatmul.bf16.gmra.mxu0 %v985
      %v2310 = vpop.f32.mrf.mxu0
      %v2311 = vadd.f32 %v2222, %v2310
      %v2312 = vpop.f32.mrf.mxu0
      %v2313 = vadd.f32 %v2224, %v2312
      %2314 = vmatmul.bf16.gmra.mxu0 %v994
      %v2315 = vpop.f32.mrf.mxu0
      %v2316 = vadd.f32 %v2227, %v2315
      %v2317 = vpop.f32.mrf.mxu0
      %v2318 = vadd.f32 %v2229, %v2317
      %2319 = vmatmul.bf16.gmra.mxu0 %v1003
      %v2320 = vpop.f32.mrf.mxu0
      %v2321 = vadd.f32 %v2232, %v2320
      %v2322 = vpop.f32.mrf.mxu0
      %v2323 = vadd.f32 %v2234, %v2322
      %2324 = vmatmul.bf16.gmra.mxu0 %v1012
      %v2325 = vpop.f32.mrf.mxu0
      %v2326 = vadd.f32 %v2237, %v2325
      %v2327 = vpop.f32.mrf.mxu0
      %v2328 = vadd.f32 %v2239, %v2327
      %2329 = vmatmul.bf16.gmra.mxu0 %v1021
      %v2330 = vpop.f32.mrf.mxu0
      %v2331 = vadd.f32 %v2242, %v2330
      %v2332 = vpop.f32.mrf.mxu0
      %v2333 = vadd.f32 %v2244, %v2332
      %2334 = vmatmul.bf16.gmra.mxu0 %v1030
      %v2335 = vpop.f32.mrf.mxu0
      %v2336 = vadd.f32 %v2247, %v2335
      %v2337 = vpop.f32.mrf.mxu0
      %v2338 = vadd.f32 %v2249, %v2337
      %2339 = vmatmul.bf16.gmra.mxu0 %v1039
      %v2340 = vpop.f32.mrf.mxu0
      %v2341 = vadd.f32 %v2252, %v2340
      %v2342 = vpop.f32.mrf.mxu0
      %v2343 = vadd.f32 %v2254, %v2342
      %2344 = vmatmul.bf16.gmra.mxu0 %v1048
      %v2345 = vpop.f32.mrf.mxu0
      %v2346 = vadd.f32 %v2257, %v2345
      %v2347 = vpop.f32.mrf.mxu0
      %v2348 = vadd.f32 %v2259, %v2347
      %2349 = vmatmul.bf16.gmra.mxu0 %v1057
      %v2350 = vpop.f32.mrf.mxu0
      %v2351 = vadd.f32 %v2262, %v2350
      %v2352 = vpop.f32.mrf.mxu0
      %v2353 = vadd.f32 %v2264, %v2352
      %2354 = vmatmul.bf16.gmra.mxu0 %v1066
      %v2355 = vpop.f32.mrf.mxu0
      %v2356 = vadd.f32 %v2267, %v2355
      %v2357 = vpop.f32.mrf.mxu0
      %v2358 = vadd.f32 %v2269, %v2357
      %2359 = vmatmul.bf16.gmra.mxu0 %v1075
      %v2360 = vpop.f32.mrf.mxu0
      %v2361 = vadd.f32 %v2272, %v2360
      %v2362 = vpop.f32.mrf.mxu0
      %v2363 = vadd.f32 %v2274, %v2362
      %2364 = vdwg.mxu0
      %2365 = vmatpush.bf16.msra.mxu0 %v1580
      %2366 = vmatpush.bf16.msra.mxu0 %v1579
      %2367 = vmatpush.bf16.msra.mxu0 %v1578
      %2368 = vmatpush.bf16.msra.mxu0 %v1577
      %2369 = vmatpush.bf16.msra.mxu0 %v1576
      %2370 = vmatpush.bf16.msra.mxu0 %v1575
      %2371 = vmatpush.bf16.msra.mxu0 %v1574
      %2372 = vmatpush.bf16.msra.mxu0 %v1573
      %2373 = vmatmul.bf16.gmra.mxu0 %v941
      %v2374 = vpop.f32.mrf.mxu0
      %v2375 = vadd.f32 %v2286, %v2374
      %v2376 = vpop.f32.mrf.mxu0
      %v2377 = vadd.f32 %v2288, %v2376
      %2378 = vmatmul.bf16.gmra.mxu0 %v950
      %v2379 = vpop.f32.mrf.mxu0
      %v2380 = vadd.f32 %v2291, %v2379
      %v2381 = vpop.f32.mrf.mxu0
      %v2382 = vadd.f32 %v2293, %v2381
      %2383 = vmatmul.bf16.gmra.mxu0 %v959
      %v2384 = vpop.f32.mrf.mxu0
      %v2385 = vadd.f32 %v2296, %v2384
      %v2386 = vpop.f32.mrf.mxu0
      %v2387 = vadd.f32 %v2298, %v2386
      %2388 = vmatmul.bf16.gmra.mxu0 %v968
      %v2389 = vpop.f32.mrf.mxu0
      %v2390 = vadd.f32 %v2301, %v2389
      %v2391 = vpop.f32.mrf.mxu0
      %v2392 = vadd.f32 %v2303, %v2391
      %2393 = vmatmul.bf16.gmra.mxu0 %v977
      %v2394 = vpop.f32.mrf.mxu0
      %v2395 = vadd.f32 %v2306, %v2394
      %v2396 = vpop.f32.mrf.mxu0
      %v2397 = vadd.f32 %v2308, %v2396
      %2398 = vmatmul.bf16.gmra.mxu0 %v986
      %v2399 = vpop.f32.mrf.mxu0
      %v2400 = vadd.f32 %v2311, %v2399
      %v2401 = vpop.f32.mrf.mxu0
      %v2402 = vadd.f32 %v2313, %v2401
      %2403 = vmatmul.bf16.gmra.mxu0 %v995
      %v2404 = vpop.f32.mrf.mxu0
      %v2405 = vadd.f32 %v2316, %v2404
      %v2406 = vpop.f32.mrf.mxu0
      %v2407 = vadd.f32 %v2318, %v2406
      %2408 = vmatmul.bf16.gmra.mxu0 %v1004
      %v2409 = vpop.f32.mrf.mxu0
      %v2410 = vadd.f32 %v2321, %v2409
      %v2411 = vpop.f32.mrf.mxu0
      %v2412 = vadd.f32 %v2323, %v2411
      %2413 = vmatmul.bf16.gmra.mxu0 %v1013
      %v2414 = vpop.f32.mrf.mxu0
      %v2415 = vadd.f32 %v2326, %v2414
      %v2416 = vpop.f32.mrf.mxu0
      %v2417 = vadd.f32 %v2328, %v2416
      %2418 = vmatmul.bf16.gmra.mxu0 %v1022
      %v2419 = vpop.f32.mrf.mxu0
      %v2420 = vadd.f32 %v2331, %v2419
      %v2421 = vpop.f32.mrf.mxu0
      %v2422 = vadd.f32 %v2333, %v2421
      %2423 = vmatmul.bf16.gmra.mxu0 %v1031
      %v2424 = vpop.f32.mrf.mxu0
      %v2425 = vadd.f32 %v2336, %v2424
      %v2426 = vpop.f32.mrf.mxu0
      %v2427 = vadd.f32 %v2338, %v2426
      %2428 = vmatmul.bf16.gmra.mxu0 %v1040
      %v2429 = vpop.f32.mrf.mxu0
      %v2430 = vadd.f32 %v2341, %v2429
      %v2431 = vpop.f32.mrf.mxu0
      %v2432 = vadd.f32 %v2343, %v2431
      %2433 = vmatmul.bf16.gmra.mxu0 %v1049
      %v2434 = vpop.f32.mrf.mxu0
      %v2435 = vadd.f32 %v2346, %v2434
      %v2436 = vpop.f32.mrf.mxu0
      %v2437 = vadd.f32 %v2348, %v2436
      %2438 = vmatmul.bf16.gmra.mxu0 %v1058
      %v2439 = vpop.f32.mrf.mxu0
      %v2440 = vadd.f32 %v2351, %v2439
      %v2441 = vpop.f32.mrf.mxu0
      %v2442 = vadd.f32 %v2353, %v2441
      %2443 = vmatmul.bf16.gmra.mxu0 %v1067
      %v2444 = vpop.f32.mrf.mxu0
      %v2445 = vadd.f32 %v2356, %v2444
      %v2446 = vpop.f32.mrf.mxu0
      %v2447 = vadd.f32 %v2358, %v2446
      %2448 = vmatmul.bf16.gmra.mxu0 %v1076
      %v2449 = vpop.f32.mrf.mxu0
      %v2450 = vadd.f32 %v2361, %v2449
      %v2451 = vpop.f32.mrf.mxu0
      %v2452 = vadd.f32 %v2363, %v2451
      %2453 = vdwg.mxu0
      %vm2454 = vcmask 261120
      %2455 = vst.msk [vmem:[%s175] sm:$0xff] %vm2454, %v2375
      %2456 = vst.msk [vmem:[%s175 + $0x8] sm:$0xff] %vm2454, %v2377
      %2457 = vst.msk [vmem:[%s175 + $0x10] sm:$0xff] %vm2454, %v2380
      %2458 = vst.msk [vmem:[%s175 + $0x18] sm:$0xff] %vm2454, %v2382
      %2459 = vst.msk [vmem:[%s175 + $0x20] sm:$0xff] %vm2454, %v2385
      %2460 = vst.msk [vmem:[%s175 + $0x28] sm:$0xff] %vm2454, %v2387
      %2461 = vst.msk [vmem:[%s175 + $0x30] sm:$0xff] %vm2454, %v2390
      %2462 = vst.msk [vmem:[%s175 + $0x38] sm:$0xff] %vm2454, %v2392
      %2463 = vst.msk [vmem:[%s175 + $0x40] sm:$0xff] %vm2454, %v2395
      %2464 = vst.msk [vmem:[%s175 + $0x48] sm:$0xff] %vm2454, %v2397
      %2465 = vst.msk [vmem:[%s175 + $0x50] sm:$0xff] %vm2454, %v2400
      %2466 = vst.msk [vmem:[%s175 + $0x58] sm:$0xff] %vm2454, %v2402
      %2467 = vst.msk [vmem:[%s175 + $0x60] sm:$0xff] %vm2454, %v2405
      %2468 = vst.msk [vmem:[%s175 + $0x68] sm:$0xff] %vm2454, %v2407
      %2469 = vst.msk [vmem:[%s175 + $0x70] sm:$0xff] %vm2454, %v2410
      %2470 = vst.msk [vmem:[%s175 + $0x78] sm:$0xff] %vm2454, %v2412
      %2471 = vst.msk [vmem:[%s175 + $0x80] sm:$0xff] %vm2454, %v2415
      %2472 = vst.msk [vmem:[%s175 + $0x88] sm:$0xff] %vm2454, %v2417
      %2473 = vst.msk [vmem:[%s175 + $0x90] sm:$0xff] %vm2454, %v2420
      %2474 = vst.msk [vmem:[%s175 + $0x98] sm:$0xff] %vm2454, %v2422
      %2475 = vst.msk [vmem:[%s175 + $0xa0] sm:$0xff] %vm2454, %v2425
      %2476 = vst.msk [vmem:[%s175 + $0xa8] sm:$0xff] %vm2454, %v2427
      %2477 = vst.msk [vmem:[%s175 + $0xb0] sm:$0xff] %vm2454, %v2430
      %2478 = vst.msk [vmem:[%s175 + $0xb8] sm:$0xff] %vm2454, %v2432
      %2479 = vst.msk [vmem:[%s175 + $0xc0] sm:$0xff] %vm2454, %v2435
      %2480 = vst.msk [vmem:[%s175 + $0xc8] sm:$0xff] %vm2454, %v2437
      %2481 = vst.msk [vmem:[%s175 + $0xd0] sm:$0xff] %vm2454, %v2440
      %2482 = vst.msk [vmem:[%s175 + $0xd8] sm:$0xff] %vm2454, %v2442
      %2483 = vst.msk [vmem:[%s175 + $0xe0] sm:$0xff] %vm2454, %v2445
      %2484 = vst.msk [vmem:[%s175 + $0xe8] sm:$0xff] %vm2454, %v2447
      %2485 = vst.msk [vmem:[%s175 + $0xf0] sm:$0xff] %vm2454, %v2450
      %2486 = vst.msk [vmem:[%s175 + $0xf8] sm:$0xff] %vm2454, %v2452
      %s2487 = smul.u32 32, %s14
      %p2488 = scmp.lt.s32.totalorder %s2487, 63
      %s2489 = scalar_select %p2488, %s2487, 63
      %s2490 = smul.addr %s2489, 8
      %s2491 = scalar_lea.vmem %s3, %s2490
      // Predicated region
      $region33: #{unet_forward.17} parent=31 // pred_check
        %p2492 = pneg %p100
      $region34: #{unet_forward.17} parent=31 // pred_check_branch
        %2494 = sbr.rel (%p2492) target = $region36
      $region35: #{unet_forward.17} parent=31 // pred_region
        %s2495 = smul.u32 32, %s14
      $region36: #{unet_forward.17} parent=31 // pred_fallthru
        _
    $region32: #{unet_forward.17} parent=5 // pred_fallthru
      _
    %p2496 = scmp.le.s32.totalorder 2, %s9
    // Predicated region
    $region37: #{unet_forward.17} parent=5 // pred_check
      %p2497 = pneg %p2496
    $region38: #{unet_forward.17} parent=5 // pred_check_branch
      %2499 = sbr.rel (%p2497) target = $region40
    $region39: #{unet_forward.17} parent=5 // pred_region
      %s2500 = ssub.s32 %s9, 2
      // Predicated region
      $region41: #{unet_forward.17} parent=39 // pred_check
        %p2501 = pneg %p106
      $region42: #{unet_forward.17} parent=39 // pred_check_branch
        %2503 = sbr.rel (%p2501) target = $region44
      $region43: #{unet_forward.17} parent=39 // pred_region
        %s2504 = smul.u32 32, %s15
        %p2505 = scmp.lt.s32.totalorder %s2504, 63
        %s2506 = scalar_select %p2505, %s2504, 63
        %s2507 = smul.addr %s2506, 8
        %s2508 = scalar_lea.vmem %s3, %s2507
      $region44: #{unet_forward.17} parent=39 // pred_fallthru
        _
    $region40: #{unet_forward.17} parent=5 // pred_fallthru
      _
  $region6: #{unet_forward.17} parent=0 // loop_footer
    %s13 = sadd.s32 1, %s9
  $region7: #{unet_forward.17} parent=0 // loop_footer_branch
    %8 = sbr.rel target = $region3
  $region8: #{unet_forward.17} parent=0 // loop_exit
    _

// kernel: unet_forward.18
$region0: #{unet_forward.18}
  #allocation0 [shape = 'u32[]', space=smem, size = 0x4, offset = 0x4, fixed_abs, tag = 'smem constant byte address 0x4 - core index']
  #allocation1 [shape = 'u32[72,128]{1,0:T(1,128)}', space=vmem, size = 0x9000, scoped, tag = 'internal scratch']
  %s0 = inlined_call_operand.vmem [shape: bf16[2048,576], index: 0, kind: input, shape index: {}]
  %s1 = inlined_call_operand.vmem [shape: bf16[576,16], index: 1, kind: input, shape index: {}]
  %s2 = inlined_call_operand.vmem [shape: f32[1,16], index: 2, kind: input, shape index: {}]
  %s3 = inlined_call_operand.vmem [shape: f32[2048,16], index: 3, kind: output, shape index: {}]
  %s4 = sld [smem:[#allocation0]]
  $region45: #{unet_forward.18} parent=0
    _
  %s6 = ssub.s32 1, %s4
  %s7 = scalar_select 0, %s6, %s4
  loop: start=0, step=1, limit=10
  $region2: #{unet_forward.18} parent=0 // loop_pre_header
    _
  $region3: #{unet_forward.18} parent=0 // loop_header
    %s9 = sphi 0, %s13
    %p10 = scmp.ge.s32.totalorder %s9, 10
    %s19 = sphi 0, %s21
    %s22 = sphi 0, %s19
    %s23 = sphi 0, %s22
    %s39 = sphi 0, %s23
    %s43 = sphi 0, %s43
    %s45 = sphi 0, %s43
    %s46 = sphi 0, %s45
    %s60 = sphi 0, %s46
    %s64 = sphi 0, %s64
    %s66 = sphi 0, %s64
    %s67 = sphi 0, %s66
    %s81 = sphi 0, %s67
    %s87 = sphi 0, %s89
    %s90 = sphi 0, %s87
    %s91 = sphi 0, %s90
    %s107 = sphi 0, %s91
  $region4: #{unet_forward.18} parent=0 // loop_header_branch
    %12 = sbr.rel (%p10) target = $region8
  $region5: #{unet_forward.18} parent=0 // loop_body
    %s14 = ssub.s32 %s9, 1
    %s15 = ssub.s32 %s9, 2
    %s16 = sadd.s32 %s9, 1
    %s17 = ssub.s32 %s9, %s16
    %p18 = scmp.eq.s32.totalorder %s17, 0
    %s20 = sadd.s32 %s19, 1
    %s21 = scalar_select %p18, %s19, %s20
    %p24 = pneg %p18
    %p25 = scmp.eq.s32.totalorder %s9, 7
    %p26 = por %p24, %p25
    %p27 = scmp.ne.s32.totalorder %s19, %s22
    %p28 = scmp.eq.s32.totalorder %s9, 0
    %p29 = por %p27, %p28
    %p30 = scmp.ne.s32.totalorder %s19, %s22
    %p31 = scmp.eq.s32.totalorder %s14, 7
    %p32 = por %p30, %p31
    %p33 = scmp.ne.s32.totalorder %s22, %s23
    %p34 = scmp.eq.s32.totalorder %s14, 0
    %p35 = por %p33, %p34
    %p36 = scmp.ne.s32.totalorder %s22, %s23
    %p37 = scmp.eq.s32.totalorder %s15, 7
    %p38 = por %p36, %p37
    %p40 = scmp.ne.s32.totalorder %s23, %s39
    %p41 = scmp.eq.s32.totalorder %s15, 0
    %p42 = por %p40, %p41
    %s44 = sadd.s32 %s43, 1
    %p47 = scmp.eq.s32.totalorder %s9, 7
    %p48 = scmp.ne.s32.totalorder %s43, %s45
    %p49 = scmp.eq.s32.totalorder %s9, 0
    %p50 = por %p48, %p49
    %p51 = scmp.ne.s32.totalorder %s43, %s45
    %p52 = scmp.eq.s32.totalorder %s14, 7
    %p53 = por %p51, %p52
    %p54 = scmp.ne.s32.totalorder %s45, %s46
    %p55 = scmp.eq.s32.totalorder %s14, 0
    %p56 = por %p54, %p55
    %p57 = scmp.ne.s32.totalorder %s45, %s46
    %p58 = scmp.eq.s32.totalorder %s15, 7
    %p59 = por %p57, %p58
    %p61 = scmp.ne.s32.totalorder %s46, %s60
    %p62 = scmp.eq.s32.totalorder %s15, 0
    %p63 = por %p61, %p62
    %s65 = sadd.s32 %s64, 1
    %p68 = scmp.eq.s32.totalorder %s9, 7
    %p69 = scmp.ne.s32.totalorder %s64, %s66
    %p70 = scmp.eq.s32.totalorder %s9, 0
    %p71 = por %p69, %p70
    %p72 = scmp.ne.s32.totalorder %s64, %s66
    %p73 = scmp.eq.s32.totalorder %s14, 7
    %p74 = por %p72, %p73
    %p75 = scmp.ne.s32.totalorder %s66, %s67
    %p76 = scmp.eq.s32.totalorder %s14, 0
    %p77 = por %p75, %p76
    %p78 = scmp.ne.s32.totalorder %s66, %s67
    %p79 = scmp.eq.s32.totalorder %s15, 7
    %p80 = por %p78, %p79
    %p82 = scmp.ne.s32.totalorder %s67, %s81
    %p83 = scmp.eq.s32.totalorder %s15, 0
    %p84 = por %p82, %p83
    %s85 = ssub.s32 %s9, %s16
    %p86 = scmp.eq.s32.totalorder %s85, 0
    %s88 = sadd.s32 %s87, 1
    %s89 = scalar_select %p86, %s87, %s88
    %p92 = pneg %p86
    %p93 = scmp.eq.s32.totalorder %s9, 7
    %p94 = por %p92, %p93
    %p95 = scmp.ne.s32.totalorder %s87, %s90
    %p96 = scmp.eq.s32.totalorder %s9, 0
    %p97 = por %p95, %p96
    %p98 = scmp.ne.s32.totalorder %s87, %s90
    %p99 = scmp.eq.s32.totalorder %s14, 7
    %p100 = por %p98, %p99
    %p101 = scmp.ne.s32.totalorder %s90, %s91
    %p102 = scmp.eq.s32.totalorder %s14, 0
    %p103 = por %p101, %p102
    %p104 = scmp.ne.s32.totalorder %s90, %s91
    %p105 = scmp.eq.s32.totalorder %s15, 7
    %p106 = por %p104, %p105
    %p108 = scmp.ne.s32.totalorder %s91, %s107
    %p109 = scmp.eq.s32.totalorder %s15, 0
    %p110 = por %p108, %p109
    %p111 = scmp.le.s32.totalorder 1, %s9
    %p112 = scmp.lt.s32.totalorder %s9, 9
    %p113 = pnand %p111, %p112
    %p114 = pneg %p113
    // Predicated region
    $region9: #{unet_forward.18} parent=5 // pred_check
      _
    $region10: #{unet_forward.18} parent=5 // pred_check_branch
      %116 = sbr.rel (%p113) target = $region12
    $region11: #{unet_forward.18} parent=5 // pred_region
      %s117 = ssub.s32 %s9, 1
      // Predicated region
      $region13: #{unet_forward.18} parent=11 // pred_check
        %p118 = pneg %p56
      $region14: #{unet_forward.18} parent=11 // pred_check_branch
        %120 = sbr.rel (%p118) target = $region16
      $region15: #{unet_forward.18} parent=11 // pred_region
        _
      $region16: #{unet_forward.18} parent=11 // pred_fallthru
        _
      // Predicated region
      $region17: #{unet_forward.18} parent=11 // pred_check
        %p121 = pneg %p77
      $region18: #{unet_forward.18} parent=11 // pred_check_branch
        %123 = sbr.rel (%p121) target = $region20
      $region19: #{unet_forward.18} parent=11 // pred_region
        _
      $region20: #{unet_forward.18} parent=11 // pred_fallthru
        _
    $region12: #{unet_forward.18} parent=5 // pred_fallthru
      _
    %p124 = scmp.lt.s32.totalorder %s9, 8
    // Predicated region
    $region21: #{unet_forward.18} parent=5 // pred_check
      %p125 = pneg %p124
    $region22: #{unet_forward.18} parent=5 // pred_check_branch
      %127 = sbr.rel (%p125) target = $region24
    $region23: #{unet_forward.18} parent=5 // pred_region
      // Predicated region
      $region25: #{unet_forward.18} parent=23 // pred_check
        %p128 = pneg %p29
      $region26: #{unet_forward.18} parent=23 // pred_check_branch
        %130 = sbr.rel (%p128) target = $region28
      $region27: #{unet_forward.18} parent=23 // pred_region
        %s131 = smul.u32 32, %s9
        %p132 = scmp.lt.s32.totalorder %s131, 255
        %s133 = scalar_select %p132, %s131, 255
        %s134 = smul.addr %s133, 5
        %s135 = smul.addr %s134, 4
        %s136 = scalar_lea.vmem %s0, %s135
        %s137 = smul.u32 32, %s9
      $region28: #{unet_forward.18} parent=23 // pred_fallthru
        _
    $region24: #{unet_forward.18} parent=5 // pred_fallthru
      _
    %p138 = scmp.le.s32.totalorder 1, %s9
    %p139 = scmp.lt.s32.totalorder %s9, 9
    %p140 = pnand %p138, %p139
    %p141 = pneg %p140
    // Predicated region
    $region29: #{unet_forward.18} parent=5 // pred_check
      _
    $region30: #{unet_forward.18} parent=5 // pred_check_branch
      %143 = sbr.rel (%p140) target = $region32
    $region31: #{unet_forward.18} parent=5 // pred_region
      %s144 = ssub.s32 %s9, 1
      %s145 = smul.u32 32, %s14
      %p146 = scmp.lt.s32.totalorder %s145, 255
      %s147 = scalar_select %p146, %s145, 255
      %s148 = smul.addr %s147, 5
      %s149 = smul.addr %s148, 4
      %s150 = scalar_lea.vmem %s0, %s149
      %p151 = pneg %p35
      %p152 = pneg %p32
      %p153 = pneg %p56
      %p154 = pneg %p53
      %p155 = pneg %p77
      %p156 = pneg %p74
      %p157 = pneg %p103
      %p158 = pneg %p100
      %s159 = smul.u32 32, %s14
      %p160 = scmp.lt.s32.totalorder %s159, 255
      %s161 = scalar_select %p160, %s159, 255
      %s162 = smul.addr %s161, 8
      %s163 = scalar_lea.vmem %s3, %s162
      %s164 = smul.u32 32, %s14
      %p165 = scmp.lt.s32.totalorder %s164, 255
      %s166 = scalar_select %p165, %s164, 255
      %s167 = smul.addr %s166, 5
      %s168 = smul.addr %s167, 4
      %s169 = scalar_lea.vmem %s0, %s168
      %s170 = smul.u32 32, %s14
      %s171 = smul.u32 32, %s14
      %p172 = scmp.lt.s32.totalorder %s171, 255
      %s173 = scalar_select %p172, %s171, 255
      %s174 = smul.addr %s173, 8
      %s175 = scalar_lea.vmem %s3, %s174
      %s176 = smul.u32 32, %s14
      %v178 = vld [vmem:[%s169] sm:$0xff]
      %v179 = vld [vmem:[%s169 + $0x8] sm:$0xff]
      %v180 = vld [vmem:[%s169 + $0x10] sm:$0xf]
      %v181 = vld [vmem:[%s169 + $0x14] sm:$0xff]
      %v182 = vld [vmem:[%s169 + $0x1c] sm:$0xff]
      %v183 = vld [vmem:[%s169 + $0x24] sm:$0xf]
      %v184 = vld [vmem:[%s169 + $0x28] sm:$0xff]
      %v185 = vld [vmem:[%s169 + $0x30] sm:$0xff]
      %v186 = vld [vmem:[%s169 + $0x38] sm:$0xf]
      %v187 = vld [vmem:[%s169 + $0x3c] sm:$0xff]
      %v188 = vld [vmem:[%s169 + $0x44] sm:$0xff]
      %v189 = vld [vmem:[%s169 + $0x4c] sm:$0xf]
      %v190 = vld [vmem:[%s169 + $0x50] sm:$0xff]
      %v191 = vld [vmem:[%s169 + $0x58] sm:$0xff]
      %v192 = vld [vmem:[%s169 + $0x60] sm:$0xf]
      %v193 = vld [vmem:[%s169 + $0x64] sm:$0xff]
      %v194 = vld [vmem:[%s169 + $0x6c] sm:$0xff]
      %v195 = vld [vmem:[%s169 + $0x74] sm:$0xf]
      %v196 = vld [vmem:[%s169 + $0x78] sm:$0xff]
      %v197 = vld [vmem:[%s169 + $0x80] sm:$0xff]
      %v198 = vld [vmem:[%s169 + $0x88] sm:$0xf]
      %v199 = vld [vmem:[%s169 + $0x8c] sm:$0xff]
      %v200 = vld [vmem:[%s169 + $0x94] sm:$0xff]
      %v201 = vld [vmem:[%s169 + $0x9c] sm:$0xf]
      %v202 = vld [vmem:[%s169 + $0xa0] sm:$0xff]
      %v203 = vld [vmem:[%s169 + $0xa8] sm:$0xff]
      %v204 = vld [vmem:[%s169 + $0xb0] sm:$0xf]
      %v205 = vld [vmem:[%s169 + $0xb4] sm:$0xff]
      %v206 = vld [vmem:[%s169 + $0xbc] sm:$0xff]
      %v207 = vld [vmem:[%s169 + $0xc4] sm:$0xf]
      %v208 = vld [vmem:[%s169 + $0xc8] sm:$0xff]
      %v209 = vld [vmem:[%s169 + $0xd0] sm:$0xff]
      %v210 = vld [vmem:[%s169 + $0xd8] sm:$0xf]
      %v211 = vld [vmem:[%s169 + $0xdc] sm:$0xff]
      %v212 = vld [vmem:[%s169 + $0xe4] sm:$0xff]
      %v213 = vld [vmem:[%s169 + $0xec] sm:$0xf]
      %v214 = vld [vmem:[%s169 + $0xf0] sm:$0xff]
      %v215 = vld [vmem:[%s169 + $0xf8] sm:$0xff]
      %v216 = vld [vmem:[%s169 + $0x100] sm:$0xf]
      %v217 = vld [vmem:[%s169 + $0x104] sm:$0xff]
      %v218 = vld [vmem:[%s169 + $0x10c] sm:$0xff]
      %v219 = vld [vmem:[%s169 + $0x114] sm:$0xf]
      %v220 = vld [vmem:[%s169 + $0x118] sm:$0xff]
      %v221 = vld [vmem:[%s169 + $0x120] sm:$0xff]
      %v222 = vld [vmem:[%s169 + $0x128] sm:$0xf]
      %v223 = vld [vmem:[%s169 + $0x12c] sm:$0xff]
      %v224 = vld [vmem:[%s169 + $0x134] sm:$0xff]
      %v225 = vld [vmem:[%s169 + $0x13c] sm:$0xf]
      %v226 = vld [vmem:[%s169 + $0x140] sm:$0xff]
      %v227 = vld [vmem:[%s169 + $0x148] sm:$0xff]
      %v228 = vld [vmem:[%s169 + $0x150] sm:$0xf]
      %v229 = vld [vmem:[%s169 + $0x154] sm:$0xff]
      %v230 = vld [vmem:[%s169 + $0x15c] sm:$0xff]
      %v231 = vld [vmem:[%s169 + $0x164] sm:$0xf]
      %v232 = vld [vmem:[%s169 + $0x168] sm:$0xff]
      %v233 = vld [vmem:[%s169 + $0x170] sm:$0xff]
      %v234 = vld [vmem:[%s169 + $0x178] sm:$0xf]
      %v235 = vld [vmem:[%s169 + $0x17c] sm:$0xff]
      %v236 = vld [vmem:[%s169 + $0x184] sm:$0xff]
      %v237 = vld [vmem:[%s169 + $0x18c] sm:$0xf]
      %v238 = vld [vmem:[%s169 + $0x190] sm:$0xff]
      %v239 = vld [vmem:[%s169 + $0x198] sm:$0xff]
      %v240 = vld [vmem:[%s169 + $0x1a0] sm:$0xf]
      %v241 = vld [vmem:[%s169 + $0x1a4] sm:$0xff]
      %v242 = vld [vmem:[%s169 + $0x1ac] sm:$0xff]
      %v243 = vld [vmem:[%s169 + $0x1b4] sm:$0xf]
      %v244 = vld [vmem:[%s169 + $0x1b8] sm:$0xff]
      %v245 = vld [vmem:[%s169 + $0x1c0] sm:$0xff]
      %v246 = vld [vmem:[%s169 + $0x1c8] sm:$0xf]
      %v247 = vld [vmem:[%s169 + $0x1cc] sm:$0xff]
      %v248 = vld [vmem:[%s169 + $0x1d4] sm:$0xff]
      %v249 = vld [vmem:[%s169 + $0x1dc] sm:$0xf]
      %v250 = vld [vmem:[%s169 + $0x1e0] sm:$0xff]
      %v251 = vld [vmem:[%s169 + $0x1e8] sm:$0xff]
      %v252 = vld [vmem:[%s169 + $0x1f0] sm:$0xf]
      %v253 = vld [vmem:[%s169 + $0x1f4] sm:$0xff]
      %v254 = vld [vmem:[%s169 + $0x1fc] sm:$0xff]
      %v255 = vld [vmem:[%s169 + $0x204] sm:$0xf]
      %v256 = vld [vmem:[%s169 + $0x208] sm:$0xff]
      %v257 = vld [vmem:[%s169 + $0x210] sm:$0xff]
      %v258 = vld [vmem:[%s169 + $0x218] sm:$0xf]
      %v259 = vld [vmem:[%s169 + $0x21c] sm:$0xff]
      %v260 = vld [vmem:[%s169 + $0x224] sm:$0xff]
      %v261 = vld [vmem:[%s169 + $0x22c] sm:$0xf]
      %v262 = vld [vmem:[%s169 + $0x230] sm:$0xff]
      %v263 = vld [vmem:[%s169 + $0x238] sm:$0xff]
      %v264 = vld [vmem:[%s169 + $0x240] sm:$0xf]
      %v265 = vld [vmem:[%s169 + $0x244] sm:$0xff]
      %v266 = vld [vmem:[%s169 + $0x24c] sm:$0xff]
      %v267 = vld [vmem:[%s169 + $0x254] sm:$0xf]
      %v268 = vld [vmem:[%s169 + $0x258] sm:$0xff]
      %v269 = vld [vmem:[%s169 + $0x260] sm:$0xff]
      %v270 = vld [vmem:[%s169 + $0x268] sm:$0xf]
      %v271 = vld [vmem:[%s169 + $0x26c] sm:$0xff]
      %v272 = vld [vmem:[%s169 + $0x274] sm:$0xff]
      %v273 = vld [vmem:[%s169 + $0x27c] sm:$0xf]
      %v274 = vld [vmem:[%s1] sm:$0xf]
      %v275 = vld [vmem:[%s1 + $0x4] sm:$0xf]
      %v276 = vld [vmem:[%s1 + $0x8] sm:$0xf]
      %v277 = vld [vmem:[%s1 + $0xc] sm:$0xf]
      %v278 = vld [vmem:[%s1 + $0x10] sm:$0xf]
      %v279 = vld [vmem:[%s1 + $0x14] sm:$0xf]
      %v280 = vld [vmem:[%s1 + $0x18] sm:$0xf]
      %v281 = vld [vmem:[%s1 + $0x1c] sm:$0xf]
      %v282 = vld [vmem:[%s1 + $0x20] sm:$0xf]
      %v283 = vld [vmem:[%s1 + $0x24] sm:$0xf]
      %v284 = vld [vmem:[%s1 + $0x28] sm:$0xf]
      %v285 = vld [vmem:[%s1 + $0x2c] sm:$0xf]
      %v286 = vld [vmem:[%s1 + $0x30] sm:$0xf]
      %v287 = vld [vmem:[%s1 + $0x34] sm:$0xf]
      %v288 = vld [vmem:[%s1 + $0x38] sm:$0xf]
      %v289 = vld [vmem:[%s1 + $0x3c] sm:$0xf]
      %v290 = vld [vmem:[%s1 + $0x40] sm:$0xf]
      %v291 = vld [vmem:[%s1 + $0x44] sm:$0xf]
      %v292 = vld [vmem:[%s1 + $0x48] sm:$0xf]
      %v293 = vld [vmem:[%s1 + $0x4c] sm:$0xf]
      %v294 = vld [vmem:[%s1 + $0x50] sm:$0xf]
      %v295 = vld [vmem:[%s1 + $0x54] sm:$0xf]
      %v296 = vld [vmem:[%s1 + $0x58] sm:$0xf]
      %v297 = vld [vmem:[%s1 + $0x5c] sm:$0xf]
      %v298 = vld [vmem:[%s1 + $0x60] sm:$0xf]
      %v299 = vld [vmem:[%s1 + $0x64] sm:$0xf]
      %v300 = vld [vmem:[%s1 + $0x68] sm:$0xf]
      %v301 = vld [vmem:[%s1 + $0x6c] sm:$0xf]
      %v302 = vld [vmem:[%s1 + $0x70] sm:$0xf]
      %v303 = vld [vmem:[%s1 + $0x74] sm:$0xf]
      %v304 = vld [vmem:[%s1 + $0x78] sm:$0xf]
      %v305 = vld [vmem:[%s1 + $0x7c] sm:$0xf]
      %v306 = vld [vmem:[%s1 + $0x80] sm:$0xf]
      %v307 = vld [vmem:[%s1 + $0x84] sm:$0xf]
      %v308 = vld [vmem:[%s1 + $0x88] sm:$0xf]
      %v309 = vld [vmem:[%s1 + $0x8c] sm:$0xf]
      %v310 = vld [vmem:[%s1 + $0x90] sm:$0xf]
      %v311 = vld [vmem:[%s1 + $0x94] sm:$0xf]
      %v312 = vld [vmem:[%s1 + $0x98] sm:$0xf]
      %v313 = vld [vmem:[%s1 + $0x9c] sm:$0xf]
      %v314 = vld [vmem:[%s1 + $0xa0] sm:$0xf]
      %v315 = vld [vmem:[%s1 + $0xa4] sm:$0xf]
      %v316 = vld [vmem:[%s1 + $0xa8] sm:$0xf]
      %v317 = vld [vmem:[%s1 + $0xac] sm:$0xf]
      %v318 = vld [vmem:[%s1 + $0xb0] sm:$0xf]
      %v319 = vld [vmem:[%s1 + $0xb4] sm:$0xf]
      %v320 = vld [vmem:[%s1 + $0xb8] sm:$0xf]
      %v321 = vld [vmem:[%s1 + $0xbc] sm:$0xf]
      %v322 = vld [vmem:[%s1 + $0xc0] sm:$0xf]
      %v323 = vld [vmem:[%s1 + $0xc4] sm:$0xf]
      %v324 = vld [vmem:[%s1 + $0xc8] sm:$0xf]
      %v325 = vld [vmem:[%s1 + $0xcc] sm:$0xf]
      %v326 = vld [vmem:[%s1 + $0xd0] sm:$0xf]
      %v327 = vld [vmem:[%s1 + $0xd4] sm:$0xf]
      %v328 = vld [vmem:[%s1 + $0xd8] sm:$0xf]
      %v329 = vld [vmem:[%s1 + $0xdc] sm:$0xf]
      %v330 = vld [vmem:[%s1 + $0xe0] sm:$0xf]
      %v331 = vld [vmem:[%s1 + $0xe4] sm:$0xf]
      %v332 = vld [vmem:[%s1 + $0xe8] sm:$0xf]
      %v333 = vld [vmem:[%s1 + $0xec] sm:$0xf]
      %v334 = vld [vmem:[%s1 + $0xf0] sm:$0xf]
      %v335 = vld [vmem:[%s1 + $0xf4] sm:$0xf]
      %v336 = vld [vmem:[%s1 + $0xf8] sm:$0xf]
      %v337 = vld [vmem:[%s1 + $0xfc] sm:$0xf]
      %v338 = vld [vmem:[%s1 + $0x100] sm:$0xf]
      %v339 = vld [vmem:[%s1 + $0x104] sm:$0xf]
      %v340 = vld [vmem:[%s1 + $0x108] sm:$0xf]
      %v341 = vld [vmem:[%s1 + $0x10c] sm:$0xf]
      %v342 = vld [vmem:[%s1 + $0x110] sm:$0xf]
      %v343 = vld [vmem:[%s1 + $0x114] sm:$0xf]
      %v344 = vld [vmem:[%s1 + $0x118] sm:$0xf]
      %v345 = vld [vmem:[%s1 + $0x11c] sm:$0xf]
      %v346 = vld [vmem:[%s2] sm:$0x1]
      %v348 = vperm.slane %v346, 0
      %v446 = vunpack.c.l.b16 %v178
      %v447 = vunpack.c.h.b16 %v178
      %v448 = vunpack.c.l.b16 %v179
      %v449 = vunpack.c.h.b16 %v179
      %v450 = vunpack.c.l.b16 %v180
      %v451 = vunpack.c.l.b16 %v181
      %v452 = vunpack.c.h.b16 %v181
      %v453 = vunpack.c.l.b16 %v182
      %v454 = vunpack.c.h.b16 %v182
      %v455 = vunpack.c.l.b16 %v183
      %v456 = vunpack.c.l.b16 %v184
      %v457 = vunpack.c.h.b16 %v184
      %v458 = vunpack.c.l.b16 %v185
      %v459 = vunpack.c.h.b16 %v185
      %v460 = vunpack.c.l.b16 %v186
      %v461 = vunpack.c.l.b16 %v187
      %v462 = vunpack.c.h.b16 %v187
      %v463 = vunpack.c.l.b16 %v188
      %v464 = vunpack.c.h.b16 %v188
      %v465 = vunpack.c.l.b16 %v189
      %v466 = vunpack.c.l.b16 %v190
      %v467 = vunpack.c.h.b16 %v190
      %v468 = vunpack.c.l.b16 %v191
      %v469 = vunpack.c.h.b16 %v191
      %v470 = vunpack.c.l.b16 %v192
      %v471 = vunpack.c.l.b16 %v193
      %v472 = vunpack.c.h.b16 %v193
      %v473 = vunpack.c.l.b16 %v194
      %v474 = vunpack.c.h.b16 %v194
      %v475 = vunpack.c.l.b16 %v195
      %v476 = vunpack.c.l.b16 %v196
      %v477 = vunpack.c.h.b16 %v196
      %v478 = vunpack.c.l.b16 %v197
      %v479 = vunpack.c.h.b16 %v197
      %v480 = vunpack.c.l.b16 %v198
      %v481 = vunpack.c.l.b16 %v199
      %v482 = vunpack.c.h.b16 %v199
      %v483 = vunpack.c.l.b16 %v200
      %v484 = vunpack.c.h.b16 %v200
      %v485 = vunpack.c.l.b16 %v201
      %v486 = vunpack.c.l.b16 %v202
      %v487 = vunpack.c.h.b16 %v202
      %v488 = vunpack.c.l.b16 %v203
      %v489 = vunpack.c.h.b16 %v203
      %v490 = vunpack.c.l.b16 %v204
      %v491 = vunpack.c.l.b16 %v205
      %v492 = vunpack.c.h.b16 %v205
      %v493 = vunpack.c.l.b16 %v206
      %v494 = vunpack.c.h.b16 %v206
      %v495 = vunpack.c.l.b16 %v207
      %v496 = vunpack.c.l.b16 %v208
      %v497 = vunpack.c.h.b16 %v208
      %v498 = vunpack.c.l.b16 %v209
      %v499 = vunpack.c.h.b16 %v209
      %v500 = vunpack.c.l.b16 %v210
      %v501 = vunpack.c.l.b16 %v211
      %v502 = vunpack.c.h.b16 %v211
      %v503 = vunpack.c.l.b16 %v212
      %v504 = vunpack.c.h.b16 %v212
      %v505 = vunpack.c.l.b16 %v213
      %v506 = vunpack.c.l.b16 %v214
      %v507 = vunpack.c.h.b16 %v214
      %v508 = vunpack.c.l.b16 %v215
      %v509 = vunpack.c.h.b16 %v215
      %v510 = vunpack.c.l.b16 %v216
      %v511 = vunpack.c.l.b16 %v217
      %v512 = vunpack.c.h.b16 %v217
      %v513 = vunpack.c.l.b16 %v218
      %v514 = vunpack.c.h.b16 %v218
      %v515 = vunpack.c.l.b16 %v219
      %v516 = vunpack.c.l.b16 %v220
      %v517 = vunpack.c.h.b16 %v220
      %v518 = vunpack.c.l.b16 %v221
      %v519 = vunpack.c.h.b16 %v221
      %v520 = vunpack.c.l.b16 %v222
      %v521 = vunpack.c.l.b16 %v223
      %v522 = vunpack.c.h.b16 %v223
      %v523 = vunpack.c.l.b16 %v224
      %v524 = vunpack.c.h.b16 %v224
      %v525 = vunpack.c.l.b16 %v225
      %v526 = vunpack.c.l.b16 %v226
      %v527 = vunpack.c.h.b16 %v226
      %v528 = vunpack.c.l.b16 %v227
      %v529 = vunpack.c.h.b16 %v227
      %v530 = vunpack.c.l.b16 %v228
      %v531 = vunpack.c.l.b16 %v229
      %v532 = vunpack.c.h.b16 %v229
      %v533 = vunpack.c.l.b16 %v230
      %v534 = vunpack.c.h.b16 %v230
      %v535 = vunpack.c.l.b16 %v231
      %v536 = vunpack.c.l.b16 %v232
      %v537 = vunpack.c.h.b16 %v232
      %v538 = vunpack.c.l.b16 %v233
      %v539 = vunpack.c.h.b16 %v233
      %v540 = vunpack.c.l.b16 %v234
      %v541 = vunpack.c.l.b16 %v235
      %v542 = vunpack.c.h.b16 %v235
      %v543 = vunpack.c.l.b16 %v236
      %v544 = vunpack.c.h.b16 %v236
      %v545 = vunpack.c.l.b16 %v237
      %v546 = vunpack.c.l.b16 %v238
      %v547 = vunpack.c.h.b16 %v238
      %v548 = vunpack.c.l.b16 %v239
      %v549 = vunpack.c.h.b16 %v239
      %v550 = vunpack.c.l.b16 %v240
      %v551 = vunpack.c.l.b16 %v241
      %v552 = vunpack.c.h.b16 %v241
      %v553 = vunpack.c.l.b16 %v242
      %v554 = vunpack.c.h.b16 %v242
      %v555 = vunpack.c.l.b16 %v243
      %v556 = vunpack.c.l.b16 %v244
      %v557 = vunpack.c.h.b16 %v244
      %v558 = vunpack.c.l.b16 %v245
      %v559 = vunpack.c.h.b16 %v245
      %v560 = vunpack.c.l.b16 %v246
      %v561 = vunpack.c.l.b16 %v247
      %v562 = vunpack.c.h.b16 %v247
      %v563 = vunpack.c.l.b16 %v248
      %v564 = vunpack.c.h.b16 %v248
      %v565 = vunpack.c.l.b16 %v249
      %v566 = vunpack.c.l.b16 %v250
      %v567 = vunpack.c.h.b16 %v250
      %v568 = vunpack.c.l.b16 %v251
      %v569 = vunpack.c.h.b16 %v251
      %v570 = vunpack.c.l.b16 %v252
      %v571 = vunpack.c.l.b16 %v253
      %v572 = vunpack.c.h.b16 %v253
      %v573 = vunpack.c.l.b16 %v254
      %v574 = vunpack.c.h.b16 %v254
      %v575 = vunpack.c.l.b16 %v255
      %v576 = vunpack.c.l.b16 %v256
      %v577 = vunpack.c.h.b16 %v256
      %v578 = vunpack.c.l.b16 %v257
      %v579 = vunpack.c.h.b16 %v257
      %v580 = vunpack.c.l.b16 %v258
      %v581 = vunpack.c.l.b16 %v259
      %v582 = vunpack.c.h.b16 %v259
      %v583 = vunpack.c.l.b16 %v260
      %v584 = vunpack.c.h.b16 %v260
      %v585 = vunpack.c.l.b16 %v261
      %v586 = vunpack.c.l.b16 %v262
      %v587 = vunpack.c.h.b16 %v262
      %v588 = vunpack.c.l.b16 %v263
      %v589 = vunpack.c.h.b16 %v263
      %v590 = vunpack.c.l.b16 %v264
      %v591 = vunpack.c.l.b16 %v265
      %v592 = vunpack.c.h.b16 %v265
      %v593 = vunpack.c.l.b16 %v266
      %v594 = vunpack.c.h.b16 %v266
      %v595 = vunpack.c.l.b16 %v267
      %v596 = vunpack.c.l.b16 %v268
      %v597 = vunpack.c.h.b16 %v268
      %v598 = vunpack.c.l.b16 %v269
      %v599 = vunpack.c.h.b16 %v269
      %v600 = vunpack.c.l.b16 %v270
      %v601 = vunpack.c.l.b16 %v271
      %v602 = vunpack.c.h.b16 %v271
      %v603 = vunpack.c.l.b16 %v272
      %v604 = vunpack.c.h.b16 %v272
      %v605 = vunpack.c.l.b16 %v273
      %v606 = vpack.c.b16 %v451, %v446
      %v607 = vpack.c.b16 %v452, %v447
      %v608 = vpack.c.b16 %v453, %v448
      %v609 = vpack.c.b16 %v454, %v449
      %v610 = vpack.c.b16 %v455, %v450
      %v611 = vpack.c.b16 %v461, %v456
      %v612 = vpack.c.b16 %v462, %v457
      %v613 = vpack.c.b16 %v463, %v458
      %v614 = vpack.c.b16 %v464, %v459
      %v615 = vpack.c.b16 %v465, %v460
      %v616 = vpack.c.b16 %v471, %v466
      %v617 = vpack.c.b16 %v472, %v467
      %v618 = vpack.c.b16 %v473, %v468
      %v619 = vpack.c.b16 %v474, %v469
      %v620 = vpack.c.b16 %v475, %v470
      %v621 = vpack.c.b16 %v481, %v476
      %v622 = vpack.c.b16 %v482, %v477
      %v623 = vpack.c.b16 %v483, %v478
      %v624 = vpack.c.b16 %v484, %v479
      %v625 = vpack.c.b16 %v485, %v480
      %v626 = vpack.c.b16 %v491, %v486
      %v627 = vpack.c.b16 %v492, %v487
      %v628 = vpack.c.b16 %v493, %v488
      %v629 = vpack.c.b16 %v494, %v489
      %v630 = vpack.c.b16 %v495, %v490
      %v631 = vpack.c.b16 %v501, %v496
      %v632 = vpack.c.b16 %v502, %v497
      %v633 = vpack.c.b16 %v503, %v498
      %v634 = vpack.c.b16 %v504, %v499
      %v635 = vpack.c.b16 %v505, %v500
      %v636 = vpack.c.b16 %v511, %v506
      %v637 = vpack.c.b16 %v512, %v507
      %v638 = vpack.c.b16 %v513, %v508
      %v639 = vpack.c.b16 %v514, %v509
      %v640 = vpack.c.b16 %v515, %v510
      %v641 = vpack.c.b16 %v521, %v516
      %v642 = vpack.c.b16 %v522, %v517
      %v643 = vpack.c.b16 %v523, %v518
      %v644 = vpack.c.b16 %v524, %v519
      %v645 = vpack.c.b16 %v525, %v520
      %v646 = vpack.c.b16 %v531, %v526
      %v647 = vpack.c.b16 %v532, %v527
      %v648 = vpack.c.b16 %v533, %v528
      %v649 = vpack.c.b16 %v534, %v529
      %v650 = vpack.c.b16 %v535, %v530
      %v651 = vpack.c.b16 %v541, %v536
      %v652 = vpack.c.b16 %v542, %v537
      %v653 = vpack.c.b16 %v543, %v538
      %v654 = vpack.c.b16 %v544, %v539
      %v655 = vpack.c.b16 %v545, %v540
      %v656 = vpack.c.b16 %v551, %v546
      %v657 = vpack.c.b16 %v552, %v547
      %v658 = vpack.c.b16 %v553, %v548
      %v659 = vpack.c.b16 %v554, %v549
      %v660 = vpack.c.b16 %v555, %v550
      %v661 = vpack.c.b16 %v561, %v556
      %v662 = vpack.c.b16 %v562, %v557
      %v663 = vpack.c.b16 %v563, %v558
      %v664 = vpack.c.b16 %v564, %v559
      %v665 = vpack.c.b16 %v565, %v560
      %v666 = vpack.c.b16 %v571, %v566
      %v667 = vpack.c.b16 %v572, %v567
      %v668 = vpack.c.b16 %v573, %v568
      %v669 = vpack.c.b16 %v574, %v569
      %v670 = vpack.c.b16 %v575, %v570
      %v671 = vpack.c.b16 %v581, %v576
      %v672 = vpack.c.b16 %v582, %v577
      %v673 = vpack.c.b16 %v583, %v578
      %v674 = vpack.c.b16 %v584, %v579
      %v675 = vpack.c.b16 %v585, %v580
      %v676 = vpack.c.b16 %v591, %v586
      %v677 = vpack.c.b16 %v592, %v587
      %v678 = vpack.c.b16 %v593, %v588
      %v679 = vpack.c.b16 %v594, %v589
      %v680 = vpack.c.b16 %v595, %v590
      %v681 = vpack.c.b16 %v601, %v596
      %v682 = vpack.c.b16 %v602, %v597
      %v683 = vpack.c.b16 %v603, %v598
      %v684 = vpack.c.b16 %v604, %v599
      %v685 = vpack.c.b16 %v605, %v600
      %v822 = vunpack.c.l.b16 %v274
      %v823 = vunpack.c.l.b16 %v275
      %v824 = vunpack.c.l.b16 %v276
      %v825 = vunpack.c.l.b16 %v277
      %v826 = vunpack.c.l.b16 %v278
      %v827 = vunpack.c.l.b16 %v279
      %v828 = vunpack.c.l.b16 %v280
      %v829 = vunpack.c.l.b16 %v281
      %v830 = vunpack.c.l.b16 %v282
      %v831 = vunpack.c.l.b16 %v283
      %v832 = vunpack.c.l.b16 %v284
      %v833 = vunpack.c.l.b16 %v285
      %v834 = vunpack.c.l.b16 %v286
      %v835 = vunpack.c.l.b16 %v287
      %v836 = vunpack.c.l.b16 %v288
      %v837 = vunpack.c.l.b16 %v289
      %v838 = vunpack.c.l.b16 %v290
      %v839 = vunpack.c.l.b16 %v291
      %v840 = vunpack.c.l.b16 %v292
      %v841 = vunpack.c.l.b16 %v293
      %v842 = vunpack.c.l.b16 %v294
      %v843 = vunpack.c.l.b16 %v295
      %v844 = vunpack.c.l.b16 %v296
      %v845 = vunpack.c.l.b16 %v297
      %v846 = vunpack.c.l.b16 %v298
      %v847 = vunpack.c.l.b16 %v299
      %v848 = vunpack.c.l.b16 %v300
      %v849 = vunpack.c.l.b16 %v301
      %v850 = vunpack.c.l.b16 %v302
      %v851 = vunpack.c.l.b16 %v303
      %v852 = vunpack.c.l.b16 %v304
      %v853 = vunpack.c.l.b16 %v305
      %v854 = vunpack.c.l.b16 %v306
      %v855 = vunpack.c.l.b16 %v307
      %v856 = vunpack.c.l.b16 %v308
      %v857 = vunpack.c.l.b16 %v309
      %v858 = vunpack.c.l.b16 %v310
      %v859 = vunpack.c.l.b16 %v311
      %v860 = vunpack.c.l.b16 %v312
      %v861 = vunpack.c.l.b16 %v313
      %v862 = vunpack.c.l.b16 %v314
      %v863 = vunpack.c.l.b16 %v315
      %v864 = vunpack.c.l.b16 %v316
      %v865 = vunpack.c.l.b16 %v317
      %v866 = vunpack.c.l.b16 %v318
      %v867 = vunpack.c.l.b16 %v319
      %v868 = vunpack.c.l.b16 %v320
      %v869 = vunpack.c.l.b16 %v321
      %v870 = vunpack.c.l.b16 %v322
      %v871 = vunpack.c.l.b16 %v323
      %v872 = vunpack.c.l.b16 %v324
      %v873 = vunpack.c.l.b16 %v325
      %v874 = vunpack.c.l.b16 %v326
      %v875 = vunpack.c.l.b16 %v327
      %v876 = vunpack.c.l.b16 %v328
      %v877 = vunpack.c.l.b16 %v329
      %v878 = vunpack.c.l.b16 %v330
      %v879 = vunpack.c.l.b16 %v331
      %v880 = vunpack.c.l.b16 %v332
      %v881 = vunpack.c.l.b16 %v333
      %v882 = vunpack.c.l.b16 %v334
      %v883 = vunpack.c.l.b16 %v335
      %v884 = vunpack.c.l.b16 %v336
      %v885 = vunpack.c.l.b16 %v337
      %v886 = vunpack.c.l.b16 %v338
      %v887 = vunpack.c.l.b16 %v339
      %v888 = vunpack.c.l.b16 %v340
      %v889 = vunpack.c.l.b16 %v341
      %v890 = vunpack.c.l.b16 %v342
      %v891 = vunpack.c.l.b16 %v343
      %v892 = vunpack.c.l.b16 %v344
      %v893 = vunpack.c.l.b16 %v345
      %v894 = vpack.c.b16 %v823, %v822
      %v895 = vpack.c.b16 %v825, %v824
      %v896 = vpack.c.b16 %v827, %v826
      %v897 = vpack.c.b16 %v829, %v828
      %v898 = vpack.c.b16 %v831, %v830
      %v899 = vpack.c.b16 %v833, %v832
      %v900 = vpack.c.b16 %v835, %v834
      %v901 = vpack.c.b16 %v837, %v836
      %v902 = vpack.c.b16 %v839, %v838
      %v903 = vpack.c.b16 %v841, %v840
      %v904 = vpack.c.b16 %v843, %v842
      %v905 = vpack.c.b16 %v845, %v844
      %v906 = vpack.c.b16 %v847, %v846
      %v907 = vpack.c.b16 %v849, %v848
      %v908 = vpack.c.b16 %v851, %v850
      %v909 = vpack.c.b16 %v853, %v852
      %v910 = vpack.c.b16 %v855, %v854
      %v911 = vpack.c.b16 %v857, %v856
      %v912 = vpack.c.b16 %v859, %v858
      %v913 = vpack.c.b16 %v861, %v860
      %v914 = vpack.c.b16 %v863, %v862
      %v915 = vpack.c.b16 %v865, %v864
      %v916 = vpack.c.b16 %v867, %v866
      %v917 = vpack.c.b16 %v869, %v868
      %v918 = vpack.c.b16 %v871, %v870
      %v919 = vpack.c.b16 %v873, %v872
      %v920 = vpack.c.b16 %v875, %v874
      %v921 = vpack.c.b16 %v877, %v876
      %v922 = vpack.c.b16 %v879, %v878
      %v923 = vpack.c.b16 %v881, %v880
      %v924 = vpack.c.b16 %v883, %v882
      %v925 = vpack.c.b16 %v885, %v884
      %v926 = vpack.c.b16 %v887, %v886
      %v927 = vpack.c.b16 %v889, %v888
      %v928 = vpack.c.b16 %v891, %v890
      %v929 = vpack.c.b16 %v893, %v892
      %vm966 = vcmask 523264
      %v968 = vsel %vm966, %v610, 0
      %v971 = vsel %vm966, %v615, 0
      %v974 = vsel %vm966, %v620, 0
      %v977 = vsel %vm966, %v625, 0
      %v980 = vsel %vm966, %v630, 0
      %v983 = vsel %vm966, %v635, 0
      %v986 = vsel %vm966, %v640, 0
      %v989 = vsel %vm966, %v645, 0
      %v992 = vsel %vm966, %v650, 0
      %v995 = vsel %vm966, %v655, 0
      %v998 = vsel %vm966, %v660, 0
      %v1001 = vsel %vm966, %v665, 0
      %v1004 = vsel %vm966, %v670, 0
      %v1007 = vsel %vm966, %v675, 0
      %v1010 = vsel %vm966, %v680, 0
      %v1013 = vsel %vm966, %v685, 0
      %1015 = vmatpush.bf16.msra.mxu0 %v901
      %1016 = vmatpush.bf16.msra.mxu0 %v900
      %1017 = vmatpush.bf16.msra.mxu0 %v899
      %1018 = vmatpush.bf16.msra.mxu0 %v898
      %1019 = vmatpush.bf16.msra.mxu0 %v897
      %1020 = vmatpush.bf16.msra.mxu0 %v896
      %1021 = vmatpush.bf16.msra.mxu0 %v895
      %1022 = vmatpush.bf16.msra.mxu0 %v894
      %1023 = vmatmul.bf16.gmra.mxu0 %v606
      %v1024 = vpop.f32.mrf.mxu0
      %v1025 = vadd.f32 %v348, %v1024
      %v1026 = vpop.f32.mrf.mxu0
      %v1027 = vadd.f32 %v348, %v1026
      %1028 = vmatmul.bf16.gmra.mxu0 %v611
      %v1029 = vpop.f32.mrf.mxu0
      %v1030 = vadd.f32 %v348, %v1029
      %v1031 = vpop.f32.mrf.mxu0
      %v1032 = vadd.f32 %v348, %v1031
      %1033 = vmatmul.bf16.gmra.mxu0 %v616
      %v1034 = vpop.f32.mrf.mxu0
      %v1035 = vadd.f32 %v348, %v1034
      %v1036 = vpop.f32.mrf.mxu0
      %v1037 = vadd.f32 %v348, %v1036
      %1038 = vmatmul.bf16.gmra.mxu0 %v621
      %v1039 = vpop.f32.mrf.mxu0
      %v1040 = vadd.f32 %v348, %v1039
      %v1041 = vpop.f32.mrf.mxu0
      %v1042 = vadd.f32 %v348, %v1041
      %1043 = vmatmul.bf16.gmra.mxu0 %v626
      %v1044 = vpop.f32.mrf.mxu0
      %v1045 = vadd.f32 %v348, %v1044
      %v1046 = vpop.f32.mrf.mxu0
      %v1047 = vadd.f32 %v348, %v1046
      %1048 = vmatmul.bf16.gmra.mxu0 %v631
      %v1049 = vpop.f32.mrf.mxu0
      %v1050 = vadd.f32 %v348, %v1049
      %v1051 = vpop.f32.mrf.mxu0
      %v1052 = vadd.f32 %v348, %v1051
      %1053 = vmatmul.bf16.gmra.mxu0 %v636
      %v1054 = vpop.f32.mrf.mxu0
      %v1055 = vadd.f32 %v348, %v1054
      %v1056 = vpop.f32.mrf.mxu0
      %v1057 = vadd.f32 %v348, %v1056
      %1058 = vmatmul.bf16.gmra.mxu0 %v641
      %v1059 = vpop.f32.mrf.mxu0
      %v1060 = vadd.f32 %v348, %v1059
      %v1061 = vpop.f32.mrf.mxu0
      %v1062 = vadd.f32 %v348, %v1061
      %1063 = vmatmul.bf16.gmra.mxu0 %v646
      %v1064 = vpop.f32.mrf.mxu0
      %v1065 = vadd.f32 %v348, %v1064
      %v1066 = vpop.f32.mrf.mxu0
      %v1067 = vadd.f32 %v348, %v1066
      %1068 = vmatmul.bf16.gmra.mxu0 %v651
      %v1069 = vpop.f32.mrf.mxu0
      %v1070 = vadd.f32 %v348, %v1069
      %v1071 = vpop.f32.mrf.mxu0
      %v1072 = vadd.f32 %v348, %v1071
      %1073 = vmatmul.bf16.gmra.mxu0 %v656
      %v1074 = vpop.f32.mrf.mxu0
      %v1075 = vadd.f32 %v348, %v1074
      %v1076 = vpop.f32.mrf.mxu0
      %v1077 = vadd.f32 %v348, %v1076
      %1078 = vmatmul.bf16.gmra.mxu0 %v661
      %v1079 = vpop.f32.mrf.mxu0
      %v1080 = vadd.f32 %v348, %v1079
      %v1081 = vpop.f32.mrf.mxu0
      %v1082 = vadd.f32 %v348, %v1081
      %1083 = vmatmul.bf16.gmra.mxu0 %v666
      %v1084 = vpop.f32.mrf.mxu0
      %v1085 = vadd.f32 %v348, %v1084
      %v1086 = vpop.f32.mrf.mxu0
      %v1087 = vadd.f32 %v348, %v1086
      %1088 = vmatmul.bf16.gmra.mxu0 %v671
      %v1089 = vpop.f32.mrf.mxu0
      %v1090 = vadd.f32 %v348, %v1089
      %v1091 = vpop.f32.mrf.mxu0
      %v1092 = vadd.f32 %v348, %v1091
      %1093 = vmatmul.bf16.gmra.mxu0 %v676
      %v1094 = vpop.f32.mrf.mxu0
      %v1095 = vadd.f32 %v348, %v1094
      %v1096 = vpop.f32.mrf.mxu0
      %v1097 = vadd.f32 %v348, %v1096
      %1098 = vmatmul.bf16.gmra.mxu0 %v681
      %v1099 = vpop.f32.mrf.mxu0
      %v1100 = vadd.f32 %v348, %v1099
      %v1101 = vpop.f32.mrf.mxu0
      %v1102 = vadd.f32 %v348, %v1101
      %1103 = vdwg.mxu0
      %1104 = vmatpush.bf16.msra.mxu0 %v909
      %1105 = vmatpush.bf16.msra.mxu0 %v908
      %1106 = vmatpush.bf16.msra.mxu0 %v907
      %1107 = vmatpush.bf16.msra.mxu0 %v906
      %1108 = vmatpush.bf16.msra.mxu0 %v905
      %1109 = vmatpush.bf16.msra.mxu0 %v904
      %1110 = vmatpush.bf16.msra.mxu0 %v903
      %1111 = vmatpush.bf16.msra.mxu0 %v902
      %1112 = vmatmul.bf16.gmra.mxu0 %v607
      %v1113 = vpop.f32.mrf.mxu0
      %v1114 = vadd.f32 %v1025, %v1113
      %v1115 = vpop.f32.mrf.mxu0
      %v1116 = vadd.f32 %v1027, %v1115
      %1117 = vmatmul.bf16.gmra.mxu0 %v612
      %v1118 = vpop.f32.mrf.mxu0
      %v1119 = vadd.f32 %v1030, %v1118
      %v1120 = vpop.f32.mrf.mxu0
      %v1121 = vadd.f32 %v1032, %v1120
      %1122 = vmatmul.bf16.gmra.mxu0 %v617
      %v1123 = vpop.f32.mrf.mxu0
      %v1124 = vadd.f32 %v1035, %v1123
      %v1125 = vpop.f32.mrf.mxu0
      %v1126 = vadd.f32 %v1037, %v1125
      %1127 = vmatmul.bf16.gmra.mxu0 %v622
      %v1128 = vpop.f32.mrf.mxu0
      %v1129 = vadd.f32 %v1040, %v1128
      %v1130 = vpop.f32.mrf.mxu0
      %v1131 = vadd.f32 %v1042, %v1130
      %1132 = vmatmul.bf16.gmra.mxu0 %v627
      %v1133 = vpop.f32.mrf.mxu0
      %v1134 = vadd.f32 %v1045, %v1133
      %v1135 = vpop.f32.mrf.mxu0
      %v1136 = vadd.f32 %v1047, %v1135
      %1137 = vmatmul.bf16.gmra.mxu0 %v632
      %v1138 = vpop.f32.mrf.mxu0
      %v1139 = vadd.f32 %v1050, %v1138
      %v1140 = vpop.f32.mrf.mxu0
      %v1141 = vadd.f32 %v1052, %v1140
      %1142 = vmatmul.bf16.gmra.mxu0 %v637
      %v1143 = vpop.f32.mrf.mxu0
      %v1144 = vadd.f32 %v1055, %v1143
      %v1145 = vpop.f32.mrf.mxu0
      %v1146 = vadd.f32 %v1057, %v1145
      %1147 = vmatmul.bf16.gmra.mxu0 %v642
      %v1148 = vpop.f32.mrf.mxu0
      %v1149 = vadd.f32 %v1060, %v1148
      %v1150 = vpop.f32.mrf.mxu0
      %v1151 = vadd.f32 %v1062, %v1150
      %1152 = vmatmul.bf16.gmra.mxu0 %v647
      %v1153 = vpop.f32.mrf.mxu0
      %v1154 = vadd.f32 %v1065, %v1153
      %v1155 = vpop.f32.mrf.mxu0
      %v1156 = vadd.f32 %v1067, %v1155
      %1157 = vmatmul.bf16.gmra.mxu0 %v652
      %v1158 = vpop.f32.mrf.mxu0
      %v1159 = vadd.f32 %v1070, %v1158
      %v1160 = vpop.f32.mrf.mxu0
      %v1161 = vadd.f32 %v1072, %v1160
      %1162 = vmatmul.bf16.gmra.mxu0 %v657
      %v1163 = vpop.f32.mrf.mxu0
      %v1164 = vadd.f32 %v1075, %v1163
      %v1165 = vpop.f32.mrf.mxu0
      %v1166 = vadd.f32 %v1077, %v1165
      %1167 = vmatmul.bf16.gmra.mxu0 %v662
      %v1168 = vpop.f32.mrf.mxu0
      %v1169 = vadd.f32 %v1080, %v1168
      %v1170 = vpop.f32.mrf.mxu0
      %v1171 = vadd.f32 %v1082, %v1170
      %1172 = vmatmul.bf16.gmra.mxu0 %v667
      %v1173 = vpop.f32.mrf.mxu0
      %v1174 = vadd.f32 %v1085, %v1173
      %v1175 = vpop.f32.mrf.mxu0
      %v1176 = vadd.f32 %v1087, %v1175
      %1177 = vmatmul.bf16.gmra.mxu0 %v672
      %v1178 = vpop.f32.mrf.mxu0
      %v1179 = vadd.f32 %v1090, %v1178
      %v1180 = vpop.f32.mrf.mxu0
      %v1181 = vadd.f32 %v1092, %v1180
      %1182 = vmatmul.bf16.gmra.mxu0 %v677
      %v1183 = vpop.f32.mrf.mxu0
      %v1184 = vadd.f32 %v1095, %v1183
      %v1185 = vpop.f32.mrf.mxu0
      %v1186 = vadd.f32 %v1097, %v1185
      %1187 = vmatmul.bf16.gmra.mxu0 %v682
      %v1188 = vpop.f32.mrf.mxu0
      %v1189 = vadd.f32 %v1100, %v1188
      %v1190 = vpop.f32.mrf.mxu0
      %v1191 = vadd.f32 %v1102, %v1190
      %1192 = vdwg.mxu0
      %1193 = vmatpush.bf16.msra.mxu0 %v917
      %1194 = vmatpush.bf16.msra.mxu0 %v916
      %1195 = vmatpush.bf16.msra.mxu0 %v915
      %1196 = vmatpush.bf16.msra.mxu0 %v914
      %1197 = vmatpush.bf16.msra.mxu0 %v913
      %1198 = vmatpush.bf16.msra.mxu0 %v912
      %1199 = vmatpush.bf16.msra.mxu0 %v911
      %1200 = vmatpush.bf16.msra.mxu0 %v910
      %1201 = vmatmul.bf16.gmra.mxu0 %v608
      %v1202 = vpop.f32.mrf.mxu0
      %v1203 = vadd.f32 %v1114, %v1202
      %v1204 = vpop.f32.mrf.mxu0
      %v1205 = vadd.f32 %v1116, %v1204
      %1206 = vmatmul.bf16.gmra.mxu0 %v613
      %v1207 = vpop.f32.mrf.mxu0
      %v1208 = vadd.f32 %v1119, %v1207
      %v1209 = vpop.f32.mrf.mxu0
      %v1210 = vadd.f32 %v1121, %v1209
      %1211 = vmatmul.bf16.gmra.mxu0 %v618
      %v1212 = vpop.f32.mrf.mxu0
      %v1213 = vadd.f32 %v1124, %v1212
      %v1214 = vpop.f32.mrf.mxu0
      %v1215 = vadd.f32 %v1126, %v1214
      %1216 = vmatmul.bf16.gmra.mxu0 %v623
      %v1217 = vpop.f32.mrf.mxu0
      %v1218 = vadd.f32 %v1129, %v1217
      %v1219 = vpop.f32.mrf.mxu0
      %v1220 = vadd.f32 %v1131, %v1219
      %1221 = vmatmul.bf16.gmra.mxu0 %v628
      %v1222 = vpop.f32.mrf.mxu0
      %v1223 = vadd.f32 %v1134, %v1222
      %v1224 = vpop.f32.mrf.mxu0
      %v1225 = vadd.f32 %v1136, %v1224
      %1226 = vmatmul.bf16.gmra.mxu0 %v633
      %v1227 = vpop.f32.mrf.mxu0
      %v1228 = vadd.f32 %v1139, %v1227
      %v1229 = vpop.f32.mrf.mxu0
      %v1230 = vadd.f32 %v1141, %v1229
      %1231 = vmatmul.bf16.gmra.mxu0 %v638
      %v1232 = vpop.f32.mrf.mxu0
      %v1233 = vadd.f32 %v1144, %v1232
      %v1234 = vpop.f32.mrf.mxu0
      %v1235 = vadd.f32 %v1146, %v1234
      %1236 = vmatmul.bf16.gmra.mxu0 %v643
      %v1237 = vpop.f32.mrf.mxu0
      %v1238 = vadd.f32 %v1149, %v1237
      %v1239 = vpop.f32.mrf.mxu0
      %v1240 = vadd.f32 %v1151, %v1239
      %1241 = vmatmul.bf16.gmra.mxu0 %v648
      %v1242 = vpop.f32.mrf.mxu0
      %v1243 = vadd.f32 %v1154, %v1242
      %v1244 = vpop.f32.mrf.mxu0
      %v1245 = vadd.f32 %v1156, %v1244
      %1246 = vmatmul.bf16.gmra.mxu0 %v653
      %v1247 = vpop.f32.mrf.mxu0
      %v1248 = vadd.f32 %v1159, %v1247
      %v1249 = vpop.f32.mrf.mxu0
      %v1250 = vadd.f32 %v1161, %v1249
      %1251 = vmatmul.bf16.gmra.mxu0 %v658
      %v1252 = vpop.f32.mrf.mxu0
      %v1253 = vadd.f32 %v1164, %v1252
      %v1254 = vpop.f32.mrf.mxu0
      %v1255 = vadd.f32 %v1166, %v1254
      %1256 = vmatmul.bf16.gmra.mxu0 %v663
      %v1257 = vpop.f32.mrf.mxu0
      %v1258 = vadd.f32 %v1169, %v1257
      %v1259 = vpop.f32.mrf.mxu0
      %v1260 = vadd.f32 %v1171, %v1259
      %1261 = vmatmul.bf16.gmra.mxu0 %v668
      %v1262 = vpop.f32.mrf.mxu0
      %v1263 = vadd.f32 %v1174, %v1262
      %v1264 = vpop.f32.mrf.mxu0
      %v1265 = vadd.f32 %v1176, %v1264
      %1266 = vmatmul.bf16.gmra.mxu0 %v673
      %v1267 = vpop.f32.mrf.mxu0
      %v1268 = vadd.f32 %v1179, %v1267
      %v1269 = vpop.f32.mrf.mxu0
      %v1270 = vadd.f32 %v1181, %v1269
      %1271 = vmatmul.bf16.gmra.mxu0 %v678
      %v1272 = vpop.f32.mrf.mxu0
      %v1273 = vadd.f32 %v1184, %v1272
      %v1274 = vpop.f32.mrf.mxu0
      %v1275 = vadd.f32 %v1186, %v1274
      %1276 = vmatmul.bf16.gmra.mxu0 %v683
      %v1277 = vpop.f32.mrf.mxu0
      %v1278 = vadd.f32 %v1189, %v1277
      %v1279 = vpop.f32.mrf.mxu0
      %v1280 = vadd.f32 %v1191, %v1279
      %1281 = vdwg.mxu0
      %1282 = vmatpush.bf16.msra.mxu0 %v925
      %1283 = vmatpush.bf16.msra.mxu0 %v924
      %1284 = vmatpush.bf16.msra.mxu0 %v923
      %1285 = vmatpush.bf16.msra.mxu0 %v922
      %1286 = vmatpush.bf16.msra.mxu0 %v921
      %1287 = vmatpush.bf16.msra.mxu0 %v920
      %1288 = vmatpush.bf16.msra.mxu0 %v919
      %1289 = vmatpush.bf16.msra.mxu0 %v918
      %1290 = vmatmul.bf16.gmra.mxu0 %v609
      %v1291 = vpop.f32.mrf.mxu0
      %v1292 = vadd.f32 %v1203, %v1291
      %v1293 = vpop.f32.mrf.mxu0
      %v1294 = vadd.f32 %v1205, %v1293
      %1295 = vmatmul.bf16.gmra.mxu0 %v614
      %v1296 = vpop.f32.mrf.mxu0
      %v1297 = vadd.f32 %v1208, %v1296
      %v1298 = vpop.f32.mrf.mxu0
      %v1299 = vadd.f32 %v1210, %v1298
      %1300 = vmatmul.bf16.gmra.mxu0 %v619
      %v1301 = vpop.f32.mrf.mxu0
      %v1302 = vadd.f32 %v1213, %v1301
      %v1303 = vpop.f32.mrf.mxu0
      %v1304 = vadd.f32 %v1215, %v1303
      %1305 = vmatmul.bf16.gmra.mxu0 %v624
      %v1306 = vpop.f32.mrf.mxu0
      %v1307 = vadd.f32 %v1218, %v1306
      %v1308 = vpop.f32.mrf.mxu0
      %v1309 = vadd.f32 %v1220, %v1308
      %1310 = vmatmul.bf16.gmra.mxu0 %v629
      %v1311 = vpop.f32.mrf.mxu0
      %v1312 = vadd.f32 %v1223, %v1311
      %v1313 = vpop.f32.mrf.mxu0
      %v1314 = vadd.f32 %v1225, %v1313
      %1315 = vmatmul.bf16.gmra.mxu0 %v634
      %v1316 = vpop.f32.mrf.mxu0
      %v1317 = vadd.f32 %v1228, %v1316
      %v1318 = vpop.f32.mrf.mxu0
      %v1319 = vadd.f32 %v1230, %v1318
      %1320 = vmatmul.bf16.gmra.mxu0 %v639
      %v1321 = vpop.f32.mrf.mxu0
      %v1322 = vadd.f32 %v1233, %v1321
      %v1323 = vpop.f32.mrf.mxu0
      %v1324 = vadd.f32 %v1235, %v1323
      %1325 = vmatmul.bf16.gmra.mxu0 %v644
      %v1326 = vpop.f32.mrf.mxu0
      %v1327 = vadd.f32 %v1238, %v1326
      %v1328 = vpop.f32.mrf.mxu0
      %v1329 = vadd.f32 %v1240, %v1328
      %1330 = vmatmul.bf16.gmra.mxu0 %v649
      %v1331 = vpop.f32.mrf.mxu0
      %v1332 = vadd.f32 %v1243, %v1331
      %v1333 = vpop.f32.mrf.mxu0
      %v1334 = vadd.f32 %v1245, %v1333
      %1335 = vmatmul.bf16.gmra.mxu0 %v654
      %v1336 = vpop.f32.mrf.mxu0
      %v1337 = vadd.f32 %v1248, %v1336
      %v1338 = vpop.f32.mrf.mxu0
      %v1339 = vadd.f32 %v1250, %v1338
      %1340 = vmatmul.bf16.gmra.mxu0 %v659
      %v1341 = vpop.f32.mrf.mxu0
      %v1342 = vadd.f32 %v1253, %v1341
      %v1343 = vpop.f32.mrf.mxu0
      %v1344 = vadd.f32 %v1255, %v1343
      %1345 = vmatmul.bf16.gmra.mxu0 %v664
      %v1346 = vpop.f32.mrf.mxu0
      %v1347 = vadd.f32 %v1258, %v1346
      %v1348 = vpop.f32.mrf.mxu0
      %v1349 = vadd.f32 %v1260, %v1348
      %1350 = vmatmul.bf16.gmra.mxu0 %v669
      %v1351 = vpop.f32.mrf.mxu0
      %v1352 = vadd.f32 %v1263, %v1351
      %v1353 = vpop.f32.mrf.mxu0
      %v1354 = vadd.f32 %v1265, %v1353
      %1355 = vmatmul.bf16.gmra.mxu0 %v674
      %v1356 = vpop.f32.mrf.mxu0
      %v1357 = vadd.f32 %v1268, %v1356
      %v1358 = vpop.f32.mrf.mxu0
      %v1359 = vadd.f32 %v1270, %v1358
      %1360 = vmatmul.bf16.gmra.mxu0 %v679
      %v1361 = vpop.f32.mrf.mxu0
      %v1362 = vadd.f32 %v1273, %v1361
      %v1363 = vpop.f32.mrf.mxu0
      %v1364 = vadd.f32 %v1275, %v1363
      %1365 = vmatmul.bf16.gmra.mxu0 %v684
      %v1366 = vpop.f32.mrf.mxu0
      %v1367 = vadd.f32 %v1278, %v1366
      %v1368 = vpop.f32.mrf.mxu0
      %v1369 = vadd.f32 %v1280, %v1368
      %1370 = vdwg.mxu0
      %1371 = vmatpush.bf16.msra.mxu0 0
      %1372 = vmatpush.bf16.msra.mxu0 0
      %1373 = vmatpush.bf16.msra.mxu0 0
      %1374 = vmatpush.bf16.msra.mxu0 0
      %1375 = vmatpush.bf16.msra.mxu0 %v929
      %1376 = vmatpush.bf16.msra.mxu0 %v928
      %1377 = vmatpush.bf16.msra.mxu0 %v927
      %1378 = vmatpush.bf16.msra.mxu0 %v926
      %1379 = vmatmul.bf16.gmra.mxu0 %v968
      %v1380 = vpop.f32.mrf.mxu0
      %v1381 = vadd.f32 %v1292, %v1380
      %v1382 = vpop.f32.mrf.mxu0
      %v1383 = vadd.f32 %v1294, %v1382
      %1384 = vmatmul.bf16.gmra.mxu0 %v971
      %v1385 = vpop.f32.mrf.mxu0
      %v1386 = vadd.f32 %v1297, %v1385
      %v1387 = vpop.f32.mrf.mxu0
      %v1388 = vadd.f32 %v1299, %v1387
      %1389 = vmatmul.bf16.gmra.mxu0 %v974
      %v1390 = vpop.f32.mrf.mxu0
      %v1391 = vadd.f32 %v1302, %v1390
      %v1392 = vpop.f32.mrf.mxu0
      %v1393 = vadd.f32 %v1304, %v1392
      %1394 = vmatmul.bf16.gmra.mxu0 %v977
      %v1395 = vpop.f32.mrf.mxu0
      %v1396 = vadd.f32 %v1307, %v1395
      %v1397 = vpop.f32.mrf.mxu0
      %v1398 = vadd.f32 %v1309, %v1397
      %1399 = vmatmul.bf16.gmra.mxu0 %v980
      %v1400 = vpop.f32.mrf.mxu0
      %v1401 = vadd.f32 %v1312, %v1400
      %v1402 = vpop.f32.mrf.mxu0
      %v1403 = vadd.f32 %v1314, %v1402
      %1404 = vmatmul.bf16.gmra.mxu0 %v983
      %v1405 = vpop.f32.mrf.mxu0
      %v1406 = vadd.f32 %v1317, %v1405
      %v1407 = vpop.f32.mrf.mxu0
      %v1408 = vadd.f32 %v1319, %v1407
      %1409 = vmatmul.bf16.gmra.mxu0 %v986
      %v1410 = vpop.f32.mrf.mxu0
      %v1411 = vadd.f32 %v1322, %v1410
      %v1412 = vpop.f32.mrf.mxu0
      %v1413 = vadd.f32 %v1324, %v1412
      %1414 = vmatmul.bf16.gmra.mxu0 %v989
      %v1415 = vpop.f32.mrf.mxu0
      %v1416 = vadd.f32 %v1327, %v1415
      %v1417 = vpop.f32.mrf.mxu0
      %v1418 = vadd.f32 %v1329, %v1417
      %1419 = vmatmul.bf16.gmra.mxu0 %v992
      %v1420 = vpop.f32.mrf.mxu0
      %v1421 = vadd.f32 %v1332, %v1420
      %v1422 = vpop.f32.mrf.mxu0
      %v1423 = vadd.f32 %v1334, %v1422
      %1424 = vmatmul.bf16.gmra.mxu0 %v995
      %v1425 = vpop.f32.mrf.mxu0
      %v1426 = vadd.f32 %v1337, %v1425
      %v1427 = vpop.f32.mrf.mxu0
      %v1428 = vadd.f32 %v1339, %v1427
      %1429 = vmatmul.bf16.gmra.mxu0 %v998
      %v1430 = vpop.f32.mrf.mxu0
      %v1431 = vadd.f32 %v1342, %v1430
      %v1432 = vpop.f32.mrf.mxu0
      %v1433 = vadd.f32 %v1344, %v1432
      %1434 = vmatmul.bf16.gmra.mxu0 %v1001
      %v1435 = vpop.f32.mrf.mxu0
      %v1436 = vadd.f32 %v1347, %v1435
      %v1437 = vpop.f32.mrf.mxu0
      %v1438 = vadd.f32 %v1349, %v1437
      %1439 = vmatmul.bf16.gmra.mxu0 %v1004
      %v1440 = vpop.f32.mrf.mxu0
      %v1441 = vadd.f32 %v1352, %v1440
      %v1442 = vpop.f32.mrf.mxu0
      %v1443 = vadd.f32 %v1354, %v1442
      %1444 = vmatmul.bf16.gmra.mxu0 %v1007
      %v1445 = vpop.f32.mrf.mxu0
      %v1446 = vadd.f32 %v1357, %v1445
      %v1447 = vpop.f32.mrf.mxu0
      %v1448 = vadd.f32 %v1359, %v1447
      %1449 = vmatmul.bf16.gmra.mxu0 %v1010
      %v1450 = vpop.f32.mrf.mxu0
      %v1451 = vadd.f32 %v1362, %v1450
      %v1452 = vpop.f32.mrf.mxu0
      %v1453 = vadd.f32 %v1364, %v1452
      %1454 = vmatmul.bf16.gmra.mxu0 %v1013
      %v1455 = vpop.f32.mrf.mxu0
      %v1456 = vadd.f32 %v1367, %v1455
      %v1457 = vpop.f32.mrf.mxu0
      %v1458 = vadd.f32 %v1369, %v1457
      %1459 = vdwg.mxu0
      %vm1460 = vcmask 130048
      %1461 = vst.msk [vmem:[%s175] sm:$0xff] %vm1460, %v1381
      %1462 = vst.msk [vmem:[%s175 + $0x8] sm:$0xff] %vm1460, %v1383
      %1463 = vst.msk [vmem:[%s175 + $0x10] sm:$0xff] %vm1460, %v1386
      %1464 = vst.msk [vmem:[%s175 + $0x18] sm:$0xff] %vm1460, %v1388
      %1465 = vst.msk [vmem:[%s175 + $0x20] sm:$0xff] %vm1460, %v1391
      %1466 = vst.msk [vmem:[%s175 + $0x28] sm:$0xff] %vm1460, %v1393
      %1467 = vst.msk [vmem:[%s175 + $0x30] sm:$0xff] %vm1460, %v1396
      %1468 = vst.msk [vmem:[%s175 + $0x38] sm:$0xff] %vm1460, %v1398
      %1469 = vst.msk [vmem:[%s175 + $0x40] sm:$0xff] %vm1460, %v1401
      %1470 = vst.msk [vmem:[%s175 + $0x48] sm:$0xff] %vm1460, %v1403
      %1471 = vst.msk [vmem:[%s175 + $0x50] sm:$0xff] %vm1460, %v1406
      %1472 = vst.msk [vmem:[%s175 + $0x58] sm:$0xff] %vm1460, %v1408
      %1473 = vst.msk [vmem:[%s175 + $0x60] sm:$0xff] %vm1460, %v1411
      %1474 = vst.msk [vmem:[%s175 + $0x68] sm:$0xff] %vm1460, %v1413
      %1475 = vst.msk [vmem:[%s175 + $0x70] sm:$0xff] %vm1460, %v1416
      %1476 = vst.msk [vmem:[%s175 + $0x78] sm:$0xff] %vm1460, %v1418
      %1477 = vst.msk [vmem:[%s175 + $0x80] sm:$0xff] %vm1460, %v1421
      %1478 = vst.msk [vmem:[%s175 + $0x88] sm:$0xff] %vm1460, %v1423
      %1479 = vst.msk [vmem:[%s175 + $0x90] sm:$0xff] %vm1460, %v1426
      %1480 = vst.msk [vmem:[%s175 + $0x98] sm:$0xff] %vm1460, %v1428
      %1481 = vst.msk [vmem:[%s175 + $0xa0] sm:$0xff] %vm1460, %v1431
      %1482 = vst.msk [vmem:[%s175 + $0xa8] sm:$0xff] %vm1460, %v1433
      %1483 = vst.msk [vmem:[%s175 + $0xb0] sm:$0xff] %vm1460, %v1436
      %1484 = vst.msk [vmem:[%s175 + $0xb8] sm:$0xff] %vm1460, %v1438
      %1485 = vst.msk [vmem:[%s175 + $0xc0] sm:$0xff] %vm1460, %v1441
      %1486 = vst.msk [vmem:[%s175 + $0xc8] sm:$0xff] %vm1460, %v1443
      %1487 = vst.msk [vmem:[%s175 + $0xd0] sm:$0xff] %vm1460, %v1446
      %1488 = vst.msk [vmem:[%s175 + $0xd8] sm:$0xff] %vm1460, %v1448
      %1489 = vst.msk [vmem:[%s175 + $0xe0] sm:$0xff] %vm1460, %v1451
      %1490 = vst.msk [vmem:[%s175 + $0xe8] sm:$0xff] %vm1460, %v1453
      %1491 = vst.msk [vmem:[%s175 + $0xf0] sm:$0xff] %vm1460, %v1456
      %1492 = vst.msk [vmem:[%s175 + $0xf8] sm:$0xff] %vm1460, %v1458
      %s1493 = smul.u32 32, %s14
      %p1494 = scmp.lt.s32.totalorder %s1493, 255
      %s1495 = scalar_select %p1494, %s1493, 255
      %s1496 = smul.addr %s1495, 8
      %s1497 = scalar_lea.vmem %s3, %s1496
      // Predicated region
      $region33: #{unet_forward.18} parent=31 // pred_check
        %p1498 = pneg %p100
      $region34: #{unet_forward.18} parent=31 // pred_check_branch
        %1500 = sbr.rel (%p1498) target = $region36
      $region35: #{unet_forward.18} parent=31 // pred_region
        %s1501 = smul.u32 32, %s14
      $region36: #{unet_forward.18} parent=31 // pred_fallthru
        _
    $region32: #{unet_forward.18} parent=5 // pred_fallthru
      _
    %p1502 = scmp.le.s32.totalorder 2, %s9
    // Predicated region
    $region37: #{unet_forward.18} parent=5 // pred_check
      %p1503 = pneg %p1502
    $region38: #{unet_forward.18} parent=5 // pred_check_branch
      %1505 = sbr.rel (%p1503) target = $region40
    $region39: #{unet_forward.18} parent=5 // pred_region
      %s1506 = ssub.s32 %s9, 2
      // Predicated region
      $region41: #{unet_forward.18} parent=39 // pred_check
        %p1507 = pneg %p106
      $region42: #{unet_forward.18} parent=39 // pred_check_branch
        %1509 = sbr.rel (%p1507) target = $region44
      $region43: #{unet_forward.18} parent=39 // pred_region
        %s1510 = smul.u32 32, %s15
        %p1511 = scmp.lt.s32.totalorder %s1510, 255
        %s1512 = scalar_select %p1511, %s1510, 255
        %s1513 = smul.addr %s1512, 8
        %s1514 = scalar_lea.vmem %s3, %s1513
      $region44: #{unet_forward.18} parent=39 // pred_fallthru
        _
    $region40: #{unet_forward.18} parent=5 // pred_fallthru
      _
  $region6: #{unet_forward.18} parent=0 // loop_footer
    %s13 = sadd.s32 1, %s9
  $region7: #{unet_forward.18} parent=0 // loop_footer_branch
    %8 = sbr.rel target = $region3
  $region8: #{unet_forward.18} parent=0 // loop_exit
    _

// kernel: squeeze.5
$region0: #{squeeze.5}
  %s0 = inlined_call_operand.vmem [shape: f32[8192], index: 0, kind: input, shape index: {}]
  %s1 = inlined_call_operand.hbm [shape: f32[2,64,64], index: 1, kind: output, shape index: {}]
  $region1: #{squeeze.5} parent=0
    #allocation0 [shape = 'u8[65536]{0}', space=vmem, size = 0x10000, scoped, tag = 'operand span for operand 1']
    #allocation1 [shape = 's32[1]{0}', space=sflag, size = 0x4, scoped, tag = 'scoped memory for squeeze.5']
    %2 = vsyncpa [#allocation1], 0
    %v3 = vld [vmem:[%s0] sm:$0xff]
    %vm4 = vcmask 523264
    %5 = vst.msk [vmem:[#allocation0] ss:$2 sm:$0xff] %vm4, %v3
    %s6 = scalar_lea.vmem %s0, 8
    %v7 = vld [vmem:[%s6] sm:$0xff]
    %vm8 = vcmask 523264
    %s9 = scalar_lea.vmem [#allocation0], 16
    %10 = vst.msk [vmem:[%s9] ss:$2 sm:$0xff] %vm8, %v7
    %s11 = scalar_lea.vmem %s0, 16
    %v12 = vld [vmem:[%s11] sm:$0xff]
    %vm13 = vcmask 523264
    %s14 = scalar_lea.vmem [#allocation0], 32
    %15 = vst.msk [vmem:[%s14] ss:$2 sm:$0xff] %vm13, %v12
    %s16 = scalar_lea.vmem %s0, 24
    %v17 = vld [vmem:[%s16] sm:$0xff]
    %vm18 = vcmask 523264
    %s19 = scalar_lea.vmem [#allocation0], 48
    %20 = vst.msk [vmem:[%s19] ss:$2 sm:$0xff] %vm18, %v17
    %s21 = scalar_lea.vmem %s0, 32
    %v22 = vld [vmem:[%s21] sm:$0xff]
    %vm23 = vcmask 523264
    %s24 = scalar_lea.vmem [#allocation0], 64
    %25 = vst.msk [vmem:[%s24] ss:$2 sm:$0xff] %vm23, %v22
    %s26 = scalar_lea.vmem %s0, 40
    %v27 = vld [vmem:[%s26] sm:$0xff]
    %vm28 = vcmask 523264
    %s29 = scalar_lea.vmem [#allocation0], 80
    %30 = vst.msk [vmem:[%s29] ss:$2 sm:$0xff] %vm28, %v27
    %s31 = scalar_lea.vmem %s0, 48
    %v32 = vld [vmem:[%s31] sm:$0xff]
    %vm33 = vcmask 523264
    %s34 = scalar_lea.vmem [#allocation0], 96
    %35 = vst.msk [vmem:[%s34] ss:$2 sm:$0xff] %vm33, %v32
    %s36 = scalar_lea.vmem %s0, 56
    %v37 = vld [vmem:[%s36] sm:$0xff]
    %vm38 = vcmask 523264
    %s39 = scalar_lea.vmem [#allocation0], 112
    %40 = vst.msk [vmem:[%s39] ss:$2 sm:$0xff] %vm38, %v37
    %v41 = vld [vmem:[%s0] sm:$0xff]
    %42 = vrot.lane.b32.xlu0 %v41, 64
    %v43 = vpop.permute.xlu0 %42
    %vm44 = vcmask 523264
    %s45 = scalar_lea.vmem [#allocation0], 1
    %46 = vst.msk [vmem:[%s45] ss:$2 sm:$0xff] %vm44, %v43
    %s47 = scalar_lea.vmem %s0, 16
    %v48 = vld [vmem:[%s47] sm:$0xff]
    %49 = vrot.lane.b32.xlu0 %v48, 64
    %v50 = vpop.permute.xlu0 %49
    %vm51 = vcmask 523264
    %s52 = scalar_lea.vmem [#allocation0], 33
    %53 = vst.msk [vmem:[%s52] ss:$2 sm:$0xff] %vm51, %v50
    %s54 = scalar_lea.vmem %s0, 32
    %v55 = vld [vmem:[%s54] sm:$0xff]
    %56 = vrot.lane.b32.xlu0 %v55, 64
    %v57 = vpop.permute.xlu0 %56
    %vm58 = vcmask 523264
    %s59 = scalar_lea.vmem [#allocation0], 65
    %60 = vst.msk [vmem:[%s59] ss:$2 sm:$0xff] %vm58, %v57
    %s61 = scalar_lea.vmem %s0, 48
    %v62 = vld [vmem:[%s61] sm:$0xff]
    %63 = vrot.lane.b32.xlu0 %v62, 64
    %v64 = vpop.permute.xlu0 %63
    %vm65 = vcmask 523264
    %s66 = scalar_lea.vmem [#allocation0], 97
    %67 = vst.msk [vmem:[%s66] ss:$2 sm:$0xff] %vm65, %v64
    %s68 = scalar_lea.vmem %s0, 8
    %v69 = vld [vmem:[%s68] sm:$0xff]
    %70 = vrot.lane.b32.xlu0 %v69, 64
    %v71 = vpop.permute.xlu0 %70
    %vm72 = vcmask 523264
    %s73 = scalar_lea.vmem [#allocation0], 17
    %74 = vst.msk [vmem:[%s73] ss:$2 sm:$0xff] %vm72, %v71
    %s75 = scalar_lea.vmem %s0, 24
    %v76 = vld [vmem:[%s75] sm:$0xff]
    %77 = vrot.lane.b32.xlu0 %v76, 64
    %v78 = vpop.permute.xlu0 %77
    %vm79 = vcmask 523264
    %s80 = scalar_lea.vmem [#allocation0], 49
    %81 = vst.msk [vmem:[%s80] ss:$2 sm:$0xff] %vm79, %v78
    %s82 = scalar_lea.vmem %s0, 40
    %v83 = vld [vmem:[%s82] sm:$0xff]
    %84 = vrot.lane.b32.xlu0 %v83, 64
    %v85 = vpop.permute.xlu0 %84
    %vm86 = vcmask 523264
    %s87 = scalar_lea.vmem [#allocation0], 81
    %88 = vst.msk [vmem:[%s87] ss:$2 sm:$0xff] %vm86, %v85
    %s89 = scalar_lea.vmem %s0, 56
    %v90 = vld [vmem:[%s89] sm:$0xff]
    %91 = vrot.lane.b32.xlu0 %v90, 64
    %v92 = vpop.permute.xlu0 %91
    %vm93 = vcmask 523264
    %s94 = scalar_lea.vmem [#allocation0], 113
    %95 = vst.msk [vmem:[%s94] ss:$2 sm:$0xff] %vm93, %v92
    %97 = vsyncadd [#allocation1], 0
    %s99 = sshll.u32 [#allocation0], 4
    %s100 = int_to_ptr.vmem [resolvable:$true] %s99
    %s101 = sshll.u32 %s1, 4
    %s102 = int_to_ptr.hbm [resolvable:$true] %s101
    %104 = dma.vmem_to_hbm [thread:$0]  %s100, 2048, %s102, [#allocation1]
    %106 = dma.done [#allocation1], 2048
    %107 = vsyncpa [#allocation1], 1

// kernel: unet_forward.19
$region0: #{unet_forward.19}
  #allocation0 [shape = 'u32[]', space=smem, size = 0x4, offset = 0x4, fixed_abs, tag = 'smem constant byte address 0x4 - core index']
  #allocation1 [shape = 'u32[72,128]{1,0:T(1,128)}', space=vmem, size = 0x9000, scoped, tag = 'internal scratch']
  #allocation2 [shape = 'f32[1,1]{1,0:T(1,128)S(1)}', space=vmem, size = 0x200, scoped, tag = 'scoped memory for unet_forward.19']
  %s0 = inlined_call_operand.vmem [shape: bf16[8,288], index: 0, kind: input, shape index: {}]
  %s1 = inlined_call_operand.vmem [shape: bf16[288,8192], index: 1, kind: input, shape index: {}]
  %s2 = inlined_call_operand.<no memory space> [shape: f32[1,1], index: 2, kind: input, shape index: {}]
  %s3 = inlined_call_operand.vmem [shape: f32[8,8192], index: 3, kind: output, shape index: {}]
  %s4 = sld [smem:[#allocation0]]
  $region68: #{unet_forward.19} parent=0
    _
  %s6 = ssub.s32 1, %s4
  %s7 = scalar_select 0, %s6, %s4
  %v8 = vstv %s2
  %9 = vst [vmem:[#allocation2] sm:$0x1] %v8
  $region1: #{unet_forward.19} parent=0
    #allocation3 [shape = 'u8[589824]{0}', space=vmem, size = 0x90000, scoped, tag = 'input window, operand 1']
    loop: start=0, step=1, limit=18
    $region2: #{unet_forward.19} parent=1 // loop_pre_header
      _
    $region3: #{unet_forward.19} parent=1 // loop_header
      %s11 = sphi 0, %s15
      %p12 = scmp.ge.s32.totalorder %s11, 18
      %s19 = sphi 0, %s19
      %s21 = sphi 0, %s19
      %s22 = sphi 0, %s21
      %s36 = sphi 0, %s22
      %s42 = sphi 0, %s44
      %s45 = sphi 0, %s42
      %s46 = sphi 0, %s45
      %s62 = sphi 0, %s46
      %s66 = sphi 0, %s66
      %s68 = sphi 0, %s66
      %s69 = sphi 0, %s68
      %s83 = sphi 0, %s69
      %s89 = sphi 0, %s91
      %s92 = sphi 0, %s89
      %s93 = sphi 0, %s92
      %s109 = sphi 0, %s93
    $region4: #{unet_forward.19} parent=1 // loop_header_branch
      %14 = sbr.rel (%p12) target = $region8
    $region5: #{unet_forward.19} parent=1 // loop_body
      %s16 = ssub.s32 %s11, 1
      %s17 = ssub.s32 %s11, 2
      %s18 = sadd.s32 %s11, 1
      %s20 = sadd.s32 %s19, 1
      %p23 = scmp.eq.s32.totalorder %s11, 15
      %p24 = scmp.ne.s32.totalorder %s19, %s21
      %p25 = scmp.eq.s32.totalorder %s11, 0
      %p26 = por %p24, %p25
      %p27 = scmp.ne.s32.totalorder %s19, %s21
      %p28 = scmp.eq.s32.totalorder %s16, 15
      %p29 = por %p27, %p28
      %p30 = scmp.ne.s32.totalorder %s21, %s22
      %p31 = scmp.eq.s32.totalorder %s16, 0
      %p32 = por %p30, %p31
      %p33 = scmp.ne.s32.totalorder %s21, %s22
      %p34 = scmp.eq.s32.totalorder %s17, 15
      %p35 = por %p33, %p34
      %p37 = scmp.ne.s32.totalorder %s22, %s36
      %p38 = scmp.eq.s32.totalorder %s17, 0
      %p39 = por %p37, %p38
      %s40 = ssub.s32 %s11, %s18
      %p41 = scmp.eq.s32.totalorder %s40, 0
      %s43 = sadd.s32 %s42, 1
      %s44 = scalar_select %p41, %s42, %s43
      %p47 = pneg %p41
      %p48 = scmp.eq.s32.totalorder %s11, 15
      %p49 = por %p47, %p48
      %p50 = scmp.ne.s32.totalorder %s42, %s45
      %p51 = scmp.eq.s32.totalorder %s11, 0
      %p52 = por %p50, %p51
      %p53 = scmp.ne.s32.totalorder %s42, %s45
      %p54 = scmp.eq.s32.totalorder %s16, 15
      %p55 = por %p53, %p54
      %p56 = scmp.ne.s32.totalorder %s45, %s46
      %p57 = scmp.eq.s32.totalorder %s16, 0
      %p58 = por %p56, %p57
      %p59 = scmp.ne.s32.totalorder %s45, %s46
      %p60 = scmp.eq.s32.totalorder %s17, 15
      %p61 = por %p59, %p60
      %p63 = scmp.ne.s32.totalorder %s46, %s62
      %p64 = scmp.eq.s32.totalorder %s17, 0
      %p65 = por %p63, %p64
      %s67 = sadd.s32 %s66, 1
      %p70 = scmp.eq.s32.totalorder %s11, 15
      %p71 = scmp.ne.s32.totalorder %s66, %s68
      %p72 = scmp.eq.s32.totalorder %s11, 0
      %p73 = por %p71, %p72
      %p74 = scmp.ne.s32.totalorder %s66, %s68
      %p75 = scmp.eq.s32.totalorder %s16, 15
      %p76 = por %p74, %p75
      %p77 = scmp.ne.s32.totalorder %s68, %s69
      %p78 = scmp.eq.s32.totalorder %s16, 0
      %p79 = por %p77, %p78
      %p80 = scmp.ne.s32.totalorder %s68, %s69
      %p81 = scmp.eq.s32.totalorder %s17, 15
      %p82 = por %p80, %p81
      %p84 = scmp.ne.s32.totalorder %s69, %s83
      %p85 = scmp.eq.s32.totalorder %s17, 0
      %p86 = por %p84, %p85
      %s87 = ssub.s32 %s11, %s18
      %p88 = scmp.eq.s32.totalorder %s87, 0
      %s90 = sadd.s32 %s89, 1
      %s91 = scalar_select %p88, %s89, %s90
      %p94 = pneg %p88
      %p95 = scmp.eq.s32.totalorder %s11, 15
      %p96 = por %p94, %p95
      %p97 = scmp.ne.s32.totalorder %s89, %s92
      %p98 = scmp.eq.s32.totalorder %s11, 0
      %p99 = por %p97, %p98
      %p100 = scmp.ne.s32.totalorder %s89, %s92
      %p101 = scmp.eq.s32.totalorder %s16, 15
      %p102 = por %p100, %p101
      %p103 = scmp.ne.s32.totalorder %s92, %s93
      %p104 = scmp.eq.s32.totalorder %s16, 0
      %p105 = por %p103, %p104
      %p106 = scmp.ne.s32.totalorder %s92, %s93
      %p107 = scmp.eq.s32.totalorder %s17, 15
      %p108 = por %p106, %p107
      %p110 = scmp.ne.s32.totalorder %s93, %s109
      %p111 = scmp.eq.s32.totalorder %s17, 0
      %p112 = por %p110, %p111
      %p113 = scmp.le.s32.totalorder 1, %s11
      %p114 = scmp.lt.s32.totalorder %s11, 17
      %p115 = pnand %p113, %p114
      %p116 = pneg %p115
      // Predicated region
      $region9: #{unet_forward.19} parent=5 // pred_check
        _
      $region10: #{unet_forward.19} parent=5 // pred_check_branch
        %118 = sbr.rel (%p115) target = $region12
      $region11: #{unet_forward.19} parent=5 // pred_region
        %s119 = ssub.s32 %s11, 1
        // Predicated region
        $region13: #{unet_forward.19} parent=11 // pred_check
          %p120 = pneg %p32
        $region14: #{unet_forward.19} parent=11 // pred_check_branch
          %122 = sbr.rel (%p120) target = $region16
        $region15: #{unet_forward.19} parent=11 // pred_region
          _
        $region16: #{unet_forward.19} parent=11 // pred_fallthru
          _
        // Predicated region
        $region17: #{unet_forward.19} parent=11 // pred_check
          %p123 = pneg %p79
        $region18: #{unet_forward.19} parent=11 // pred_check_branch
          %125 = sbr.rel (%p123) target = $region20
        $region19: #{unet_forward.19} parent=11 // pred_region
          _
        $region20: #{unet_forward.19} parent=11 // pred_fallthru
          _
      $region12: #{unet_forward.19} parent=5 // pred_fallthru
        _
      %p126 = scmp.lt.s32.totalorder %s11, 16
      // Predicated region
      $region21: #{unet_forward.19} parent=5 // pred_check
        %p127 = pneg %p126
      $region22: #{unet_forward.19} parent=5 // pred_check_branch
        %129 = sbr.rel (%p127) target = $region24
      $region23: #{unet_forward.19} parent=5 // pred_region
        // Predicated region
        $region25: #{unet_forward.19} parent=23 // pred_check
          %p130 = pneg %p52
        $region26: #{unet_forward.19} parent=23 // pred_check_branch
          %132 = sbr.rel (%p130) target = $region28
        $region27: #{unet_forward.19} parent=23 // pred_region
          %s133 = sand.u32 %s42, 1
          %s134 = sand.u32 %s42, 1
          %s135 = smul.addr %s134, 576
          %s136 = scalar_lea.vmem [#allocation3], %s135
          %s137 = smul.u32 4, %s11
          %s138 = smul.addr %s137, 4
          %s139 = scalar_lea.vmem %s1, %s138
          // Predicated region
          $region29: #{unet_forward.19} parent=27 // pred_check
            _
          $region30: #{unet_forward.19} parent=27 // pred_check_branch
            %141 = sbr.rel (0) target = $region32
          $region31: #{unet_forward.19} parent=27 // pred_region
            // Predicated region
            $region33: #{unet_forward.19} parent=31 // pred_check
              _
            $region34: #{unet_forward.19} parent=31 // pred_check_branch
              %143 = sbr.rel (0) target = $region36
            $region35: #{unet_forward.19} parent=31 // pred_region
              loop: start=0, step=1, limit=1
              $region37: #{unet_forward.19} parent=35 // loop_pre_header
                _
              $region38: #{unet_forward.19} parent=35 // loop_header
                %s145 = sphi 0, %s149
                %p146 = scmp.ge.s32.totalorder %s145, 1
                %s150 = sphi %s139, %s139
                %s151 = sphi %s136, %s136
              $region39: #{unet_forward.19} parent=35 // loop_header_branch
                %148 = sbr.rel (%p146) target = $region43
              $region40: #{unet_forward.19} parent=35 // loop_body
                %v152 = vld [vmem:[%s150] sm:$0xff]
                %153 = vst [vmem:[%s151] sm:$0xff] %v152
                %v154 = vld [vmem:[%s150 + $0x8] sm:$0xff]
                %155 = vst [vmem:[%s151 + $0x8] sm:$0xff] %v154
                %v156 = vld [vmem:[%s150 + $0x100] sm:$0xff]
                %157 = vst [vmem:[%s151 + $0x10] sm:$0xff] %v156
                %v158 = vld [vmem:[%s150 + $0x108] sm:$0xff]
                %159 = vst [vmem:[%s151 + $0x18] sm:$0xff] %v158
                %v160 = vld [vmem:[%s150 + $0x200] sm:$0xff]
                %161 = vst [vmem:[%s151 + $0x20] sm:$0xff] %v160
                %v162 = vld [vmem:[%s150 + $0x208] sm:$0xff]
                %163 = vst [vmem:[%s151 + $0x28] sm:$0xff] %v162
                %v164 = vld [vmem:[%s150 + $0x300] sm:$0xff]
                %165 = vst [vmem:[%s151 + $0x30] sm:$0xff] %v164
                %v166 = vld [vmem:[%s150 + $0x308] sm:$0xff]
                %167 = vst [vmem:[%s151 + $0x38] sm:$0xff] %v166
                %v168 = vld [vmem:[%s150 + $0x400] sm:$0xff]
                %169 = vst [vmem:[%s151 + $0x40] sm:$0xff] %v168
                %v170 = vld [vmem:[%s150 + $0x408] sm:$0xff]
                %171 = vst [vmem:[%s151 + $0x48] sm:$0xff] %v170
                %v172 = vld [vmem:[%s150 + $0x500] sm:$0xff]
                %173 = vst [vmem:[%s151 + $0x50] sm:$0xff] %v172
                %v174 = vld [vmem:[%s150 + $0x508] sm:$0xff]
                %175 = vst [vmem:[%s151 + $0x58] sm:$0xff] %v174
                %v176 = vld [vmem:[%s150 + $0x600] sm:$0xff]
                %177 = vst [vmem:[%s151 + $0x60] sm:$0xff] %v176
                %v178 = vld [vmem:[%s150 + $0x608] sm:$0xff]
                %179 = vst [vmem:[%s151 + $0x68] sm:$0xff] %v178
                %v180 = vld [vmem:[%s150 + $0x700] sm:$0xff]
                %181 = vst [vmem:[%s151 + $0x70] sm:$0xff] %v180
                %v182 = vld [vmem:[%s150 + $0x708] sm:$0xff]
                %183 = vst [vmem:[%s151 + $0x78] sm:$0xff] %v182
                %v184 = vld [vmem:[%s150 + $0x800] sm:$0xff]
                %185 = vst [vmem:[%s151 + $0x80] sm:$0xff] %v184
                %v186 = vld [vmem:[%s150 + $0x808] sm:$0xff]
                %187 = vst [vmem:[%s151 + $0x88] sm:$0xff] %v186
                %v188 = vld [vmem:[%s150 + $0x900] sm:$0xff]
                %189 = vst [vmem:[%s151 + $0x90] sm:$0xff] %v188
                %v190 = vld [vmem:[%s150 + $0x908] sm:$0xff]
                %191 = vst [vmem:[%s151 + $0x98] sm:$0xff] %v190
                %v192 = vld [vmem:[%s150 + $0xa00] sm:$0xff]
                %193 = vst [vmem:[%s151 + $0xa0] sm:$0xff] %v192
                %v194 = vld [vmem:[%s150 + $0xa08] sm:$0xff]
                %195 = vst [vmem:[%s151 + $0xa8] sm:$0xff] %v194
                %v196 = vld [vmem:[%s150 + $0xb00] sm:$0xff]
                %197 = vst [vmem:[%s151 + $0xb0] sm:$0xff] %v196
                %v198 = vld [vmem:[%s150 + $0xb08] sm:$0xff]
                %199 = vst [vmem:[%s151 + $0xb8] sm:$0xff] %v198
                %v200 = vld [vmem:[%s150 + $0xc00] sm:$0xff]
                %201 = vst [vmem:[%s151 + $0xc0] sm:$0xff] %v200
                %v202 = vld [vmem:[%s150 + $0xc08] sm:$0xff]
                %203 = vst [vmem:[%s151 + $0xc8] sm:$0xff] %v202
                %v204 = vld [vmem:[%s150 + $0xd00] sm:$0xff]
                %205 = vst [vmem:[%s151 + $0xd0] sm:$0xff] %v204
                %v206 = vld [vmem:[%s150 + $0xd08] sm:$0xff]
                %207 = vst [vmem:[%s151 + $0xd8] sm:$0xff] %v206
                %v208 = vld [vmem:[%s150 + $0xe00] sm:$0xff]
                %209 = vst [vmem:[%s151 + $0xe0] sm:$0xff] %v208
                %v210 = vld [vmem:[%s150 + $0xe08] sm:$0xff]
                %211 = vst [vmem:[%s151 + $0xe8] sm:$0xff] %v210
                %v212 = vld [vmem:[%s150 + $0xf00] sm:$0xff]
                %213 = vst [vmem:[%s151 + $0xf0] sm:$0xff] %v212
                %v214 = vld [vmem:[%s150 + $0xf08] sm:$0xff]
                %215 = vst [vmem:[%s151 + $0xf8] sm:$0xff] %v214
                %v216 = vld [vmem:[%s150 + $0x1000] sm:$0xff]
                %217 = vst [vmem:[%s151 + $0x100] sm:$0xff] %v216
                %v218 = vld [vmem:[%s150 + $0x1008] sm:$0xff]
                %219 = vst [vmem:[%s151 + $0x108] sm:$0xff] %v218
                %v220 = vld [vmem:[%s150 + $0x1100] sm:$0xff]
                %221 = vst [vmem:[%s151 + $0x110] sm:$0xff] %v220
                %v222 = vld [vmem:[%s150 + $0x1108] sm:$0xff]
                %223 = vst [vmem:[%s151 + $0x118] sm:$0xff] %v222
                %v224 = vld [vmem:[%s150 + $0x1200] sm:$0xff]
                %225 = vst [vmem:[%s151 + $0x120] sm:$0xff] %v224
                %v226 = vld [vmem:[%s150 + $0x1208] sm:$0xff]
                %227 = vst [vmem:[%s151 + $0x128] sm:$0xff] %v226
                %v228 = vld [vmem:[%s150 + $0x1300] sm:$0xff]
                %229 = vst [vmem:[%s151 + $0x130] sm:$0xff] %v228
                %v230 = vld [vmem:[%s150 + $0x1308] sm:$0xff]
                %231 = vst [vmem:[%s151 + $0x138] sm:$0xff] %v230
                %v232 = vld [vmem:[%s150 + $0x1400] sm:$0xff]
                %233 = vst [vmem:[%s151 + $0x140] sm:$0xff] %v232
                %v234 = vld [vmem:[%s150 + $0x1408] sm:$0xff]
                %235 = vst [vmem:[%s151 + $0x148] sm:$0xff] %v234
                %v236 = vld [vmem:[%s150 + $0x1500] sm:$0xff]
                %237 = vst [vmem:[%s151 + $0x150] sm:$0xff] %v236
                %v238 = vld [vmem:[%s150 + $0x1508] sm:$0xff]
                %239 = vst [vmem:[%s151 + $0x158] sm:$0xff] %v238
                %v240 = vld [vmem:[%s150 + $0x1600] sm:$0xff]
                %241 = vst [vmem:[%s151 + $0x160] sm:$0xff] %v240
                %v242 = vld [vmem:[%s150 + $0x1608] sm:$0xff]
                %243 = vst [vmem:[%s151 + $0x168] sm:$0xff] %v242
                %v244 = vld [vmem:[%s150 + $0x1700] sm:$0xff]
                %245 = vst [vmem:[%s151 + $0x170] sm:$0xff] %v244
                %v246 = vld [vmem:[%s150 + $0x1708] sm:$0xff]
                %247 = vst [vmem:[%s151 + $0x178] sm:$0xff] %v246
                %v248 = vld [vmem:[%s150 + $0x1800] sm:$0xff]
                %249 = vst [vmem:[%s151 + $0x180] sm:$0xff] %v248
                %v250 = vld [vmem:[%s150 + $0x1808] sm:$0xff]
                %251 = vst [vmem:[%s151 + $0x188] sm:$0xff] %v250
                %v252 = vld [vmem:[%s150 + $0x1900] sm:$0xff]
                %253 = vst [vmem:[%s151 + $0x190] sm:$0xff] %v252
                %v254 = vld [vmem:[%s150 + $0x1908] sm:$0xff]
                %255 = vst [vmem:[%s151 + $0x198] sm:$0xff] %v254
                %v256 = vld [vmem:[%s150 + $0x1a00] sm:$0xff]
                %257 = vst [vmem:[%s151 + $0x1a0] sm:$0xff] %v256
                %v258 = vld [vmem:[%s150 + $0x1a08] sm:$0xff]
                %259 = vst [vmem:[%s151 + $0x1a8] sm:$0xff] %v258
                %v260 = vld [vmem:[%s150 + $0x1b00] sm:$0xff]
                %261 = vst [vmem:[%s151 + $0x1b0] sm:$0xff] %v260
                %v262 = vld [vmem:[%s150 + $0x1b08] sm:$0xff]
                %263 = vst [vmem:[%s151 + $0x1b8] sm:$0xff] %v262
                %v264 = vld [vmem:[%s150 + $0x1c00] sm:$0xff]
                %265 = vst [vmem:[%s151 + $0x1c0] sm:$0xff] %v264
                %v266 = vld [vmem:[%s150 + $0x1c08] sm:$0xff]
                %267 = vst [vmem:[%s151 + $0x1c8] sm:$0xff] %v266
                %v268 = vld [vmem:[%s150 + $0x1d00] sm:$0xff]
                %269 = vst [vmem:[%s151 + $0x1d0] sm:$0xff] %v268
                %v270 = vld [vmem:[%s150 + $0x1d08] sm:$0xff]
                %271 = vst [vmem:[%s151 + $0x1d8] sm:$0xff] %v270
                %v272 = vld [vmem:[%s150 + $0x1e00] sm:$0xff]
                %273 = vst [vmem:[%s151 + $0x1e0] sm:$0xff] %v272
                %v274 = vld [vmem:[%s150 + $0x1e08] sm:$0xff]
                %275 = vst [vmem:[%s151 + $0x1e8] sm:$0xff] %v274
                %v276 = vld [vmem:[%s150 + $0x1f00] sm:$0xff]
                %277 = vst [vmem:[%s151 + $0x1f0] sm:$0xff] %v276
                %v278 = vld [vmem:[%s150 + $0x1f08] sm:$0xff]
                %279 = vst [vmem:[%s151 + $0x1f8] sm:$0xff] %v278
                %v280 = vld [vmem:[%s150 + $0x2000] sm:$0xff]
                %281 = vst [vmem:[%s151 + $0x200] sm:$0xff] %v280
                %v282 = vld [vmem:[%s150 + $0x2008] sm:$0xff]
                %283 = vst [vmem:[%s151 + $0x208] sm:$0xff] %v282
                %v284 = vld [vmem:[%s150 + $0x2100] sm:$0xff]
                %285 = vst [vmem:[%s151 + $0x210] sm:$0xff] %v284
                %v286 = vld [vmem:[%s150 + $0x2108] sm:$0xff]
                %287 = vst [vmem:[%s151 + $0x218] sm:$0xff] %v286
                %v288 = vld [vmem:[%s150 + $0x2200] sm:$0xff]
                %289 = vst [vmem:[%s151 + $0x220] sm:$0xff] %v288
                %v290 = vld [vmem:[%s150 + $0x2208] sm:$0xff]
                %291 = vst [vmem:[%s151 + $0x228] sm:$0xff] %v290
                %v292 = vld [vmem:[%s150 + $0x2300] sm:$0xff]
                %293 = vst [vmem:[%s151 + $0x230] sm:$0xff] %v292
                %v294 = vld [vmem:[%s150 + $0x2308] sm:$0xff]
                %295 = vst [vmem:[%s151 + $0x238] sm:$0xff] %v294
              $region41: #{unet_forward.19} parent=35 // loop_footer
                %s149 = sadd.s32 1, %s145
              $region42: #{unet_forward.19} parent=35 // loop_footer_branch
                %144 = sbr.rel target = $region38
              $region43: #{unet_forward.19} parent=35 // loop_exit
                _
            $region36: #{unet_forward.19} parent=31 // pred_fallthru
              _
            // Predicated region
            $region44: #{unet_forward.19} parent=31 // pred_check
              _
            $region45: #{unet_forward.19} parent=31 // pred_check_branch
              %297 = sbr.rel target = $region47
            $region46: #{unet_forward.19} parent=31 // pred_region
              _
            $region47: #{unet_forward.19} parent=31 // pred_fallthru
              _
          $region32: #{unet_forward.19} parent=27 // pred_fallthru
            _
          %298 = vnop
        $region28: #{unet_forward.19} parent=23 // pred_fallthru
          _
      $region24: #{unet_forward.19} parent=5 // pred_fallthru
        _
      %p299 = scmp.le.s32.totalorder 1, %s11
      %p300 = scmp.lt.s32.totalorder %s11, 17
      %p301 = pnand %p299, %p300
      %p302 = pneg %p301
      // Predicated region
      $region48: #{unet_forward.19} parent=5 // pred_check
        _
      $region49: #{unet_forward.19} parent=5 // pred_check_branch
        %304 = sbr.rel (%p301) target = $region51
      $region50: #{unet_forward.19} parent=5 // pred_region
        %s305 = ssub.s32 %s11, 1
        %s306 = sand.u32 %s45, 1
        %s307 = sand.u32 %s45, 1
        %s308 = smul.addr %s307, 576
        %s309 = scalar_lea.vmem [#allocation3], %s308
        // Predicated region
        $region52: #{unet_forward.19} parent=50 // pred_check
          %p310 = pneg %p58
        $region53: #{unet_forward.19} parent=50 // pred_check_branch
          %312 = sbr.rel (%p310) target = $region55
        $region54: #{unet_forward.19} parent=50 // pred_region
          _
        $region55: #{unet_forward.19} parent=50 // pred_fallthru
          _
        %p313 = pneg %p32
        %p314 = pneg %p29
        %s315 = sand.u32 %s45, 1
        %s316 = sand.u32 %s45, 1
        %s317 = smul.addr %s316, 576
        %s318 = scalar_lea.vmem [#allocation3], %s317
        %p319 = pneg %p58
        %p320 = pneg %p55
        %p321 = pneg %p79
        %p322 = pneg %p76
        %p323 = pneg %p105
        %p324 = pneg %p102
        %s325 = smul.u32 4, %s16
        %p326 = scmp.lt.s32.totalorder %s325, 63
        %s327 = scalar_select %p326, %s325, 63
        %s328 = smul.addr %s327, 8
        %s329 = scalar_lea.vmem %s3, %s328
        %s330 = smul.u32 4, %s16
        %s331 = smul.u32 4, %s16
        %p332 = scmp.lt.s32.totalorder %s331, 63
        %s333 = scalar_select %p332, %s331, 63
        %s334 = smul.addr %s333, 8
        %s335 = scalar_lea.vmem %s3, %s334
        %s336 = smul.u32 4, %s16
        %v338 = vld [vmem:[%s0] sm:$0xff]
        %v339 = vld [vmem:[%s0 + $0x8] sm:$0xf]
        %v340 = vld [vmem:[%s309] sm:$0xff]
        %v341 = vld [vmem:[%s309 + $0x8] sm:$0xff]
        %v342 = vld [vmem:[%s309 + $0x10] sm:$0xff]
        %v343 = vld [vmem:[%s309 + $0x18] sm:$0xff]
        %v344 = vld [vmem:[%s309 + $0x20] sm:$0xff]
        %v345 = vld [vmem:[%s309 + $0x28] sm:$0xff]
        %v346 = vld [vmem:[%s309 + $0x30] sm:$0xff]
        %v347 = vld [vmem:[%s309 + $0x38] sm:$0xff]
        %v348 = vld [vmem:[%s309 + $0x40] sm:$0xff]
        %v349 = vld [vmem:[%s309 + $0x48] sm:$0xff]
        %v350 = vld [vmem:[%s309 + $0x50] sm:$0xff]
        %v351 = vld [vmem:[%s309 + $0x58] sm:$0xff]
        %v352 = vld [vmem:[%s309 + $0x60] sm:$0xff]
        %v353 = vld [vmem:[%s309 + $0x68] sm:$0xff]
        %v354 = vld [vmem:[%s309 + $0x70] sm:$0xff]
        %v355 = vld [vmem:[%s309 + $0x78] sm:$0xff]
        %v356 = vld [vmem:[%s309 + $0x80] sm:$0xff]
        %v357 = vld [vmem:[%s309 + $0x88] sm:$0xff]
        %v358 = vld [vmem:[%s309 + $0x90] sm:$0xff]
        %v359 = vld [vmem:[%s309 + $0x98] sm:$0xff]
        %v360 = vld [vmem:[%s309 + $0xa0] sm:$0xff]
        %v361 = vld [vmem:[%s309 + $0xa8] sm:$0xff]
        %v362 = vld [vmem:[%s309 + $0xb0] sm:$0xff]
        %v363 = vld [vmem:[%s309 + $0xb8] sm:$0xff]
        %v364 = vld [vmem:[%s309 + $0xc0] sm:$0xff]
        %v365 = vld [vmem:[%s309 + $0xc8] sm:$0xff]
        %v366 = vld [vmem:[%s309 + $0xd0] sm:$0xff]
        %v367 = vld [vmem:[%s309 + $0xd8] sm:$0xff]
        %v368 = vld [vmem:[%s309 + $0xe0] sm:$0xff]
        %v369 = vld [vmem:[%s309 + $0xe8] sm:$0xff]
        %v370 = vld [vmem:[%s309 + $0xf0] sm:$0xff]
        %v371 = vld [vmem:[%s309 + $0xf8] sm:$0xff]
        %v372 = vld [vmem:[%s309 + $0x100] sm:$0xff]
        %v373 = vld [vmem:[%s309 + $0x108] sm:$0xff]
        %v374 = vld [vmem:[%s309 + $0x110] sm:$0xff]
        %v375 = vld [vmem:[%s309 + $0x118] sm:$0xff]
        %v376 = vld [vmem:[%s309 + $0x120] sm:$0xff]
        %v377 = vld [vmem:[%s309 + $0x128] sm:$0xff]
        %v378 = vld [vmem:[%s309 + $0x130] sm:$0xff]
        %v379 = vld [vmem:[%s309 + $0x138] sm:$0xff]
        %v380 = vld [vmem:[%s309 + $0x140] sm:$0xff]
        %v381 = vld [vmem:[%s309 + $0x148] sm:$0xff]
        %v382 = vld [vmem:[%s309 + $0x150] sm:$0xff]
        %v383 = vld [vmem:[%s309 + $0x158] sm:$0xff]
        %v384 = vld [vmem:[%s309 + $0x160] sm:$0xff]
        %v385 = vld [vmem:[%s309 + $0x168] sm:$0xff]
        %v386 = vld [vmem:[%s309 + $0x170] sm:$0xff]
        %v387 = vld [vmem:[%s309 + $0x178] sm:$0xff]
        %v388 = vld [vmem:[%s309 + $0x180] sm:$0xff]
        %v389 = vld [vmem:[%s309 + $0x188] sm:$0xff]
        %v390 = vld [vmem:[%s309 + $0x190] sm:$0xff]
        %v391 = vld [vmem:[%s309 + $0x198] sm:$0xff]
        %v392 = vld [vmem:[%s309 + $0x1a0] sm:$0xff]
        %v393 = vld [vmem:[%s309 + $0x1a8] sm:$0xff]
        %v394 = vld [vmem:[%s309 + $0x1b0] sm:$0xff]
        %v395 = vld [vmem:[%s309 + $0x1b8] sm:$0xff]
        %v396 = vld [vmem:[%s309 + $0x1c0] sm:$0xff]
        %v397 = vld [vmem:[%s309 + $0x1c8] sm:$0xff]
        %v398 = vld [vmem:[%s309 + $0x1d0] sm:$0xff]
        %v399 = vld [vmem:[%s309 + $0x1d8] sm:$0xff]
        %v400 = vld [vmem:[%s309 + $0x1e0] sm:$0xff]
        %v401 = vld [vmem:[%s309 + $0x1e8] sm:$0xff]
        %v402 = vld [vmem:[%s309 + $0x1f0] sm:$0xff]
        %v403 = vld [vmem:[%s309 + $0x1f8] sm:$0xff]
        %v404 = vld [vmem:[%s309 + $0x200] sm:$0xff]
        %v405 = vld [vmem:[%s309 + $0x208] sm:$0xff]
        %v406 = vld [vmem:[%s309 + $0x210] sm:$0xff]
        %v407 = vld [vmem:[%s309 + $0x218] sm:$0xff]
        %v408 = vld [vmem:[%s309 + $0x220] sm:$0xff]
        %v409 = vld [vmem:[%s309 + $0x228] sm:$0xff]
        %v410 = vld [vmem:[%s309 + $0x230] sm:$0xff]
        %v411 = vld [vmem:[%s309 + $0x238] sm:$0xff]
        %v412 = vld [vmem:[#allocation2] sm:$0x1]
        %v414 = vperm.slane %v412, 0
        %415 = vset.pattern.permute.xlu0 0
        %416 = vperm.xlu0 %415, %v414
        %v417 = vpop.permute.xlu0 %416
        %v421 = vunpack.c.l.b16 %v338
        %v422 = vunpack.c.h.b16 %v338
        %v423 = vunpack.c.l.b16 %v339
        %v424 = vpack.c.b16 %v421, %v421
        %v425 = vpack.c.b16 %v422, %v422
        %v426 = vpack.c.b16 %v423, %v423
        %v501 = vunpack.c.l.b16 %v340
        %v502 = vunpack.c.h.b16 %v340
        %v503 = vunpack.c.l.b16 %v341
        %v504 = vunpack.c.h.b16 %v341
        %v505 = vunpack.c.l.b16 %v342
        %v506 = vunpack.c.h.b16 %v342
        %v507 = vunpack.c.l.b16 %v343
        %v508 = vunpack.c.h.b16 %v343
        %v509 = vunpack.c.l.b16 %v344
        %v510 = vunpack.c.h.b16 %v344
        %v511 = vunpack.c.l.b16 %v345
        %v512 = vunpack.c.h.b16 %v345
        %v513 = vunpack.c.l.b16 %v346
        %v514 = vunpack.c.h.b16 %v346
        %v515 = vunpack.c.l.b16 %v347
        %v516 = vunpack.c.h.b16 %v347
        %v517 = vunpack.c.l.b16 %v348
        %v518 = vunpack.c.h.b16 %v348
        %v519 = vunpack.c.l.b16 %v349
        %v520 = vunpack.c.h.b16 %v349
        %v521 = vunpack.c.l.b16 %v350
        %v522 = vunpack.c.h.b16 %v350
        %v523 = vunpack.c.l.b16 %v351
        %v524 = vunpack.c.h.b16 %v351
        %v525 = vunpack.c.l.b16 %v352
        %v526 = vunpack.c.h.b16 %v352
        %v527 = vunpack.c.l.b16 %v353
        %v528 = vunpack.c.h.b16 %v353
        %v529 = vunpack.c.l.b16 %v354
        %v530 = vunpack.c.h.b16 %v354
        %v531 = vunpack.c.l.b16 %v355
        %v532 = vunpack.c.h.b16 %v355
        %v533 = vunpack.c.l.b16 %v356
        %v534 = vunpack.c.h.b16 %v356
        %v535 = vunpack.c.l.b16 %v357
        %v536 = vunpack.c.h.b16 %v357
        %v537 = vunpack.c.l.b16 %v358
        %v538 = vunpack.c.h.b16 %v358
        %v539 = vunpack.c.l.b16 %v359
        %v540 = vunpack.c.h.b16 %v359
        %v541 = vunpack.c.l.b16 %v360
        %v542 = vunpack.c.h.b16 %v360
        %v543 = vunpack.c.l.b16 %v361
        %v544 = vunpack.c.h.b16 %v361
        %v545 = vunpack.c.l.b16 %v362
        %v546 = vunpack.c.h.b16 %v362
        %v547 = vunpack.c.l.b16 %v363
        %v548 = vunpack.c.h.b16 %v363
        %v549 = vunpack.c.l.b16 %v364
        %v550 = vunpack.c.h.b16 %v364
        %v551 = vunpack.c.l.b16 %v365
        %v552 = vunpack.c.h.b16 %v365
        %v553 = vunpack.c.l.b16 %v366
        %v554 = vunpack.c.h.b16 %v366
        %v555 = vunpack.c.l.b16 %v367
        %v556 = vunpack.c.h.b16 %v367
        %v557 = vunpack.c.l.b16 %v368
        %v558 = vunpack.c.h.b16 %v368
        %v559 = vunpack.c.l.b16 %v369
        %v560 = vunpack.c.h.b16 %v369
        %v561 = vunpack.c.l.b16 %v370
        %v562 = vunpack.c.h.b16 %v370
        %v563 = vunpack.c.l.b16 %v371
        %v564 = vunpack.c.h.b16 %v371
        %v565 = vunpack.c.l.b16 %v372
        %v566 = vunpack.c.h.b16 %v372
        %v567 = vunpack.c.l.b16 %v373
        %v568 = vunpack.c.h.b16 %v373
        %v569 = vunpack.c.l.b16 %v374
        %v570 = vunpack.c.h.b16 %v374
        %v571 = vunpack.c.l.b16 %v375
        %v572 = vunpack.c.h.b16 %v375
        %v573 = vunpack.c.l.b16 %v376
        %v574 = vunpack.c.h.b16 %v376
        %v575 = vunpack.c.l.b16 %v377
        %v576 = vunpack.c.h.b16 %v377
        %v577 = vunpack.c.l.b16 %v378
        %v578 = vunpack.c.h.b16 %v378
        %v579 = vunpack.c.l.b16 %v379
        %v580 = vunpack.c.h.b16 %v379
        %v581 = vunpack.c.l.b16 %v380
        %v582 = vunpack.c.h.b16 %v380
        %v583 = vunpack.c.l.b16 %v381
        %v584 = vunpack.c.h.b16 %v381
        %v585 = vunpack.c.l.b16 %v382
        %v586 = vunpack.c.h.b16 %v382
        %v587 = vunpack.c.l.b16 %v383
        %v588 = vunpack.c.h.b16 %v383
        %v589 = vunpack.c.l.b16 %v384
        %v590 = vunpack.c.h.b16 %v384
        %v591 = vunpack.c.l.b16 %v385
        %v592 = vunpack.c.h.b16 %v385
        %v593 = vunpack.c.l.b16 %v386
        %v594 = vunpack.c.h.b16 %v386
        %v595 = vunpack.c.l.b16 %v387
        %v596 = vunpack.c.h.b16 %v387
        %v597 = vunpack.c.l.b16 %v388
        %v598 = vunpack.c.h.b16 %v388
        %v599 = vunpack.c.l.b16 %v389
        %v600 = vunpack.c.h.b16 %v389
        %v601 = vunpack.c.l.b16 %v390
        %v602 = vunpack.c.h.b16 %v390
        %v603 = vunpack.c.l.b16 %v391
        %v604 = vunpack.c.h.b16 %v391
        %v605 = vunpack.c.l.b16 %v392
        %v606 = vunpack.c.h.b16 %v392
        %v607 = vunpack.c.l.b16 %v393
        %v608 = vunpack.c.h.b16 %v393
        %v609 = vunpack.c.l.b16 %v394
        %v610 = vunpack.c.h.b16 %v394
        %v611 = vunpack.c.l.b16 %v395
        %v612 = vunpack.c.h.b16 %v395
        %v613 = vunpack.c.l.b16 %v396
        %v614 = vunpack.c.h.b16 %v396
        %v615 = vunpack.c.l.b16 %v397
        %v616 = vunpack.c.h.b16 %v397
        %v617 = vunpack.c.l.b16 %v398
        %v618 = vunpack.c.h.b16 %v398
        %v619 = vunpack.c.l.b16 %v399
        %v620 = vunpack.c.h.b16 %v399
        %v621 = vunpack.c.l.b16 %v400
        %v622 = vunpack.c.h.b16 %v400
        %v623 = vunpack.c.l.b16 %v401
        %v624 = vunpack.c.h.b16 %v401
        %v625 = vunpack.c.l.b16 %v402
        %v626 = vunpack.c.h.b16 %v402
        %v627 = vunpack.c.l.b16 %v403
        %v628 = vunpack.c.h.b16 %v403
        %v629 = vunpack.c.l.b16 %v404
        %v630 = vunpack.c.h.b16 %v404
        %v631 = vunpack.c.l.b16 %v405
        %v632 = vunpack.c.h.b16 %v405
        %v633 = vunpack.c.l.b16 %v406
        %v634 = vunpack.c.h.b16 %v406
        %v635 = vunpack.c.l.b16 %v407
        %v636 = vunpack.c.h.b16 %v407
        %v637 = vunpack.c.l.b16 %v408
        %v638 = vunpack.c.h.b16 %v408
        %v639 = vunpack.c.l.b16 %v409
        %v640 = vunpack.c.h.b16 %v409
        %v641 = vunpack.c.l.b16 %v410
        %v642 = vunpack.c.h.b16 %v410
        %v643 = vunpack.c.l.b16 %v411
        %v644 = vunpack.c.h.b16 %v411
        %v645 = vpack.c.b16 %v505, %v501
        %v646 = vpack.c.b16 %v506, %v502
        %v647 = vpack.c.b16 %v507, %v503
        %v648 = vpack.c.b16 %v508, %v504
        %v649 = vpack.c.b16 %v513, %v509
        %v650 = vpack.c.b16 %v514, %v510
        %v651 = vpack.c.b16 %v515, %v511
        %v652 = vpack.c.b16 %v516, %v512
        %v653 = vpack.c.b16 %v521, %v517
        %v654 = vpack.c.b16 %v522, %v518
        %v655 = vpack.c.b16 %v523, %v519
        %v656 = vpack.c.b16 %v524, %v520
        %v657 = vpack.c.b16 %v529, %v525
        %v658 = vpack.c.b16 %v530, %v526
        %v659 = vpack.c.b16 %v531, %v527
        %v660 = vpack.c.b16 %v532, %v528
        %v661 = vpack.c.b16 %v537, %v533
        %v662 = vpack.c.b16 %v538, %v534
        %v663 = vpack.c.b16 %v539, %v535
        %v664 = vpack.c.b16 %v540, %v536
        %v665 = vpack.c.b16 %v545, %v541
        %v666 = vpack.c.b16 %v546, %v542
        %v667 = vpack.c.b16 %v547, %v543
        %v668 = vpack.c.b16 %v548, %v544
        %v669 = vpack.c.b16 %v553, %v549
        %v670 = vpack.c.b16 %v554, %v550
        %v671 = vpack.c.b16 %v555, %v551
        %v672 = vpack.c.b16 %v556, %v552
        %v673 = vpack.c.b16 %v561, %v557
        %v674 = vpack.c.b16 %v562, %v558
        %v675 = vpack.c.b16 %v563, %v559
        %v676 = vpack.c.b16 %v564, %v560
        %v677 = vpack.c.b16 %v569, %v565
        %v678 = vpack.c.b16 %v570, %v566
        %v679 = vpack.c.b16 %v571, %v567
        %v680 = vpack.c.b16 %v572, %v568
        %v681 = vpack.c.b16 %v577, %v573
        %v682 = vpack.c.b16 %v578, %v574
        %v683 = vpack.c.b16 %v579, %v575
        %v684 = vpack.c.b16 %v580, %v576
        %v685 = vpack.c.b16 %v585, %v581
        %v686 = vpack.c.b16 %v586, %v582
        %v687 = vpack.c.b16 %v587, %v583
        %v688 = vpack.c.b16 %v588, %v584
        %v689 = vpack.c.b16 %v593, %v589
        %v690 = vpack.c.b16 %v594, %v590
        %v691 = vpack.c.b16 %v595, %v591
        %v692 = vpack.c.b16 %v596, %v592
        %v693 = vpack.c.b16 %v601, %v597
        %v694 = vpack.c.b16 %v602, %v598
        %v695 = vpack.c.b16 %v603, %v599
        %v696 = vpack.c.b16 %v604, %v600
        %v697 = vpack.c.b16 %v609, %v605
        %v698 = vpack.c.b16 %v610, %v606
        %v699 = vpack.c.b16 %v611, %v607
        %v700 = vpack.c.b16 %v612, %v608
        %v701 = vpack.c.b16 %v617, %v613
        %v702 = vpack.c.b16 %v618, %v614
        %v703 = vpack.c.b16 %v619, %v615
        %v704 = vpack.c.b16 %v620, %v616
        %v705 = vpack.c.b16 %v625, %v621
        %v706 = vpack.c.b16 %v626, %v622
        %v707 = vpack.c.b16 %v627, %v623
        %v708 = vpack.c.b16 %v628, %v624
        %v709 = vpack.c.b16 %v633, %v629
        %v710 = vpack.c.b16 %v634, %v630
        %v711 = vpack.c.b16 %v635, %v631
        %v712 = vpack.c.b16 %v636, %v632
        %v713 = vpack.c.b16 %v641, %v637
        %v714 = vpack.c.b16 %v642, %v638
        %v715 = vpack.c.b16 %v643, %v639
        %v716 = vpack.c.b16 %v644, %v640
        %vm789 = vcmask 261120
        %v791 = vsel %vm789, %v426, 0
        %793 = vmatpush.bf16.msra.mxu0 %v673
        %794 = vmatpush.bf16.msra.mxu0 %v669
        %795 = vmatpush.bf16.msra.mxu0 %v665
        %796 = vmatpush.bf16.msra.mxu0 %v661
        %797 = vmatpush.bf16.msra.mxu0 %v657
        %798 = vmatpush.bf16.msra.mxu0 %v653
        %799 = vmatpush.bf16.msra.mxu0 %v649
        %800 = vmatpush.bf16.msra.mxu0 %v645
        %801 = vmatmul.bf16.gmra.mxu0 %v424
        %v802 = vpop.f32.mrf.mxu0
        %v803 = vadd.f32 %v417, %v802
        %v804 = vpop.f32.mrf.mxu0
        %805 = vdwg.mxu0
        %806 = vmatpush.bf16.msra.mxu0 %v705
        %807 = vmatpush.bf16.msra.mxu0 %v701
        %808 = vmatpush.bf16.msra.mxu0 %v697
        %809 = vmatpush.bf16.msra.mxu0 %v693
        %810 = vmatpush.bf16.msra.mxu0 %v689
        %811 = vmatpush.bf16.msra.mxu0 %v685
        %812 = vmatpush.bf16.msra.mxu0 %v681
        %813 = vmatpush.bf16.msra.mxu0 %v677
        %814 = vmatmul.bf16.gmra.mxu0 %v425
        %v815 = vpop.f32.mrf.mxu0
        %v816 = vadd.f32 %v803, %v815
        %v817 = vpop.f32.mrf.mxu0
        %818 = vdwg.mxu0
        %819 = vmatpush.bf16.msra.mxu0 0
        %820 = vmatpush.bf16.msra.mxu0 0
        %821 = vmatpush.bf16.msra.mxu0 0
        %822 = vmatpush.bf16.msra.mxu0 0
        %823 = vmatpush.bf16.msra.mxu0 0
        %824 = vmatpush.bf16.msra.mxu0 0
        %825 = vmatpush.bf16.msra.mxu0 %v713
        %826 = vmatpush.bf16.msra.mxu0 %v709
        %827 = vmatmul.bf16.gmra.mxu0 %v791
        %v828 = vpop.f32.mrf.mxu0
        %v829 = vadd.f32 %v816, %v828
        %v830 = vpop.f32.mrf.mxu0
        %831 = vdwg.mxu0
        %832 = vmatpush.bf16.msra.mxu0 %v674
        %833 = vmatpush.bf16.msra.mxu0 %v670
        %834 = vmatpush.bf16.msra.mxu0 %v666
        %835 = vmatpush.bf16.msra.mxu0 %v662
        %836 = vmatpush.bf16.msra.mxu0 %v658
        %837 = vmatpush.bf16.msra.mxu0 %v654
        %838 = vmatpush.bf16.msra.mxu0 %v650
        %839 = vmatpush.bf16.msra.mxu0 %v646
        %840 = vmatmul.bf16.gmra.mxu0 %v424
        %v841 = vpop.f32.mrf.mxu0
        %v842 = vadd.f32 %v417, %v841
        %v843 = vpop.f32.mrf.mxu0
        %844 = vdwg.mxu0
        %845 = vmatpush.bf16.msra.mxu0 %v706
        %846 = vmatpush.bf16.msra.mxu0 %v702
        %847 = vmatpush.bf16.msra.mxu0 %v698
        %848 = vmatpush.bf16.msra.mxu0 %v694
        %849 = vmatpush.bf16.msra.mxu0 %v690
        %850 = vmatpush.bf16.msra.mxu0 %v686
        %851 = vmatpush.bf16.msra.mxu0 %v682
        %852 = vmatpush.bf16.msra.mxu0 %v678
        %853 = vmatmul.bf16.gmra.mxu0 %v425
        %v854 = vpop.f32.mrf.mxu0
        %v855 = vadd.f32 %v842, %v854
        %v856 = vpop.f32.mrf.mxu0
        %857 = vdwg.mxu0
        %858 = vmatpush.bf16.msra.mxu0 0
        %859 = vmatpush.bf16.msra.mxu0 0
        %860 = vmatpush.bf16.msra.mxu0 0
        %861 = vmatpush.bf16.msra.mxu0 0
        %862 = vmatpush.bf16.msra.mxu0 0
        %863 = vmatpush.bf16.msra.mxu0 0
        %864 = vmatpush.bf16.msra.mxu0 %v714
        %865 = vmatpush.bf16.msra.mxu0 %v710
        %866 = vmatmul.bf16.gmra.mxu0 %v791
        %v867 = vpop.f32.mrf.mxu0
        %v868 = vadd.f32 %v855, %v867
        %v869 = vpop.f32.mrf.mxu0
        %870 = vdwg.mxu0
        %871 = vmatpush.bf16.msra.mxu0 %v675
        %872 = vmatpush.bf16.msra.mxu0 %v671
        %873 = vmatpush.bf16.msra.mxu0 %v667
        %874 = vmatpush.bf16.msra.mxu0 %v663
        %875 = vmatpush.bf16.msra.mxu0 %v659
        %876 = vmatpush.bf16.msra.mxu0 %v655
        %877 = vmatpush.bf16.msra.mxu0 %v651
        %878 = vmatpush.bf16.msra.mxu0 %v647
        %879 = vmatmul.bf16.gmra.mxu0 %v424
        %v880 = vpop.f32.mrf.mxu0
        %v881 = vadd.f32 %v417, %v880
        %v882 = vpop.f32.mrf.mxu0
        %883 = vdwg.mxu0
        %884 = vmatpush.bf16.msra.mxu0 %v707
        %885 = vmatpush.bf16.msra.mxu0 %v703
        %886 = vmatpush.bf16.msra.mxu0 %v699
        %887 = vmatpush.bf16.msra.mxu0 %v695
        %888 = vmatpush.bf16.msra.mxu0 %v691
        %889 = vmatpush.bf16.msra.mxu0 %v687
        %890 = vmatpush.bf16.msra.mxu0 %v683
        %891 = vmatpush.bf16.msra.mxu0 %v679
        %892 = vmatmul.bf16.gmra.mxu0 %v425
        %v893 = vpop.f32.mrf.mxu0
        %v894 = vadd.f32 %v881, %v893
        %v895 = vpop.f32.mrf.mxu0
        %896 = vdwg.mxu0
        %897 = vmatpush.bf16.msra.mxu0 0
        %898 = vmatpush.bf16.msra.mxu0 0
        %899 = vmatpush.bf16.msra.mxu0 0
        %900 = vmatpush.bf16.msra.mxu0 0
        %901 = vmatpush.bf16.msra.mxu0 0
        %902 = vmatpush.bf16.msra.mxu0 0
        %903 = vmatpush.bf16.msra.mxu0 %v715
        %904 = vmatpush.bf16.msra.mxu0 %v711
        %905 = vmatmul.bf16.gmra.mxu0 %v791
        %v906 = vpop.f32.mrf.mxu0
        %v907 = vadd.f32 %v894, %v906
        %v908 = vpop.f32.mrf.mxu0
        %909 = vdwg.mxu0
        %910 = vmatpush.bf16.msra.mxu0 %v676
        %911 = vmatpush.bf16.msra.mxu0 %v672
        %912 = vmatpush.bf16.msra.mxu0 %v668
        %913 = vmatpush.bf16.msra.mxu0 %v664
        %914 = vmatpush.bf16.msra.mxu0 %v660
        %915 = vmatpush.bf16.msra.mxu0 %v656
        %916 = vmatpush.bf16.msra.mxu0 %v652
        %917 = vmatpush.bf16.msra.mxu0 %v648
        %918 = vmatmul.bf16.gmra.mxu0 %v424
        %v919 = vpop.f32.mrf.mxu0
        %v920 = vadd.f32 %v417, %v919
        %v921 = vpop.f32.mrf.mxu0
        %922 = vdwg.mxu0
        %923 = vmatpush.bf16.msra.mxu0 %v708
        %924 = vmatpush.bf16.msra.mxu0 %v704
        %925 = vmatpush.bf16.msra.mxu0 %v700
        %926 = vmatpush.bf16.msra.mxu0 %v696
        %927 = vmatpush.bf16.msra.mxu0 %v692
        %928 = vmatpush.bf16.msra.mxu0 %v688
        %929 = vmatpush.bf16.msra.mxu0 %v684
        %930 = vmatpush.bf16.msra.mxu0 %v680
        %931 = vmatmul.bf16.gmra.mxu0 %v425
        %v932 = vpop.f32.mrf.mxu0
        %v933 = vadd.f32 %v920, %v932
        %v934 = vpop.f32.mrf.mxu0
        %935 = vdwg.mxu0
        %936 = vmatpush.bf16.msra.mxu0 0
        %937 = vmatpush.bf16.msra.mxu0 0
        %938 = vmatpush.bf16.msra.mxu0 0
        %939 = vmatpush.bf16.msra.mxu0 0
        %940 = vmatpush.bf16.msra.mxu0 0
        %941 = vmatpush.bf16.msra.mxu0 0
        %942 = vmatpush.bf16.msra.mxu0 %v716
        %943 = vmatpush.bf16.msra.mxu0 %v712
        %944 = vmatmul.bf16.gmra.mxu0 %v791
        %v945 = vpop.f32.mrf.mxu0
        %v946 = vadd.f32 %v933, %v945
        %v947 = vpop.f32.mrf.mxu0
        %948 = vdwg.mxu0
        %949 = vst [vmem:[%s335] sm:$0xff] %v829
        %950 = vst [vmem:[%s335 + $0x8] sm:$0xff] %v868
        %951 = vst [vmem:[%s335 + $0x10] sm:$0xff] %v907
        %952 = vst [vmem:[%s335 + $0x18] sm:$0xff] %v946
        %s953 = smul.u32 4, %s16
        %p954 = scmp.lt.s32.totalorder %s953, 63
        %s955 = scalar_select %p954, %s953, 63
        %s956 = smul.addr %s955, 8
        %s957 = scalar_lea.vmem %s3, %s956
        // Predicated region
        $region56: #{unet_forward.19} parent=50 // pred_check
          %p958 = pneg %p102
        $region57: #{unet_forward.19} parent=50 // pred_check_branch
          %960 = sbr.rel (%p958) target = $region59
        $region58: #{unet_forward.19} parent=50 // pred_region
          %s961 = smul.u32 4, %s16
        $region59: #{unet_forward.19} parent=50 // pred_fallthru
          _
      $region51: #{unet_forward.19} parent=5 // pred_fallthru
        _
      %p962 = scmp.le.s32.totalorder 2, %s11
      // Predicated region
      $region60: #{unet_forward.19} parent=5 // pred_check
        %p963 = pneg %p962
      $region61: #{unet_forward.19} parent=5 // pred_check_branch
        %965 = sbr.rel (%p963) target = $region63
      $region62: #{unet_forward.19} parent=5 // pred_region
        %s966 = ssub.s32 %s11, 2
        // Predicated region
        $region64: #{unet_forward.19} parent=62 // pred_check
          %p967 = pneg %p108
        $region65: #{unet_forward.19} parent=62 // pred_check_branch
          %969 = sbr.rel (%p967) target = $region67
        $region66: #{unet_forward.19} parent=62 // pred_region
          %s970 = smul.u32 4, %s17
          %p971 = scmp.lt.s32.totalorder %s970, 63
          %s972 = scalar_select %p971, %s970, 63
          %s973 = smul.addr %s972, 8
          %s974 = scalar_lea.vmem %s3, %s973
        $region67: #{unet_forward.19} parent=62 // pred_fallthru
          _
      $region63: #{unet_forward.19} parent=5 // pred_fallthru
        _
    $region6: #{unet_forward.19} parent=1 // loop_footer
      %s15 = sadd.s32 1, %s11
    $region7: #{unet_forward.19} parent=1 // loop_footer_branch
      %10 = sbr.rel target = $region3
    $region8: #{unet_forward.19} parent=1 // loop_exit
      _

</llo_original>
